<compile_context>
chip_gen: v5e
topology: v5e:2x2
jax: 0.10.0
libtpu: 0.0.40
codegen_flags: <defaults>
</compile_context>

<pallas_src>
import functools
import math

import jax
import jax.numpy as jnp
import numpy as np
from jax.experimental import pallas as pl
from jax.experimental.pallas import tpu as pltpu

DIM_MODEL = 128          # module default
NUM_LAYERS = 3
NHEAD = 8
HEAD_DIM = DIM_MODEL // NHEAD
DIM_FF = 4 * DIM_MODEL
LN_EPS = 1e-5            # PyTorch LayerNorm default
NEG_BIG = -1e30          # finite stand-in for -inf (avoids NaN on fully masked rows)
PAD_IN = 8               # coordinate dim (2) padded once at init


def _round_up(x, m):
    return ((x + m - 1) // m) * m


def _row_tile(m, pref=512):
    """Largest row tile <= pref that divides m (m is always a multiple of 8)."""
    if m <= pref:
        return m
    for t in (512, 256, 128, 64, 32, 16, 8):
        if m % t == 0:
            return t
    return m


# -----------------------------------------------------------------------------
# Kernel 1: selection embedding + positional encoding (memory construction)
# -----------------------------------------------------------------------------
def _embed_pe_kernel(sel_ref, w_ref, b_ref, pe_ref, o_ref):
    o_ref[0] = (jnp.dot(sel_ref[0], w_ref[...], preferred_element_type=jnp.float32)
                + b_ref[...] + pe_ref[...])


def embed_selections(sel_p, w_p, b, pe):
    N, Tp, _ = sel_p.shape
    D = w_p.shape[1]
    return pl.pallas_call(
        _embed_pe_kernel,
        out_shape=jax.ShapeDtypeStruct((N, Tp, D), jnp.float32),
        grid=(N,),
        in_specs=[
            pl.BlockSpec((1, Tp, PAD_IN), lambda n: (n, 0, 0)),
            pl.BlockSpec((PAD_IN, D), lambda n: (0, 0)),
            pl.BlockSpec((1, D), lambda n: (0, 0)),
            pl.BlockSpec((Tp, D), lambda n: (0, 0)),
        ],
        out_specs=pl.BlockSpec((1, Tp, D), lambda n: (n, 0, 0)),
        compiler_params=pltpu.CompilerParams(dimension_semantics=("parallel",)),
    )(sel_p, w_p, b, pe)


# -----------------------------------------------------------------------------
# Kernel 2: fused multi-head attention + out-proj + residual + LayerNorm
# -----------------------------------------------------------------------------
def _mha_ln_kernel(q_in_ref, kv_in_ref, bias_ref, wq_ref, bq_ref, wkv_ref, bkv_ref,
                   wo_ref, bo_ref, g_ref, bt_ref, o_ref, *, nhead, scale):
    x_q = q_in_ref[0]                       # (Lq, D)   (also the residual)
    x_kv = kv_in_ref[0]                     # (Lk, D)
    bias = bias_ref[0]                      # (1, Lk)   additive key-padding bias
    D = x_q.shape[-1]
    hd = D // nhead

    q = jnp.dot(x_q, wq_ref[...], preferred_element_type=jnp.float32) + bq_ref[...]
    kv = jnp.dot(x_kv, wkv_ref[...], preferred_element_type=jnp.float32) + bkv_ref[...]

    out = None
    for h in range(nhead):                  # static, unrolled
        lo = h * hd
        qh = q[:, lo:lo + hd]               # (Lq, hd)
        kh = kv[:, lo:lo + hd]              # (Lk, hd)
        vh = kv[:, D + lo:D + lo + hd]      # (Lk, hd)
        s = jax.lax.dot_general(qh, kh, (((1,), (1,)), ((), ())),
                                preferred_element_type=jnp.float32) * scale
        s = s + bias                        # (Lq, Lk)
        m = jnp.max(s, axis=-1, keepdims=True)
        p = jnp.exp(s - m)
        p = p * pl.reciprocal(jnp.sum(p, axis=-1, keepdims=True), approx=True)
        ah = jnp.dot(p, vh, preferred_element_type=jnp.float32)              # (Lq, hd)
        oh = jnp.dot(ah, wo_ref[lo:lo + hd, :], preferred_element_type=jnp.float32)
        out = oh if out is None else out + oh                                # accumulate out-proj

    y = out + bo_ref[...] + x_q             # out-proj bias + residual
    mu = jnp.mean(y, axis=-1, keepdims=True)
    d = y - mu
    var = jnp.mean(d * d, axis=-1, keepdims=True)
    o_ref[0] = d * jax.lax.rsqrt(var + LN_EPS) * g_ref[...] + bt_ref[...]


def fused_mha_ln(q_in, kv_in, bias, p, gamma, beta):
    N, Lq, D = q_in.shape
    Lk = kv_in.shape[1]
    kern = functools.partial(_mha_ln_kernel, nhead=NHEAD,
                             scale=1.0 / math.sqrt(HEAD_DIM))
    return pl.pallas_call(
        kern,
        out_shape=jax.ShapeDtypeStruct((N, Lq, D), jnp.float32),
        grid=(N,),
        in_specs=[
            pl.BlockSpec((1, Lq, D), lambda n: (n, 0, 0)),
            pl.BlockSpec((1, Lk, D), lambda n: (n, 0, 0)),
            pl.BlockSpec((1, 1, Lk), lambda n: (n, 0, 0)),
            pl.BlockSpec((D, D), lambda n: (0, 0)),
            pl.BlockSpec((1, D), lambda n: (0, 0)),
            pl.BlockSpec((D, 2 * D), lambda n: (0, 0)),
            pl.BlockSpec((1, 2 * D), lambda n: (0, 0)),
            pl.BlockSpec((D, D), lambda n: (0, 0)),
            pl.BlockSpec((1, D), lambda n: (0, 0)),
            pl.BlockSpec((1, D), lambda n: (0, 0)),
            pl.BlockSpec((1, D), lambda n: (0, 0)),
        ],
        out_specs=pl.BlockSpec((1, Lq, D), lambda n: (n, 0, 0)),
        compiler_params=pltpu.CompilerParams(dimension_semantics=("parallel",)),
    )(q_in, kv_in, bias, p["wq"], p["bq"], p["wkv"], p["bkv"], p["wo"], p["bo"],
      gamma, beta)


# -----------------------------------------------------------------------------
# Kernel 3: fused FFN (FF1 + ReLU + FF2) + residual + LayerNorm
# -----------------------------------------------------------------------------
def _ffn_ln_kernel(x_ref, w1_ref, b1_ref, w2_ref, b2_ref, g_ref, bt_ref, o_ref):
    x = x_ref[...]
    h = jnp.maximum(
        jnp.dot(x, w1_ref[...], preferred_element_type=jnp.float32) + b1_ref[...], 0.0)
    y = jnp.dot(h, w2_ref[...], preferred_element_type=jnp.float32) + b2_ref[...] + x
    mu = jnp.mean(y, axis=-1, keepdims=True)
    d = y - mu
    var = jnp.mean(d * d, axis=-1, keepdims=True)
    o_ref[...] = d * jax.lax.rsqrt(var + LN_EPS) * g_ref[...] + bt_ref[...]


def fused_ffn_ln(x, w1, b1, w2, b2, gamma, beta):
    M, D = x.shape
    F = w1.shape[1]
    TM = _row_tile(M)
    return pl.pallas_call(
        _ffn_ln_kernel,
        out_shape=jax.ShapeDtypeStruct((M, D), jnp.float32),
        grid=(M // TM,),
        in_specs=[
            pl.BlockSpec((TM, D), lambda i: (i, 0)),
            pl.BlockSpec((D, F), lambda i: (0, 0)),
            pl.BlockSpec((1, F), lambda i: (0, 0)),
            pl.BlockSpec((F, D), lambda i: (0, 0)),
            pl.BlockSpec((1, D), lambda i: (0, 0)),
            pl.BlockSpec((1, D), lambda i: (0, 0)),
            pl.BlockSpec((1, D), lambda i: (0, 0)),
        ],
        out_specs=pl.BlockSpec((TM, D), lambda i: (i, 0)),
        compiler_params=pltpu.CompilerParams(dimension_semantics=("parallel",)),
    )(x, w1, b1, w2, b2, gamma, beta)


# -----------------------------------------------------------------------------
# Kernel 4: fused output head (Linear+ReLU+Linear->1) + mask + reset_pads + log_softmax
# -----------------------------------------------------------------------------
def _dist_head_kernel(x_ref, w1_ref, b1_ref, w2t_ref, b2_ref, mask_ref, eos_ref, o_ref):
    x = x_ref[0]                                                # (S, D)
    h = jnp.maximum(
        jnp.dot(x, w1_ref[...], preferred_element_type=jnp.float32) + b1_ref[...], 0.0)
    logits = jax.lax.dot_general(w2t_ref[...], h, (((1,), (1,)), ((), ())),
                                 preferred_element_type=jnp.float32) + b2_ref[...]  # (1, S)
    lg = jnp.where(mask_ref[0] > 0.5, NEG_BIG, logits)          # logits[mask] = -inf
    # TODO(synk): reset_pads assumed to zero the whole logits row of EOS batches,
    #             applied AFTER masking (matches the reference call order).
    lg = jnp.where(eos_ref[0] > 0.5, 0.0, lg)
    m = jnp.max(lg, axis=-1, keepdims=True)
    e = jnp.exp(lg - m)
    lse = jnp.log(jnp.sum(e, axis=-1, keepdims=True)) + m
    o_ref[0] = lg - lse                                          # log_softmax over S


def dist_head_logsoftmax(x, w1, b1, w2t, b2, mask_f, eos_f):
    N, S, D = x.shape
    out = pl.pallas_call(
        _dist_head_kernel,
        out_shape=jax.ShapeDtypeStruct((N, 1, S), jnp.float32),
        grid=(N,),
        in_specs=[
            pl.BlockSpec((1, S, D), lambda n: (n, 0, 0)),
            pl.BlockSpec((D, D), lambda n: (0, 0)),
            pl.BlockSpec((1, D), lambda n: (0, 0)),
            pl.BlockSpec((1, D), lambda n: (0, 0)),
            pl.BlockSpec((1, 1), lambda n: (0, 0)),
            pl.BlockSpec((1, 1, S), lambda n: (n, 0, 0)),
            pl.BlockSpec((1, 1, 1), lambda n: (n, 0, 0)),
        ],
        out_specs=pl.BlockSpec((1, 1, S), lambda n: (n, 0, 0)),
        compiler_params=pltpu.CompilerParams(dimension_semantics=("parallel",)),
    )(x, w1, b1, w2t, b2, mask_f, eos_f)
    return out.reshape(N, S)


# -----------------------------------------------------------------------------
# Model glue (plain JAX: only tiny pads / mask prep, no activation transposes)
# -----------------------------------------------------------------------------
def positional_encoding(length, d_model):
    pos = np.arange(length)[:, None].astype(np.float32)
    div = np.exp(np.arange(0, d_model, 2).astype(np.float32)
                 * (-math.log(10000.0) / d_model))
    pe = np.zeros((length, d_model), np.float32)
    pe[:, 0::2] = np.sin(pos * div)
    pe[:, 1::2] = np.cos(pos * div)
    return jnp.asarray(pe)


def decoder_layer(x, memory, self_bias, mem_bias, p):
    """PyTorch nn.TransformerDecoderLayer (post-norm, relu, dropout=0)."""
    N, Sp, D = x.shape
    x1 = fused_mha_ln(x, x, self_bias, p["self_attn"], p["ln1_g"], p["ln1_b"])
    x2 = fused_mha_ln(x1, memory, mem_bias, p["cross_attn"], p["ln2_g"], p["ln2_b"])
    x3 = fused_ffn_ln(x2.reshape(N * Sp, D), p["w_ff1"], p["b_ff1"],
                      p["w_ff2"], p["b_ff2"], p["ln3_g"], p["ln3_b"])
    return x3.reshape(N, Sp, D)


def tsp_monty_style_decoder_forward(params, node_encodings, selections,
                                    output_mask, node_enc_padding_mask, eos_mask):
    """
    node_encodings: (N, S, dim_model)  selections: (N, T, 2)
    output_mask / node_enc_padding_mask: (N, S) bool   eos_mask: (N,) bool
    returns log-probs (N, S)
    """
    N, S, D = node_encodings.shape
    T = selections.shape[1]
    Sp, Tp = _round_up(S, 8), _round_up(T, 8)

    # TODO(synk): generate_padding_mask assumed = "all selection coordinates equal 0".
    select_pad_mask = jnp.all(selections == 0.0, axis=-1)                      # (N, T)

    tgt = node_encodings
    tgt_kpm = node_enc_padding_mask
    if Sp != S:   # padded tgt rows are masked as keys and sliced off at the head
        tgt = jnp.pad(tgt, ((0, 0), (0, Sp - S), (0, 0)))
        tgt_kpm = jnp.pad(tgt_kpm, ((0, 0), (0, Sp - S)), constant_values=True)
    mem_kpm = select_pad_mask
    if Tp != T:
        mem_kpm = jnp.pad(mem_kpm, ((0, 0), (0, Tp - T)), constant_values=True)

    # memory = embed(selections*2-1) + positional encoding  (one fused kernel)
    sel_sym = selections.astype(jnp.float32) * 2.0 - 1.0
    sel_p = jnp.zeros((N, Tp, PAD_IN), jnp.float32).at[:, :T, :2].set(sel_sym)
    pe = positional_encoding(Tp, D)
    # TODO(synk): PositionalEncoding dropout treated as identity (eval mode).
    memory = embed_selections(sel_p, params["embed_w"], params["embed_b"], pe)

    # additive key-padding biases, shared across all 3 layers
    self_bias = jnp.where(tgt_kpm, NEG_BIG, 0.0).astype(jnp.float32)[:, None, :]   # (N,1,Sp)
    mem_bias = jnp.where(mem_kpm, NEG_BIG, 0.0).astype(jnp.float32)[:, None, :]    # (N,1,Tp)

    x = tgt
    for lp in params["layers"]:
        x = decoder_layer(x, memory, self_bias, mem_bias, lp)

    x_real = x[:, :S, :] if Sp != S else x
    comb_mask = jnp.logical_or(output_mask, node_enc_padding_mask)
    comb_mask = comb_mask.astype(jnp.float32)[:, None, :]                      # (N,1,S)
    eos_f = eos_mask.astype(jnp.float32).reshape(N, 1, 1)
    return dist_head_logsoftmax(x_real, params["dist_w1"], params["dist_b1"],
                                params["dist_w2t"], params["dist_b2"],
                                comb_mask, eos_f)


# -----------------------------------------------------------------------------
# Deterministic parameter initialization (synthetic weights, fused layouts)
# -----------------------------------------------------------------------------
def _dense(key, fan_in, fan_out):
    k1, k2 = jax.random.split(key)
    bound = 1.0 / math.sqrt(fan_in)
    w = jax.random.uniform(k1, (fan_in, fan_out), jnp.float32, -bound, bound)
    b = jax.random.uniform(k2, (1, fan_out), jnp.float32, -bound, bound)
    return w, b


def _attn_params(key):
    ks = jax.random.split(key, 4)
    wq, bq = _dense(ks[0], DIM_MODEL, DIM_MODEL)
    wk, bk = _dense(ks[1], DIM_MODEL, DIM_MODEL)
    wv, bv = _dense(ks[2], DIM_MODEL, DIM_MODEL)
    wo, bo = _dense(ks[3], DIM_MODEL, DIM_MODEL)
    return {"wq": wq, "bq": bq,
            "wkv": jnp.concatenate([wk, wv], axis=1),      # fused K|V projection
            "bkv": jnp.concatenate([bk, bv], axis=1),
            "wo": wo, "bo": bo}


def init_params(key):
    keys = jax.random.split(key, 4 + NUM_LAYERS)
    params = {}
    ew, eb = _dense(keys[0], 2, DIM_MODEL)
    params["embed_w"] = jnp.zeros((PAD_IN, DIM_MODEL), jnp.float32).at[:2, :].set(ew)
    params["embed_b"] = eb
    params["dist_w1"], params["dist_b1"] = _dense(keys[1], DIM_MODEL, DIM_MODEL)
    w2, b2 = _dense(keys[2], DIM_MODEL, 1)
    params["dist_w2t"] = jnp.transpose(w2)                 # (1, D) row layout, padded once
    params["dist_b2"] = b2.reshape(1, 1)
    layers = []
    for i in range(NUM_LAYERS):
        lk = jax.random.split(keys[4 + i], 4)
        w_ff1, b_ff1 = _dense(lk[2], DIM_MODEL, DIM_FF)
        w_ff2, b_ff2 = _dense(lk[3], DIM_FF, DIM_MODEL)
        layers.append({
            "self_attn": _attn_params(lk[0]),
            "cross_attn": _attn_params(lk[1]),
            "w_ff1": w_ff1, "b_ff1": b_ff1,
            "w_ff2": w_ff2, "b_ff2": b_ff2,
            "ln1_g": jnp.ones((1, DIM_MODEL), jnp.float32),
            "ln1_b": jnp.zeros((1, DIM_MODEL), jnp.float32),
            "ln2_g": jnp.ones((1, DIM_MODEL), jnp.float32),
            "ln2_b": jnp.zeros((1, DIM_MODEL), jnp.float32),
            "ln3_g": jnp.ones((1, DIM_MODEL), jnp.float32),
            "ln3_b": jnp.zeros((1, DIM_MODEL), jnp.float32),
        })
    params["layers"] = layers
    return params


if __name__ == "__main__":
    key = jax.random.PRNGKey(0)
    pkey, dkey = jax.random.split(key)
    params = init_params(pkey)

    N, S, T = 2, 8, 5  # batch, nodes, selections-so-far
    k1, k2 = jax.random.split(dkey)
    node_encodings = jax.random.normal(k1, (N, S, DIM_MODEL), jnp.float32)
    selections = jax.random.uniform(k2, (N, T, 2), jnp.float32, 0.05, 0.95)
    output_mask = jnp.zeros((N, S), bool).at[:, 0].set(True).at[0, 3].set(True)
    node_enc_padding_mask = jnp.zeros((N, S), bool).at[1, S - 1].set(True)
    eos_mask = jnp.array([False, True])

    fwd = jax.jit(tsp_monty_style_decoder_forward)
    out = fwd(params, node_encodings, selections, output_mask,
              node_enc_padding_mask, eos_mask)
    out = jax.block_until_ready(out)
    assert out.shape == (N, S)
    assert not bool(jnp.any(jnp.isnan(out)))
    print("KERNEL_OK")
</pallas_src>

<mosaic_0001>
module attributes {stable_mosaic.version = 11 : i64} {
  func.func @_ffn_ln_kernel(%arg0: i32, %arg1: memref<16x128xf32, #tpu.memory_space<vmem>>, %arg2: memref<128x512xf32, #tpu.memory_space<vmem>>, %arg3: memref<1x512xf32, #tpu.memory_space<vmem>>, %arg4: memref<512x128xf32, #tpu.memory_space<vmem>>, %arg5: memref<1x128xf32, #tpu.memory_space<vmem>>, %arg6: memref<1x128xf32, #tpu.memory_space<vmem>>, %arg7: memref<1x128xf32, #tpu.memory_space<vmem>>, %arg8: memref<16x128xf32, #tpu.memory_space<vmem>>) attributes {dimension_semantics = [#tpu.dimension_semantics<parallel>], iteration_bounds = array<i64: 1>, scalar_prefetch = 0 : i64, scratch_operands = 0 : i64, tpu.core_type = #tpu.core_type<tc>, window_params = [{transform_indices = @transform_0, window_bounds = array<i64: 16, 128>}, {pipeline_mode = #tpu.pipeline_mode<synchronous>, transform_indices = @transform_1, window_bounds = array<i64: 128, 512>}, {pipeline_mode = #tpu.pipeline_mode<synchronous>, transform_indices = @transform_2, window_bounds = array<i64: 1, 512>}, {pipeline_mode = #tpu.pipeline_mode<synchronous>, transform_indices = @transform_3, window_bounds = array<i64: 512, 128>}, {pipeline_mode = #tpu.pipeline_mode<synchronous>, transform_indices = @transform_4, window_bounds = array<i64: 1, 128>}, {pipeline_mode = #tpu.pipeline_mode<synchronous>, transform_indices = @transform_5, window_bounds = array<i64: 1, 128>}, {pipeline_mode = #tpu.pipeline_mode<synchronous>, transform_indices = @transform_6, window_bounds = array<i64: 1, 128>}, {transform_indices = @transform_7, window_bounds = array<i64: 16, 128>}]} {
    %c0 = arith.constant 0 : index
    %c0_0 = arith.constant 0 : index
    %0 = vector.load %arg1[%c0, %c0_0] : memref<16x128xf32, #tpu.memory_space<vmem>>, vector<16x128xf32>
    %c0_1 = arith.constant 0 : index
    %c0_2 = arith.constant 0 : index
    %1 = vector.load %arg2[%c0_1, %c0_2] : memref<128x512xf32, #tpu.memory_space<vmem>>, vector<128x512xf32>
    %cst = arith.constant dense<0.000000e+00> : vector<16x512xf32>
    %2 = tpu.matmul %0, %1, %cst {dimension_numbers = #tpu.dot_dimension_numbers<[1], [0], [0], [1], [0, 0, 1, 1], [], []>} : vector<16x128xf32>, vector<128x512xf32>, vector<16x512xf32> -> vector<16x512xf32>
    %c0_3 = arith.constant 0 : index
    %c0_4 = arith.constant 0 : index
    %3 = vector.load %arg3[%c0_3, %c0_4] : memref<1x512xf32, #tpu.memory_space<vmem>>, vector<1x512xf32>
    %4 = vector.broadcast %3 : vector<1x512xf32> to vector<16x512xf32>
    %5 = arith.addf %2, %4 : vector<16x512xf32>
    %cst_5 = arith.constant 0.000000e+00 : f32
    %6 = vector.broadcast %cst_5 : f32 to vector<16x512xf32>
    %7 = arith.maximumf %5, %6 : vector<16x512xf32>
    %c0_6 = arith.constant 0 : index
    %c0_7 = arith.constant 0 : index
    %8 = vector.load %arg4[%c0_6, %c0_7] : memref<512x128xf32, #tpu.memory_space<vmem>>, vector<512x128xf32>
    %cst_8 = arith.constant dense<0.000000e+00> : vector<16x128xf32>
    %9 = tpu.matmul %7, %8, %cst_8 {dimension_numbers = #tpu.dot_dimension_numbers<[1], [0], [0], [1], [0, 0, 1, 1], [], []>} : vector<16x512xf32>, vector<512x128xf32>, vector<16x128xf32> -> vector<16x128xf32>
    %c0_9 = arith.constant 0 : index
    %c0_10 = arith.constant 0 : index
    %10 = vector.load %arg5[%c0_9, %c0_10] : memref<1x128xf32, #tpu.memory_space<vmem>>, vector<1x128xf32>
    %11 = vector.broadcast %10 : vector<1x128xf32> to vector<16x128xf32>
    %12 = arith.addf %9, %11 : vector<16x128xf32>
    %13 = arith.addf %12, %0 : vector<16x128xf32>
    %cst_11 = arith.constant dense<0.000000e+00> : vector<16xf32>
    %14 = vector.multi_reduction <add>, %13, %cst_11 [1] : vector<16x128xf32> to vector<16xf32>
    %15 = vector.shape_cast %14 : vector<16xf32> to vector<16x1xf32>
    %cst_12 = arith.constant 1.280000e+02 : f32
    %16 = vector.broadcast %cst_12 : f32 to vector<16x1xf32>
    %17 = arith.divf %15, %16 : vector<16x1xf32>
    %18 = vector.broadcast %17 : vector<16x1xf32> to vector<16x128xf32>
    %19 = arith.subf %13, %18 : vector<16x128xf32>
    %20 = arith.mulf %19, %19 : vector<16x128xf32>
    %cst_13 = arith.constant dense<0.000000e+00> : vector<16xf32>
    %21 = vector.multi_reduction <add>, %20, %cst_13 [1] : vector<16x128xf32> to vector<16xf32>
    %22 = vector.shape_cast %21 : vector<16xf32> to vector<16x1xf32>
    %cst_14 = arith.constant 1.280000e+02 : f32
    %23 = vector.broadcast %cst_14 : f32 to vector<16x1xf32>
    %24 = arith.divf %22, %23 : vector<16x1xf32>
    %cst_15 = arith.constant 9.99999974E-6 : f32
    %25 = vector.broadcast %cst_15 : f32 to vector<16x1xf32>
    %26 = arith.addf %24, %25 : vector<16x1xf32>
    %27 = math.rsqrt %26 : vector<16x1xf32>
    %28 = vector.broadcast %27 : vector<16x1xf32> to vector<16x128xf32>
    %29 = arith.mulf %19, %28 : vector<16x128xf32>
    %c0_16 = arith.constant 0 : index
    %c0_17 = arith.constant 0 : index
    %30 = vector.load %arg6[%c0_16, %c0_17] : memref<1x128xf32, #tpu.memory_space<vmem>>, vector<1x128xf32>
    %31 = vector.broadcast %30 : vector<1x128xf32> to vector<16x128xf32>
    %32 = arith.mulf %29, %31 : vector<16x128xf32>
    %c0_18 = arith.constant 0 : index
    %c0_19 = arith.constant 0 : index
    %33 = vector.load %arg7[%c0_18, %c0_19] : memref<1x128xf32, #tpu.memory_space<vmem>>, vector<1x128xf32>
    %34 = vector.broadcast %33 : vector<1x128xf32> to vector<16x128xf32>
    %35 = arith.addf %32, %34 : vector<16x128xf32>
    %c0_20 = arith.constant 0 : index
    %c0_21 = arith.constant 0 : index
    %36 = vector.load %arg8[%c0_20, %c0_21] : memref<16x128xf32, #tpu.memory_space<vmem>>, vector<16x128xf32>
    tpu.vector_store %arg8[%c0_20, %c0_21], %35 {strides = array<i32>} : memref<16x128xf32, #tpu.memory_space<vmem>>, vector<16x128xf32>,
    return
  }
  func.func @transform_0(%arg0: i32) -> (i32, i32) {
    %c0_i32 = arith.constant 0 : i32
    %c0_i32_0 = arith.constant 0 : i32
    return %arg0, %c0_i32 : i32, i32
  }
  func.func @transform_1(%arg0: i32) -> (i32, i32) {
    %c0_i32 = arith.constant 0 : i32
    %c0_i32_0 = arith.constant 0 : i32
    %c0_i32_1 = arith.constant 0 : i32
    return %c0_i32, %c0_i32_0 : i32, i32
  }
  func.func @transform_2(%arg0: i32) -> (i32, i32) {
    %c0_i32 = arith.constant 0 : i32
    %c0_i32_0 = arith.constant 0 : i32
    %c0_i32_1 = arith.constant 0 : i32
    return %c0_i32, %c0_i32_0 : i32, i32
  }
  func.func @transform_3(%arg0: i32) -> (i32, i32) {
    %c0_i32 = arith.constant 0 : i32
    %c0_i32_0 = arith.constant 0 : i32
    %c0_i32_1 = arith.constant 0 : i32
    return %c0_i32, %c0_i32_0 : i32, i32
  }
  func.func @transform_4(%arg0: i32) -> (i32, i32) {
    %c0_i32 = arith.constant 0 : i32
    %c0_i32_0 = arith.constant 0 : i32
    %c0_i32_1 = arith.constant 0 : i32
    return %c0_i32, %c0_i32_0 : i32, i32
  }
  func.func @transform_5(%arg0: i32) -> (i32, i32) {
    %c0_i32 = arith.constant 0 : i32
    %c0_i32_0 = arith.constant 0 : i32
    %c0_i32_1 = arith.constant 0 : i32
    return %c0_i32, %c0_i32_0 : i32, i32
  }
  func.func @transform_6(%arg0: i32) -> (i32, i32) {
    %c0_i32 = arith.constant 0 : i32
    %c0_i32_0 = arith.constant 0 : i32
    %c0_i32_1 = arith.constant 0 : i32
    return %c0_i32, %c0_i32_0 : i32, i32
  }
  func.func @transform_7(%arg0: i32) -> (i32, i32) {
    %c0_i32 = arith.constant 0 : i32
    %c0_i32_0 = arith.constant 0 : i32
    return %arg0, %c0_i32 : i32, i32
  }
}

module attributes {stable_mosaic.version = 11 : i64} {
  func.func @_embed_pe_kernel(%arg0: i32, %arg1: memref<1x8x8xf32, #tpu.memory_space<vmem>>, %arg2: memref<8x128xf32, #tpu.memory_space<vmem>>, %arg3: memref<1x128xf32, #tpu.memory_space<vmem>>, %arg4: memref<8x128xf32, #tpu.memory_space<vmem>>, %arg5: memref<1x8x128xf32, #tpu.memory_space<vmem>>) attributes {dimension_semantics = [#tpu.dimension_semantics<parallel>], iteration_bounds = array<i64: 2>, scalar_prefetch = 0 : i64, scratch_operands = 0 : i64, tpu.core_type = #tpu.core_type<tc>, window_params = [{transform_indices = @transform_0, window_bounds = array<i64: 1, 8, 8>}, {pipeline_mode = #tpu.pipeline_mode<synchronous>, transform_indices = @transform_1, window_bounds = array<i64: 8, 128>}, {pipeline_mode = #tpu.pipeline_mode<synchronous>, transform_indices = @transform_2, window_bounds = array<i64: 1, 128>}, {pipeline_mode = #tpu.pipeline_mode<synchronous>, transform_indices = @transform_3, window_bounds = array<i64: 8, 128>}, {transform_indices = @transform_4, window_bounds = array<i64: 1, 8, 128>}]} {
    %c0 = arith.constant 0 : index
    %c0_0 = arith.constant 0 : index
    %c0_1 = arith.constant 0 : index
    %0 = vector.load %arg1[%c0, %c0_0, %c0_1] : memref<1x8x8xf32, #tpu.memory_space<vmem>>, vector<1x8x8xf32>
    %1 = vector.shape_cast %0 : vector<1x8x8xf32> to vector<8x8xf32>
    %c0_2 = arith.constant 0 : index
    %c0_3 = arith.constant 0 : index
    %2 = vector.load %arg2[%c0_2, %c0_3] : memref<8x128xf32, #tpu.memory_space<vmem>>, vector<8x128xf32>
    %cst = arith.constant dense<0.000000e+00> : vector<8x128xf32>
    %3 = tpu.matmul %1, %2, %cst {dimension_numbers = #tpu.dot_dimension_numbers<[1], [0], [0], [1], [0, 0, 1, 1], [], []>} : vector<8x8xf32>, vector<8x128xf32>, vector<8x128xf32> -> vector<8x128xf32>
    %c0_4 = arith.constant 0 : index
    %c0_5 = arith.constant 0 : index
    %4 = vector.load %arg3[%c0_4, %c0_5] : memref<1x128xf32, #tpu.memory_space<vmem>>, vector<1x128xf32>
    %5 = vector.broadcast %4 : vector<1x128xf32> to vector<8x128xf32>
    %6 = arith.addf %3, %5 : vector<8x128xf32>
    %c0_6 = arith.constant 0 : index
    %c0_7 = arith.constant 0 : index
    %7 = vector.load %arg4[%c0_6, %c0_7] : memref<8x128xf32, #tpu.memory_space<vmem>>, vector<8x128xf32>
    %8 = arith.addf %6, %7 : vector<8x128xf32>
    %c0_8 = arith.constant 0 : index
    %c0_9 = arith.constant 0 : index
    %c0_10 = arith.constant 0 : index
    %9 = vector.load %arg5[%c0_8, %c0_9, %c0_10] : memref<1x8x128xf32, #tpu.memory_space<vmem>>, vector<1x8x128xf32>
    %10 = vector.shape_cast %9 : vector<1x8x128xf32> to vector<8x128xf32>
    %11 = vector.shape_cast %8 : vector<8x128xf32> to vector<1x8x128xf32>
    tpu.vector_store %arg5[%c0_8, %c0_9, %c0_10], %11 {strides = array<i32>} : memref<1x8x128xf32, #tpu.memory_space<vmem>>, vector<1x8x128xf32>,
    return
  }
  func.func @transform_0(%arg0: i32) -> (i32, i32, i32) {
    %c0_i32 = arith.constant 0 : i32
    %c0_i32_0 = arith.constant 0 : i32
    %c0_i32_1 = arith.constant 0 : i32
    return %arg0, %c0_i32, %c0_i32_0 : i32, i32, i32
  }
  func.func @transform_1(%arg0: i32) -> (i32, i32) {
    %c0_i32 = arith.constant 0 : i32
    %c0_i32_0 = arith.constant 0 : i32
    %c0_i32_1 = arith.constant 0 : i32
    return %c0_i32, %c0_i32_0 : i32, i32
  }
  func.func @transform_2(%arg0: i32) -> (i32, i32) {
    %c0_i32 = arith.constant 0 : i32
    %c0_i32_0 = arith.constant 0 : i32
    %c0_i32_1 = arith.constant 0 : i32
    return %c0_i32, %c0_i32_0 : i32, i32
  }
  func.func @transform_3(%arg0: i32) -> (i32, i32) {
    %c0_i32 = arith.constant 0 : i32
    %c0_i32_0 = arith.constant 0 : i32
    %c0_i32_1 = arith.constant 0 : i32
    return %c0_i32, %c0_i32_0 : i32, i32
  }
  func.func @transform_4(%arg0: i32) -> (i32, i32, i32) {
    %c0_i32 = arith.constant 0 : i32
    %c0_i32_0 = arith.constant 0 : i32
    %c0_i32_1 = arith.constant 0 : i32
    return %arg0, %c0_i32, %c0_i32_0 : i32, i32, i32
  }
}

module attributes {stable_mosaic.version = 11 : i64} {
  func.func @_mha_ln_kernel(%arg0: i32, %arg1: memref<1x8x128xf32, #tpu.memory_space<vmem>>, %arg2: memref<1x8x128xf32, #tpu.memory_space<vmem>>, %arg3: memref<1x1x8xf32, #tpu.memory_space<vmem>>, %arg4: memref<128x128xf32, #tpu.memory_space<vmem>>, %arg5: memref<1x128xf32, #tpu.memory_space<vmem>>, %arg6: memref<128x256xf32, #tpu.memory_space<vmem>>, %arg7: memref<1x256xf32, #tpu.memory_space<vmem>>, %arg8: memref<128x128xf32, #tpu.memory_space<vmem>>, %arg9: memref<1x128xf32, #tpu.memory_space<vmem>>, %arg10: memref<1x128xf32, #tpu.memory_space<vmem>>, %arg11: memref<1x128xf32, #tpu.memory_space<vmem>>, %arg12: memref<1x8x128xf32, #tpu.memory_space<vmem>>) attributes {dimension_semantics = [#tpu.dimension_semantics<parallel>], iteration_bounds = array<i64: 2>, scalar_prefetch = 0 : i64, scratch_operands = 0 : i64, tpu.core_type = #tpu.core_type<tc>, window_params = [{transform_indices = @transform_0, window_bounds = array<i64: 1, 8, 128>}, {transform_indices = @transform_1, window_bounds = array<i64: 1, 8, 128>}, {transform_indices = @transform_2, window_bounds = array<i64: 1, 1, 8>}, {pipeline_mode = #tpu.pipeline_mode<synchronous>, transform_indices = @transform_3, window_bounds = array<i64: 128, 128>}, {pipeline_mode = #tpu.pipeline_mode<synchronous>, transform_indices = @transform_4, window_bounds = array<i64: 1, 128>}, {pipeline_mode = #tpu.pipeline_mode<synchronous>, transform_indices = @transform_5, window_bounds = array<i64: 128, 256>}, {pipeline_mode = #tpu.pipeline_mode<synchronous>, transform_indices = @transform_6, window_bounds = array<i64: 1, 256>}, {pipeline_mode = #tpu.pipeline_mode<synchronous>, transform_indices = @transform_7, window_bounds = array<i64: 128, 128>}, {pipeline_mode = #tpu.pipeline_mode<synchronous>, transform_indices = @transform_8, window_bounds = array<i64: 1, 128>}, {pipeline_mode = #tpu.pipeline_mode<synchronous>, transform_indices = @transform_9, window_bounds = array<i64: 1, 128>}, {pipeline_mode = #tpu.pipeline_mode<synchronous>, transform_indices = @transform_10, window_bounds = array<i64: 1, 128>}, {transform_indices = @transform_11, window_bounds = array<i64: 1, 8, 128>}]} {
    %c0 = arith.constant 0 : index
    %c0_0 = arith.constant 0 : index
    %c0_1 = arith.constant 0 : index
    %0 = vector.load %arg1[%c0, %c0_0, %c0_1] : memref<1x8x128xf32, #tpu.memory_space<vmem>>, vector<1x8x128xf32>
    %1 = vector.shape_cast %0 : vector<1x8x128xf32> to vector<8x128xf32>
    %c0_2 = arith.constant 0 : index
    %c0_3 = arith.constant 0 : index
    %c0_4 = arith.constant 0 : index
    %2 = vector.load %arg2[%c0_2, %c0_3, %c0_4] : memref<1x8x128xf32, #tpu.memory_space<vmem>>, vector<1x8x128xf32>
    %3 = vector.shape_cast %2 : vector<1x8x128xf32> to vector<8x128xf32>
    %c0_5 = arith.constant 0 : index
    %c0_6 = arith.constant 0 : index
    %c0_7 = arith.constant 0 : index
    %4 = vector.load %arg3[%c0_5, %c0_6, %c0_7] : memref<1x1x8xf32, #tpu.memory_space<vmem>>, vector<1x1x8xf32>
    %5 = vector.shape_cast %4 : vector<1x1x8xf32> to vector<1x8xf32>
    %c0_8 = arith.constant 0 : index
    %c0_9 = arith.constant 0 : index
    %6 = vector.load %arg4[%c0_8, %c0_9] : memref<128x128xf32, #tpu.memory_space<vmem>>, vector<128x128xf32>
    %cst = arith.constant dense<0.000000e+00> : vector<8x128xf32>
    %7 = tpu.matmul %1, %6, %cst {dimension_numbers = #tpu.dot_dimension_numbers<[1], [0], [0], [1], [0, 0, 1, 1], [], []>} : vector<8x128xf32>, vector<128x128xf32>, vector<8x128xf32> -> vector<8x128xf32>
    %c0_10 = arith.constant 0 : index
    %c0_11 = arith.constant 0 : index
    %8 = vector.load %arg5[%c0_10, %c0_11] : memref<1x128xf32, #tpu.memory_space<vmem>>, vector<1x128xf32>
    %9 = vector.broadcast %8 : vector<1x128xf32> to vector<8x128xf32>
    %10 = arith.addf %7, %9 : vector<8x128xf32>
    %c0_12 = arith.constant 0 : index
    %c0_13 = arith.constant 0 : index
    %11 = vector.load %arg6[%c0_12, %c0_13] : memref<128x256xf32, #tpu.memory_space<vmem>>, vector<128x256xf32>
    %cst_14 = arith.constant dense<0.000000e+00> : vector<8x256xf32>
    %12 = tpu.matmul %3, %11, %cst_14 {dimension_numbers = #tpu.dot_dimension_numbers<[1], [0], [0], [1], [0, 0, 1, 1], [], []>} : vector<8x128xf32>, vector<128x256xf32>, vector<8x256xf32> -> vector<8x256xf32>
    %c0_15 = arith.constant 0 : index
    %c0_16 = arith.constant 0 : index
    %13 = vector.load %arg7[%c0_15, %c0_16] : memref<1x256xf32, #tpu.memory_space<vmem>>, vector<1x256xf32>
    %14 = vector.broadcast %13 : vector<1x256xf32> to vector<8x256xf32>
    %15 = arith.addf %12, %14 : vector<8x256xf32>
    %16 = vector.extract_strided_slice %10 {offsets = [0, 0], sizes = [8, 16], strides = [1, 1]} : vector<8x128xf32> to vector<8x16xf32>
    %17 = vector.extract_strided_slice %15 {offsets = [0, 0], sizes = [8, 16], strides = [1, 1]} : vector<8x256xf32> to vector<8x16xf32>
    %18 = vector.extract_strided_slice %15 {offsets = [0, 128], sizes = [8, 16], strides = [1, 1]} : vector<8x256xf32> to vector<8x16xf32>
    %cst_17 = arith.constant dense<0.000000e+00> : vector<8x8xf32>
    %19 = tpu.matmul %16, %17, %cst_17 {dimension_numbers = #tpu.dot_dimension_numbers<[1], [1], [0], [0], [0, 0, 1, 0], [], []>} : vector<8x16xf32>, vector<8x16xf32>, vector<8x8xf32> -> vector<8x8xf32>
    %cst_18 = arith.constant 2.500000e-01 : f32
    %20 = vector.broadcast %cst_18 : f32 to vector<8x8xf32>
    %21 = arith.mulf %19, %20 : vector<8x8xf32>
    %22 = vector.broadcast %5 : vector<1x8xf32> to vector<8x8xf32>
    %23 = arith.addf %21, %22 : vector<8x8xf32>
    %cst_19 = arith.constant dense<0xFF800000> : vector<8xf32>
    %24 = vector.multi_reduction <maximumf>, %23, %cst_19 [1] : vector<8x8xf32> to vector<8xf32>
    %25 = vector.shape_cast %24 : vector<8xf32> to vector<8x1xf32>
    %26 = vector.broadcast %25 : vector<8x1xf32> to vector<8x8xf32>
    %27 = arith.subf %23, %26 : vector<8x8xf32>
    %28 = math.exp %27 : vector<8x8xf32>
    %cst_20 = arith.constant dense<0.000000e+00> : vector<8xf32>
    %29 = vector.multi_reduction <add>, %28, %cst_20 [1] : vector<8x8xf32> to vector<8xf32>
    %30 = vector.shape_cast %29 : vector<8xf32> to vector<8x1xf32>
    %31 = tpu.reciprocal %30 {approx = true} : vector<8x1xf32> -> vector<8x1xf32>
    %32 = vector.broadcast %31 : vector<8x1xf32> to vector<8x8xf32>
    %33 = arith.mulf %28, %32 : vector<8x8xf32>
    %cst_21 = arith.constant dense<0.000000e+00> : vector<8x16xf32>
    %34 = tpu.matmul %33, %18, %cst_21 {dimension_numbers = #tpu.dot_dimension_numbers<[1], [0], [0], [1], [0, 0, 1, 1], [], []>} : vector<8x8xf32>, vector<8x16xf32>, vector<8x16xf32> -> vector<8x16xf32>
    %c0_22 = arith.constant 0 : index
    %c0_23 = arith.constant 0 : index
    %35 = vector.load %arg8[%c0_22, %c0_23] : memref<128x128xf32, #tpu.memory_space<vmem>>, vector<16x128xf32>
    %cst_24 = arith.constant dense<0.000000e+00> : vector<8x128xf32>
    %36 = tpu.matmul %34, %35, %cst_24 {dimension_numbers = #tpu.dot_dimension_numbers<[1], [0], [0], [1], [0, 0, 1, 1], [], []>} : vector<8x16xf32>, vector<16x128xf32>, vector<8x128xf32> -> vector<8x128xf32>
    %37 = vector.extract_strided_slice %10 {offsets = [0, 16], sizes = [8, 16], strides = [1, 1]} : vector<8x128xf32> to vector<8x16xf32>
    %38 = vector.extract_strided_slice %15 {offsets = [0, 16], sizes = [8, 16], strides = [1, 1]} : vector<8x256xf32> to vector<8x16xf32>
    %39 = vector.extract_strided_slice %15 {offsets = [0, 144], sizes = [8, 16], strides = [1, 1]} : vector<8x256xf32> to vector<8x16xf32>
    %cst_25 = arith.constant dense<0.000000e+00> : vector<8x8xf32>
    %40 = tpu.matmul %37, %38, %cst_25 {dimension_numbers = #tpu.dot_dimension_numbers<[1], [1], [0], [0], [0, 0, 1, 0], [], []>} : vector<8x16xf32>, vector<8x16xf32>, vector<8x8xf32> -> vector<8x8xf32>
    %cst_26 = arith.constant 2.500000e-01 : f32
    %41 = vector.broadcast %cst_26 : f32 to vector<8x8xf32>
    %42 = arith.mulf %40, %41 : vector<8x8xf32>
    %43 = vector.broadcast %5 : vector<1x8xf32> to vector<8x8xf32>
    %44 = arith.addf %42, %43 : vector<8x8xf32>
    %cst_27 = arith.constant dense<0xFF800000> : vector<8xf32>
    %45 = vector.multi_reduction <maximumf>, %44, %cst_27 [1] : vector<8x8xf32> to vector<8xf32>
    %46 = vector.shape_cast %45 : vector<8xf32> to vector<8x1xf32>
    %47 = vector.broadcast %46 : vector<8x1xf32> to vector<8x8xf32>
    %48 = arith.subf %44, %47 : vector<8x8xf32>
    %49 = math.exp %48 : vector<8x8xf32>
    %cst_28 = arith.constant dense<0.000000e+00> : vector<8xf32>
    %50 = vector.multi_reduction <add>, %49, %cst_28 [1] : vector<8x8xf32> to vector<8xf32>
    %51 = vector.shape_cast %50 : vector<8xf32> to vector<8x1xf32>
    %52 = tpu.reciprocal %51 {approx = true} : vector<8x1xf32> -> vector<8x1xf32>
    %53 = vector.broadcast %52 : vector<8x1xf32> to vector<8x8xf32>
    %54 = arith.mulf %49, %53 : vector<8x8xf32>
    %cst_29 = arith.constant dense<0.000000e+00> : vector<8x16xf32>
    %55 = tpu.matmul %54, %39, %cst_29 {dimension_numbers = #tpu.dot_dimension_numbers<[1], [0], [0], [1], [0, 0, 1, 1], [], []>} : vector<8x8xf32>, vector<8x16xf32>, vector<8x16xf32> -> vector<8x16xf32>
    %c16 = arith.constant 16 : index
    %c0_30 = arith.constant 0 : index
    %56 = vector.load %arg8[%c16, %c0_30] : memref<128x128xf32, #tpu.memory_space<vmem>>, vector<16x128xf32>
    %cst_31 = arith.constant dense<0.000000e+00> : vector<8x128xf32>
    %57 = tpu.matmul %55, %56, %cst_31 {dimension_numbers = #tpu.dot_dimension_numbers<[1], [0], [0], [1], [0, 0, 1, 1], [], []>} : vector<8x16xf32>, vector<16x128xf32>, vector<8x128xf32> -> vector<8x128xf32>
    %58 = arith.addf %36, %57 : vector<8x128xf32>
    %59 = vector.extract_strided_slice %10 {offsets = [0, 32], sizes = [8, 16], strides = [1, 1]} : vector<8x128xf32> to vector<8x16xf32>
    %60 = vector.extract_strided_slice %15 {offsets = [0, 32], sizes = [8, 16], strides = [1, 1]} : vector<8x256xf32> to vector<8x16xf32>
    %61 = vector.extract_strided_slice %15 {offsets = [0, 160], sizes = [8, 16], strides = [1, 1]} : vector<8x256xf32> to vector<8x16xf32>
    %cst_32 = arith.constant dense<0.000000e+00> : vector<8x8xf32>
    %62 = tpu.matmul %59, %60, %cst_32 {dimension_numbers = #tpu.dot_dimension_numbers<[1], [1], [0], [0], [0, 0, 1, 0], [], []>} : vector<8x16xf32>, vector<8x16xf32>, vector<8x8xf32> -> vector<8x8xf32>
    %cst_33 = arith.constant 2.500000e-01 : f32
    %63 = vector.broadcast %cst_33 : f32 to vector<8x8xf32>
    %64 = arith.mulf %62, %63 : vector<8x8xf32>
    %65 = vector.broadcast %5 : vector<1x8xf32> to vector<8x8xf32>
    %66 = arith.addf %64, %65 : vector<8x8xf32>
    %cst_34 = arith.constant dense<0xFF800000> : vector<8xf32>
    %67 = vector.multi_reduction <maximumf>, %66, %cst_34 [1] : vector<8x8xf32> to vector<8xf32>
    %68 = vector.shape_cast %67 : vector<8xf32> to vector<8x1xf32>
    %69 = vector.broadcast %68 : vector<8x1xf32> to vector<8x8xf32>
    %70 = arith.subf %66, %69 : vector<8x8xf32>
    %71 = math.exp %70 : vector<8x8xf32>
    %cst_35 = arith.constant dense<0.000000e+00> : vector<8xf32>
    %72 = vector.multi_reduction <add>, %71, %cst_35 [1] : vector<8x8xf32> to vector<8xf32>
    %73 = vector.shape_cast %72 : vector<8xf32> to vector<8x1xf32>
    %74 = tpu.reciprocal %73 {approx = true} : vector<8x1xf32> -> vector<8x1xf32>
    %75 = vector.broadcast %74 : vector<8x1xf32> to vector<8x8xf32>
    %76 = arith.mulf %71, %75 : vector<8x8xf32>
    %cst_36 = arith.constant dense<0.000000e+00> : vector<8x16xf32>
    %77 = tpu.matmul %76, %61, %cst_36 {dimension_numbers = #tpu.dot_dimension_numbers<[1], [0], [0], [1], [0, 0, 1, 1], [], []>} : vector<8x8xf32>, vector<8x16xf32>, vector<8x16xf32> -> vector<8x16xf32>
    %c32 = arith.constant 32 : index
    %c0_37 = arith.constant 0 : index
    %78 = vector.load %arg8[%c32, %c0_37] : memref<128x128xf32, #tpu.memory_space<vmem>>, vector<16x128xf32>
    %cst_38 = arith.constant dense<0.000000e+00> : vector<8x128xf32>
    %79 = tpu.matmul %77, %78, %cst_38 {dimension_numbers = #tpu.dot_dimension_numbers<[1], [0], [0], [1], [0, 0, 1, 1], [], []>} : vector<8x16xf32>, vector<16x128xf32>, vector<8x128xf32> -> vector<8x128xf32>
    %80 = arith.addf %58, %79 : vector<8x128xf32>
    %81 = vector.extract_strided_slice %10 {offsets = [0, 48], sizes = [8, 16], strides = [1, 1]} : vector<8x128xf32> to vector<8x16xf32>
    %82 = vector.extract_strided_slice %15 {offsets = [0, 48], sizes = [8, 16], strides = [1, 1]} : vector<8x256xf32> to vector<8x16xf32>
    %83 = vector.extract_strided_slice %15 {offsets = [0, 176], sizes = [8, 16], strides = [1, 1]} : vector<8x256xf32> to vector<8x16xf32>
    %cst_39 = arith.constant dense<0.000000e+00> : vector<8x8xf32>
    %84 = tpu.matmul %81, %82, %cst_39 {dimension_numbers = #tpu.dot_dimension_numbers<[1], [1], [0], [0], [0, 0, 1, 0], [], []>} : vector<8x16xf32>, vector<8x16xf32>, vector<8x8xf32> -> vector<8x8xf32>
    %cst_40 = arith.constant 2.500000e-01 : f32
    %85 = vector.broadcast %cst_40 : f32 to vector<8x8xf32>
    %86 = arith.mulf %84, %85 : vector<8x8xf32>
    %87 = vector.broadcast %5 : vector<1x8xf32> to vector<8x8xf32>
    %88 = arith.addf %86, %87 : vector<8x8xf32>
    %cst_41 = arith.constant dense<0xFF800000> : vector<8xf32>
    %89 = vector.multi_reduction <maximumf>, %88, %cst_41 [1] : vector<8x8xf32> to vector<8xf32>
    %90 = vector.shape_cast %89 : vector<8xf32> to vector<8x1xf32>
    %91 = vector.broadcast %90 : vector<8x1xf32> to vector<8x8xf32>
    %92 = arith.subf %88, %91 : vector<8x8xf32>
    %93 = math.exp %92 : vector<8x8xf32>
    %cst_42 = arith.constant dense<0.000000e+00> : vector<8xf32>
    %94 = vector.multi_reduction <add>, %93, %cst_42 [1] : vector<8x8xf32> to vector<8xf32>
    %95 = vector.shape_cast %94 : vector<8xf32> to vector<8x1xf32>
    %96 = tpu.reciprocal %95 {approx = true} : vector<8x1xf32> -> vector<8x1xf32>
    %97 = vector.broadcast %96 : vector<8x1xf32> to vector<8x8xf32>
    %98 = arith.mulf %93, %97 : vector<8x8xf32>
    %cst_43 = arith.constant dense<0.000000e+00> : vector<8x16xf32>
    %99 = tpu.matmul %98, %83, %cst_43 {dimension_numbers = #tpu.dot_dimension_numbers<[1], [0], [0], [1], [0, 0, 1, 1], [], []>} : vector<8x8xf32>, vector<8x16xf32>, vector<8x16xf32> -> vector<8x16xf32>
    %c48 = arith.constant 48 : index
    %c0_44 = arith.constant 0 : index
    %100 = vector.load %arg8[%c48, %c0_44] : memref<128x128xf32, #tpu.memory_space<vmem>>, vector<16x128xf32>
    %cst_45 = arith.constant dense<0.000000e+00> : vector<8x128xf32>
    %101 = tpu.matmul %99, %100, %cst_45 {dimension_numbers = #tpu.dot_dimension_numbers<[1], [0], [0], [1], [0, 0, 1, 1], [], []>} : vector<8x16xf32>, vector<16x128xf32>, vector<8x128xf32> -> vector<8x128xf32>
    %102 = arith.addf %80, %101 : vector<8x128xf32>
    %103 = vector.extract_strided_slice %10 {offsets = [0, 64], sizes = [8, 16], strides = [1, 1]} : vector<8x128xf32> to vector<8x16xf32>
    %104 = vector.extract_strided_slice %15 {offsets = [0, 64], sizes = [8, 16], strides = [1, 1]} : vector<8x256xf32> to vector<8x16xf32>
    %105 = vector.extract_strided_slice %15 {offsets = [0, 192], sizes = [8, 16], strides = [1, 1]} : vector<8x256xf32> to vector<8x16xf32>
    %cst_46 = arith.constant dense<0.000000e+00> : vector<8x8xf32>
    %106 = tpu.matmul %103, %104, %cst_46 {dimension_numbers = #tpu.dot_dimension_numbers<[1], [1], [0], [0], [0, 0, 1, 0], [], []>} : vector<8x16xf32>, vector<8x16xf32>, vector<8x8xf32> -> vector<8x8xf32>
    %cst_47 = arith.constant 2.500000e-01 : f32
    %107 = vector.broadcast %cst_47 : f32 to vector<8x8xf32>
    %108 = arith.mulf %106, %107 : vector<8x8xf32>
    %109 = vector.broadcast %5 : vector<1x8xf32> to vector<8x8xf32>
    %110 = arith.addf %108, %109 : vector<8x8xf32>
    %cst_48 = arith.constant dense<0xFF800000> : vector<8xf32>
    %111 = vector.multi_reduction <maximumf>, %110, %cst_48 [1] : vector<8x8xf32> to vector<8xf32>
    %112 = vector.shape_cast %111 : vector<8xf32> to vector<8x1xf32>
    %113 = vector.broadcast %112 : vector<8x1xf32> to vector<8x8xf32>
    %114 = arith.subf %110, %113 : vector<8x8xf32>
    %115 = math.exp %114 : vector<8x8xf32>
    %cst_49 = arith.constant dense<0.000000e+00> : vector<8xf32>
    %116 = vector.multi_reduction <add>, %115, %cst_49 [1] : vector<8x8xf32> to vector<8xf32>
    %117 = vector.shape_cast %116 : vector<8xf32> to vector<8x1xf32>
    %118 = tpu.reciprocal %117 {approx = true} : vector<8x1xf32> -> vector<8x1xf32>
    %119 = vector.broadcast %118 : vector<8x1xf32> to vector<8x8xf32>
    %120 = arith.mulf %115, %119 : vector<8x8xf32>
    %cst_50 = arith.constant dense<0.000000e+00> : vector<8x16xf32>
    %121 = tpu.matmul %120, %105, %cst_50 {dimension_numbers = #tpu.dot_dimension_numbers<[1], [0], [0], [1], [0, 0, 1, 1], [], []>} : vector<8x8xf32>, vector<8x16xf32>, vector<8x16xf32> -> vector<8x16xf32>
    %c64 = arith.constant 64 : index
    %c0_51 = arith.constant 0 : index
    %122 = vector.load %arg8[%c64, %c0_51] : memref<128x128xf32, #tpu.memory_space<vmem>>, vector<16x128xf32>
    %cst_52 = arith.constant dense<0.000000e+00> : vector<8x128xf32>
    %123 = tpu.matmul %121, %122, %cst_52 {dimension_numbers = #tpu.dot_dimension_numbers<[1], [0], [0], [1], [0, 0, 1, 1], [], []>} : vector<8x16xf32>, vector<16x128xf32>, vector<8x128xf32> -> vector<8x128xf32>
    %124 = arith.addf %102, %123 : vector<8x128xf32>
    %125 = vector.extract_strided_slice %10 {offsets = [0, 80], sizes = [8, 16], strides = [1, 1]} : vector<8x128xf32> to vector<8x16xf32>
    %126 = vector.extract_strided_slice %15 {offsets = [0, 80], sizes = [8, 16], strides = [1, 1]} : vector<8x256xf32> to vector<8x16xf32>
    %127 = vector.extract_strided_slice %15 {offsets = [0, 208], sizes = [8, 16], strides = [1, 1]} : vector<8x256xf32> to vector<8x16xf32>
    %cst_53 = arith.constant dense<0.000000e+00> : vector<8x8xf32>
    %128 = tpu.matmul %125, %126, %cst_53 {dimension_numbers = #tpu.dot_dimension_numbers<[1], [1], [0], [0], [0, 0, 1, 0], [], []>} : vector<8x16xf32>, vector<8x16xf32>, vector<8x8xf32> -> vector<8x8xf32>
    %cst_54 = arith.constant 2.500000e-01 : f32
    %129 = vector.broadcast %cst_54 : f32 to vector<8x8xf32>
    %130 = arith.mulf %128, %129 : vector<8x8xf32>
    %131 = vector.broadcast %5 : vector<1x8xf32> to vector<8x8xf32>
    %132 = arith.addf %130, %131 : vector<8x8xf32>
    %cst_55 = arith.constant dense<0xFF800000> : vector<8xf32>
    %133 = vector.multi_reduction <maximumf>, %132, %cst_55 [1] : vector<8x8xf32> to vector<8xf32>
    %134 = vector.shape_cast %133 : vector<8xf32> to vector<8x1xf32>
    %135 = vector.broadcast %134 : vector<8x1xf32> to vector<8x8xf32>
    %136 = arith.subf %132, %135 : vector<8x8xf32>
    %137 = math.exp %136 : vector<8x8xf32>
    %cst_56 = arith.constant dense<0.000000e+00> : vector<8xf32>
    %138 = vector.multi_reduction <add>, %137, %cst_56 [1] : vector<8x8xf32> to vector<8xf32>
    %139 = vector.shape_cast %138 : vector<8xf32> to vector<8x1xf32>
    %140 = tpu.reciprocal %139 {approx = true} : vector<8x1xf32> -> vector<8x1xf32>
    %141 = vector.broadcast %140 : vector<8x1xf32> to vector<8x8xf32>
    %142 = arith.mulf %137, %141 : vector<8x8xf32>
    %cst_57 = arith.constant dense<0.000000e+00> : vector<8x16xf32>
    %143 = tpu.matmul %142, %127, %cst_57 {dimension_numbers = #tpu.dot_dimension_numbers<[1], [0], [0], [1], [0, 0, 1, 1], [], []>} : vector<8x8xf32>, vector<8x16xf32>, vector<8x16xf32> -> vector<8x16xf32>
    %c80 = arith.constant 80 : index
    %c0_58 = arith.constant 0 : index
    %144 = vector.load %arg8[%c80, %c0_58] : memref<128x128xf32, #tpu.memory_space<vmem>>, vector<16x128xf32>
    %cst_59 = arith.constant dense<0.000000e+00> : vector<8x128xf32>
    %145 = tpu.matmul %143, %144, %cst_59 {dimension_numbers = #tpu.dot_dimension_numbers<[1], [0], [0], [1], [0, 0, 1, 1], [], []>} : vector<8x16xf32>, vector<16x128xf32>, vector<8x128xf32> -> vector<8x128xf32>
    %146 = arith.addf %124, %145 : vector<8x128xf32>
    %147 = vector.extract_strided_slice %10 {offsets = [0, 96], sizes = [8, 16], strides = [1, 1]} : vector<8x128xf32> to vector<8x16xf32>
    %148 = vector.extract_strided_slice %15 {offsets = [0, 96], sizes = [8, 16], strides = [1, 1]} : vector<8x256xf32> to vector<8x16xf32>
    %149 = vector.extract_strided_slice %15 {offsets = [0, 224], sizes = [8, 16], strides = [1, 1]} : vector<8x256xf32> to vector<8x16xf32>
    %cst_60 = arith.constant dense<0.000000e+00> : vector<8x8xf32>
    %150 = tpu.matmul %147, %148, %cst_60 {dimension_numbers = #tpu.dot_dimension_numbers<[1], [1], [0], [0], [0, 0, 1, 0], [], []>} : vector<8x16xf32>, vector<8x16xf32>, vector<8x8xf32> -> vector<8x8xf32>
    %cst_61 = arith.constant 2.500000e-01 : f32
    %151 = vector.broadcast %cst_61 : f32 to vector<8x8xf32>
    %152 = arith.mulf %150, %151 : vector<8x8xf32>
    %153 = vector.broadcast %5 : vector<1x8xf32> to vector<8x8xf32>
    %154 = arith.addf %152, %153 : vector<8x8xf32>
    %cst_62 = arith.constant dense<0xFF800000> : vector<8xf32>
    %155 = vector.multi_reduction <maximumf>, %154, %cst_62 [1] : vector<8x8xf32> to vector<8xf32>
    %156 = vector.shape_cast %155 : vector<8xf32> to vector<8x1xf32>
    %157 = vector.broadcast %156 : vector<8x1xf32> to vector<8x8xf32>
    %158 = arith.subf %154, %157 : vector<8x8xf32>
    %159 = math.exp %158 : vector<8x8xf32>
    %cst_63 = arith.constant dense<0.000000e+00> : vector<8xf32>
    %160 = vector.multi_reduction <add>, %159, %cst_63 [1] : vector<8x8xf32> to vector<8xf32>
    %161 = vector.shape_cast %160 : vector<8xf32> to vector<8x1xf32>
    %162 = tpu.reciprocal %161 {approx = true} : vector<8x1xf32> -> vector<8x1xf32>
    %163 = vector.broadcast %162 : vector<8x1xf32> to vector<8x8xf32>
    %164 = arith.mulf %159, %163 : vector<8x8xf32>
    %cst_64 = arith.constant dense<0.000000e+00> : vector<8x16xf32>
    %165 = tpu.matmul %164, %149, %cst_64 {dimension_numbers = #tpu.dot_dimension_numbers<[1], [0], [0], [1], [0, 0, 1, 1], [], []>} : vector<8x8xf32>, vector<8x16xf32>, vector<8x16xf32> -> vector<8x16xf32>
    %c96 = arith.constant 96 : index
    %c0_65 = arith.constant 0 : index
    %166 = vector.load %arg8[%c96, %c0_65] : memref<128x128xf32, #tpu.memory_space<vmem>>, vector<16x128xf32>
    %cst_66 = arith.constant dense<0.000000e+00> : vector<8x128xf32>
    %167 = tpu.matmul %165, %166, %cst_66 {dimension_numbers = #tpu.dot_dimension_numbers<[1], [0], [0], [1], [0, 0, 1, 1], [], []>} : vector<8x16xf32>, vector<16x128xf32>, vector<8x128xf32> -> vector<8x128xf32>
    %168 = arith.addf %146, %167 : vector<8x128xf32>
    %169 = vector.extract_strided_slice %10 {offsets = [0, 112], sizes = [8, 16], strides = [1, 1]} : vector<8x128xf32> to vector<8x16xf32>
    %170 = vector.extract_strided_slice %15 {offsets = [0, 112], sizes = [8, 16], strides = [1, 1]} : vector<8x256xf32> to vector<8x16xf32>
    %171 = vector.extract_strided_slice %15 {offsets = [0, 240], sizes = [8, 16], strides = [1, 1]} : vector<8x256xf32> to vector<8x16xf32>
    %cst_67 = arith.constant dense<0.000000e+00> : vector<8x8xf32>
    %172 = tpu.matmul %169, %170, %cst_67 {dimension_numbers = #tpu.dot_dimension_numbers<[1], [1], [0], [0], [0, 0, 1, 0], [], []>} : vector<8x16xf32>, vector<8x16xf32>, vector<8x8xf32> -> vector<8x8xf32>
    %cst_68 = arith.constant 2.500000e-01 : f32
    %173 = vector.broadcast %cst_68 : f32 to vector<8x8xf32>
    %174 = arith.mulf %172, %173 : vector<8x8xf32>
    %175 = vector.broadcast %5 : vector<1x8xf32> to vector<8x8xf32>
    %176 = arith.addf %174, %175 : vector<8x8xf32>
    %cst_69 = arith.constant dense<0xFF800000> : vector<8xf32>
    %177 = vector.multi_reduction <maximumf>, %176, %cst_69 [1] : vector<8x8xf32> to vector<8xf32>
    %178 = vector.shape_cast %177 : vector<8xf32> to vector<8x1xf32>
    %179 = vector.broadcast %178 : vector<8x1xf32> to vector<8x8xf32>
    %180 = arith.subf %176, %179 : vector<8x8xf32>
    %181 = math.exp %180 : vector<8x8xf32>
    %cst_70 = arith.constant dense<0.000000e+00> : vector<8xf32>
    %182 = vector.multi_reduction <add>, %181, %cst_70 [1] : vector<8x8xf32> to vector<8xf32>
    %183 = vector.shape_cast %182 : vector<8xf32> to vector<8x1xf32>
    %184 = tpu.reciprocal %183 {approx = true} : vector<8x1xf32> -> vector<8x1xf32>
    %185 = vector.broadcast %184 : vector<8x1xf32> to vector<8x8xf32>
    %186 = arith.mulf %181, %185 : vector<8x8xf32>
    %cst_71 = arith.constant dense<0.000000e+00> : vector<8x16xf32>
    %187 = tpu.matmul %186, %171, %cst_71 {dimension_numbers = #tpu.dot_dimension_numbers<[1], [0], [0], [1], [0, 0, 1, 1], [], []>} : vector<8x8xf32>, vector<8x16xf32>, vector<8x16xf32> -> vector<8x16xf32>
    %c112 = arith.constant 112 : index
    %c0_72 = arith.constant 0 : index
    %188 = vector.load %arg8[%c112, %c0_72] : memref<128x128xf32, #tpu.memory_space<vmem>>, vector<16x128xf32>
    %cst_73 = arith.constant dense<0.000000e+00> : vector<8x128xf32>
    %189 = tpu.matmul %187, %188, %cst_73 {dimension_numbers = #tpu.dot_dimension_numbers<[1], [0], [0], [1], [0, 0, 1, 1], [], []>} : vector<8x16xf32>, vector<16x128xf32>, vector<8x128xf32> -> vector<8x128xf32>
    %190 = arith.addf %168, %189 : vector<8x128xf32>
    %c0_74 = arith.constant 0 : index
    %c0_75 = arith.constant 0 : index
    %191 = vector.load %arg9[%c0_74, %c0_75] : memref<1x128xf32, #tpu.memory_space<vmem>>, vector<1x128xf32>
    %192 = vector.broadcast %191 : vector<1x128xf32> to vector<8x128xf32>
    %193 = arith.addf %190, %192 : vector<8x128xf32>
    %194 = arith.addf %193, %1 : vector<8x128xf32>
    %cst_76 = arith.constant dense<0.000000e+00> : vector<8xf32>
    %195 = vector.multi_reduction <add>, %194, %cst_76 [1] : vector<8x128xf32> to vector<8xf32>
    %196 = vector.shape_cast %195 : vector<8xf32> to vector<8x1xf32>
    %cst_77 = arith.constant 1.280000e+02 : f32
    %197 = vector.broadcast %cst_77 : f32 to vector<8x1xf32>
    %198 = arith.divf %196, %197 : vector<8x1xf32>
    %199 = vector.broadcast %198 : vector<8x1xf32> to vector<8x128xf32>
    %200 = arith.subf %194, %199 : vector<8x128xf32>
    %201 = arith.mulf %200, %200 : vector<8x128xf32>
    %cst_78 = arith.constant dense<0.000000e+00> : vector<8xf32>
    %202 = vector.multi_reduction <add>, %201, %cst_78 [1] : vector<8x128xf32> to vector<8xf32>
    %203 = vector.shape_cast %202 : vector<8xf32> to vector<8x1xf32>
    %cst_79 = arith.constant 1.280000e+02 : f32
    %204 = vector.broadcast %cst_79 : f32 to vector<8x1xf32>
    %205 = arith.divf %203, %204 : vector<8x1xf32>
    %cst_80 = arith.constant 9.99999974E-6 : f32
    %206 = vector.broadcast %cst_80 : f32 to vector<8x1xf32>
    %207 = arith.addf %205, %206 : vector<8x1xf32>
    %208 = math.rsqrt %207 : vector<8x1xf32>
    %209 = vector.broadcast %208 : vector<8x1xf32> to vector<8x128xf32>
    %210 = arith.mulf %200, %209 : vector<8x128xf32>
    %c0_81 = arith.constant 0 : index
    %c0_82 = arith.constant 0 : index
    %211 = vector.load %arg10[%c0_81, %c0_82] : memref<1x128xf32, #tpu.memory_space<vmem>>, vector<1x128xf32>
    %212 = vector.broadcast %211 : vector<1x128xf32> to vector<8x128xf32>
    %213 = arith.mulf %210, %212 : vector<8x128xf32>
    %c0_83 = arith.constant 0 : index
    %c0_84 = arith.constant 0 : index
    %214 = vector.load %arg11[%c0_83, %c0_84] : memref<1x128xf32, #tpu.memory_space<vmem>>, vector<1x128xf32>
    %215 = vector.broadcast %214 : vector<1x128xf32> to vector<8x128xf32>
    %216 = arith.addf %213, %215 : vector<8x128xf32>
    %c0_85 = arith.constant 0 : index
    %c0_86 = arith.constant 0 : index
    %c0_87 = arith.constant 0 : index
    %217 = vector.load %arg12[%c0_85, %c0_86, %c0_87] : memref<1x8x128xf32, #tpu.memory_space<vmem>>, vector<1x8x128xf32>
    %218 = vector.shape_cast %217 : vector<1x8x128xf32> to vector<8x128xf32>
    %219 = vector.shape_cast %216 : vector<8x128xf32> to vector<1x8x128xf32>
    tpu.vector_store %arg12[%c0_85, %c0_86, %c0_87], %219 {strides = array<i32>} : memref<1x8x128xf32, #tpu.memory_space<vmem>>, vector<1x8x128xf32>,
    return
  }
  func.func @transform_0(%arg0: i32) -> (i32, i32, i32) {
    %c0_i32 = arith.constant 0 : i32
    %c0_i32_0 = arith.constant 0 : i32
    %c0_i32_1 = arith.constant 0 : i32
    return %arg0, %c0_i32, %c0_i32_0 : i32, i32, i32
  }
  func.func @transform_1(%arg0: i32) -> (i32, i32, i32) {
    %c0_i32 = arith.constant 0 : i32
    %c0_i32_0 = arith.constant 0 : i32
    %c0_i32_1 = arith.constant 0 : i32
    return %arg0, %c0_i32, %c0_i32_0 : i32, i32, i32
  }
  func.func @transform_2(%arg0: i32) -> (i32, i32, i32) {
    %c0_i32 = arith.constant 0 : i32
    %c0_i32_0 = arith.constant 0 : i32
    %c0_i32_1 = arith.constant 0 : i32
    return %arg0, %c0_i32, %c0_i32_0 : i32, i32, i32
  }
  func.func @transform_3(%arg0: i32) -> (i32, i32) {
    %c0_i32 = arith.constant 0 : i32
    %c0_i32_0 = arith.constant 0 : i32
    %c0_i32_1 = arith.constant 0 : i32
    return %c0_i32, %c0_i32_0 : i32, i32
  }
  func.func @transform_4(%arg0: i32) -> (i32, i32) {
    %c0_i32 = arith.constant 0 : i32
    %c0_i32_0 = arith.constant 0 : i32
    %c0_i32_1 = arith.constant 0 : i32
    return %c0_i32, %c0_i32_0 : i32, i32
  }
  func.func @transform_5(%arg0: i32) -> (i32, i32) {
    %c0_i32 = arith.constant 0 : i32
    %c0_i32_0 = arith.constant 0 : i32
    %c0_i32_1 = arith.constant 0 : i32
    return %c0_i32, %c0_i32_0 : i32, i32
  }
  func.func @transform_6(%arg0: i32) -> (i32, i32) {
    %c0_i32 = arith.constant 0 : i32
    %c0_i32_0 = arith.constant 0 : i32
    %c0_i32_1 = arith.constant 0 : i32
    return %c0_i32, %c0_i32_0 : i32, i32
  }
  func.func @transform_7(%arg0: i32) -> (i32, i32) {
    %c0_i32 = arith.constant 0 : i32
    %c0_i32_0 = arith.constant 0 : i32
    %c0_i32_1 = arith.constant 0 : i32
    return %c0_i32, %c0_i32_0 : i32, i32
  }
  func.func @transform_8(%arg0: i32) -> (i32, i32) {
    %c0_i32 = arith.constant 0 : i32
    %c0_i32_0 = arith.constant 0 : i32
    %c0_i32_1 = arith.constant 0 : i32
    return %c0_i32, %c0_i32_0 : i32, i32
  }
  func.func @transform_9(%arg0: i32) -> (i32, i32) {
    %c0_i32 = arith.constant 0 : i32
    %c0_i32_0 = arith.constant 0 : i32
    %c0_i32_1 = arith.constant 0 : i32
    return %c0_i32, %c0_i32_0 : i32, i32
  }
  func.func @transform_10(%arg0: i32) -> (i32, i32) {
    %c0_i32 = arith.constant 0 : i32
    %c0_i32_0 = arith.constant 0 : i32
    %c0_i32_1 = arith.constant 0 : i32
    return %c0_i32, %c0_i32_0 : i32, i32
  }
  func.func @transform_11(%arg0: i32) -> (i32, i32, i32) {
    %c0_i32 = arith.constant 0 : i32
    %c0_i32_0 = arith.constant 0 : i32
    %c0_i32_1 = arith.constant 0 : i32
    return %arg0, %c0_i32, %c0_i32_0 : i32, i32, i32
  }
}

module attributes {stable_mosaic.version = 11 : i64} {
  func.func @_mha_ln_kernel(%arg0: i32, %arg1: memref<1x8x128xf32, #tpu.memory_space<vmem>>, %arg2: memref<1x8x128xf32, #tpu.memory_space<vmem>>, %arg3: memref<1x1x8xf32, #tpu.memory_space<vmem>>, %arg4: memref<128x128xf32, #tpu.memory_space<vmem>>, %arg5: memref<1x128xf32, #tpu.memory_space<vmem>>, %arg6: memref<128x256xf32, #tpu.memory_space<vmem>>, %arg7: memref<1x256xf32, #tpu.memory_space<vmem>>, %arg8: memref<128x128xf32, #tpu.memory_space<vmem>>, %arg9: memref<1x128xf32, #tpu.memory_space<vmem>>, %arg10: memref<1x128xf32, #tpu.memory_space<vmem>>, %arg11: memref<1x128xf32, #tpu.memory_space<vmem>>, %arg12: memref<1x8x128xf32, #tpu.memory_space<vmem>>) attributes {dimension_semantics = [#tpu.dimension_semantics<parallel>], iteration_bounds = array<i64: 2>, scalar_prefetch = 0 : i64, scratch_operands = 0 : i64, tpu.core_type = #tpu.core_type<tc>, window_params = [{transform_indices = @transform_0, window_bounds = array<i64: 1, 8, 128>}, {transform_indices = @transform_1, window_bounds = array<i64: 1, 8, 128>}, {transform_indices = @transform_2, window_bounds = array<i64: 1, 1, 8>}, {pipeline_mode = #tpu.pipeline_mode<synchronous>, transform_indices = @transform_3, window_bounds = array<i64: 128, 128>}, {pipeline_mode = #tpu.pipeline_mode<synchronous>, transform_indices = @transform_4, window_bounds = array<i64: 1, 128>}, {pipeline_mode = #tpu.pipeline_mode<synchronous>, transform_indices = @transform_5, window_bounds = array<i64: 128, 256>}, {pipeline_mode = #tpu.pipeline_mode<synchronous>, transform_indices = @transform_6, window_bounds = array<i64: 1, 256>}, {pipeline_mode = #tpu.pipeline_mode<synchronous>, transform_indices = @transform_7, window_bounds = array<i64: 128, 128>}, {pipeline_mode = #tpu.pipeline_mode<synchronous>, transform_indices = @transform_8, window_bounds = array<i64: 1, 128>}, {pipeline_mode = #tpu.pipeline_mode<synchronous>, transform_indices = @transform_9, window_bounds = array<i64: 1, 128>}, {pipeline_mode = #tpu.pipeline_mode<synchronous>, transform_indices = @transform_10, window_bounds = array<i64: 1, 128>}, {transform_indices = @transform_11, window_bounds = array<i64: 1, 8, 128>}]} {
    %c0 = arith.constant 0 : index
    %c0_0 = arith.constant 0 : index
    %c0_1 = arith.constant 0 : index
    %0 = vector.load %arg1[%c0, %c0_0, %c0_1] : memref<1x8x128xf32, #tpu.memory_space<vmem>>, vector<1x8x128xf32>
    %1 = vector.shape_cast %0 : vector<1x8x128xf32> to vector<8x128xf32>
    %c0_2 = arith.constant 0 : index
    %c0_3 = arith.constant 0 : index
    %c0_4 = arith.constant 0 : index
    %2 = vector.load %arg2[%c0_2, %c0_3, %c0_4] : memref<1x8x128xf32, #tpu.memory_space<vmem>>, vector<1x8x128xf32>
    %3 = vector.shape_cast %2 : vector<1x8x128xf32> to vector<8x128xf32>
    %c0_5 = arith.constant 0 : index
    %c0_6 = arith.constant 0 : index
    %c0_7 = arith.constant 0 : index
    %4 = vector.load %arg3[%c0_5, %c0_6, %c0_7] : memref<1x1x8xf32, #tpu.memory_space<vmem>>, vector<1x1x8xf32>
    %5 = vector.shape_cast %4 : vector<1x1x8xf32> to vector<1x8xf32>
    %c0_8 = arith.constant 0 : index
    %c0_9 = arith.constant 0 : index
    %6 = vector.load %arg4[%c0_8, %c0_9] : memref<128x128xf32, #tpu.memory_space<vmem>>, vector<128x128xf32>
    %cst = arith.constant dense<0.000000e+00> : vector<8x128xf32>
    %7 = tpu.matmul %1, %6, %cst {dimension_numbers = #tpu.dot_dimension_numbers<[1], [0], [0], [1], [0, 0, 1, 1], [], []>} : vector<8x128xf32>, vector<128x128xf32>, vector<8x128xf32> -> vector<8x128xf32>
    %c0_10 = arith.constant 0 : index
    %c0_11 = arith.constant 0 : index
    %8 = vector.load %arg5[%c0_10, %c0_11] : memref<1x128xf32, #tpu.memory_space<vmem>>, vector<1x128xf32>
    %9 = vector.broadcast %8 : vector<1x128xf32> to vector<8x128xf32>
    %10 = arith.addf %7, %9 : vector<8x128xf32>
    %c0_12 = arith.constant 0 : index
    %c0_13 = arith.constant 0 : index
    %11 = vector.load %arg6[%c0_12, %c0_13] : memref<128x256xf32, #tpu.memory_space<vmem>>, vector<128x256xf32>
    %cst_14 = arith.constant dense<0.000000e+00> : vector<8x256xf32>
    %12 = tpu.matmul %3, %11, %cst_14 {dimension_numbers = #tpu.dot_dimension_numbers<[1], [0], [0], [1], [0, 0, 1, 1], [], []>} : vector<8x128xf32>, vector<128x256xf32>, vector<8x256xf32> -> vector<8x256xf32>
    %c0_15 = arith.constant 0 : index
    %c0_16 = arith.constant 0 : index
    %13 = vector.load %arg7[%c0_15, %c0_16] : memref<1x256xf32, #tpu.memory_space<vmem>>, vector<1x256xf32>
    %14 = vector.broadcast %13 : vector<1x256xf32> to vector<8x256xf32>
    %15 = arith.addf %12, %14 : vector<8x256xf32>
    %16 = vector.extract_strided_slice %10 {offsets = [0, 0], sizes = [8, 16], strides = [1, 1]} : vector<8x128xf32> to vector<8x16xf32>
    %17 = vector.extract_strided_slice %15 {offsets = [0, 0], sizes = [8, 16], strides = [1, 1]} : vector<8x256xf32> to vector<8x16xf32>
    %18 = vector.extract_strided_slice %15 {offsets = [0, 128], sizes = [8, 16], strides = [1, 1]} : vector<8x256xf32> to vector<8x16xf32>
    %cst_17 = arith.constant dense<0.000000e+00> : vector<8x8xf32>
    %19 = tpu.matmul %16, %17, %cst_17 {dimension_numbers = #tpu.dot_dimension_numbers<[1], [1], [0], [0], [0, 0, 1, 0], [], []>} : vector<8x16xf32>, vector<8x16xf32>, vector<8x8xf32> -> vector<8x8xf32>
    %cst_18 = arith.constant 2.500000e-01 : f32
    %20 = vector.broadcast %cst_18 : f32 to vector<8x8xf32>
    %21 = arith.mulf %19, %20 : vector<8x8xf32>
    %22 = vector.broadcast %5 : vector<1x8xf32> to vector<8x8xf32>
    %23 = arith.addf %21, %22 : vector<8x8xf32>
    %cst_19 = arith.constant dense<0xFF800000> : vector<8xf32>
    %24 = vector.multi_reduction <maximumf>, %23, %cst_19 [1] : vector<8x8xf32> to vector<8xf32>
    %25 = vector.shape_cast %24 : vector<8xf32> to vector<8x1xf32>
    %26 = vector.broadcast %25 : vector<8x1xf32> to vector<8x8xf32>
    %27 = arith.subf %23, %26 : vector<8x8xf32>
    %28 = math.exp %27 : vector<8x8xf32>
    %cst_20 = arith.constant dense<0.000000e+00> : vector<8xf32>
    %29 = vector.multi_reduction <add>, %28, %cst_20 [1] : vector<8x8xf32> to vector<8xf32>
    %30 = vector.shape_cast %29 : vector<8xf32> to vector<8x1xf32>
    %31 = tpu.reciprocal %30 {approx = true} : vector<8x1xf32> -> vector<8x1xf32>
    %32 = vector.broadcast %31 : vector<8x1xf32> to vector<8x8xf32>
    %33 = arith.mulf %28, %32 : vector<8x8xf32>
    %cst_21 = arith.constant dense<0.000000e+00> : vector<8x16xf32>
    %34 = tpu.matmul %33, %18, %cst_21 {dimension_numbers = #tpu.dot_dimension_numbers<[1], [0], [0], [1], [0, 0, 1, 1], [], []>} : vector<8x8xf32>, vector<8x16xf32>, vector<8x16xf32> -> vector<8x16xf32>
    %c0_22 = arith.constant 0 : index
    %c0_23 = arith.constant 0 : index
    %35 = vector.load %arg8[%c0_22, %c0_23] : memref<128x128xf32, #tpu.memory_space<vmem>>, vector<16x128xf32>
    %cst_24 = arith.constant dense<0.000000e+00> : vector<8x128xf32>
    %36 = tpu.matmul %34, %35, %cst_24 {dimension_numbers = #tpu.dot_dimension_numbers<[1], [0], [0], [1], [0, 0, 1, 1], [], []>} : vector<8x16xf32>, vector<16x128xf32>, vector<8x128xf32> -> vector<8x128xf32>
    %37 = vector.extract_strided_slice %10 {offsets = [0, 16], sizes = [8, 16], strides = [1, 1]} : vector<8x128xf32> to vector<8x16xf32>
    %38 = vector.extract_strided_slice %15 {offsets = [0, 16], sizes = [8, 16], strides = [1, 1]} : vector<8x256xf32> to vector<8x16xf32>
    %39 = vector.extract_strided_slice %15 {offsets = [0, 144], sizes = [8, 16], strides = [1, 1]} : vector<8x256xf32> to vector<8x16xf32>
    %cst_25 = arith.constant dense<0.000000e+00> : vector<8x8xf32>
    %40 = tpu.matmul %37, %38, %cst_25 {dimension_numbers = #tpu.dot_dimension_numbers<[1], [1], [0], [0], [0, 0, 1, 0], [], []>} : vector<8x16xf32>, vector<8x16xf32>, vector<8x8xf32> -> vector<8x8xf32>
    %cst_26 = arith.constant 2.500000e-01 : f32
    %41 = vector.broadcast %cst_26 : f32 to vector<8x8xf32>
    %42 = arith.mulf %40, %41 : vector<8x8xf32>
    %43 = vector.broadcast %5 : vector<1x8xf32> to vector<8x8xf32>
    %44 = arith.addf %42, %43 : vector<8x8xf32>
    %cst_27 = arith.constant dense<0xFF800000> : vector<8xf32>
    %45 = vector.multi_reduction <maximumf>, %44, %cst_27 [1] : vector<8x8xf32> to vector<8xf32>
    %46 = vector.shape_cast %45 : vector<8xf32> to vector<8x1xf32>
    %47 = vector.broadcast %46 : vector<8x1xf32> to vector<8x8xf32>
    %48 = arith.subf %44, %47 : vector<8x8xf32>
    %49 = math.exp %48 : vector<8x8xf32>
    %cst_28 = arith.constant dense<0.000000e+00> : vector<8xf32>
    %50 = vector.multi_reduction <add>, %49, %cst_28 [1] : vector<8x8xf32> to vector<8xf32>
    %51 = vector.shape_cast %50 : vector<8xf32> to vector<8x1xf32>
    %52 = tpu.reciprocal %51 {approx = true} : vector<8x1xf32> -> vector<8x1xf32>
    %53 = vector.broadcast %52 : vector<8x1xf32> to vector<8x8xf32>
    %54 = arith.mulf %49, %53 : vector<8x8xf32>
    %cst_29 = arith.constant dense<0.000000e+00> : vector<8x16xf32>
    %55 = tpu.matmul %54, %39, %cst_29 {dimension_numbers = #tpu.dot_dimension_numbers<[1], [0], [0], [1], [0, 0, 1, 1], [], []>} : vector<8x8xf32>, vector<8x16xf32>, vector<8x16xf32> -> vector<8x16xf32>
    %c16 = arith.constant 16 : index
    %c0_30 = arith.constant 0 : index
    %56 = vector.load %arg8[%c16, %c0_30] : memref<128x128xf32, #tpu.memory_space<vmem>>, vector<16x128xf32>
    %cst_31 = arith.constant dense<0.000000e+00> : vector<8x128xf32>
    %57 = tpu.matmul %55, %56, %cst_31 {dimension_numbers = #tpu.dot_dimension_numbers<[1], [0], [0], [1], [0, 0, 1, 1], [], []>} : vector<8x16xf32>, vector<16x128xf32>, vector<8x128xf32> -> vector<8x128xf32>
    %58 = arith.addf %36, %57 : vector<8x128xf32>
    %59 = vector.extract_strided_slice %10 {offsets = [0, 32], sizes = [8, 16], strides = [1, 1]} : vector<8x128xf32> to vector<8x16xf32>
    %60 = vector.extract_strided_slice %15 {offsets = [0, 32], sizes = [8, 16], strides = [1, 1]} : vector<8x256xf32> to vector<8x16xf32>
    %61 = vector.extract_strided_slice %15 {offsets = [0, 160], sizes = [8, 16], strides = [1, 1]} : vector<8x256xf32> to vector<8x16xf32>
    %cst_32 = arith.constant dense<0.000000e+00> : vector<8x8xf32>
    %62 = tpu.matmul %59, %60, %cst_32 {dimension_numbers = #tpu.dot_dimension_numbers<[1], [1], [0], [0], [0, 0, 1, 0], [], []>} : vector<8x16xf32>, vector<8x16xf32>, vector<8x8xf32> -> vector<8x8xf32>
    %cst_33 = arith.constant 2.500000e-01 : f32
    %63 = vector.broadcast %cst_33 : f32 to vector<8x8xf32>
    %64 = arith.mulf %62, %63 : vector<8x8xf32>
    %65 = vector.broadcast %5 : vector<1x8xf32> to vector<8x8xf32>
    %66 = arith.addf %64, %65 : vector<8x8xf32>
    %cst_34 = arith.constant dense<0xFF800000> : vector<8xf32>
    %67 = vector.multi_reduction <maximumf>, %66, %cst_34 [1] : vector<8x8xf32> to vector<8xf32>
    %68 = vector.shape_cast %67 : vector<8xf32> to vector<8x1xf32>
    %69 = vector.broadcast %68 : vector<8x1xf32> to vector<8x8xf32>
    %70 = arith.subf %66, %69 : vector<8x8xf32>
    %71 = math.exp %70 : vector<8x8xf32>
    %cst_35 = arith.constant dense<0.000000e+00> : vector<8xf32>
    %72 = vector.multi_reduction <add>, %71, %cst_35 [1] : vector<8x8xf32> to vector<8xf32>
    %73 = vector.shape_cast %72 : vector<8xf32> to vector<8x1xf32>
    %74 = tpu.reciprocal %73 {approx = true} : vector<8x1xf32> -> vector<8x1xf32>
    %75 = vector.broadcast %74 : vector<8x1xf32> to vector<8x8xf32>
    %76 = arith.mulf %71, %75 : vector<8x8xf32>
    %cst_36 = arith.constant dense<0.000000e+00> : vector<8x16xf32>
    %77 = tpu.matmul %76, %61, %cst_36 {dimension_numbers = #tpu.dot_dimension_numbers<[1], [0], [0], [1], [0, 0, 1, 1], [], []>} : vector<8x8xf32>, vector<8x16xf32>, vector<8x16xf32> -> vector<8x16xf32>
    %c32 = arith.constant 32 : index
    %c0_37 = arith.constant 0 : index
    %78 = vector.load %arg8[%c32, %c0_37] : memref<128x128xf32, #tpu.memory_space<vmem>>, vector<16x128xf32>
    %cst_38 = arith.constant dense<0.000000e+00> : vector<8x128xf32>
    %79 = tpu.matmul %77, %78, %cst_38 {dimension_numbers = #tpu.dot_dimension_numbers<[1], [0], [0], [1], [0, 0, 1, 1], [], []>} : vector<8x16xf32>, vector<16x128xf32>, vector<8x128xf32> -> vector<8x128xf32>
    %80 = arith.addf %58, %79 : vector<8x128xf32>
    %81 = vector.extract_strided_slice %10 {offsets = [0, 48], sizes = [8, 16], strides = [1, 1]} : vector<8x128xf32> to vector<8x16xf32>
    %82 = vector.extract_strided_slice %15 {offsets = [0, 48], sizes = [8, 16], strides = [1, 1]} : vector<8x256xf32> to vector<8x16xf32>
    %83 = vector.extract_strided_slice %15 {offsets = [0, 176], sizes = [8, 16], strides = [1, 1]} : vector<8x256xf32> to vector<8x16xf32>
    %cst_39 = arith.constant dense<0.000000e+00> : vector<8x8xf32>
    %84 = tpu.matmul %81, %82, %cst_39 {dimension_numbers = #tpu.dot_dimension_numbers<[1], [1], [0], [0], [0, 0, 1, 0], [], []>} : vector<8x16xf32>, vector<8x16xf32>, vector<8x8xf32> -> vector<8x8xf32>
    %cst_40 = arith.constant 2.500000e-01 : f32
    %85 = vector.broadcast %cst_40 : f32 to vector<8x8xf32>
    %86 = arith.mulf %84, %85 : vector<8x8xf32>
    %87 = vector.broadcast %5 : vector<1x8xf32> to vector<8x8xf32>
    %88 = arith.addf %86, %87 : vector<8x8xf32>
    %cst_41 = arith.constant dense<0xFF800000> : vector<8xf32>
    %89 = vector.multi_reduction <maximumf>, %88, %cst_41 [1] : vector<8x8xf32> to vector<8xf32>
    %90 = vector.shape_cast %89 : vector<8xf32> to vector<8x1xf32>
    %91 = vector.broadcast %90 : vector<8x1xf32> to vector<8x8xf32>
    %92 = arith.subf %88, %91 : vector<8x8xf32>
    %93 = math.exp %92 : vector<8x8xf32>
    %cst_42 = arith.constant dense<0.000000e+00> : vector<8xf32>
    %94 = vector.multi_reduction <add>, %93, %cst_42 [1] : vector<8x8xf32> to vector<8xf32>
    %95 = vector.shape_cast %94 : vector<8xf32> to vector<8x1xf32>
    %96 = tpu.reciprocal %95 {approx = true} : vector<8x1xf32> -> vector<8x1xf32>
    %97 = vector.broadcast %96 : vector<8x1xf32> to vector<8x8xf32>
    %98 = arith.mulf %93, %97 : vector<8x8xf32>
    %cst_43 = arith.constant dense<0.000000e+00> : vector<8x16xf32>
    %99 = tpu.matmul %98, %83, %cst_43 {dimension_numbers = #tpu.dot_dimension_numbers<[1], [0], [0], [1], [0, 0, 1, 1], [], []>} : vector<8x8xf32>, vector<8x16xf32>, vector<8x16xf32> -> vector<8x16xf32>
    %c48 = arith.constant 48 : index
    %c0_44 = arith.constant 0 : index
    %100 = vector.load %arg8[%c48, %c0_44] : memref<128x128xf32, #tpu.memory_space<vmem>>, vector<16x128xf32>
    %cst_45 = arith.constant dense<0.000000e+00> : vector<8x128xf32>
    %101 = tpu.matmul %99, %100, %cst_45 {dimension_numbers = #tpu.dot_dimension_numbers<[1], [0], [0], [1], [0, 0, 1, 1], [], []>} : vector<8x16xf32>, vector<16x128xf32>, vector<8x128xf32> -> vector<8x128xf32>
    %102 = arith.addf %80, %101 : vector<8x128xf32>
    %103 = vector.extract_strided_slice %10 {offsets = [0, 64], sizes = [8, 16], strides = [1, 1]} : vector<8x128xf32> to vector<8x16xf32>
    %104 = vector.extract_strided_slice %15 {offsets = [0, 64], sizes = [8, 16], strides = [1, 1]} : vector<8x256xf32> to vector<8x16xf32>
    %105 = vector.extract_strided_slice %15 {offsets = [0, 192], sizes = [8, 16], strides = [1, 1]} : vector<8x256xf32> to vector<8x16xf32>
    %cst_46 = arith.constant dense<0.000000e+00> : vector<8x8xf32>
    %106 = tpu.matmul %103, %104, %cst_46 {dimension_numbers = #tpu.dot_dimension_numbers<[1], [1], [0], [0], [0, 0, 1, 0], [], []>} : vector<8x16xf32>, vector<8x16xf32>, vector<8x8xf32> -> vector<8x8xf32>
    %cst_47 = arith.constant 2.500000e-01 : f32
    %107 = vector.broadcast %cst_47 : f32 to vector<8x8xf32>
    %108 = arith.mulf %106, %107 : vector<8x8xf32>
    %109 = vector.broadcast %5 : vector<1x8xf32> to vector<8x8xf32>
    %110 = arith.addf %108, %109 : vector<8x8xf32>
    %cst_48 = arith.constant dense<0xFF800000> : vector<8xf32>
    %111 = vector.multi_reduction <maximumf>, %110, %cst_48 [1] : vector<8x8xf32> to vector<8xf32>
    %112 = vector.shape_cast %111 : vector<8xf32> to vector<8x1xf32>
    %113 = vector.broadcast %112 : vector<8x1xf32> to vector<8x8xf32>
    %114 = arith.subf %110, %113 : vector<8x8xf32>
    %115 = math.exp %114 : vector<8x8xf32>
    %cst_49 = arith.constant dense<0.000000e+00> : vector<8xf32>
    %116 = vector.multi_reduction <add>, %115, %cst_49 [1] : vector<8x8xf32> to vector<8xf32>
    %117 = vector.shape_cast %116 : vector<8xf32> to vector<8x1xf32>
    %118 = tpu.reciprocal %117 {approx = true} : vector<8x1xf32> -> vector<8x1xf32>
    %119 = vector.broadcast %118 : vector<8x1xf32> to vector<8x8xf32>
    %120 = arith.mulf %115, %119 : vector<8x8xf32>
    %cst_50 = arith.constant dense<0.000000e+00> : vector<8x16xf32>
    %121 = tpu.matmul %120, %105, %cst_50 {dimension_numbers = #tpu.dot_dimension_numbers<[1], [0], [0], [1], [0, 0, 1, 1], [], []>} : vector<8x8xf32>, vector<8x16xf32>, vector<8x16xf32> -> vector<8x16xf32>
    %c64 = arith.constant 64 : index
    %c0_51 = arith.constant 0 : index
    %122 = vector.load %arg8[%c64, %c0_51] : memref<128x128xf32, #tpu.memory_space<vmem>>, vector<16x128xf32>
    %cst_52 = arith.constant dense<0.000000e+00> : vector<8x128xf32>
    %123 = tpu.matmul %121, %122, %cst_52 {dimension_numbers = #tpu.dot_dimension_numbers<[1], [0], [0], [1], [0, 0, 1, 1], [], []>} : vector<8x16xf32>, vector<16x128xf32>, vector<8x128xf32> -> vector<8x128xf32>
    %124 = arith.addf %102, %123 : vector<8x128xf32>
    %125 = vector.extract_strided_slice %10 {offsets = [0, 80], sizes = [8, 16], strides = [1, 1]} : vector<8x128xf32> to vector<8x16xf32>
    %126 = vector.extract_strided_slice %15 {offsets = [0, 80], sizes = [8, 16], strides = [1, 1]} : vector<8x256xf32> to vector<8x16xf32>
    %127 = vector.extract_strided_slice %15 {offsets = [0, 208], sizes = [8, 16], strides = [1, 1]} : vector<8x256xf32> to vector<8x16xf32>
    %cst_53 = arith.constant dense<0.000000e+00> : vector<8x8xf32>
    %128 = tpu.matmul %125, %126, %cst_53 {dimension_numbers = #tpu.dot_dimension_numbers<[1], [1], [0], [0], [0, 0, 1, 0], [], []>} : vector<8x16xf32>, vector<8x16xf32>, vector<8x8xf32> -> vector<8x8xf32>
    %cst_54 = arith.constant 2.500000e-01 : f32
    %129 = vector.broadcast %cst_54 : f32 to vector<8x8xf32>
    %130 = arith.mulf %128, %129 : vector<8x8xf32>
    %131 = vector.broadcast %5 : vector<1x8xf32> to vector<8x8xf32>
    %132 = arith.addf %130, %131 : vector<8x8xf32>
    %cst_55 = arith.constant dense<0xFF800000> : vector<8xf32>
    %133 = vector.multi_reduction <maximumf>, %132, %cst_55 [1] : vector<8x8xf32> to vector<8xf32>
    %134 = vector.shape_cast %133 : vector<8xf32> to vector<8x1xf32>
    %135 = vector.broadcast %134 : vector<8x1xf32> to vector<8x8xf32>
    %136 = arith.subf %132, %135 : vector<8x8xf32>
    %137 = math.exp %136 : vector<8x8xf32>
    %cst_56 = arith.constant dense<0.000000e+00> : vector<8xf32>
    %138 = vector.multi_reduction <add>, %137, %cst_56 [1] : vector<8x8xf32> to vector<8xf32>
    %139 = vector.shape_cast %138 : vector<8xf32> to vector<8x1xf32>
    %140 = tpu.reciprocal %139 {approx = true} : vector<8x1xf32> -> vector<8x1xf32>
    %141 = vector.broadcast %140 : vector<8x1xf32> to vector<8x8xf32>
    %142 = arith.mulf %137, %141 : vector<8x8xf32>
    %cst_57 = arith.constant dense<0.000000e+00> : vector<8x16xf32>
    %143 = tpu.matmul %142, %127, %cst_57 {dimension_numbers = #tpu.dot_dimension_numbers<[1], [0], [0], [1], [0, 0, 1, 1], [], []>} : vector<8x8xf32>, vector<8x16xf32>, vector<8x16xf32> -> vector<8x16xf32>
    %c80 = arith.constant 80 : index
    %c0_58 = arith.constant 0 : index
    %144 = vector.load %arg8[%c80, %c0_58] : memref<128x128xf32, #tpu.memory_space<vmem>>, vector<16x128xf32>
    %cst_59 = arith.constant dense<0.000000e+00> : vector<8x128xf32>
    %145 = tpu.matmul %143, %144, %cst_59 {dimension_numbers = #tpu.dot_dimension_numbers<[1], [0], [0], [1], [0, 0, 1, 1], [], []>} : vector<8x16xf32>, vector<16x128xf32>, vector<8x128xf32> -> vector<8x128xf32>
    %146 = arith.addf %124, %145 : vector<8x128xf32>
    %147 = vector.extract_strided_slice %10 {offsets = [0, 96], sizes = [8, 16], strides = [1, 1]} : vector<8x128xf32> to vector<8x16xf32>
    %148 = vector.extract_strided_slice %15 {offsets = [0, 96], sizes = [8, 16], strides = [1, 1]} : vector<8x256xf32> to vector<8x16xf32>
    %149 = vector.extract_strided_slice %15 {offsets = [0, 224], sizes = [8, 16], strides = [1, 1]} : vector<8x256xf32> to vector<8x16xf32>
    %cst_60 = arith.constant dense<0.000000e+00> : vector<8x8xf32>
    %150 = tpu.matmul %147, %148, %cst_60 {dimension_numbers = #tpu.dot_dimension_numbers<[1], [1], [0], [0], [0, 0, 1, 0], [], []>} : vector<8x16xf32>, vector<8x16xf32>, vector<8x8xf32> -> vector<8x8xf32>
    %cst_61 = arith.constant 2.500000e-01 : f32
    %151 = vector.broadcast %cst_61 : f32 to vector<8x8xf32>
    %152 = arith.mulf %150, %151 : vector<8x8xf32>
    %153 = vector.broadcast %5 : vector<1x8xf32> to vector<8x8xf32>
    %154 = arith.addf %152, %153 : vector<8x8xf32>
    %cst_62 = arith.constant dense<0xFF800000> : vector<8xf32>
    %155 = vector.multi_reduction <maximumf>, %154, %cst_62 [1] : vector<8x8xf32> to vector<8xf32>
    %156 = vector.shape_cast %155 : vector<8xf32> to vector<8x1xf32>
    %157 = vector.broadcast %156 : vector<8x1xf32> to vector<8x8xf32>
    %158 = arith.subf %154, %157 : vector<8x8xf32>
    %159 = math.exp %158 : vector<8x8xf32>
    %cst_63 = arith.constant dense<0.000000e+00> : vector<8xf32>
    %160 = vector.multi_reduction <add>, %159, %cst_63 [1] : vector<8x8xf32> to vector<8xf32>
    %161 = vector.shape_cast %160 : vector<8xf32> to vector<8x1xf32>
    %162 = tpu.reciprocal %161 {approx = true} : vector<8x1xf32> -> vector<8x1xf32>
    %163 = vector.broadcast %162 : vector<8x1xf32> to vector<8x8xf32>
    %164 = arith.mulf %159, %163 : vector<8x8xf32>
    %cst_64 = arith.constant dense<0.000000e+00> : vector<8x16xf32>
    %165 = tpu.matmul %164, %149, %cst_64 {dimension_numbers = #tpu.dot_dimension_numbers<[1], [0], [0], [1], [0, 0, 1, 1], [], []>} : vector<8x8xf32>, vector<8x16xf32>, vector<8x16xf32> -> vector<8x16xf32>
    %c96 = arith.constant 96 : index
    %c0_65 = arith.constant 0 : index
    %166 = vector.load %arg8[%c96, %c0_65] : memref<128x128xf32, #tpu.memory_space<vmem>>, vector<16x128xf32>
    %cst_66 = arith.constant dense<0.000000e+00> : vector<8x128xf32>
    %167 = tpu.matmul %165, %166, %cst_66 {dimension_numbers = #tpu.dot_dimension_numbers<[1], [0], [0], [1], [0, 0, 1, 1], [], []>} : vector<8x16xf32>, vector<16x128xf32>, vector<8x128xf32> -> vector<8x128xf32>
    %168 = arith.addf %146, %167 : vector<8x128xf32>
    %169 = vector.extract_strided_slice %10 {offsets = [0, 112], sizes = [8, 16], strides = [1, 1]} : vector<8x128xf32> to vector<8x16xf32>
    %170 = vector.extract_strided_slice %15 {offsets = [0, 112], sizes = [8, 16], strides = [1, 1]} : vector<8x256xf32> to vector<8x16xf32>
    %171 = vector.extract_strided_slice %15 {offsets = [0, 240], sizes = [8, 16], strides = [1, 1]} : vector<8x256xf32> to vector<8x16xf32>
    %cst_67 = arith.constant dense<0.000000e+00> : vector<8x8xf32>
    %172 = tpu.matmul %169, %170, %cst_67 {dimension_numbers = #tpu.dot_dimension_numbers<[1], [1], [0], [0], [0, 0, 1, 0], [], []>} : vector<8x16xf32>, vector<8x16xf32>, vector<8x8xf32> -> vector<8x8xf32>
    %cst_68 = arith.constant 2.500000e-01 : f32
    %173 = vector.broadcast %cst_68 : f32 to vector<8x8xf32>
    %174 = arith.mulf %172, %173 : vector<8x8xf32>
    %175 = vector.broadcast %5 : vector<1x8xf32> to vector<8x8xf32>
    %176 = arith.addf %174, %175 : vector<8x8xf32>
    %cst_69 = arith.constant dense<0xFF800000> : vector<8xf32>
    %177 = vector.multi_reduction <maximumf>, %176, %cst_69 [1] : vector<8x8xf32> to vector<8xf32>
    %178 = vector.shape_cast %177 : vector<8xf32> to vector<8x1xf32>
    %179 = vector.broadcast %178 : vector<8x1xf32> to vector<8x8xf32>
    %180 = arith.subf %176, %179 : vector<8x8xf32>
    %181 = math.exp %180 : vector<8x8xf32>
    %cst_70 = arith.constant dense<0.000000e+00> : vector<8xf32>
    %182 = vector.multi_reduction <add>, %181, %cst_70 [1] : vector<8x8xf32> to vector<8xf32>
    %183 = vector.shape_cast %182 : vector<8xf32> to vector<8x1xf32>
    %184 = tpu.reciprocal %183 {approx = true} : vector<8x1xf32> -> vector<8x1xf32>
    %185 = vector.broadcast %184 : vector<8x1xf32> to vector<8x8xf32>
    %186 = arith.mulf %181, %185 : vector<8x8xf32>
    %cst_71 = arith.constant dense<0.000000e+00> : vector<8x16xf32>
    %187 = tpu.matmul %186, %171, %cst_71 {dimension_numbers = #tpu.dot_dimension_numbers<[1], [0], [0], [1], [0, 0, 1, 1], [], []>} : vector<8x8xf32>, vector<8x16xf32>, vector<8x16xf32> -> vector<8x16xf32>
    %c112 = arith.constant 112 : index
    %c0_72 = arith.constant 0 : index
    %188 = vector.load %arg8[%c112, %c0_72] : memref<128x128xf32, #tpu.memory_space<vmem>>, vector<16x128xf32>
    %cst_73 = arith.constant dense<0.000000e+00> : vector<8x128xf32>
    %189 = tpu.matmul %187, %188, %cst_73 {dimension_numbers = #tpu.dot_dimension_numbers<[1], [0], [0], [1], [0, 0, 1, 1], [], []>} : vector<8x16xf32>, vector<16x128xf32>, vector<8x128xf32> -> vector<8x128xf32>
    %190 = arith.addf %168, %189 : vector<8x128xf32>
    %c0_74 = arith.constant 0 : index
    %c0_75 = arith.constant 0 : index
    %191 = vector.load %arg9[%c0_74, %c0_75] : memref<1x128xf32, #tpu.memory_space<vmem>>, vector<1x128xf32>
    %192 = vector.broadcast %191 : vector<1x128xf32> to vector<8x128xf32>
    %193 = arith.addf %190, %192 : vector<8x128xf32>
    %194 = arith.addf %193, %1 : vector<8x128xf32>
    %cst_76 = arith.constant dense<0.000000e+00> : vector<8xf32>
    %195 = vector.multi_reduction <add>, %194, %cst_76 [1] : vector<8x128xf32> to vector<8xf32>
    %196 = vector.shape_cast %195 : vector<8xf32> to vector<8x1xf32>
    %cst_77 = arith.constant 1.280000e+02 : f32
    %197 = vector.broadcast %cst_77 : f32 to vector<8x1xf32>
    %198 = arith.divf %196, %197 : vector<8x1xf32>
    %199 = vector.broadcast %198 : vector<8x1xf32> to vector<8x128xf32>
    %200 = arith.subf %194, %199 : vector<8x128xf32>
    %201 = arith.mulf %200, %200 : vector<8x128xf32>
    %cst_78 = arith.constant dense<0.000000e+00> : vector<8xf32>
    %202 = vector.multi_reduction <add>, %201, %cst_78 [1] : vector<8x128xf32> to vector<8xf32>
    %203 = vector.shape_cast %202 : vector<8xf32> to vector<8x1xf32>
    %cst_79 = arith.constant 1.280000e+02 : f32
    %204 = vector.broadcast %cst_79 : f32 to vector<8x1xf32>
    %205 = arith.divf %203, %204 : vector<8x1xf32>
    %cst_80 = arith.constant 9.99999974E-6 : f32
    %206 = vector.broadcast %cst_80 : f32 to vector<8x1xf32>
    %207 = arith.addf %205, %206 : vector<8x1xf32>
    %208 = math.rsqrt %207 : vector<8x1xf32>
    %209 = vector.broadcast %208 : vector<8x1xf32> to vector<8x128xf32>
    %210 = arith.mulf %200, %209 : vector<8x128xf32>
    %c0_81 = arith.constant 0 : index
    %c0_82 = arith.constant 0 : index
    %211 = vector.load %arg10[%c0_81, %c0_82] : memref<1x128xf32, #tpu.memory_space<vmem>>, vector<1x128xf32>
    %212 = vector.broadcast %211 : vector<1x128xf32> to vector<8x128xf32>
    %213 = arith.mulf %210, %212 : vector<8x128xf32>
    %c0_83 = arith.constant 0 : index
    %c0_84 = arith.constant 0 : index
    %214 = vector.load %arg11[%c0_83, %c0_84] : memref<1x128xf32, #tpu.memory_space<vmem>>, vector<1x128xf32>
    %215 = vector.broadcast %214 : vector<1x128xf32> to vector<8x128xf32>
    %216 = arith.addf %213, %215 : vector<8x128xf32>
    %c0_85 = arith.constant 0 : index
    %c0_86 = arith.constant 0 : index
    %c0_87 = arith.constant 0 : index
    %217 = vector.load %arg12[%c0_85, %c0_86, %c0_87] : memref<1x8x128xf32, #tpu.memory_space<vmem>>, vector<1x8x128xf32>
    %218 = vector.shape_cast %217 : vector<1x8x128xf32> to vector<8x128xf32>
    %219 = vector.shape_cast %216 : vector<8x128xf32> to vector<1x8x128xf32>
    tpu.vector_store %arg12[%c0_85, %c0_86, %c0_87], %219 {strides = array<i32>} : memref<1x8x128xf32, #tpu.memory_space<vmem>>, vector<1x8x128xf32>,
    return
  }
  func.func @transform_0(%arg0: i32) -> (i32, i32, i32) {
    %c0_i32 = arith.constant 0 : i32
    %c0_i32_0 = arith.constant 0 : i32
    %c0_i32_1 = arith.constant 0 : i32
    return %arg0, %c0_i32, %c0_i32_0 : i32, i32, i32
  }
  func.func @transform_1(%arg0: i32) -> (i32, i32, i32) {
    %c0_i32 = arith.constant 0 : i32
    %c0_i32_0 = arith.constant 0 : i32
    %c0_i32_1 = arith.constant 0 : i32
    return %arg0, %c0_i32, %c0_i32_0 : i32, i32, i32
  }
  func.func @transform_2(%arg0: i32) -> (i32, i32, i32) {
    %c0_i32 = arith.constant 0 : i32
    %c0_i32_0 = arith.constant 0 : i32
    %c0_i32_1 = arith.constant 0 : i32
    return %arg0, %c0_i32, %c0_i32_0 : i32, i32, i32
  }
  func.func @transform_3(%arg0: i32) -> (i32, i32) {
    %c0_i32 = arith.constant 0 : i32
    %c0_i32_0 = arith.constant 0 : i32
    %c0_i32_1 = arith.constant 0 : i32
    return %c0_i32, %c0_i32_0 : i32, i32
  }
  func.func @transform_4(%arg0: i32) -> (i32, i32) {
    %c0_i32 = arith.constant 0 : i32
    %c0_i32_0 = arith.constant 0 : i32
    %c0_i32_1 = arith.constant 0 : i32
    return %c0_i32, %c0_i32_0 : i32, i32
  }
  func.func @transform_5(%arg0: i32) -> (i32, i32) {
    %c0_i32 = arith.constant 0 : i32
    %c0_i32_0 = arith.constant 0 : i32
    %c0_i32_1 = arith.constant 0 : i32
    return %c0_i32, %c0_i32_0 : i32, i32
  }
  func.func @transform_6(%arg0: i32) -> (i32, i32) {
    %c0_i32 = arith.constant 0 : i32
    %c0_i32_0 = arith.constant 0 : i32
    %c0_i32_1 = arith.constant 0 : i32
    return %c0_i32, %c0_i32_0 : i32, i32
  }
  func.func @transform_7(%arg0: i32) -> (i32, i32) {
    %c0_i32 = arith.constant 0 : i32
    %c0_i32_0 = arith.constant 0 : i32
    %c0_i32_1 = arith.constant 0 : i32
    return %c0_i32, %c0_i32_0 : i32, i32
  }
  func.func @transform_8(%arg0: i32) -> (i32, i32) {
    %c0_i32 = arith.constant 0 : i32
    %c0_i32_0 = arith.constant 0 : i32
    %c0_i32_1 = arith.constant 0 : i32
    return %c0_i32, %c0_i32_0 : i32, i32
  }
  func.func @transform_9(%arg0: i32) -> (i32, i32) {
    %c0_i32 = arith.constant 0 : i32
    %c0_i32_0 = arith.constant 0 : i32
    %c0_i32_1 = arith.constant 0 : i32
    return %c0_i32, %c0_i32_0 : i32, i32
  }
  func.func @transform_10(%arg0: i32) -> (i32, i32) {
    %c0_i32 = arith.constant 0 : i32
    %c0_i32_0 = arith.constant 0 : i32
    %c0_i32_1 = arith.constant 0 : i32
    return %c0_i32, %c0_i32_0 : i32, i32
  }
  func.func @transform_11(%arg0: i32) -> (i32, i32, i32) {
    %c0_i32 = arith.constant 0 : i32
    %c0_i32_0 = arith.constant 0 : i32
    %c0_i32_1 = arith.constant 0 : i32
    return %arg0, %c0_i32, %c0_i32_0 : i32, i32, i32
  }
}

module attributes {stable_mosaic.version = 11 : i64} {
  func.func @_ffn_ln_kernel(%arg0: i32, %arg1: memref<16x128xf32, #tpu.memory_space<vmem>>, %arg2: memref<128x512xf32, #tpu.memory_space<vmem>>, %arg3: memref<1x512xf32, #tpu.memory_space<vmem>>, %arg4: memref<512x128xf32, #tpu.memory_space<vmem>>, %arg5: memref<1x128xf32, #tpu.memory_space<vmem>>, %arg6: memref<1x128xf32, #tpu.memory_space<vmem>>, %arg7: memref<1x128xf32, #tpu.memory_space<vmem>>, %arg8: memref<16x128xf32, #tpu.memory_space<vmem>>) attributes {dimension_semantics = [#tpu.dimension_semantics<parallel>], iteration_bounds = array<i64: 1>, scalar_prefetch = 0 : i64, scratch_operands = 0 : i64, tpu.core_type = #tpu.core_type<tc>, window_params = [{transform_indices = @transform_0, window_bounds = array<i64: 16, 128>}, {pipeline_mode = #tpu.pipeline_mode<synchronous>, transform_indices = @transform_1, window_bounds = array<i64: 128, 512>}, {pipeline_mode = #tpu.pipeline_mode<synchronous>, transform_indices = @transform_2, window_bounds = array<i64: 1, 512>}, {pipeline_mode = #tpu.pipeline_mode<synchronous>, transform_indices = @transform_3, window_bounds = array<i64: 512, 128>}, {pipeline_mode = #tpu.pipeline_mode<synchronous>, transform_indices = @transform_4, window_bounds = array<i64: 1, 128>}, {pipeline_mode = #tpu.pipeline_mode<synchronous>, transform_indices = @transform_5, window_bounds = array<i64: 1, 128>}, {pipeline_mode = #tpu.pipeline_mode<synchronous>, transform_indices = @transform_6, window_bounds = array<i64: 1, 128>}, {transform_indices = @transform_7, window_bounds = array<i64: 16, 128>}]} {
    %c0 = arith.constant 0 : index
    %c0_0 = arith.constant 0 : index
    %0 = vector.load %arg1[%c0, %c0_0] : memref<16x128xf32, #tpu.memory_space<vmem>>, vector<16x128xf32>
    %c0_1 = arith.constant 0 : index
    %c0_2 = arith.constant 0 : index
    %1 = vector.load %arg2[%c0_1, %c0_2] : memref<128x512xf32, #tpu.memory_space<vmem>>, vector<128x512xf32>
    %cst = arith.constant dense<0.000000e+00> : vector<16x512xf32>
    %2 = tpu.matmul %0, %1, %cst {dimension_numbers = #tpu.dot_dimension_numbers<[1], [0], [0], [1], [0, 0, 1, 1], [], []>} : vector<16x128xf32>, vector<128x512xf32>, vector<16x512xf32> -> vector<16x512xf32>
    %c0_3 = arith.constant 0 : index
    %c0_4 = arith.constant 0 : index
    %3 = vector.load %arg3[%c0_3, %c0_4] : memref<1x512xf32, #tpu.memory_space<vmem>>, vector<1x512xf32>
    %4 = vector.broadcast %3 : vector<1x512xf32> to vector<16x512xf32>
    %5 = arith.addf %2, %4 : vector<16x512xf32>
    %cst_5 = arith.constant 0.000000e+00 : f32
    %6 = vector.broadcast %cst_5 : f32 to vector<16x512xf32>
    %7 = arith.maximumf %5, %6 : vector<16x512xf32>
    %c0_6 = arith.constant 0 : index
    %c0_7 = arith.constant 0 : index
    %8 = vector.load %arg4[%c0_6, %c0_7] : memref<512x128xf32, #tpu.memory_space<vmem>>, vector<512x128xf32>
    %cst_8 = arith.constant dense<0.000000e+00> : vector<16x128xf32>
    %9 = tpu.matmul %7, %8, %cst_8 {dimension_numbers = #tpu.dot_dimension_numbers<[1], [0], [0], [1], [0, 0, 1, 1], [], []>} : vector<16x512xf32>, vector<512x128xf32>, vector<16x128xf32> -> vector<16x128xf32>
    %c0_9 = arith.constant 0 : index
    %c0_10 = arith.constant 0 : index
    %10 = vector.load %arg5[%c0_9, %c0_10] : memref<1x128xf32, #tpu.memory_space<vmem>>, vector<1x128xf32>
    %11 = vector.broadcast %10 : vector<1x128xf32> to vector<16x128xf32>
    %12 = arith.addf %9, %11 : vector<16x128xf32>
    %13 = arith.addf %12, %0 : vector<16x128xf32>
    %cst_11 = arith.constant dense<0.000000e+00> : vector<16xf32>
    %14 = vector.multi_reduction <add>, %13, %cst_11 [1] : vector<16x128xf32> to vector<16xf32>
    %15 = vector.shape_cast %14 : vector<16xf32> to vector<16x1xf32>
    %cst_12 = arith.constant 1.280000e+02 : f32
    %16 = vector.broadcast %cst_12 : f32 to vector<16x1xf32>
    %17 = arith.divf %15, %16 : vector<16x1xf32>
    %18 = vector.broadcast %17 : vector<16x1xf32> to vector<16x128xf32>
    %19 = arith.subf %13, %18 : vector<16x128xf32>
    %20 = arith.mulf %19, %19 : vector<16x128xf32>
    %cst_13 = arith.constant dense<0.000000e+00> : vector<16xf32>
    %21 = vector.multi_reduction <add>, %20, %cst_13 [1] : vector<16x128xf32> to vector<16xf32>
    %22 = vector.shape_cast %21 : vector<16xf32> to vector<16x1xf32>
    %cst_14 = arith.constant 1.280000e+02 : f32
    %23 = vector.broadcast %cst_14 : f32 to vector<16x1xf32>
    %24 = arith.divf %22, %23 : vector<16x1xf32>
    %cst_15 = arith.constant 9.99999974E-6 : f32
    %25 = vector.broadcast %cst_15 : f32 to vector<16x1xf32>
    %26 = arith.addf %24, %25 : vector<16x1xf32>
    %27 = math.rsqrt %26 : vector<16x1xf32>
    %28 = vector.broadcast %27 : vector<16x1xf32> to vector<16x128xf32>
    %29 = arith.mulf %19, %28 : vector<16x128xf32>
    %c0_16 = arith.constant 0 : index
    %c0_17 = arith.constant 0 : index
    %30 = vector.load %arg6[%c0_16, %c0_17] : memref<1x128xf32, #tpu.memory_space<vmem>>, vector<1x128xf32>
    %31 = vector.broadcast %30 : vector<1x128xf32> to vector<16x128xf32>
    %32 = arith.mulf %29, %31 : vector<16x128xf32>
    %c0_18 = arith.constant 0 : index
    %c0_19 = arith.constant 0 : index
    %33 = vector.load %arg7[%c0_18, %c0_19] : memref<1x128xf32, #tpu.memory_space<vmem>>, vector<1x128xf32>
    %34 = vector.broadcast %33 : vector<1x128xf32> to vector<16x128xf32>
    %35 = arith.addf %32, %34 : vector<16x128xf32>
    %c0_20 = arith.constant 0 : index
    %c0_21 = arith.constant 0 : index
    %36 = vector.load %arg8[%c0_20, %c0_21] : memref<16x128xf32, #tpu.memory_space<vmem>>, vector<16x128xf32>
    tpu.vector_store %arg8[%c0_20, %c0_21], %35 {strides = array<i32>} : memref<16x128xf32, #tpu.memory_space<vmem>>, vector<16x128xf32>,
    return
  }
  func.func @transform_0(%arg0: i32) -> (i32, i32) {
    %c0_i32 = arith.constant 0 : i32
    %c0_i32_0 = arith.constant 0 : i32
    return %arg0, %c0_i32 : i32, i32
  }
  func.func @transform_1(%arg0: i32) -> (i32, i32) {
    %c0_i32 = arith.constant 0 : i32
    %c0_i32_0 = arith.constant 0 : i32
    %c0_i32_1 = arith.constant 0 : i32
    return %c0_i32, %c0_i32_0 : i32, i32
  }
  func.func @transform_2(%arg0: i32) -> (i32, i32) {
    %c0_i32 = arith.constant 0 : i32
    %c0_i32_0 = arith.constant 0 : i32
    %c0_i32_1 = arith.constant 0 : i32
    return %c0_i32, %c0_i32_0 : i32, i32
  }
  func.func @transform_3(%arg0: i32) -> (i32, i32) {
    %c0_i32 = arith.constant 0 : i32
    %c0_i32_0 = arith.constant 0 : i32
    %c0_i32_1 = arith.constant 0 : i32
    return %c0_i32, %c0_i32_0 : i32, i32
  }
  func.func @transform_4(%arg0: i32) -> (i32, i32) {
    %c0_i32 = arith.constant 0 : i32
    %c0_i32_0 = arith.constant 0 : i32
    %c0_i32_1 = arith.constant 0 : i32
    return %c0_i32, %c0_i32_0 : i32, i32
  }
  func.func @transform_5(%arg0: i32) -> (i32, i32) {
    %c0_i32 = arith.constant 0 : i32
    %c0_i32_0 = arith.constant 0 : i32
    %c0_i32_1 = arith.constant 0 : i32
    return %c0_i32, %c0_i32_0 : i32, i32
  }
  func.func @transform_6(%arg0: i32) -> (i32, i32) {
    %c0_i32 = arith.constant 0 : i32
    %c0_i32_0 = arith.constant 0 : i32
    %c0_i32_1 = arith.constant 0 : i32
    return %c0_i32, %c0_i32_0 : i32, i32
  }
  func.func @transform_7(%arg0: i32) -> (i32, i32) {
    %c0_i32 = arith.constant 0 : i32
    %c0_i32_0 = arith.constant 0 : i32
    return %arg0, %c0_i32 : i32, i32
  }
}

module attributes {stable_mosaic.version = 11 : i64} {
  func.func @_dist_head_kernel(%arg0: i32, %arg1: memref<1x8x128xf32, #tpu.memory_space<vmem>>, %arg2: memref<128x128xf32, #tpu.memory_space<vmem>>, %arg3: memref<1x128xf32, #tpu.memory_space<vmem>>, %arg4: memref<1x128xf32, #tpu.memory_space<vmem>>, %arg5: memref<1x1xf32, #tpu.memory_space<vmem>>, %arg6: memref<1x1x8xf32, #tpu.memory_space<vmem>>, %arg7: memref<1x1x1xf32, #tpu.memory_space<vmem>>, %arg8: memref<1x1x8xf32, #tpu.memory_space<vmem>>) attributes {dimension_semantics = [#tpu.dimension_semantics<parallel>], iteration_bounds = array<i64: 2>, scalar_prefetch = 0 : i64, scratch_operands = 0 : i64, tpu.core_type = #tpu.core_type<tc>, window_params = [{transform_indices = @transform_0, window_bounds = array<i64: 1, 8, 128>}, {pipeline_mode = #tpu.pipeline_mode<synchronous>, transform_indices = @transform_1, window_bounds = array<i64: 128, 128>}, {pipeline_mode = #tpu.pipeline_mode<synchronous>, transform_indices = @transform_2, window_bounds = array<i64: 1, 128>}, {pipeline_mode = #tpu.pipeline_mode<synchronous>, transform_indices = @transform_3, window_bounds = array<i64: 1, 128>}, {pipeline_mode = #tpu.pipeline_mode<synchronous>, transform_indices = @transform_4, window_bounds = array<i64: 1, 1>}, {transform_indices = @transform_5, window_bounds = array<i64: 1, 1, 8>}, {transform_indices = @transform_6, window_bounds = array<i64: 1, 1, 1>}, {transform_indices = @transform_7, window_bounds = array<i64: 1, 1, 8>}]} {
    %c0 = arith.constant 0 : index
    %c0_0 = arith.constant 0 : index
    %c0_1 = arith.constant 0 : index
    %0 = vector.load %arg1[%c0, %c0_0, %c0_1] : memref<1x8x128xf32, #tpu.memory_space<vmem>>, vector<1x8x128xf32>
    %1 = vector.shape_cast %0 : vector<1x8x128xf32> to vector<8x128xf32>
    %c0_2 = arith.constant 0 : index
    %c0_3 = arith.constant 0 : index
    %2 = vector.load %arg2[%c0_2, %c0_3] : memref<128x128xf32, #tpu.memory_space<vmem>>, vector<128x128xf32>
    %cst = arith.constant dense<0.000000e+00> : vector<8x128xf32>
    %3 = tpu.matmul %1, %2, %cst {dimension_numbers = #tpu.dot_dimension_numbers<[1], [0], [0], [1], [0, 0, 1, 1], [], []>} : vector<8x128xf32>, vector<128x128xf32>, vector<8x128xf32> -> vector<8x128xf32>
    %c0_4 = arith.constant 0 : index
    %c0_5 = arith.constant 0 : index
    %4 = vector.load %arg3[%c0_4, %c0_5] : memref<1x128xf32, #tpu.memory_space<vmem>>, vector<1x128xf32>
    %5 = vector.broadcast %4 : vector<1x128xf32> to vector<8x128xf32>
    %6 = arith.addf %3, %5 : vector<8x128xf32>
    %cst_6 = arith.constant 0.000000e+00 : f32
    %7 = vector.broadcast %cst_6 : f32 to vector<8x128xf32>
    %8 = arith.maximumf %6, %7 : vector<8x128xf32>
    %c0_7 = arith.constant 0 : index
    %c0_8 = arith.constant 0 : index
    %9 = vector.load %arg4[%c0_7, %c0_8] : memref<1x128xf32, #tpu.memory_space<vmem>>, vector<1x128xf32>
    %cst_9 = arith.constant dense<0.000000e+00> : vector<1x8xf32>
    %10 = tpu.matmul %9, %8, %cst_9 {dimension_numbers = #tpu.dot_dimension_numbers<[1], [1], [0], [0], [0, 0, 1, 0], [], []>} : vector<1x128xf32>, vector<8x128xf32>, vector<1x8xf32> -> vector<1x8xf32>
    %c0_10 = arith.constant 0 : index
    %c0_11 = arith.constant 0 : index
    %11 = vector.load %arg5[%c0_10, %c0_11] : memref<1x1xf32, #tpu.memory_space<vmem>>, vector<1x1xf32>
    %12 = vector.broadcast %11 : vector<1x1xf32> to vector<1x8xf32>
    %13 = arith.addf %10, %12 : vector<1x8xf32>
    %c0_12 = arith.constant 0 : index
    %c0_13 = arith.constant 0 : index
    %c0_14 = arith.constant 0 : index
    %14 = vector.load %arg6[%c0_12, %c0_13, %c0_14] : memref<1x1x8xf32, #tpu.memory_space<vmem>>, vector<1x1x8xf32>
    %15 = vector.shape_cast %14 : vector<1x1x8xf32> to vector<1x8xf32>
    %cst_15 = arith.constant 5.000000e-01 : f32
    %16 = vector.broadcast %cst_15 : f32 to vector<1x8xf32>
    %17 = arith.cmpf ogt, %15, %16 : vector<1x8xf32>
    %cst_16 = arith.constant -1.000000e+30 : f32
    %18 = vector.broadcast %cst_16 : f32 to vector<1x8xf32>
    %19 = arith.select %17, %18, %13 : vector<1x8xi1>, vector<1x8xf32>
    %c0_17 = arith.constant 0 : index
    %c0_18 = arith.constant 0 : index
    %c0_19 = arith.constant 0 : index
    %20 = vector.load %arg7[%c0_17, %c0_18, %c0_19] : memref<1x1x1xf32, #tpu.memory_space<vmem>>, vector<1x1x1xf32>
    %21 = vector.shape_cast %20 : vector<1x1x1xf32> to vector<1x1xf32>
    %cst_20 = arith.constant 5.000000e-01 : f32
    %22 = vector.broadcast %cst_20 : f32 to vector<1x1xf32>
    %23 = arith.cmpf ogt, %21, %22 : vector<1x1xf32>
    %cst_21 = arith.constant 0.000000e+00 : f32
    %24 = vector.shape_cast %23 : vector<1x1xi1> to vector<1x1xi1>
    %25 = vector.broadcast %24 : vector<1x1xi1> to vector<1x8xi1>
    %26 = vector.broadcast %cst_21 : f32 to vector<1x8xf32>
    %27 = arith.select %25, %26, %19 : vector<1x8xi1>, vector<1x8xf32>
    %cst_22 = arith.constant dense<0xFF800000> : vector<1xf32>
    %28 = vector.multi_reduction <maximumf>, %27, %cst_22 [1] : vector<1x8xf32> to vector<1xf32>
    %29 = vector.shape_cast %28 : vector<1xf32> to vector<1x1xf32>
    %30 = vector.broadcast %29 : vector<1x1xf32> to vector<1x8xf32>
    %31 = arith.subf %27, %30 : vector<1x8xf32>
    %32 = math.exp %31 : vector<1x8xf32>
    %cst_23 = arith.constant dense<0.000000e+00> : vector<1xf32>
    %33 = vector.multi_reduction <add>, %32, %cst_23 [1] : vector<1x8xf32> to vector<1xf32>
    %34 = vector.shape_cast %33 : vector<1xf32> to vector<1x1xf32>
    %35 = math.log %34 : vector<1x1xf32>
    %36 = arith.addf %35, %29 : vector<1x1xf32>
    %37 = vector.broadcast %36 : vector<1x1xf32> to vector<1x8xf32>
    %38 = arith.subf %27, %37 : vector<1x8xf32>
    %c0_24 = arith.constant 0 : index
    %c0_25 = arith.constant 0 : index
    %c0_26 = arith.constant 0 : index
    %39 = vector.load %arg8[%c0_24, %c0_25, %c0_26] : memref<1x1x8xf32, #tpu.memory_space<vmem>>, vector<1x1x8xf32>
    %40 = vector.shape_cast %39 : vector<1x1x8xf32> to vector<1x8xf32>
    %41 = vector.shape_cast %38 : vector<1x8xf32> to vector<1x1x8xf32>
    tpu.vector_store %arg8[%c0_24, %c0_25, %c0_26], %41 {strides = array<i32>} : memref<1x1x8xf32, #tpu.memory_space<vmem>>, vector<1x1x8xf32>,
    return
  }
  func.func @transform_0(%arg0: i32) -> (i32, i32, i32) {
    %c0_i32 = arith.constant 0 : i32
    %c0_i32_0 = arith.constant 0 : i32
    %c0_i32_1 = arith.constant 0 : i32
    return %arg0, %c0_i32, %c0_i32_0 : i32, i32, i32
  }
  func.func @transform_1(%arg0: i32) -> (i32, i32) {
    %c0_i32 = arith.constant 0 : i32
    %c0_i32_0 = arith.constant 0 : i32
    %c0_i32_1 = arith.constant 0 : i32
    return %c0_i32, %c0_i32_0 : i32, i32
  }
  func.func @transform_2(%arg0: i32) -> (i32, i32) {
    %c0_i32 = arith.constant 0 : i32
    %c0_i32_0 = arith.constant 0 : i32
    %c0_i32_1 = arith.constant 0 : i32
    return %c0_i32, %c0_i32_0 : i32, i32
  }
  func.func @transform_3(%arg0: i32) -> (i32, i32) {
    %c0_i32 = arith.constant 0 : i32
    %c0_i32_0 = arith.constant 0 : i32
    %c0_i32_1 = arith.constant 0 : i32
    return %c0_i32, %c0_i32_0 : i32, i32
  }
  func.func @transform_4(%arg0: i32) -> (i32, i32) {
    %c0_i32 = arith.constant 0 : i32
    %c0_i32_0 = arith.constant 0 : i32
    %c0_i32_1 = arith.constant 0 : i32
    return %c0_i32, %c0_i32_0 : i32, i32
  }
  func.func @transform_5(%arg0: i32) -> (i32, i32, i32) {
    %c0_i32 = arith.constant 0 : i32
    %c0_i32_0 = arith.constant 0 : i32
    %c0_i32_1 = arith.constant 0 : i32
    return %arg0, %c0_i32, %c0_i32_0 : i32, i32, i32
  }
  func.func @transform_6(%arg0: i32) -> (i32, i32, i32) {
    %c0_i32 = arith.constant 0 : i32
    %c0_i32_0 = arith.constant 0 : i32
    %c0_i32_1 = arith.constant 0 : i32
    return %arg0, %c0_i32, %c0_i32_0 : i32, i32, i32
  }
  func.func @transform_7(%arg0: i32) -> (i32, i32, i32) {
    %c0_i32 = arith.constant 0 : i32
    %c0_i32_0 = arith.constant 0 : i32
    %c0_i32_1 = arith.constant 0 : i32
    return %arg0, %c0_i32, %c0_i32_0 : i32, i32, i32
  }
}

</mosaic_0001>

<llo_original>
// kernel: tsp_monty_style_decoder_forward.11
$region0: #{tsp_monty_style_decoder_forward.11}
  #allocation0 [shape = 'u32[]', space=smem, size = 0x4, offset = 0x4, fixed_abs, tag = 'smem constant byte address 0x4 - core index']
  #allocation1 [shape = 'u32[72,128]{1,0:T(1,128)}', space=vmem, size = 0x9000, scoped, tag = 'internal scratch']
  %s0 = inlined_call_operand.vmem [shape: f32[2,8,8], index: 0, kind: input, shape index: {}]
  %s1 = inlined_call_operand.vmem [shape: f32[8,128], index: 1, kind: input, shape index: {}]
  %s2 = inlined_call_operand.vmem [shape: f32[1,128], index: 2, kind: input, shape index: {}]
  %s3 = inlined_call_operand.vmem [shape: f32[8,128], index: 3, kind: input, shape index: {}]
  %s4 = inlined_call_operand.vmem [shape: f32[2,8,128], index: 4, kind: output, shape index: {}]
  %s5 = sld [smem:[#allocation0]]
  $region49: #{tsp_monty_style_decoder_forward.11} parent=0
    _
  %s7 = ssub.s32 1, %s5
  %s8 = scalar_select 0, %s7, %s5
  loop: start=0, step=1, limit=4
  $region2: #{tsp_monty_style_decoder_forward.11} parent=0 // loop_pre_header
    _
  $region3: #{tsp_monty_style_decoder_forward.11} parent=0 // loop_header
    %s10 = sphi 0, %s14
    %p11 = scmp.ge.s32.totalorder %s10, 4
    %s20 = sphi 0, %s22
    %s23 = sphi 0, %s20
    %s24 = sphi 0, %s23
    %s40 = sphi 0, %s24
    %s44 = sphi 0, %s44
    %s46 = sphi 0, %s44
    %s47 = sphi 0, %s46
    %s61 = sphi 0, %s47
    %s65 = sphi 0, %s65
    %s67 = sphi 0, %s65
    %s68 = sphi 0, %s67
    %s82 = sphi 0, %s68
    %s86 = sphi 0, %s86
    %s88 = sphi 0, %s86
    %s89 = sphi 0, %s88
    %s103 = sphi 0, %s89
    %s109 = sphi 0, %s111
    %s112 = sphi 0, %s109
    %s113 = sphi 0, %s112
    %s129 = sphi 0, %s113
  $region4: #{tsp_monty_style_decoder_forward.11} parent=0 // loop_header_branch
    %13 = sbr.rel (%p11) target = $region8
  $region5: #{tsp_monty_style_decoder_forward.11} parent=0 // loop_body
    %s15 = ssub.s32 %s10, 1
    %s16 = ssub.s32 %s10, 2
    %s17 = sadd.s32 %s10, 1
    %s18 = ssub.s32 %s10, %s17
    %p19 = scmp.eq.s32.totalorder %s18, 0
    %s21 = sadd.s32 %s20, 1
    %s22 = scalar_select %p19, %s20, %s21
    %p25 = pneg %p19
    %p26 = scmp.eq.s32.totalorder %s10, 1
    %p27 = por %p25, %p26
    %p28 = scmp.ne.s32.totalorder %s20, %s23
    %p29 = scmp.eq.s32.totalorder %s10, 0
    %p30 = por %p28, %p29
    %p31 = scmp.ne.s32.totalorder %s20, %s23
    %p32 = scmp.eq.s32.totalorder %s15, 1
    %p33 = por %p31, %p32
    %p34 = scmp.ne.s32.totalorder %s23, %s24
    %p35 = scmp.eq.s32.totalorder %s15, 0
    %p36 = por %p34, %p35
    %p37 = scmp.ne.s32.totalorder %s23, %s24
    %p38 = scmp.eq.s32.totalorder %s16, 1
    %p39 = por %p37, %p38
    %p41 = scmp.ne.s32.totalorder %s24, %s40
    %p42 = scmp.eq.s32.totalorder %s16, 0
    %p43 = por %p41, %p42
    %s45 = sadd.s32 %s44, 1
    %p48 = scmp.eq.s32.totalorder %s10, 1
    %p49 = scmp.ne.s32.totalorder %s44, %s46
    %p50 = scmp.eq.s32.totalorder %s10, 0
    %p51 = por %p49, %p50
    %p52 = scmp.ne.s32.totalorder %s44, %s46
    %p53 = scmp.eq.s32.totalorder %s15, 1
    %p54 = por %p52, %p53
    %p55 = scmp.ne.s32.totalorder %s46, %s47
    %p56 = scmp.eq.s32.totalorder %s15, 0
    %p57 = por %p55, %p56
    %p58 = scmp.ne.s32.totalorder %s46, %s47
    %p59 = scmp.eq.s32.totalorder %s16, 1
    %p60 = por %p58, %p59
    %p62 = scmp.ne.s32.totalorder %s47, %s61
    %p63 = scmp.eq.s32.totalorder %s16, 0
    %p64 = por %p62, %p63
    %s66 = sadd.s32 %s65, 1
    %p69 = scmp.eq.s32.totalorder %s10, 1
    %p70 = scmp.ne.s32.totalorder %s65, %s67
    %p71 = scmp.eq.s32.totalorder %s10, 0
    %p72 = por %p70, %p71
    %p73 = scmp.ne.s32.totalorder %s65, %s67
    %p74 = scmp.eq.s32.totalorder %s15, 1
    %p75 = por %p73, %p74
    %p76 = scmp.ne.s32.totalorder %s67, %s68
    %p77 = scmp.eq.s32.totalorder %s15, 0
    %p78 = por %p76, %p77
    %p79 = scmp.ne.s32.totalorder %s67, %s68
    %p80 = scmp.eq.s32.totalorder %s16, 1
    %p81 = por %p79, %p80
    %p83 = scmp.ne.s32.totalorder %s68, %s82
    %p84 = scmp.eq.s32.totalorder %s16, 0
    %p85 = por %p83, %p84
    %s87 = sadd.s32 %s86, 1
    %p90 = scmp.eq.s32.totalorder %s10, 1
    %p91 = scmp.ne.s32.totalorder %s86, %s88
    %p92 = scmp.eq.s32.totalorder %s10, 0
    %p93 = por %p91, %p92
    %p94 = scmp.ne.s32.totalorder %s86, %s88
    %p95 = scmp.eq.s32.totalorder %s15, 1
    %p96 = por %p94, %p95
    %p97 = scmp.ne.s32.totalorder %s88, %s89
    %p98 = scmp.eq.s32.totalorder %s15, 0
    %p99 = por %p97, %p98
    %p100 = scmp.ne.s32.totalorder %s88, %s89
    %p101 = scmp.eq.s32.totalorder %s16, 1
    %p102 = por %p100, %p101
    %p104 = scmp.ne.s32.totalorder %s89, %s103
    %p105 = scmp.eq.s32.totalorder %s16, 0
    %p106 = por %p104, %p105
    %s107 = ssub.s32 %s10, %s17
    %p108 = scmp.eq.s32.totalorder %s107, 0
    %s110 = sadd.s32 %s109, 1
    %s111 = scalar_select %p108, %s109, %s110
    %p114 = pneg %p108
    %p115 = scmp.eq.s32.totalorder %s10, 1
    %p116 = por %p114, %p115
    %p117 = scmp.ne.s32.totalorder %s109, %s112
    %p118 = scmp.eq.s32.totalorder %s10, 0
    %p119 = por %p117, %p118
    %p120 = scmp.ne.s32.totalorder %s109, %s112
    %p121 = scmp.eq.s32.totalorder %s15, 1
    %p122 = por %p120, %p121
    %p123 = scmp.ne.s32.totalorder %s112, %s113
    %p124 = scmp.eq.s32.totalorder %s15, 0
    %p125 = por %p123, %p124
    %p126 = scmp.ne.s32.totalorder %s112, %s113
    %p127 = scmp.eq.s32.totalorder %s16, 1
    %p128 = por %p126, %p127
    %p130 = scmp.ne.s32.totalorder %s113, %s129
    %p131 = scmp.eq.s32.totalorder %s16, 0
    %p132 = por %p130, %p131
    %p133 = scmp.le.s32.totalorder 1, %s10
    %p134 = scmp.lt.s32.totalorder %s10, 3
    %p135 = pnand %p133, %p134
    %p136 = pneg %p135
    // Predicated region
    $region9: #{tsp_monty_style_decoder_forward.11} parent=5 // pred_check
      _
    $region10: #{tsp_monty_style_decoder_forward.11} parent=5 // pred_check_branch
      %138 = sbr.rel (%p135) target = $region12
    $region11: #{tsp_monty_style_decoder_forward.11} parent=5 // pred_region
      %s139 = ssub.s32 %s10, 1
      // Predicated region
      $region13: #{tsp_monty_style_decoder_forward.11} parent=11 // pred_check
        %p140 = pneg %p57
      $region14: #{tsp_monty_style_decoder_forward.11} parent=11 // pred_check_branch
        %142 = sbr.rel (%p140) target = $region16
      $region15: #{tsp_monty_style_decoder_forward.11} parent=11 // pred_region
        _
      $region16: #{tsp_monty_style_decoder_forward.11} parent=11 // pred_fallthru
        _
      // Predicated region
      $region17: #{tsp_monty_style_decoder_forward.11} parent=11 // pred_check
        %p143 = pneg %p78
      $region18: #{tsp_monty_style_decoder_forward.11} parent=11 // pred_check_branch
        %145 = sbr.rel (%p143) target = $region20
      $region19: #{tsp_monty_style_decoder_forward.11} parent=11 // pred_region
        _
      $region20: #{tsp_monty_style_decoder_forward.11} parent=11 // pred_fallthru
        _
      // Predicated region
      $region21: #{tsp_monty_style_decoder_forward.11} parent=11 // pred_check
        %p146 = pneg %p99
      $region22: #{tsp_monty_style_decoder_forward.11} parent=11 // pred_check_branch
        %148 = sbr.rel (%p146) target = $region24
      $region23: #{tsp_monty_style_decoder_forward.11} parent=11 // pred_region
        _
      $region24: #{tsp_monty_style_decoder_forward.11} parent=11 // pred_fallthru
        _
    $region12: #{tsp_monty_style_decoder_forward.11} parent=5 // pred_fallthru
      _
    %p149 = scmp.lt.s32.totalorder %s10, 2
    // Predicated region
    $region25: #{tsp_monty_style_decoder_forward.11} parent=5 // pred_check
      %p150 = pneg %p149
    $region26: #{tsp_monty_style_decoder_forward.11} parent=5 // pred_check_branch
      %152 = sbr.rel (%p150) target = $region28
    $region27: #{tsp_monty_style_decoder_forward.11} parent=5 // pred_region
      // Predicated region
      $region29: #{tsp_monty_style_decoder_forward.11} parent=27 // pred_check
        %p153 = pneg %p30
      $region30: #{tsp_monty_style_decoder_forward.11} parent=27 // pred_check_branch
        %155 = sbr.rel (%p153) target = $region32
      $region31: #{tsp_monty_style_decoder_forward.11} parent=27 // pred_region
        %p156 = scmp.lt.s32.totalorder %s10, 1
        %s157 = scalar_select %p156, %s10, 1
        %s158 = smul.addr %s157, 8
        %s159 = scalar_lea.vmem %s0, %s158
      $region32: #{tsp_monty_style_decoder_forward.11} parent=27 // pred_fallthru
        _
    $region28: #{tsp_monty_style_decoder_forward.11} parent=5 // pred_fallthru
      _
    %p160 = scmp.le.s32.totalorder 1, %s10
    %p161 = scmp.lt.s32.totalorder %s10, 3
    %p162 = pnand %p160, %p161
    %p163 = pneg %p162
    // Predicated region
    $region33: #{tsp_monty_style_decoder_forward.11} parent=5 // pred_check
      _
    $region34: #{tsp_monty_style_decoder_forward.11} parent=5 // pred_check_branch
      %165 = sbr.rel (%p162) target = $region36
    $region35: #{tsp_monty_style_decoder_forward.11} parent=5 // pred_region
      %s166 = ssub.s32 %s10, 1
      %p167 = scmp.lt.s32.totalorder %s15, 1
      %s168 = scalar_select %p167, %s15, 1
      %s169 = smul.addr %s168, 8
      %s170 = scalar_lea.vmem %s0, %s169
      %p171 = pneg %p36
      %p172 = pneg %p33
      %p173 = pneg %p57
      %p174 = pneg %p54
      %p175 = pneg %p78
      %p176 = pneg %p75
      %p177 = pneg %p99
      %p178 = pneg %p96
      %p179 = pneg %p125
      %p180 = pneg %p122
      %p181 = scmp.lt.s32.totalorder %s15, 1
      %s182 = scalar_select %p181, %s15, 1
      %s183 = smul.addr %s182, 8
      %s184 = scalar_lea.vmem %s4, %s183
      %p185 = scmp.lt.s32.totalorder %s15, 1
      %s186 = scalar_select %p185, %s15, 1
      %s187 = smul.addr %s186, 8
      %s188 = scalar_lea.vmem %s0, %s187
      %p189 = scmp.lt.s32.totalorder %s15, 1
      %s190 = scalar_select %p189, %s15, 1
      %s191 = smul.addr %s190, 8
      %s192 = scalar_lea.vmem %s4, %s191
      %v193 = vld [vmem:[%s188] sm:$0xff]
      %v194 = vld [vmem:[%s1] sm:$0xff]
      %v195 = vld [vmem:[%s2] sm:$0x1]
      %v197 = vperm.slane %v195, 0
      %vm199 = vcmask 64512
      %v201 = vsel %vm199, %v193, 0
      %203 = vmatpush.msra.mxu0 0.0
      %204 = vmatpush.msra.mxu0 0.0
      %205 = vmatpush.msra.mxu0 0.0
      %206 = vmatpush.msra.mxu0 0.0
      %207 = vmatpush.msra.mxu0 0.0
      %208 = vmatpush.msra.mxu0 0.0
      %209 = vmatpush.msra.mxu0 0.0
      %210 = vmatpush.msra.mxu0 0.0
      %211 = vmatpush.msra.mxu0 0.0
      %212 = vmatpush.msra.mxu0 0.0
      %213 = vmatpush.msra.mxu0 0.0
      %214 = vmatpush.msra.mxu0 0.0
      %215 = vmatpush.msra.mxu0 0.0
      %216 = vmatpush.msra.mxu0 0.0
      %217 = vmatpush.msra.mxu0 0.0
      %218 = vmatpush.msra.mxu0 %v194
      %219 = vmatmul.f32.gmra.mxu0 %v201
      %v220 = vpop.f32.mrf.mxu0
      %v221 = vadd.f32 %v197, %v220
      %222 = vdwg.mxu0
      %v223 = vld [vmem:[%s3] sm:$0xff]
      %v224 = vadd.f32 %v221, %v223
      %225 = vst [vmem:[%s192] sm:$0xff] %v224
      %p226 = scmp.lt.s32.totalorder %s15, 1
      %s227 = scalar_select %p226, %s15, 1
      %s228 = smul.addr %s227, 8
      %s229 = scalar_lea.vmem %s4, %s228
      // Predicated region
      $region37: #{tsp_monty_style_decoder_forward.11} parent=35 // pred_check
        %p230 = pneg %p122
      $region38: #{tsp_monty_style_decoder_forward.11} parent=35 // pred_check_branch
        %232 = sbr.rel (%p230) target = $region40
      $region39: #{tsp_monty_style_decoder_forward.11} parent=35 // pred_region
        _
      $region40: #{tsp_monty_style_decoder_forward.11} parent=35 // pred_fallthru
        _
    $region36: #{tsp_monty_style_decoder_forward.11} parent=5 // pred_fallthru
      _
    %p233 = scmp.le.s32.totalorder 2, %s10
    // Predicated region
    $region41: #{tsp_monty_style_decoder_forward.11} parent=5 // pred_check
      %p234 = pneg %p233
    $region42: #{tsp_monty_style_decoder_forward.11} parent=5 // pred_check_branch
      %236 = sbr.rel (%p234) target = $region44
    $region43: #{tsp_monty_style_decoder_forward.11} parent=5 // pred_region
      %s237 = ssub.s32 %s10, 2
      // Predicated region
      $region45: #{tsp_monty_style_decoder_forward.11} parent=43 // pred_check
        %p238 = pneg %p128
      $region46: #{tsp_monty_style_decoder_forward.11} parent=43 // pred_check_branch
        %240 = sbr.rel (%p238) target = $region48
      $region47: #{tsp_monty_style_decoder_forward.11} parent=43 // pred_region
        %p241 = scmp.lt.s32.totalorder %s16, 1
        %s242 = scalar_select %p241, %s16, 1
        %s243 = smul.addr %s242, 8
        %s244 = scalar_lea.vmem %s4, %s243
      $region48: #{tsp_monty_style_decoder_forward.11} parent=43 // pred_fallthru
        _
    $region44: #{tsp_monty_style_decoder_forward.11} parent=5 // pred_fallthru
      _
  $region6: #{tsp_monty_style_decoder_forward.11} parent=0 // loop_footer
    %s14 = sadd.s32 1, %s10
  $region7: #{tsp_monty_style_decoder_forward.11} parent=0 // loop_footer_branch
    %9 = sbr.rel target = $region3
  $region8: #{tsp_monty_style_decoder_forward.11} parent=0 // loop_exit
    _

// kernel: tsp_monty_style_decoder_forward.14
$region0: #{tsp_monty_style_decoder_forward.14}
  #allocation0 [shape = 'u32[]', space=smem, size = 0x4, offset = 0x4, fixed_abs, tag = 'smem constant byte address 0x4 - core index']
  #allocation1 [shape = 'u32[72,128]{1,0:T(1,128)}', space=vmem, size = 0x9000, scoped, tag = 'internal scratch']
  %s0 = inlined_call_operand.vmem [shape: f32[16,128], index: 0, kind: input, shape index: {}]
  %s1 = inlined_call_operand.hbm [shape: f32[128,512], index: 1, kind: input, shape index: {}]
  %s2 = inlined_call_operand.vmem [shape: f32[1,512], index: 2, kind: input, shape index: {}]
  %s3 = inlined_call_operand.hbm [shape: f32[512,128], index: 3, kind: input, shape index: {}]
  %s4 = inlined_call_operand.vmem [shape: f32[1,128], index: 4, kind: input, shape index: {}]
  %s5 = inlined_call_operand.vmem [shape: f32[1,128], index: 5, kind: input, shape index: {}]
  %s6 = inlined_call_operand.vmem [shape: f32[1,128], index: 6, kind: input, shape index: {}]
  %s7 = inlined_call_operand.vmem [shape: f32[16,128], index: 7, kind: output, shape index: {}]
  %s8 = sld [smem:[#allocation0]]
  $region46: #{tsp_monty_style_decoder_forward.14} parent=0
    _
  %s10 = ssub.s32 1, %s8
  %s11 = scalar_select 0, %s10, %s8
  $region1: #{tsp_monty_style_decoder_forward.14} parent=0
    #allocation2 [shape = 'u8[262144]{0}', space=vmem, size = 0x40000, scoped, tag = 'input window, operand 1, single buffered']
    #allocation3 [shape = 's32[1]{0}', space=sflag, size = 0x4, scoped, tag = 'scoped memory for tsp_monty_style_decoder_forward.14']
    #allocation4 [shape = 'u8[262144]{0}', space=vmem, size = 0x40000, scoped, tag = 'input window, operand 3, single buffered']
    #allocation5 [shape = 's32[1]{0}', space=sflag, size = 0x4, scoped, tag = 'scoped memory for tsp_monty_style_decoder_forward.14']
    %12 = vsyncpa [#allocation3], 0
    %13 = vsyncpa [#allocation5], 0
    // Predicated region
    $region2: #{tsp_monty_style_decoder_forward.14} parent=1 // pred_check
      _
    $region3: #{tsp_monty_style_decoder_forward.14} parent=1 // pred_check_branch
      %15 = sbr.rel (0) target = $region5
    $region4: #{tsp_monty_style_decoder_forward.14} parent=1 // pred_region
      _
    $region5: #{tsp_monty_style_decoder_forward.14} parent=1 // pred_fallthru
      _
    // Predicated region
    $region6: #{tsp_monty_style_decoder_forward.14} parent=1 // pred_check
      _
    $region7: #{tsp_monty_style_decoder_forward.14} parent=1 // pred_check_branch
      %17 = sbr.rel (0) target = $region9
    $region8: #{tsp_monty_style_decoder_forward.14} parent=1 // pred_region
      %19 = vsyncadd [#allocation3], 0
      %s20 = sshll.u32 %s1, 4
      %s21 = int_to_ptr.hbm [resolvable:$true] %s20
      %s22 = sshll.u32 [#allocation2], 4
      %s23 = int_to_ptr.vmem [resolvable:$true] %s22
      %28 = dma.hbm_to_vmem [thread:$0]  %s21, 8192, %s23, [#allocation3], 512, 512, 32
    $region9: #{tsp_monty_style_decoder_forward.14} parent=1 // pred_fallthru
      _
    // Predicated region
    $region10: #{tsp_monty_style_decoder_forward.14} parent=1 // pred_check
      _
    $region11: #{tsp_monty_style_decoder_forward.14} parent=1 // pred_check_branch
      %30 = sbr.rel (0) target = $region13
    $region12: #{tsp_monty_style_decoder_forward.14} parent=1 // pred_region
      _
    $region13: #{tsp_monty_style_decoder_forward.14} parent=1 // pred_fallthru
      _
    // Predicated region
    $region14: #{tsp_monty_style_decoder_forward.14} parent=1 // pred_check
      _
    $region15: #{tsp_monty_style_decoder_forward.14} parent=1 // pred_check_branch
      %32 = sbr.rel (0) target = $region17
    $region16: #{tsp_monty_style_decoder_forward.14} parent=1 // pred_region
      %34 = vsyncadd [#allocation5], 0
      %s35 = sshll.u32 %s3, 4
      %s36 = int_to_ptr.hbm [resolvable:$true] %s35
      %s37 = sshll.u32 [#allocation4], 4
      %s38 = int_to_ptr.vmem [resolvable:$true] %s37
      %43 = dma.hbm_to_vmem [thread:$0]  %s36, 8192, %s38, [#allocation5], 128, 128, 8
    $region17: #{tsp_monty_style_decoder_forward.14} parent=1 // pred_fallthru
      _
    // Predicated region
    $region18: #{tsp_monty_style_decoder_forward.14} parent=1 // pred_check
      _
    $region19: #{tsp_monty_style_decoder_forward.14} parent=1 // pred_check_branch
      %45 = sbr.rel (0) target = $region21
    $region20: #{tsp_monty_style_decoder_forward.14} parent=1 // pred_region
      _
    $region21: #{tsp_monty_style_decoder_forward.14} parent=1 // pred_fallthru
      _
    // Predicated region
    $region22: #{tsp_monty_style_decoder_forward.14} parent=1 // pred_check
      _
    $region23: #{tsp_monty_style_decoder_forward.14} parent=1 // pred_check_branch
      %47 = sbr.rel (0) target = $region25
    $region24: #{tsp_monty_style_decoder_forward.14} parent=1 // pred_region
      _
    $region25: #{tsp_monty_style_decoder_forward.14} parent=1 // pred_fallthru
      _
    // Predicated region
    $region26: #{tsp_monty_style_decoder_forward.14} parent=1 // pred_check
      _
    $region27: #{tsp_monty_style_decoder_forward.14} parent=1 // pred_check_branch
      %49 = sbr.rel (0) target = $region29
    $region28: #{tsp_monty_style_decoder_forward.14} parent=1 // pred_region
      _
    $region29: #{tsp_monty_style_decoder_forward.14} parent=1 // pred_fallthru
      _
    // Predicated region
    $region30: #{tsp_monty_style_decoder_forward.14} parent=1 // pred_check
      _
    $region31: #{tsp_monty_style_decoder_forward.14} parent=1 // pred_check_branch
      %51 = sbr.rel (0) target = $region33
    $region32: #{tsp_monty_style_decoder_forward.14} parent=1 // pred_region
      %53 = dma.done [#allocation3], 8192
    $region33: #{tsp_monty_style_decoder_forward.14} parent=1 // pred_fallthru
      _
    // Predicated region
    $region34: #{tsp_monty_style_decoder_forward.14} parent=1 // pred_check
      _
    $region35: #{tsp_monty_style_decoder_forward.14} parent=1 // pred_check_branch
      %55 = sbr.rel (0) target = $region37
    $region36: #{tsp_monty_style_decoder_forward.14} parent=1 // pred_region
      %57 = dma.done [#allocation5], 8192
    $region37: #{tsp_monty_style_decoder_forward.14} parent=1 // pred_fallthru
      _
    %v58 = vld [vmem:[%s0] sm:$0xff]
    %v59 = vld [vmem:[%s0 + $0x8] sm:$0xff]
    %v60 = vld [vmem:[#allocation2] sm:$0xff]
    %v61 = vld [vmem:[#allocation2 + $0x8] sm:$0xff]
    %v62 = vld [vmem:[#allocation2 + $0x10] sm:$0xff]
    %v63 = vld [vmem:[#allocation2 + $0x18] sm:$0xff]
    %v64 = vld [vmem:[#allocation2 + $0x20] sm:$0xff]
    %v65 = vld [vmem:[#allocation2 + $0x28] sm:$0xff]
    %v66 = vld [vmem:[#allocation2 + $0x30] sm:$0xff]
    %v67 = vld [vmem:[#allocation2 + $0x38] sm:$0xff]
    %v68 = vld [vmem:[#allocation2 + $0x40] sm:$0xff]
    %v69 = vld [vmem:[#allocation2 + $0x48] sm:$0xff]
    %v70 = vld [vmem:[#allocation2 + $0x50] sm:$0xff]
    %v71 = vld [vmem:[#allocation2 + $0x58] sm:$0xff]
    %v72 = vld [vmem:[#allocation2 + $0x60] sm:$0xff]
    %v73 = vld [vmem:[#allocation2 + $0x68] sm:$0xff]
    %v74 = vld [vmem:[#allocation2 + $0x70] sm:$0xff]
    %v75 = vld [vmem:[#allocation2 + $0x78] sm:$0xff]
    %v76 = vld [vmem:[#allocation2 + $0x80] sm:$0xff]
    %v77 = vld [vmem:[#allocation2 + $0x88] sm:$0xff]
    %v78 = vld [vmem:[#allocation2 + $0x90] sm:$0xff]
    %v79 = vld [vmem:[#allocation2 + $0x98] sm:$0xff]
    %v80 = vld [vmem:[#allocation2 + $0xa0] sm:$0xff]
    %v81 = vld [vmem:[#allocation2 + $0xa8] sm:$0xff]
    %v82 = vld [vmem:[#allocation2 + $0xb0] sm:$0xff]
    %v83 = vld [vmem:[#allocation2 + $0xb8] sm:$0xff]
    %v84 = vld [vmem:[#allocation2 + $0xc0] sm:$0xff]
    %v85 = vld [vmem:[#allocation2 + $0xc8] sm:$0xff]
    %v86 = vld [vmem:[#allocation2 + $0xd0] sm:$0xff]
    %v87 = vld [vmem:[#allocation2 + $0xd8] sm:$0xff]
    %v88 = vld [vmem:[#allocation2 + $0xe0] sm:$0xff]
    %v89 = vld [vmem:[#allocation2 + $0xe8] sm:$0xff]
    %v90 = vld [vmem:[#allocation2 + $0xf0] sm:$0xff]
    %v91 = vld [vmem:[#allocation2 + $0xf8] sm:$0xff]
    %v92 = vld [vmem:[#allocation2 + $0x100] sm:$0xff]
    %v93 = vld [vmem:[#allocation2 + $0x108] sm:$0xff]
    %v94 = vld [vmem:[#allocation2 + $0x110] sm:$0xff]
    %v95 = vld [vmem:[#allocation2 + $0x118] sm:$0xff]
    %v96 = vld [vmem:[#allocation2 + $0x120] sm:$0xff]
    %v97 = vld [vmem:[#allocation2 + $0x128] sm:$0xff]
    %v98 = vld [vmem:[#allocation2 + $0x130] sm:$0xff]
    %v99 = vld [vmem:[#allocation2 + $0x138] sm:$0xff]
    %v100 = vld [vmem:[#allocation2 + $0x140] sm:$0xff]
    %v101 = vld [vmem:[#allocation2 + $0x148] sm:$0xff]
    %v102 = vld [vmem:[#allocation2 + $0x150] sm:$0xff]
    %v103 = vld [vmem:[#allocation2 + $0x158] sm:$0xff]
    %v104 = vld [vmem:[#allocation2 + $0x160] sm:$0xff]
    %v105 = vld [vmem:[#allocation2 + $0x168] sm:$0xff]
    %v106 = vld [vmem:[#allocation2 + $0x170] sm:$0xff]
    %v107 = vld [vmem:[#allocation2 + $0x178] sm:$0xff]
    %v108 = vld [vmem:[#allocation2 + $0x180] sm:$0xff]
    %v109 = vld [vmem:[#allocation2 + $0x188] sm:$0xff]
    %v110 = vld [vmem:[#allocation2 + $0x190] sm:$0xff]
    %v111 = vld [vmem:[#allocation2 + $0x198] sm:$0xff]
    %v112 = vld [vmem:[#allocation2 + $0x1a0] sm:$0xff]
    %v113 = vld [vmem:[#allocation2 + $0x1a8] sm:$0xff]
    %v114 = vld [vmem:[#allocation2 + $0x1b0] sm:$0xff]
    %v115 = vld [vmem:[#allocation2 + $0x1b8] sm:$0xff]
    %v116 = vld [vmem:[#allocation2 + $0x1c0] sm:$0xff]
    %v117 = vld [vmem:[#allocation2 + $0x1c8] sm:$0xff]
    %v118 = vld [vmem:[#allocation2 + $0x1d0] sm:$0xff]
    %v119 = vld [vmem:[#allocation2 + $0x1d8] sm:$0xff]
    %v120 = vld [vmem:[#allocation2 + $0x1e0] sm:$0xff]
    %v121 = vld [vmem:[#allocation2 + $0x1e8] sm:$0xff]
    %v122 = vld [vmem:[#allocation2 + $0x1f0] sm:$0xff]
    %v123 = vld [vmem:[#allocation2 + $0x1f8] sm:$0xff]
    %v124 = vld [vmem:[%s2] sm:$0xf]
    %v126 = vperm.slane %v124, 0
    %v127 = vperm.slane %v124, 1
    %v128 = vperm.slane %v124, 2
    %v129 = vperm.slane %v124, 3
    %134 = vmatpush.msra.mxu0 %v120
    %135 = vmatpush.msra.mxu0 %v116
    %136 = vmatpush.msra.mxu0 %v112
    %137 = vmatpush.msra.mxu0 %v108
    %138 = vmatpush.msra.mxu0 %v104
    %139 = vmatpush.msra.mxu0 %v100
    %140 = vmatpush.msra.mxu0 %v96
    %141 = vmatpush.msra.mxu0 %v92
    %142 = vmatpush.msra.mxu0 %v88
    %143 = vmatpush.msra.mxu0 %v84
    %144 = vmatpush.msra.mxu0 %v80
    %145 = vmatpush.msra.mxu0 %v76
    %146 = vmatpush.msra.mxu0 %v72
    %147 = vmatpush.msra.mxu0 %v68
    %148 = vmatpush.msra.mxu0 %v64
    %149 = vmatpush.msra.mxu0 %v60
    %150 = vmatmul.f32.gmra.mxu0 %v58
    %v151 = vpop.f32.mrf.mxu0
    %v152 = vadd.f32 %v126, %v151
    %153 = vmatmul.f32.gmra.mxu0 %v59
    %v154 = vpop.f32.mrf.mxu0
    %v155 = vadd.f32 %v126, %v154
    %156 = vdwg.mxu0
    %157 = vmatpush.msra.mxu0 %v121
    %158 = vmatpush.msra.mxu0 %v117
    %159 = vmatpush.msra.mxu0 %v113
    %160 = vmatpush.msra.mxu0 %v109
    %161 = vmatpush.msra.mxu0 %v105
    %162 = vmatpush.msra.mxu0 %v101
    %163 = vmatpush.msra.mxu0 %v97
    %164 = vmatpush.msra.mxu0 %v93
    %165 = vmatpush.msra.mxu0 %v89
    %166 = vmatpush.msra.mxu0 %v85
    %167 = vmatpush.msra.mxu0 %v81
    %168 = vmatpush.msra.mxu0 %v77
    %169 = vmatpush.msra.mxu0 %v73
    %170 = vmatpush.msra.mxu0 %v69
    %171 = vmatpush.msra.mxu0 %v65
    %172 = vmatpush.msra.mxu0 %v61
    %173 = vmatmul.f32.gmra.mxu0 %v58
    %v174 = vpop.f32.mrf.mxu0
    %v175 = vadd.f32 %v127, %v174
    %176 = vmatmul.f32.gmra.mxu0 %v59
    %v177 = vpop.f32.mrf.mxu0
    %v178 = vadd.f32 %v127, %v177
    %179 = vdwg.mxu0
    %180 = vmatpush.msra.mxu0 %v122
    %181 = vmatpush.msra.mxu0 %v118
    %182 = vmatpush.msra.mxu0 %v114
    %183 = vmatpush.msra.mxu0 %v110
    %184 = vmatpush.msra.mxu0 %v106
    %185 = vmatpush.msra.mxu0 %v102
    %186 = vmatpush.msra.mxu0 %v98
    %187 = vmatpush.msra.mxu0 %v94
    %188 = vmatpush.msra.mxu0 %v90
    %189 = vmatpush.msra.mxu0 %v86
    %190 = vmatpush.msra.mxu0 %v82
    %191 = vmatpush.msra.mxu0 %v78
    %192 = vmatpush.msra.mxu0 %v74
    %193 = vmatpush.msra.mxu0 %v70
    %194 = vmatpush.msra.mxu0 %v66
    %195 = vmatpush.msra.mxu0 %v62
    %196 = vmatmul.f32.gmra.mxu0 %v58
    %v197 = vpop.f32.mrf.mxu0
    %v198 = vadd.f32 %v128, %v197
    %199 = vmatmul.f32.gmra.mxu0 %v59
    %v200 = vpop.f32.mrf.mxu0
    %v201 = vadd.f32 %v128, %v200
    %202 = vdwg.mxu0
    %203 = vmatpush.msra.mxu0 %v123
    %204 = vmatpush.msra.mxu0 %v119
    %205 = vmatpush.msra.mxu0 %v115
    %206 = vmatpush.msra.mxu0 %v111
    %207 = vmatpush.msra.mxu0 %v107
    %208 = vmatpush.msra.mxu0 %v103
    %209 = vmatpush.msra.mxu0 %v99
    %210 = vmatpush.msra.mxu0 %v95
    %211 = vmatpush.msra.mxu0 %v91
    %212 = vmatpush.msra.mxu0 %v87
    %213 = vmatpush.msra.mxu0 %v83
    %214 = vmatpush.msra.mxu0 %v79
    %215 = vmatpush.msra.mxu0 %v75
    %216 = vmatpush.msra.mxu0 %v71
    %217 = vmatpush.msra.mxu0 %v67
    %218 = vmatpush.msra.mxu0 %v63
    %219 = vmatmul.f32.gmra.mxu0 %v58
    %v220 = vpop.f32.mrf.mxu0
    %v221 = vadd.f32 %v129, %v220
    %222 = vmatmul.f32.gmra.mxu0 %v59
    %v223 = vpop.f32.mrf.mxu0
    %v224 = vadd.f32 %v129, %v223
    %225 = vdwg.mxu0
    %v226 = vmax.f32 %v152, 0.0
    %v227 = vmax.f32 %v175, 0.0
    %v228 = vmax.f32 %v198, 0.0
    %v229 = vmax.f32 %v221, 0.0
    %v230 = vmax.f32 %v155, 0.0
    %v231 = vmax.f32 %v178, 0.0
    %v232 = vmax.f32 %v201, 0.0
    %v233 = vmax.f32 %v224, 0.0
    %v234 = vld [vmem:[#allocation4] sm:$0xff]
    %v235 = vld [vmem:[#allocation4 + $0x8] sm:$0xff]
    %v236 = vld [vmem:[#allocation4 + $0x10] sm:$0xff]
    %v237 = vld [vmem:[#allocation4 + $0x18] sm:$0xff]
    %v238 = vld [vmem:[#allocation4 + $0x20] sm:$0xff]
    %v239 = vld [vmem:[#allocation4 + $0x28] sm:$0xff]
    %v240 = vld [vmem:[#allocation4 + $0x30] sm:$0xff]
    %v241 = vld [vmem:[#allocation4 + $0x38] sm:$0xff]
    %v242 = vld [vmem:[#allocation4 + $0x40] sm:$0xff]
    %v243 = vld [vmem:[#allocation4 + $0x48] sm:$0xff]
    %v244 = vld [vmem:[#allocation4 + $0x50] sm:$0xff]
    %v245 = vld [vmem:[#allocation4 + $0x58] sm:$0xff]
    %v246 = vld [vmem:[#allocation4 + $0x60] sm:$0xff]
    %v247 = vld [vmem:[#allocation4 + $0x68] sm:$0xff]
    %v248 = vld [vmem:[#allocation4 + $0x70] sm:$0xff]
    %v249 = vld [vmem:[#allocation4 + $0x78] sm:$0xff]
    %v250 = vld [vmem:[#allocation4 + $0x80] sm:$0xff]
    %v251 = vld [vmem:[#allocation4 + $0x88] sm:$0xff]
    %v252 = vld [vmem:[#allocation4 + $0x90] sm:$0xff]
    %v253 = vld [vmem:[#allocation4 + $0x98] sm:$0xff]
    %v254 = vld [vmem:[#allocation4 + $0xa0] sm:$0xff]
    %v255 = vld [vmem:[#allocation4 + $0xa8] sm:$0xff]
    %v256 = vld [vmem:[#allocation4 + $0xb0] sm:$0xff]
    %v257 = vld [vmem:[#allocation4 + $0xb8] sm:$0xff]
    %v258 = vld [vmem:[#allocation4 + $0xc0] sm:$0xff]
    %v259 = vld [vmem:[#allocation4 + $0xc8] sm:$0xff]
    %v260 = vld [vmem:[#allocation4 + $0xd0] sm:$0xff]
    %v261 = vld [vmem:[#allocation4 + $0xd8] sm:$0xff]
    %v262 = vld [vmem:[#allocation4 + $0xe0] sm:$0xff]
    %v263 = vld [vmem:[#allocation4 + $0xe8] sm:$0xff]
    %v264 = vld [vmem:[#allocation4 + $0xf0] sm:$0xff]
    %v265 = vld [vmem:[#allocation4 + $0xf8] sm:$0xff]
    %v266 = vld [vmem:[#allocation4 + $0x100] sm:$0xff]
    %v267 = vld [vmem:[#allocation4 + $0x108] sm:$0xff]
    %v268 = vld [vmem:[#allocation4 + $0x110] sm:$0xff]
    %v269 = vld [vmem:[#allocation4 + $0x118] sm:$0xff]
    %v270 = vld [vmem:[#allocation4 + $0x120] sm:$0xff]
    %v271 = vld [vmem:[#allocation4 + $0x128] sm:$0xff]
    %v272 = vld [vmem:[#allocation4 + $0x130] sm:$0xff]
    %v273 = vld [vmem:[#allocation4 + $0x138] sm:$0xff]
    %v274 = vld [vmem:[#allocation4 + $0x140] sm:$0xff]
    %v275 = vld [vmem:[#allocation4 + $0x148] sm:$0xff]
    %v276 = vld [vmem:[#allocation4 + $0x150] sm:$0xff]
    %v277 = vld [vmem:[#allocation4 + $0x158] sm:$0xff]
    %v278 = vld [vmem:[#allocation4 + $0x160] sm:$0xff]
    %v279 = vld [vmem:[#allocation4 + $0x168] sm:$0xff]
    %v280 = vld [vmem:[#allocation4 + $0x170] sm:$0xff]
    %v281 = vld [vmem:[#allocation4 + $0x178] sm:$0xff]
    %v282 = vld [vmem:[#allocation4 + $0x180] sm:$0xff]
    %v283 = vld [vmem:[#allocation4 + $0x188] sm:$0xff]
    %v284 = vld [vmem:[#allocation4 + $0x190] sm:$0xff]
    %v285 = vld [vmem:[#allocation4 + $0x198] sm:$0xff]
    %v286 = vld [vmem:[#allocation4 + $0x1a0] sm:$0xff]
    %v287 = vld [vmem:[#allocation4 + $0x1a8] sm:$0xff]
    %v288 = vld [vmem:[#allocation4 + $0x1b0] sm:$0xff]
    %v289 = vld [vmem:[#allocation4 + $0x1b8] sm:$0xff]
    %v290 = vld [vmem:[#allocation4 + $0x1c0] sm:$0xff]
    %v291 = vld [vmem:[#allocation4 + $0x1c8] sm:$0xff]
    %v292 = vld [vmem:[#allocation4 + $0x1d0] sm:$0xff]
    %v293 = vld [vmem:[#allocation4 + $0x1d8] sm:$0xff]
    %v294 = vld [vmem:[#allocation4 + $0x1e0] sm:$0xff]
    %v295 = vld [vmem:[#allocation4 + $0x1e8] sm:$0xff]
    %v296 = vld [vmem:[#allocation4 + $0x1f0] sm:$0xff]
    %v297 = vld [vmem:[#allocation4 + $0x1f8] sm:$0xff]
    %v298 = vld [vmem:[%s4] sm:$0x1]
    %v300 = vperm.slane %v298, 0
    %302 = vmatpush.msra.mxu0 %v249
    %303 = vmatpush.msra.mxu0 %v248
    %304 = vmatpush.msra.mxu0 %v247
    %305 = vmatpush.msra.mxu0 %v246
    %306 = vmatpush.msra.mxu0 %v245
    %307 = vmatpush.msra.mxu0 %v244
    %308 = vmatpush.msra.mxu0 %v243
    %309 = vmatpush.msra.mxu0 %v242
    %310 = vmatpush.msra.mxu0 %v241
    %311 = vmatpush.msra.mxu0 %v240
    %312 = vmatpush.msra.mxu0 %v239
    %313 = vmatpush.msra.mxu0 %v238
    %314 = vmatpush.msra.mxu0 %v237
    %315 = vmatpush.msra.mxu0 %v236
    %316 = vmatpush.msra.mxu0 %v235
    %317 = vmatpush.msra.mxu0 %v234
    %318 = vmatmul.f32.gmra.mxu0 %v226
    %v319 = vpop.f32.mrf.mxu0
    %v320 = vadd.f32 %v300, %v319
    %321 = vmatmul.f32.gmra.mxu0 %v230
    %v322 = vpop.f32.mrf.mxu0
    %v323 = vadd.f32 %v300, %v322
    %324 = vdwg.mxu0
    %325 = vmatpush.msra.mxu0 %v265
    %326 = vmatpush.msra.mxu0 %v264
    %327 = vmatpush.msra.mxu0 %v263
    %328 = vmatpush.msra.mxu0 %v262
    %329 = vmatpush.msra.mxu0 %v261
    %330 = vmatpush.msra.mxu0 %v260
    %331 = vmatpush.msra.mxu0 %v259
    %332 = vmatpush.msra.mxu0 %v258
    %333 = vmatpush.msra.mxu0 %v257
    %334 = vmatpush.msra.mxu0 %v256
    %335 = vmatpush.msra.mxu0 %v255
    %336 = vmatpush.msra.mxu0 %v254
    %337 = vmatpush.msra.mxu0 %v253
    %338 = vmatpush.msra.mxu0 %v252
    %339 = vmatpush.msra.mxu0 %v251
    %340 = vmatpush.msra.mxu0 %v250
    %341 = vmatmul.f32.gmra.mxu0 %v227
    %v342 = vpop.f32.mrf.mxu0
    %v343 = vadd.f32 %v320, %v342
    %344 = vmatmul.f32.gmra.mxu0 %v231
    %v345 = vpop.f32.mrf.mxu0
    %v346 = vadd.f32 %v323, %v345
    %347 = vdwg.mxu0
    %348 = vmatpush.msra.mxu0 %v281
    %349 = vmatpush.msra.mxu0 %v280
    %350 = vmatpush.msra.mxu0 %v279
    %351 = vmatpush.msra.mxu0 %v278
    %352 = vmatpush.msra.mxu0 %v277
    %353 = vmatpush.msra.mxu0 %v276
    %354 = vmatpush.msra.mxu0 %v275
    %355 = vmatpush.msra.mxu0 %v274
    %356 = vmatpush.msra.mxu0 %v273
    %357 = vmatpush.msra.mxu0 %v272
    %358 = vmatpush.msra.mxu0 %v271
    %359 = vmatpush.msra.mxu0 %v270
    %360 = vmatpush.msra.mxu0 %v269
    %361 = vmatpush.msra.mxu0 %v268
    %362 = vmatpush.msra.mxu0 %v267
    %363 = vmatpush.msra.mxu0 %v266
    %364 = vmatmul.f32.gmra.mxu0 %v228
    %v365 = vpop.f32.mrf.mxu0
    %v366 = vadd.f32 %v343, %v365
    %367 = vmatmul.f32.gmra.mxu0 %v232
    %v368 = vpop.f32.mrf.mxu0
    %v369 = vadd.f32 %v346, %v368
    %370 = vdwg.mxu0
    %371 = vmatpush.msra.mxu0 %v297
    %372 = vmatpush.msra.mxu0 %v296
    %373 = vmatpush.msra.mxu0 %v295
    %374 = vmatpush.msra.mxu0 %v294
    %375 = vmatpush.msra.mxu0 %v293
    %376 = vmatpush.msra.mxu0 %v292
    %377 = vmatpush.msra.mxu0 %v291
    %378 = vmatpush.msra.mxu0 %v290
    %379 = vmatpush.msra.mxu0 %v289
    %380 = vmatpush.msra.mxu0 %v288
    %381 = vmatpush.msra.mxu0 %v287
    %382 = vmatpush.msra.mxu0 %v286
    %383 = vmatpush.msra.mxu0 %v285
    %384 = vmatpush.msra.mxu0 %v284
    %385 = vmatpush.msra.mxu0 %v283
    %386 = vmatpush.msra.mxu0 %v282
    %387 = vmatmul.f32.gmra.mxu0 %v229
    %v388 = vpop.f32.mrf.mxu0
    %v389 = vadd.f32 %v366, %v388
    %390 = vmatmul.f32.gmra.mxu0 %v233
    %v391 = vpop.f32.mrf.mxu0
    %v392 = vadd.f32 %v369, %v391
    %393 = vdwg.mxu0
    %v394 = vadd.f32 %v389, %v58
    %v395 = vadd.f32 %v392, %v59
    %396 = vadd.xlane.f32.xlu0 %v394
    %v397 = vpop.xlane.xlu0 %396
    %398 = vadd.xlane.f32.xlu0 %v395
    %v399 = vpop.xlane.xlu0 %398
    %v400 = vrcp.pop 128.0
    %v401 = vmul.f32 128.0, %v400
    %v402 = vsub.f32 1.0, %v401
    %v403 = vmul.f32 %v400, %v402
    %v404 = vadd.f32 %v400, %v403
    %vm405 = vweird.f32 %v400
    %v406 = vsel %vm405, %v400, %v404
    %v407 = vmul.f32 %v397, %v406
    %v408 = vmul.f32 %v399, %v406
    %v409 = vsub.f32 %v394, %v407
    %v410 = vsub.f32 %v395, %v408
    %v411 = vmul.f32 %v409, %v409
    %v412 = vmul.f32 %v410, %v410
    %413 = vadd.xlane.f32.xlu0 %v411
    %v414 = vpop.xlane.xlu0 %413
    %415 = vadd.xlane.f32.xlu0 %v412
    %v416 = vpop.xlane.xlu0 %415
    %v417 = vmul.f32 %v414, %v406
    %v418 = vmul.f32 %v416, %v406
    %v419 = vadd.f32 %v417, 1e-05
    %v420 = vadd.f32 %v418, 1e-05
    %v421 = vrsqrt.pop %v419
    %v422 = vmul.f32 %v421, %v419
    %v423 = vmul.f32 %v422, %v421
    %v424 = vmul.f32 0.5, %v423
    %v425 = vsub.f32 1.5, %v424
    %v426 = vmul.f32 %v421, %v425
    %vm427 = vweird.f32 %v419
    %vm428 = vweird.f32 %v421
    %vm429 = vmor %vm427, %vm428
    %v430 = vsel %vm429, %v421, %v426
    %v431 = vrsqrt.pop %v420
    %v432 = vmul.f32 %v431, %v420
    %v433 = vmul.f32 %v432, %v431
    %v434 = vmul.f32 0.5, %v433
    %v435 = vsub.f32 1.5, %v434
    %v436 = vmul.f32 %v431, %v435
    %vm437 = vweird.f32 %v420
    %vm438 = vweird.f32 %v431
    %vm439 = vmor %vm437, %vm438
    %v440 = vsel %vm439, %v431, %v436
    %v441 = vmul.f32 %v409, %v430
    %v442 = vmul.f32 %v410, %v440
    %v443 = vld [vmem:[%s5] sm:$0x1]
    %v445 = vperm.slane %v443, 0
    %v447 = vmul.f32 %v441, %v445
    %v448 = vmul.f32 %v442, %v445
    %v449 = vld [vmem:[%s6] sm:$0x1]
    %v451 = vperm.slane %v449, 0
    %v453 = vadd.f32 %v447, %v451
    %v454 = vadd.f32 %v448, %v451
    %455 = vst [vmem:[%s7] sm:$0xff] %v453
    %456 = vst [vmem:[%s7 + $0x8] sm:$0xff] %v454
    // Predicated region
    $region38: #{tsp_monty_style_decoder_forward.14} parent=1 // pred_check
      _
    $region39: #{tsp_monty_style_decoder_forward.14} parent=1 // pred_check_branch
      %458 = sbr.rel (0) target = $region41
    $region40: #{tsp_monty_style_decoder_forward.14} parent=1 // pred_region
      _
    $region41: #{tsp_monty_style_decoder_forward.14} parent=1 // pred_fallthru
      _
    // Predicated region
    $region42: #{tsp_monty_style_decoder_forward.14} parent=1 // pred_check
      _
    $region43: #{tsp_monty_style_decoder_forward.14} parent=1 // pred_check_branch
      %460 = sbr.rel (0) target = $region45
    $region44: #{tsp_monty_style_decoder_forward.14} parent=1 // pred_region
      _
    $region45: #{tsp_monty_style_decoder_forward.14} parent=1 // pred_fallthru
      _
    %461 = vsyncpa [#allocation3], 1
    %462 = vsyncpa [#allocation5], 1

// kernel: tsp_monty_style_decoder_forward.12
$region0: #{tsp_monty_style_decoder_forward.12}
  #allocation0 [shape = 'u32[]', space=smem, size = 0x4, offset = 0x4, fixed_abs, tag = 'smem constant byte address 0x4 - core index']
  #allocation1 [shape = 'u32[72,128]{1,0:T(1,128)}', space=vmem, size = 0x9000, scoped, tag = 'internal scratch']
  %s0 = inlined_call_operand.vmem [shape: f32[2,8,128], index: 0, kind: input, shape index: {}, may-alias: {0,1}]
  %s1 = inlined_call_operand.vmem [shape: f32[2,8,128], index: 1, kind: input, shape index: {}, may-alias: {0,1}]
  %s2 = inlined_call_operand.vmem [shape: f32[2,1,8], index: 2, kind: input, shape index: {}]
  %s3 = inlined_call_operand.hbm [shape: f32[128,128], index: 3, kind: input, shape index: {}]
  %s4 = inlined_call_operand.vmem [shape: f32[1,128], index: 4, kind: input, shape index: {}]
  %s5 = inlined_call_operand.hbm [shape: f32[128,256], index: 5, kind: input, shape index: {}]
  %s6 = inlined_call_operand.vmem [shape: f32[1,256], index: 6, kind: input, shape index: {}]
  %s7 = inlined_call_operand.hbm [shape: f32[128,128], index: 7, kind: input, shape index: {}]
  %s8 = inlined_call_operand.vmem [shape: f32[1,128], index: 8, kind: input, shape index: {}]
  %s9 = inlined_call_operand.vmem [shape: f32[1,128], index: 9, kind: input, shape index: {}]
  %s10 = inlined_call_operand.vmem [shape: f32[1,128], index: 10, kind: input, shape index: {}]
  %s11 = inlined_call_operand.vmem [shape: f32[2,8,128], index: 11, kind: output, shape index: {}]
  %s12 = sld [smem:[#allocation0]]
  $region89: #{tsp_monty_style_decoder_forward.12} parent=0
    _
  %s14 = ssub.s32 1, %s12
  %s15 = scalar_select 0, %s14, %s12
  $region1: #{tsp_monty_style_decoder_forward.12} parent=0
    #allocation2 [shape = 'u8[65536]{0}', space=vmem, size = 0x10000, scoped, tag = 'input window, operand 3, single buffered']
    #allocation3 [shape = 's32[2]{0}', space=sflag, size = 0x8, scoped, tag = 'scoped memory for tsp_monty_style_decoder_forward.12']
    #allocation4 [shape = 'u8[131072]{0}', space=vmem, size = 0x20000, scoped, tag = 'input window, operand 5, single buffered']
    #allocation5 [shape = 's32[1]{0}', space=sflag, size = 0x4, scoped, tag = 'scoped memory for tsp_monty_style_decoder_forward.12']
    #allocation6 [shape = 'u8[65536]{0}', space=vmem, size = 0x10000, scoped, tag = 'input window, operand 7, single buffered']
    %16 = vsyncpa [#allocation3], 0
    %17 = vsyncpa [#allocation5], 0
    loop: start=0, step=1, limit=4
    $region2: #{tsp_monty_style_decoder_forward.12} parent=1 // loop_pre_header
      _
    $region3: #{tsp_monty_style_decoder_forward.12} parent=1 // loop_header
      %s19 = sphi 0, %s23
      %p20 = scmp.ge.s32.totalorder %s19, 4
      %s29 = sphi 0, %s31
      %s32 = sphi 0, %s29
      %s33 = sphi 0, %s32
      %s49 = sphi 0, %s33
      %s55 = sphi 0, %s57
      %s58 = sphi 0, %s55
      %s59 = sphi 0, %s58
      %s75 = sphi 0, %s59
      %s81 = sphi 0, %s83
      %s84 = sphi 0, %s81
      %s85 = sphi 0, %s84
      %s101 = sphi 0, %s85
      %s105 = sphi 0, %s105
      %s107 = sphi 0, %s105
      %s108 = sphi 0, %s107
      %s122 = sphi 0, %s108
      %s126 = sphi 0, %s126
      %s128 = sphi 0, %s126
      %s129 = sphi 0, %s128
      %s143 = sphi 0, %s129
      %s147 = sphi 0, %s147
      %s149 = sphi 0, %s147
      %s150 = sphi 0, %s149
      %s164 = sphi 0, %s150
      %s168 = sphi 0, %s168
      %s170 = sphi 0, %s168
      %s171 = sphi 0, %s170
      %s185 = sphi 0, %s171
      %s189 = sphi 0, %s189
      %s191 = sphi 0, %s189
      %s192 = sphi 0, %s191
      %s206 = sphi 0, %s192
      %s210 = sphi 0, %s210
      %s212 = sphi 0, %s210
      %s213 = sphi 0, %s212
      %s227 = sphi 0, %s213
      %s231 = sphi 0, %s231
      %s233 = sphi 0, %s231
      %s234 = sphi 0, %s233
      %s248 = sphi 0, %s234
      %s252 = sphi 0, %s252
      %s254 = sphi 0, %s252
      %s255 = sphi 0, %s254
      %s269 = sphi 0, %s255
      %s275 = sphi 0, %s277
      %s278 = sphi 0, %s275
      %s279 = sphi 0, %s278
      %s295 = sphi 0, %s279
    $region4: #{tsp_monty_style_decoder_forward.12} parent=1 // loop_header_branch
      %22 = sbr.rel (%p20) target = $region8
    $region5: #{tsp_monty_style_decoder_forward.12} parent=1 // loop_body
      %s24 = ssub.s32 %s19, 1
      %s25 = ssub.s32 %s19, 2
      %s26 = sadd.s32 %s19, 1
      %s27 = ssub.s32 %s19, %s26
      %p28 = scmp.eq.s32.totalorder %s27, 0
      %s30 = sadd.s32 %s29, 1
      %s31 = scalar_select %p28, %s29, %s30
      %p34 = pneg %p28
      %p35 = scmp.eq.s32.totalorder %s19, 1
      %p36 = por %p34, %p35
      %p37 = scmp.ne.s32.totalorder %s29, %s32
      %p38 = scmp.eq.s32.totalorder %s19, 0
      %p39 = por %p37, %p38
      %p40 = scmp.ne.s32.totalorder %s29, %s32
      %p41 = scmp.eq.s32.totalorder %s24, 1
      %p42 = por %p40, %p41
      %p43 = scmp.ne.s32.totalorder %s32, %s33
      %p44 = scmp.eq.s32.totalorder %s24, 0
      %p45 = por %p43, %p44
      %p46 = scmp.ne.s32.totalorder %s32, %s33
      %p47 = scmp.eq.s32.totalorder %s25, 1
      %p48 = por %p46, %p47
      %p50 = scmp.ne.s32.totalorder %s33, %s49
      %p51 = scmp.eq.s32.totalorder %s25, 0
      %p52 = por %p50, %p51
      %s53 = ssub.s32 %s19, %s26
      %p54 = scmp.eq.s32.totalorder %s53, 0
      %s56 = sadd.s32 %s55, 1
      %s57 = scalar_select %p54, %s55, %s56
      %p60 = pneg %p54
      %p61 = scmp.eq.s32.totalorder %s19, 1
      %p62 = por %p60, %p61
      %p63 = scmp.ne.s32.totalorder %s55, %s58
      %p64 = scmp.eq.s32.totalorder %s19, 0
      %p65 = por %p63, %p64
      %p66 = scmp.ne.s32.totalorder %s55, %s58
      %p67 = scmp.eq.s32.totalorder %s24, 1
      %p68 = por %p66, %p67
      %p69 = scmp.ne.s32.totalorder %s58, %s59
      %p70 = scmp.eq.s32.totalorder %s24, 0
      %p71 = por %p69, %p70
      %p72 = scmp.ne.s32.totalorder %s58, %s59
      %p73 = scmp.eq.s32.totalorder %s25, 1
      %p74 = por %p72, %p73
      %p76 = scmp.ne.s32.totalorder %s59, %s75
      %p77 = scmp.eq.s32.totalorder %s25, 0
      %p78 = por %p76, %p77
      %s79 = ssub.s32 %s19, %s26
      %p80 = scmp.eq.s32.totalorder %s79, 0
      %s82 = sadd.s32 %s81, 1
      %s83 = scalar_select %p80, %s81, %s82
      %p86 = pneg %p80
      %p87 = scmp.eq.s32.totalorder %s19, 1
      %p88 = por %p86, %p87
      %p89 = scmp.ne.s32.totalorder %s81, %s84
      %p90 = scmp.eq.s32.totalorder %s19, 0
      %p91 = por %p89, %p90
      %p92 = scmp.ne.s32.totalorder %s81, %s84
      %p93 = scmp.eq.s32.totalorder %s24, 1
      %p94 = por %p92, %p93
      %p95 = scmp.ne.s32.totalorder %s84, %s85
      %p96 = scmp.eq.s32.totalorder %s24, 0
      %p97 = por %p95, %p96
      %p98 = scmp.ne.s32.totalorder %s84, %s85
      %p99 = scmp.eq.s32.totalorder %s25, 1
      %p100 = por %p98, %p99
      %p102 = scmp.ne.s32.totalorder %s85, %s101
      %p103 = scmp.eq.s32.totalorder %s25, 0
      %p104 = por %p102, %p103
      %s106 = sadd.s32 %s105, 1
      %p109 = scmp.eq.s32.totalorder %s19, 1
      %p110 = scmp.ne.s32.totalorder %s105, %s107
      %p111 = scmp.eq.s32.totalorder %s19, 0
      %p112 = por %p110, %p111
      %p113 = scmp.ne.s32.totalorder %s105, %s107
      %p114 = scmp.eq.s32.totalorder %s24, 1
      %p115 = por %p113, %p114
      %p116 = scmp.ne.s32.totalorder %s107, %s108
      %p117 = scmp.eq.s32.totalorder %s24, 0
      %p118 = por %p116, %p117
      %p119 = scmp.ne.s32.totalorder %s107, %s108
      %p120 = scmp.eq.s32.totalorder %s25, 1
      %p121 = por %p119, %p120
      %p123 = scmp.ne.s32.totalorder %s108, %s122
      %p124 = scmp.eq.s32.totalorder %s25, 0
      %p125 = por %p123, %p124
      %s127 = sadd.s32 %s126, 1
      %p130 = scmp.eq.s32.totalorder %s19, 1
      %p131 = scmp.ne.s32.totalorder %s126, %s128
      %p132 = scmp.eq.s32.totalorder %s19, 0
      %p133 = por %p131, %p132
      %p134 = scmp.ne.s32.totalorder %s126, %s128
      %p135 = scmp.eq.s32.totalorder %s24, 1
      %p136 = por %p134, %p135
      %p137 = scmp.ne.s32.totalorder %s128, %s129
      %p138 = scmp.eq.s32.totalorder %s24, 0
      %p139 = por %p137, %p138
      %p140 = scmp.ne.s32.totalorder %s128, %s129
      %p141 = scmp.eq.s32.totalorder %s25, 1
      %p142 = por %p140, %p141
      %p144 = scmp.ne.s32.totalorder %s129, %s143
      %p145 = scmp.eq.s32.totalorder %s25, 0
      %p146 = por %p144, %p145
      %s148 = sadd.s32 %s147, 1
      %p151 = scmp.eq.s32.totalorder %s19, 1
      %p152 = scmp.ne.s32.totalorder %s147, %s149
      %p153 = scmp.eq.s32.totalorder %s19, 0
      %p154 = por %p152, %p153
      %p155 = scmp.ne.s32.totalorder %s147, %s149
      %p156 = scmp.eq.s32.totalorder %s24, 1
      %p157 = por %p155, %p156
      %p158 = scmp.ne.s32.totalorder %s149, %s150
      %p159 = scmp.eq.s32.totalorder %s24, 0
      %p160 = por %p158, %p159
      %p161 = scmp.ne.s32.totalorder %s149, %s150
      %p162 = scmp.eq.s32.totalorder %s25, 1
      %p163 = por %p161, %p162
      %p165 = scmp.ne.s32.totalorder %s150, %s164
      %p166 = scmp.eq.s32.totalorder %s25, 0
      %p167 = por %p165, %p166
      %s169 = sadd.s32 %s168, 1
      %p172 = scmp.eq.s32.totalorder %s19, 1
      %p173 = scmp.ne.s32.totalorder %s168, %s170
      %p174 = scmp.eq.s32.totalorder %s19, 0
      %p175 = por %p173, %p174
      %p176 = scmp.ne.s32.totalorder %s168, %s170
      %p177 = scmp.eq.s32.totalorder %s24, 1
      %p178 = por %p176, %p177
      %p179 = scmp.ne.s32.totalorder %s170, %s171
      %p180 = scmp.eq.s32.totalorder %s24, 0
      %p181 = por %p179, %p180
      %p182 = scmp.ne.s32.totalorder %s170, %s171
      %p183 = scmp.eq.s32.totalorder %s25, 1
      %p184 = por %p182, %p183
      %p186 = scmp.ne.s32.totalorder %s171, %s185
      %p187 = scmp.eq.s32.totalorder %s25, 0
      %p188 = por %p186, %p187
      %s190 = sadd.s32 %s189, 1
      %p193 = scmp.eq.s32.totalorder %s19, 1
      %p194 = scmp.ne.s32.totalorder %s189, %s191
      %p195 = scmp.eq.s32.totalorder %s19, 0
      %p196 = por %p194, %p195
      %p197 = scmp.ne.s32.totalorder %s189, %s191
      %p198 = scmp.eq.s32.totalorder %s24, 1
      %p199 = por %p197, %p198
      %p200 = scmp.ne.s32.totalorder %s191, %s192
      %p201 = scmp.eq.s32.totalorder %s24, 0
      %p202 = por %p200, %p201
      %p203 = scmp.ne.s32.totalorder %s191, %s192
      %p204 = scmp.eq.s32.totalorder %s25, 1
      %p205 = por %p203, %p204
      %p207 = scmp.ne.s32.totalorder %s192, %s206
      %p208 = scmp.eq.s32.totalorder %s25, 0
      %p209 = por %p207, %p208
      %s211 = sadd.s32 %s210, 1
      %p214 = scmp.eq.s32.totalorder %s19, 1
      %p215 = scmp.ne.s32.totalorder %s210, %s212
      %p216 = scmp.eq.s32.totalorder %s19, 0
      %p217 = por %p215, %p216
      %p218 = scmp.ne.s32.totalorder %s210, %s212
      %p219 = scmp.eq.s32.totalorder %s24, 1
      %p220 = por %p218, %p219
      %p221 = scmp.ne.s32.totalorder %s212, %s213
      %p222 = scmp.eq.s32.totalorder %s24, 0
      %p223 = por %p221, %p222
      %p224 = scmp.ne.s32.totalorder %s212, %s213
      %p225 = scmp.eq.s32.totalorder %s25, 1
      %p226 = por %p224, %p225
      %p228 = scmp.ne.s32.totalorder %s213, %s227
      %p229 = scmp.eq.s32.totalorder %s25, 0
      %p230 = por %p228, %p229
      %s232 = sadd.s32 %s231, 1
      %p235 = scmp.eq.s32.totalorder %s19, 1
      %p236 = scmp.ne.s32.totalorder %s231, %s233
      %p237 = scmp.eq.s32.totalorder %s19, 0
      %p238 = por %p236, %p237
      %p239 = scmp.ne.s32.totalorder %s231, %s233
      %p240 = scmp.eq.s32.totalorder %s24, 1
      %p241 = por %p239, %p240
      %p242 = scmp.ne.s32.totalorder %s233, %s234
      %p243 = scmp.eq.s32.totalorder %s24, 0
      %p244 = por %p242, %p243
      %p245 = scmp.ne.s32.totalorder %s233, %s234
      %p246 = scmp.eq.s32.totalorder %s25, 1
      %p247 = por %p245, %p246
      %p249 = scmp.ne.s32.totalorder %s234, %s248
      %p250 = scmp.eq.s32.totalorder %s25, 0
      %p251 = por %p249, %p250
      %s253 = sadd.s32 %s252, 1
      %p256 = scmp.eq.s32.totalorder %s19, 1
      %p257 = scmp.ne.s32.totalorder %s252, %s254
      %p258 = scmp.eq.s32.totalorder %s19, 0
      %p259 = por %p257, %p258
      %p260 = scmp.ne.s32.totalorder %s252, %s254
      %p261 = scmp.eq.s32.totalorder %s24, 1
      %p262 = por %p260, %p261
      %p263 = scmp.ne.s32.totalorder %s254, %s255
      %p264 = scmp.eq.s32.totalorder %s24, 0
      %p265 = por %p263, %p264
      %p266 = scmp.ne.s32.totalorder %s254, %s255
      %p267 = scmp.eq.s32.totalorder %s25, 1
      %p268 = por %p266, %p267
      %p270 = scmp.ne.s32.totalorder %s255, %s269
      %p271 = scmp.eq.s32.totalorder %s25, 0
      %p272 = por %p270, %p271
      %s273 = ssub.s32 %s19, %s26
      %p274 = scmp.eq.s32.totalorder %s273, 0
      %s276 = sadd.s32 %s275, 1
      %s277 = scalar_select %p274, %s275, %s276
      %p280 = pneg %p274
      %p281 = scmp.eq.s32.totalorder %s19, 1
      %p282 = por %p280, %p281
      %p283 = scmp.ne.s32.totalorder %s275, %s278
      %p284 = scmp.eq.s32.totalorder %s19, 0
      %p285 = por %p283, %p284
      %p286 = scmp.ne.s32.totalorder %s275, %s278
      %p287 = scmp.eq.s32.totalorder %s24, 1
      %p288 = por %p286, %p287
      %p289 = scmp.ne.s32.totalorder %s278, %s279
      %p290 = scmp.eq.s32.totalorder %s24, 0
      %p291 = por %p289, %p290
      %p292 = scmp.ne.s32.totalorder %s278, %s279
      %p293 = scmp.eq.s32.totalorder %s25, 1
      %p294 = por %p292, %p293
      %p296 = scmp.ne.s32.totalorder %s279, %s295
      %p297 = scmp.eq.s32.totalorder %s25, 0
      %p298 = por %p296, %p297
      %p299 = scmp.le.s32.totalorder 1, %s19
      %p300 = scmp.lt.s32.totalorder %s19, 3
      %p301 = pnand %p299, %p300
      %p302 = pneg %p301
      // Predicated region
      $region9: #{tsp_monty_style_decoder_forward.12} parent=5 // pred_check
        _
      $region10: #{tsp_monty_style_decoder_forward.12} parent=5 // pred_check_branch
        %304 = sbr.rel (%p301) target = $region12
      $region11: #{tsp_monty_style_decoder_forward.12} parent=5 // pred_region
        %s305 = ssub.s32 %s19, 1
        // Predicated region
        $region13: #{tsp_monty_style_decoder_forward.12} parent=11 // pred_check
          %p306 = pneg %p118
        $region14: #{tsp_monty_style_decoder_forward.12} parent=11 // pred_check_branch
          %308 = sbr.rel (%p306) target = $region16
        $region15: #{tsp_monty_style_decoder_forward.12} parent=11 // pred_region
          %310 = vsyncadd [#allocation3], 0
          %s311 = sshll.u32 %s3, 4
          %s312 = int_to_ptr.hbm [resolvable:$true] %s311
          %s313 = sshll.u32 [#allocation2], 4
          %s314 = int_to_ptr.vmem [resolvable:$true] %s313
          %319 = dma.hbm_to_vmem [thread:$0]  %s312, 2048, %s314, [#allocation3], 128, 128, 8
        $region16: #{tsp_monty_style_decoder_forward.12} parent=11 // pred_fallthru
          _
        // Predicated region
        $region17: #{tsp_monty_style_decoder_forward.12} parent=11 // pred_check
          %p320 = pneg %p139
        $region18: #{tsp_monty_style_decoder_forward.12} parent=11 // pred_check_branch
          %322 = sbr.rel (%p320) target = $region20
        $region19: #{tsp_monty_style_decoder_forward.12} parent=11 // pred_region
          _
        $region20: #{tsp_monty_style_decoder_forward.12} parent=11 // pred_fallthru
          _
        // Predicated region
        $region21: #{tsp_monty_style_decoder_forward.12} parent=11 // pred_check
          %p323 = pneg %p160
        $region22: #{tsp_monty_style_decoder_forward.12} parent=11 // pred_check_branch
          %325 = sbr.rel (%p323) target = $region24
        $region23: #{tsp_monty_style_decoder_forward.12} parent=11 // pred_region
          %327 = vsyncadd [#allocation5], 0
          %s328 = sshll.u32 %s5, 4
          %s329 = int_to_ptr.hbm [resolvable:$true] %s328
          %s330 = sshll.u32 [#allocation4], 4
          %s331 = int_to_ptr.vmem [resolvable:$true] %s330
          %336 = dma.hbm_to_vmem [thread:$0]  %s329, 4096, %s331, [#allocation5], 256, 256, 16
        $region24: #{tsp_monty_style_decoder_forward.12} parent=11 // pred_fallthru
          _
        // Predicated region
        $region25: #{tsp_monty_style_decoder_forward.12} parent=11 // pred_check
          %p337 = pneg %p181
        $region26: #{tsp_monty_style_decoder_forward.12} parent=11 // pred_check_branch
          %339 = sbr.rel (%p337) target = $region28
        $region27: #{tsp_monty_style_decoder_forward.12} parent=11 // pred_region
          _
        $region28: #{tsp_monty_style_decoder_forward.12} parent=11 // pred_fallthru
          _
        // Predicated region
        $region29: #{tsp_monty_style_decoder_forward.12} parent=11 // pred_check
          %p340 = pneg %p202
        $region30: #{tsp_monty_style_decoder_forward.12} parent=11 // pred_check_branch
          %342 = sbr.rel (%p340) target = $region32
        $region31: #{tsp_monty_style_decoder_forward.12} parent=11 // pred_region
          %344 = vsyncadd [#allocation5], 0
          %s345 = sshll.u32 %s7, 4
          %s346 = int_to_ptr.hbm [resolvable:$true] %s345
          %s347 = sshll.u32 [#allocation6], 4
          %s348 = int_to_ptr.vmem [resolvable:$true] %s347
          %353 = dma.hbm_to_vmem [thread:$0]  %s346, 2048, %s348, [#allocation5], 128, 128, 8
        $region32: #{tsp_monty_style_decoder_forward.12} parent=11 // pred_fallthru
          _
        // Predicated region
        $region33: #{tsp_monty_style_decoder_forward.12} parent=11 // pred_check
          %p354 = pneg %p223
        $region34: #{tsp_monty_style_decoder_forward.12} parent=11 // pred_check_branch
          %356 = sbr.rel (%p354) target = $region36
        $region35: #{tsp_monty_style_decoder_forward.12} parent=11 // pred_region
          _
        $region36: #{tsp_monty_style_decoder_forward.12} parent=11 // pred_fallthru
          _
        // Predicated region
        $region37: #{tsp_monty_style_decoder_forward.12} parent=11 // pred_check
          %p357 = pneg %p244
        $region38: #{tsp_monty_style_decoder_forward.12} parent=11 // pred_check_branch
          %359 = sbr.rel (%p357) target = $region40
        $region39: #{tsp_monty_style_decoder_forward.12} parent=11 // pred_region
          _
        $region40: #{tsp_monty_style_decoder_forward.12} parent=11 // pred_fallthru
          _
        // Predicated region
        $region41: #{tsp_monty_style_decoder_forward.12} parent=11 // pred_check
          %p360 = pneg %p265
        $region42: #{tsp_monty_style_decoder_forward.12} parent=11 // pred_check_branch
          %362 = sbr.rel (%p360) target = $region44
        $region43: #{tsp_monty_style_decoder_forward.12} parent=11 // pred_region
          _
        $region44: #{tsp_monty_style_decoder_forward.12} parent=11 // pred_fallthru
          _
      $region12: #{tsp_monty_style_decoder_forward.12} parent=5 // pred_fallthru
        _
      %p363 = scmp.lt.s32.totalorder %s19, 2
      // Predicated region
      $region45: #{tsp_monty_style_decoder_forward.12} parent=5 // pred_check
        %p364 = pneg %p363
      $region46: #{tsp_monty_style_decoder_forward.12} parent=5 // pred_check_branch
        %366 = sbr.rel (%p364) target = $region48
      $region47: #{tsp_monty_style_decoder_forward.12} parent=5 // pred_region
        // Predicated region
        $region49: #{tsp_monty_style_decoder_forward.12} parent=47 // pred_check
          %p367 = pneg %p39
        $region50: #{tsp_monty_style_decoder_forward.12} parent=47 // pred_check_branch
          %369 = sbr.rel (%p367) target = $region52
        $region51: #{tsp_monty_style_decoder_forward.12} parent=47 // pred_region
          %p370 = scmp.lt.s32.totalorder %s19, 1
          %s371 = scalar_select %p370, %s19, 1
          %s372 = smul.addr %s371, 8
          %s373 = scalar_lea.vmem %s0, %s372
        $region52: #{tsp_monty_style_decoder_forward.12} parent=47 // pred_fallthru
          _
        // Predicated region
        $region53: #{tsp_monty_style_decoder_forward.12} parent=47 // pred_check
          %p374 = pneg %p65
        $region54: #{tsp_monty_style_decoder_forward.12} parent=47 // pred_check_branch
          %376 = sbr.rel (%p374) target = $region56
        $region55: #{tsp_monty_style_decoder_forward.12} parent=47 // pred_region
          %p377 = scmp.lt.s32.totalorder %s19, 1
          %s378 = scalar_select %p377, %s19, 1
          %s379 = smul.addr %s378, 8
          %s380 = scalar_lea.vmem %s1, %s379
        $region56: #{tsp_monty_style_decoder_forward.12} parent=47 // pred_fallthru
          _
        // Predicated region
        $region57: #{tsp_monty_style_decoder_forward.12} parent=47 // pred_check
          %p381 = pneg %p91
        $region58: #{tsp_monty_style_decoder_forward.12} parent=47 // pred_check_branch
          %383 = sbr.rel (%p381) target = $region60
        $region59: #{tsp_monty_style_decoder_forward.12} parent=47 // pred_region
          %p384 = scmp.lt.s32.totalorder %s19, 1
          %s385 = scalar_select %p384, %s19, 1
          %s386 = scalar_lea.vmem %s2, %s385
        $region60: #{tsp_monty_style_decoder_forward.12} parent=47 // pred_fallthru
          _
      $region48: #{tsp_monty_style_decoder_forward.12} parent=5 // pred_fallthru
        _
      %p387 = scmp.le.s32.totalorder 1, %s19
      %p388 = scmp.lt.s32.totalorder %s19, 3
      %p389 = pnand %p387, %p388
      %p390 = pneg %p389
      // Predicated region
      $region61: #{tsp_monty_style_decoder_forward.12} parent=5 // pred_check
        _
      $region62: #{tsp_monty_style_decoder_forward.12} parent=5 // pred_check_branch
        %392 = sbr.rel (%p389) target = $region64
      $region63: #{tsp_monty_style_decoder_forward.12} parent=5 // pred_region
        %s393 = ssub.s32 %s19, 1
        // Predicated region
        $region65: #{tsp_monty_style_decoder_forward.12} parent=63 // pred_check
          %p394 = pneg %p118
        $region66: #{tsp_monty_style_decoder_forward.12} parent=63 // pred_check_branch
          %396 = sbr.rel (%p394) target = $region68
        $region67: #{tsp_monty_style_decoder_forward.12} parent=63 // pred_region
          %398 = dma.done [#allocation3], 2048
        $region68: #{tsp_monty_style_decoder_forward.12} parent=63 // pred_fallthru
          _
        // Predicated region
        $region69: #{tsp_monty_style_decoder_forward.12} parent=63 // pred_check
          %p399 = pneg %p160
        $region70: #{tsp_monty_style_decoder_forward.12} parent=63 // pred_check_branch
          %401 = sbr.rel (%p399) target = $region72
        $region71: #{tsp_monty_style_decoder_forward.12} parent=63 // pred_region
          %403 = dma.done [#allocation5], 4096
        $region72: #{tsp_monty_style_decoder_forward.12} parent=63 // pred_fallthru
          _
        // Predicated region
        $region73: #{tsp_monty_style_decoder_forward.12} parent=63 // pred_check
          %p404 = pneg %p202
        $region74: #{tsp_monty_style_decoder_forward.12} parent=63 // pred_check_branch
          %406 = sbr.rel (%p404) target = $region76
        $region75: #{tsp_monty_style_decoder_forward.12} parent=63 // pred_region
          %408 = dma.done [#allocation5], 2048
        $region76: #{tsp_monty_style_decoder_forward.12} parent=63 // pred_fallthru
          _
        %p409 = scmp.lt.s32.totalorder %s24, 1
        %s410 = scalar_select %p409, %s24, 1
        %s411 = smul.addr %s410, 8
        %s412 = scalar_lea.vmem %s0, %s411
        %p413 = pneg %p45
        %p414 = pneg %p42
        %p415 = scmp.lt.s32.totalorder %s24, 1
        %s416 = scalar_select %p415, %s24, 1
        %s417 = smul.addr %s416, 8
        %s418 = scalar_lea.vmem %s1, %s417
        %p419 = pneg %p71
        %p420 = pneg %p68
        %p421 = scmp.lt.s32.totalorder %s24, 1
        %s422 = scalar_select %p421, %s24, 1
        %s423 = scalar_lea.vmem %s2, %s422
        %p424 = pneg %p97
        %p425 = pneg %p94
        %p426 = pneg %p118
        %p427 = pneg %p115
        %p428 = pneg %p139
        %p429 = pneg %p136
        %p430 = pneg %p160
        %p431 = pneg %p157
        %p432 = pneg %p181
        %p433 = pneg %p178
        %p434 = pneg %p202
        %p435 = pneg %p199
        %p436 = pneg %p223
        %p437 = pneg %p220
        %p438 = pneg %p244
        %p439 = pneg %p241
        %p440 = pneg %p265
        %p441 = pneg %p262
        %p442 = pneg %p291
        %p443 = pneg %p288
        %p444 = scmp.lt.s32.totalorder %s24, 1
        %s445 = scalar_select %p444, %s24, 1
        %s446 = smul.addr %s445, 8
        %s447 = scalar_lea.vmem %s11, %s446
        %p448 = scmp.lt.s32.totalorder %s24, 1
        %s449 = scalar_select %p448, %s24, 1
        %s450 = smul.addr %s449, 8
        %s451 = scalar_lea.vmem %s0, %s450
        %p452 = scmp.lt.s32.totalorder %s24, 1
        %s453 = scalar_select %p452, %s24, 1
        %s454 = smul.addr %s453, 8
        %s455 = scalar_lea.vmem %s1, %s454
        %p456 = scmp.lt.s32.totalorder %s24, 1
        %s457 = scalar_select %p456, %s24, 1
        %s458 = scalar_lea.vmem %s2, %s457
        %p459 = scmp.lt.s32.totalorder %s24, 1
        %s460 = scalar_select %p459, %s24, 1
        %s461 = smul.addr %s460, 8
        %s462 = scalar_lea.vmem %s11, %s461
        %v463 = vld [vmem:[%s451] sm:$0xff]
        %v464 = vld [vmem:[%s455] sm:$0xff]
        %v465 = vld [vmem:[%s458] sm:$0x1]
        %v466 = vld [vmem:[#allocation2] sm:$0xff]
        %v467 = vld [vmem:[#allocation2 + $0x8] sm:$0xff]
        %v468 = vld [vmem:[#allocation2 + $0x10] sm:$0xff]
        %v469 = vld [vmem:[#allocation2 + $0x18] sm:$0xff]
        %v470 = vld [vmem:[#allocation2 + $0x20] sm:$0xff]
        %v471 = vld [vmem:[#allocation2 + $0x28] sm:$0xff]
        %v472 = vld [vmem:[#allocation2 + $0x30] sm:$0xff]
        %v473 = vld [vmem:[#allocation2 + $0x38] sm:$0xff]
        %v474 = vld [vmem:[#allocation2 + $0x40] sm:$0xff]
        %v475 = vld [vmem:[#allocation2 + $0x48] sm:$0xff]
        %v476 = vld [vmem:[#allocation2 + $0x50] sm:$0xff]
        %v477 = vld [vmem:[#allocation2 + $0x58] sm:$0xff]
        %v478 = vld [vmem:[#allocation2 + $0x60] sm:$0xff]
        %v479 = vld [vmem:[#allocation2 + $0x68] sm:$0xff]
        %v480 = vld [vmem:[#allocation2 + $0x70] sm:$0xff]
        %v481 = vld [vmem:[#allocation2 + $0x78] sm:$0xff]
        %v482 = vld [vmem:[%s4] sm:$0x1]
        %v484 = vperm.slane %v482, 0
        %486 = vmatpush.msra.mxu0 %v481
        %487 = vmatpush.msra.mxu0 %v480
        %488 = vmatpush.msra.mxu0 %v479
        %489 = vmatpush.msra.mxu0 %v478
        %490 = vmatpush.msra.mxu0 %v477
        %491 = vmatpush.msra.mxu0 %v476
        %492 = vmatpush.msra.mxu0 %v475
        %493 = vmatpush.msra.mxu0 %v474
        %494 = vmatpush.msra.mxu0 %v473
        %495 = vmatpush.msra.mxu0 %v472
        %496 = vmatpush.msra.mxu0 %v471
        %497 = vmatpush.msra.mxu0 %v470
        %498 = vmatpush.msra.mxu0 %v469
        %499 = vmatpush.msra.mxu0 %v468
        %500 = vmatpush.msra.mxu0 %v467
        %501 = vmatpush.msra.mxu0 %v466
        %502 = vmatmul.f32.gmra.mxu0 %v463
        %v503 = vpop.f32.mrf.mxu0
        %v504 = vadd.f32 %v484, %v503
        %505 = vdwg.mxu0
        %v506 = vld [vmem:[#allocation4] sm:$0xff]
        %v507 = vld [vmem:[#allocation4 + $0x8] sm:$0xff]
        %v508 = vld [vmem:[#allocation4 + $0x10] sm:$0xff]
        %v509 = vld [vmem:[#allocation4 + $0x18] sm:$0xff]
        %v510 = vld [vmem:[#allocation4 + $0x20] sm:$0xff]
        %v511 = vld [vmem:[#allocation4 + $0x28] sm:$0xff]
        %v512 = vld [vmem:[#allocation4 + $0x30] sm:$0xff]
        %v513 = vld [vmem:[#allocation4 + $0x38] sm:$0xff]
        %v514 = vld [vmem:[#allocation4 + $0x40] sm:$0xff]
        %v515 = vld [vmem:[#allocation4 + $0x48] sm:$0xff]
        %v516 = vld [vmem:[#allocation4 + $0x50] sm:$0xff]
        %v517 = vld [vmem:[#allocation4 + $0x58] sm:$0xff]
        %v518 = vld [vmem:[#allocation4 + $0x60] sm:$0xff]
        %v519 = vld [vmem:[#allocation4 + $0x68] sm:$0xff]
        %v520 = vld [vmem:[#allocation4 + $0x70] sm:$0xff]
        %v521 = vld [vmem:[#allocation4 + $0x78] sm:$0xff]
        %v522 = vld [vmem:[#allocation4 + $0x80] sm:$0xff]
        %v523 = vld [vmem:[#allocation4 + $0x88] sm:$0xff]
        %v524 = vld [vmem:[#allocation4 + $0x90] sm:$0xff]
        %v525 = vld [vmem:[#allocation4 + $0x98] sm:$0xff]
        %v526 = vld [vmem:[#allocation4 + $0xa0] sm:$0xff]
        %v527 = vld [vmem:[#allocation4 + $0xa8] sm:$0xff]
        %v528 = vld [vmem:[#allocation4 + $0xb0] sm:$0xff]
        %v529 = vld [vmem:[#allocation4 + $0xb8] sm:$0xff]
        %v530 = vld [vmem:[#allocation4 + $0xc0] sm:$0xff]
        %v531 = vld [vmem:[#allocation4 + $0xc8] sm:$0xff]
        %v532 = vld [vmem:[#allocation4 + $0xd0] sm:$0xff]
        %v533 = vld [vmem:[#allocation4 + $0xd8] sm:$0xff]
        %v534 = vld [vmem:[#allocation4 + $0xe0] sm:$0xff]
        %v535 = vld [vmem:[#allocation4 + $0xe8] sm:$0xff]
        %v536 = vld [vmem:[#allocation4 + $0xf0] sm:$0xff]
        %v537 = vld [vmem:[#allocation4 + $0xf8] sm:$0xff]
        %v538 = vld [vmem:[%s6] sm:$0x3]
        %v540 = vperm.slane %v538, 0
        %v541 = vperm.slane %v538, 1
        %544 = vmatpush.msra.mxu0 %v536
        %545 = vmatpush.msra.mxu0 %v534
        %546 = vmatpush.msra.mxu0 %v532
        %547 = vmatpush.msra.mxu0 %v530
        %548 = vmatpush.msra.mxu0 %v528
        %549 = vmatpush.msra.mxu0 %v526
        %550 = vmatpush.msra.mxu0 %v524
        %551 = vmatpush.msra.mxu0 %v522
        %552 = vmatpush.msra.mxu0 %v520
        %553 = vmatpush.msra.mxu0 %v518
        %554 = vmatpush.msra.mxu0 %v516
        %555 = vmatpush.msra.mxu0 %v514
        %556 = vmatpush.msra.mxu0 %v512
        %557 = vmatpush.msra.mxu0 %v510
        %558 = vmatpush.msra.mxu0 %v508
        %559 = vmatpush.msra.mxu0 %v506
        %560 = vmatmul.f32.gmra.mxu0 %v464
        %v561 = vpop.f32.mrf.mxu0
        %v562 = vadd.f32 %v540, %v561
        %563 = vdwg.mxu0
        %564 = vmatpush.msra.mxu0 %v537
        %565 = vmatpush.msra.mxu0 %v535
        %566 = vmatpush.msra.mxu0 %v533
        %567 = vmatpush.msra.mxu0 %v531
        %568 = vmatpush.msra.mxu0 %v529
        %569 = vmatpush.msra.mxu0 %v527
        %570 = vmatpush.msra.mxu0 %v525
        %571 = vmatpush.msra.mxu0 %v523
        %572 = vmatpush.msra.mxu0 %v521
        %573 = vmatpush.msra.mxu0 %v519
        %574 = vmatpush.msra.mxu0 %v517
        %575 = vmatpush.msra.mxu0 %v515
        %576 = vmatpush.msra.mxu0 %v513
        %577 = vmatpush.msra.mxu0 %v511
        %578 = vmatpush.msra.mxu0 %v509
        %579 = vmatpush.msra.mxu0 %v507
        %580 = vmatmul.f32.gmra.mxu0 %v464
        %v581 = vpop.f32.mrf.mxu0
        %v582 = vadd.f32 %v541, %v581
        %583 = vdwg.mxu0
        %vm584 = vcmask 130048
        %v586 = vsel %vm584, %v504, 0
        %v589 = vsel %vm584, %v562, 0
        %591 = vmatpush.xpose.msra.mxu0 0.0
        %592 = vmatpush.xpose.msra.mxu0 0.0
        %593 = vmatpush.xpose.msra.mxu0 0.0
        %594 = vmatpush.xpose.msra.mxu0 0.0
        %595 = vmatpush.xpose.msra.mxu0 0.0
        %596 = vmatpush.xpose.msra.mxu0 0.0
        %597 = vmatpush.xpose.msra.mxu0 0.0
        %598 = vmatpush.xpose.msra.mxu0 0.0
        %599 = vmatpush.xpose.msra.mxu0 0.0
        %600 = vmatpush.xpose.msra.mxu0 0.0
        %601 = vmatpush.xpose.msra.mxu0 0.0
        %602 = vmatpush.xpose.msra.mxu0 0.0
        %603 = vmatpush.xpose.msra.mxu0 0.0
        %604 = vmatpush.xpose.msra.mxu0 0.0
        %605 = vmatpush.xpose.msra.mxu0 0.0
        %606 = vmatpush.xpose.msra.mxu0 %v589
        %607 = vmatmul.f32.gmra.mxu0 %v586
        %v608 = vpop.f32.mrf.mxu0
        %v609 = vadd.f32 0.0, %v608
        %610 = vdwg.mxu0
        %v611 = vmul.f32 %v609, 0.25
        %v613 = vperm.slane %v465, 0
        %v615 = vadd.f32 %v611, %v613
        %vm616 = vcmask 64512
        %v617 = vsel %vm616, %v615, -inf
        %618 = vmax.xlane.f32.xlu0 %v617
        %v619 = vpop.xlane.xlu0 %618
        %v620 = vsub.f32 %v615, %v619
        %v621 = vmul.f32 %v620, 1.442695
        %v622 = vpow.pop %v621
        %v623 = vsel %vm616, %v622, 0.0
        %624 = vadd.xlane.f32.xlu0 %v623
        %v625 = vpop.xlane.xlu0 %624
        %v626 = vrcp.pop %v625
        %v627 = vmul.f32 %v622, %v626
        %v629 = vsel %vm616, %v627, 0
        %631 = vmatpush.msra.mxu0 0.0
        %632 = vmatpush.msra.mxu0 0.0
        %633 = vmatpush.msra.mxu0 0.0
        %634 = vmatpush.msra.mxu0 0.0
        %635 = vmatpush.msra.mxu0 0.0
        %636 = vmatpush.msra.mxu0 0.0
        %637 = vmatpush.msra.mxu0 0.0
        %638 = vmatpush.msra.mxu0 0.0
        %639 = vmatpush.msra.mxu0 0.0
        %640 = vmatpush.msra.mxu0 0.0
        %641 = vmatpush.msra.mxu0 0.0
        %642 = vmatpush.msra.mxu0 0.0
        %643 = vmatpush.msra.mxu0 0.0
        %644 = vmatpush.msra.mxu0 0.0
        %645 = vmatpush.msra.mxu0 0.0
        %646 = vmatpush.msra.mxu0 %v582
        %647 = vmatmul.f32.gmra.mxu0 %v629
        %v648 = vpop.f32.mrf.mxu0
        %v649 = vadd.f32 0.0, %v648
        %650 = vdwg.mxu0
        %v651 = vld [vmem:[#allocation6] sm:$0xff]
        %v652 = vld [vmem:[#allocation6 + $0x8] sm:$0xff]
        %653 = vrot.lane.b32.xlu0 %v504, 112
        %v654 = vpop.permute.xlu0 %653
        %655 = vrot.lane.b32.xlu0 %v562, 112
        %v656 = vpop.permute.xlu0 %655
        %v657 = vsel %vm584, %v654, 0
        %v659 = vsel %vm584, %v656, 0
        %661 = vmatpush.xpose.msra.mxu0 0.0
        %662 = vmatpush.xpose.msra.mxu0 0.0
        %663 = vmatpush.xpose.msra.mxu0 0.0
        %664 = vmatpush.xpose.msra.mxu0 0.0
        %665 = vmatpush.xpose.msra.mxu0 0.0
        %666 = vmatpush.xpose.msra.mxu0 0.0
        %667 = vmatpush.xpose.msra.mxu0 0.0
        %668 = vmatpush.xpose.msra.mxu0 0.0
        %669 = vmatpush.xpose.msra.mxu0 0.0
        %670 = vmatpush.xpose.msra.mxu0 0.0
        %671 = vmatpush.xpose.msra.mxu0 0.0
        %672 = vmatpush.xpose.msra.mxu0 0.0
        %673 = vmatpush.xpose.msra.mxu0 0.0
        %674 = vmatpush.xpose.msra.mxu0 0.0
        %675 = vmatpush.xpose.msra.mxu0 0.0
        %676 = vmatpush.xpose.msra.mxu0 %v659
        %677 = vmatmul.f32.gmra.mxu0 %v657
        %v678 = vpop.f32.mrf.mxu0
        %v679 = vadd.f32 0.0, %v678
        %680 = vdwg.mxu0
        %v681 = vmul.f32 %v679, 0.25
        %v682 = vadd.f32 %v681, %v613
        %v683 = vsel %vm616, %v682, -inf
        %684 = vmax.xlane.f32.xlu0 %v683
        %v685 = vpop.xlane.xlu0 %684
        %v686 = vsub.f32 %v682, %v685
        %v687 = vmul.f32 %v686, 1.442695
        %v688 = vpow.pop %v687
        %v689 = vsel %vm616, %v688, 0.0
        %690 = vadd.xlane.f32.xlu0 %v689
        %v691 = vpop.xlane.xlu0 %690
        %v692 = vrcp.pop %v691
        %v693 = vmul.f32 %v688, %v692
        %695 = vrot.lane.b32.xlu0 %v582, 112
        %v696 = vpop.permute.xlu0 %695
        %v699 = vsel %vm616, %v693, 0
        %701 = vmatpush.msra.mxu0 0.0
        %702 = vmatpush.msra.mxu0 0.0
        %703 = vmatpush.msra.mxu0 0.0
        %704 = vmatpush.msra.mxu0 0.0
        %705 = vmatpush.msra.mxu0 0.0
        %706 = vmatpush.msra.mxu0 0.0
        %707 = vmatpush.msra.mxu0 0.0
        %708 = vmatpush.msra.mxu0 0.0
        %709 = vmatpush.msra.mxu0 0.0
        %710 = vmatpush.msra.mxu0 0.0
        %711 = vmatpush.msra.mxu0 0.0
        %712 = vmatpush.msra.mxu0 0.0
        %713 = vmatpush.msra.mxu0 0.0
        %714 = vmatpush.msra.mxu0 0.0
        %715 = vmatpush.msra.mxu0 0.0
        %716 = vmatpush.msra.mxu0 %v696
        %717 = vmatmul.f32.gmra.mxu0 %v699
        %v718 = vpop.f32.mrf.mxu0
        %v719 = vadd.f32 0.0, %v718
        %720 = vdwg.mxu0
        %v721 = vld [vmem:[#allocation6 + $0x10] sm:$0xff]
        %v722 = vld [vmem:[#allocation6 + $0x18] sm:$0xff]
        %v724 = vsel %vm584, %v719, 0
        %726 = vmatpush.msra.mxu0 0.0
        %727 = vmatpush.msra.mxu0 0.0
        %728 = vmatpush.msra.mxu0 0.0
        %729 = vmatpush.msra.mxu0 0.0
        %730 = vmatpush.msra.mxu0 0.0
        %731 = vmatpush.msra.mxu0 0.0
        %732 = vmatpush.msra.mxu0 0.0
        %733 = vmatpush.msra.mxu0 0.0
        %734 = vmatpush.msra.mxu0 0.0
        %735 = vmatpush.msra.mxu0 0.0
        %736 = vmatpush.msra.mxu0 0.0
        %737 = vmatpush.msra.mxu0 0.0
        %738 = vmatpush.msra.mxu0 0.0
        %739 = vmatpush.msra.mxu0 0.0
        %740 = vmatpush.msra.mxu0 %v722
        %741 = vmatpush.msra.mxu0 %v721
        %742 = vmatmul.f32.gmra.mxu0 %v724
        %v743 = vpop.f32.mrf.mxu0
        %v744 = vadd.f32 0.0, %v743
        %745 = vdwg.mxu0
        %v747 = vsel %vm584, %v649, 0
        %749 = vmatpush.msra.mxu0 0.0
        %750 = vmatpush.msra.mxu0 0.0
        %751 = vmatpush.msra.mxu0 0.0
        %752 = vmatpush.msra.mxu0 0.0
        %753 = vmatpush.msra.mxu0 0.0
        %754 = vmatpush.msra.mxu0 0.0
        %755 = vmatpush.msra.mxu0 0.0
        %756 = vmatpush.msra.mxu0 0.0
        %757 = vmatpush.msra.mxu0 0.0
        %758 = vmatpush.msra.mxu0 0.0
        %759 = vmatpush.msra.mxu0 0.0
        %760 = vmatpush.msra.mxu0 0.0
        %761 = vmatpush.msra.mxu0 0.0
        %762 = vmatpush.msra.mxu0 0.0
        %763 = vmatpush.msra.mxu0 %v652
        %764 = vmatpush.msra.mxu0 %v651
        %765 = vmatmul.f32.gmra.mxu0 %v747
        %v766 = vpop.f32.mrf.mxu0
        %v767 = vadd.f32 %v744, %v766
        %768 = vdwg.mxu0
        %769 = vrot.lane.b32.xlu0 %v504, 96
        %v770 = vpop.permute.xlu0 %769
        %771 = vrot.lane.b32.xlu0 %v562, 96
        %v772 = vpop.permute.xlu0 %771
        %v773 = vsel %vm584, %v770, 0
        %v775 = vsel %vm584, %v772, 0
        %777 = vmatpush.xpose.msra.mxu0 0.0
        %778 = vmatpush.xpose.msra.mxu0 0.0
        %779 = vmatpush.xpose.msra.mxu0 0.0
        %780 = vmatpush.xpose.msra.mxu0 0.0
        %781 = vmatpush.xpose.msra.mxu0 0.0
        %782 = vmatpush.xpose.msra.mxu0 0.0
        %783 = vmatpush.xpose.msra.mxu0 0.0
        %784 = vmatpush.xpose.msra.mxu0 0.0
        %785 = vmatpush.xpose.msra.mxu0 0.0
        %786 = vmatpush.xpose.msra.mxu0 0.0
        %787 = vmatpush.xpose.msra.mxu0 0.0
        %788 = vmatpush.xpose.msra.mxu0 0.0
        %789 = vmatpush.xpose.msra.mxu0 0.0
        %790 = vmatpush.xpose.msra.mxu0 0.0
        %791 = vmatpush.xpose.msra.mxu0 0.0
        %792 = vmatpush.xpose.msra.mxu0 %v775
        %793 = vmatmul.f32.gmra.mxu0 %v773
        %v794 = vpop.f32.mrf.mxu0
        %v795 = vadd.f32 0.0, %v794
        %796 = vdwg.mxu0
        %v797 = vmul.f32 %v795, 0.25
        %v798 = vadd.f32 %v797, %v613
        %v799 = vsel %vm616, %v798, -inf
        %800 = vmax.xlane.f32.xlu0 %v799
        %v801 = vpop.xlane.xlu0 %800
        %v802 = vsub.f32 %v798, %v801
        %v803 = vmul.f32 %v802, 1.442695
        %v804 = vpow.pop %v803
        %v805 = vsel %vm616, %v804, 0.0
        %806 = vadd.xlane.f32.xlu0 %v805
        %v807 = vpop.xlane.xlu0 %806
        %v808 = vrcp.pop %v807
        %v809 = vmul.f32 %v804, %v808
        %810 = vrot.lane.b32.xlu0 %v582, 96
        %v811 = vpop.permute.xlu0 %810
        %v814 = vsel %vm616, %v809, 0
        %816 = vmatpush.msra.mxu0 0.0
        %817 = vmatpush.msra.mxu0 0.0
        %818 = vmatpush.msra.mxu0 0.0
        %819 = vmatpush.msra.mxu0 0.0
        %820 = vmatpush.msra.mxu0 0.0
        %821 = vmatpush.msra.mxu0 0.0
        %822 = vmatpush.msra.mxu0 0.0
        %823 = vmatpush.msra.mxu0 0.0
        %824 = vmatpush.msra.mxu0 0.0
        %825 = vmatpush.msra.mxu0 0.0
        %826 = vmatpush.msra.mxu0 0.0
        %827 = vmatpush.msra.mxu0 0.0
        %828 = vmatpush.msra.mxu0 0.0
        %829 = vmatpush.msra.mxu0 0.0
        %830 = vmatpush.msra.mxu0 0.0
        %831 = vmatpush.msra.mxu0 %v811
        %832 = vmatmul.f32.gmra.mxu0 %v814
        %v833 = vpop.f32.mrf.mxu0
        %v834 = vadd.f32 0.0, %v833
        %835 = vdwg.mxu0
        %v836 = vld [vmem:[#allocation6 + $0x20] sm:$0xff]
        %v837 = vld [vmem:[#allocation6 + $0x28] sm:$0xff]
        %v839 = vsel %vm584, %v834, 0
        %841 = vmatpush.msra.mxu0 0.0
        %842 = vmatpush.msra.mxu0 0.0
        %843 = vmatpush.msra.mxu0 0.0
        %844 = vmatpush.msra.mxu0 0.0
        %845 = vmatpush.msra.mxu0 0.0
        %846 = vmatpush.msra.mxu0 0.0
        %847 = vmatpush.msra.mxu0 0.0
        %848 = vmatpush.msra.mxu0 0.0
        %849 = vmatpush.msra.mxu0 0.0
        %850 = vmatpush.msra.mxu0 0.0
        %851 = vmatpush.msra.mxu0 0.0
        %852 = vmatpush.msra.mxu0 0.0
        %853 = vmatpush.msra.mxu0 0.0
        %854 = vmatpush.msra.mxu0 0.0
        %855 = vmatpush.msra.mxu0 %v837
        %856 = vmatpush.msra.mxu0 %v836
        %857 = vmatmul.f32.gmra.mxu0 %v839
        %v858 = vpop.f32.mrf.mxu0
        %v859 = vadd.f32 0.0, %v858
        %860 = vdwg.mxu0
        %v861 = vadd.f32 %v767, %v859
        %862 = vrot.lane.b32.xlu0 %v504, 80
        %v863 = vpop.permute.xlu0 %862
        %864 = vrot.lane.b32.xlu0 %v562, 80
        %v865 = vpop.permute.xlu0 %864
        %v866 = vsel %vm584, %v863, 0
        %v868 = vsel %vm584, %v865, 0
        %870 = vmatpush.xpose.msra.mxu0 0.0
        %871 = vmatpush.xpose.msra.mxu0 0.0
        %872 = vmatpush.xpose.msra.mxu0 0.0
        %873 = vmatpush.xpose.msra.mxu0 0.0
        %874 = vmatpush.xpose.msra.mxu0 0.0
        %875 = vmatpush.xpose.msra.mxu0 0.0
        %876 = vmatpush.xpose.msra.mxu0 0.0
        %877 = vmatpush.xpose.msra.mxu0 0.0
        %878 = vmatpush.xpose.msra.mxu0 0.0
        %879 = vmatpush.xpose.msra.mxu0 0.0
        %880 = vmatpush.xpose.msra.mxu0 0.0
        %881 = vmatpush.xpose.msra.mxu0 0.0
        %882 = vmatpush.xpose.msra.mxu0 0.0
        %883 = vmatpush.xpose.msra.mxu0 0.0
        %884 = vmatpush.xpose.msra.mxu0 0.0
        %885 = vmatpush.xpose.msra.mxu0 %v868
        %886 = vmatmul.f32.gmra.mxu0 %v866
        %v887 = vpop.f32.mrf.mxu0
        %v888 = vadd.f32 0.0, %v887
        %889 = vdwg.mxu0
        %v890 = vmul.f32 %v888, 0.25
        %v891 = vadd.f32 %v890, %v613
        %v892 = vsel %vm616, %v891, -inf
        %893 = vmax.xlane.f32.xlu0 %v892
        %v894 = vpop.xlane.xlu0 %893
        %v895 = vsub.f32 %v891, %v894
        %v896 = vmul.f32 %v895, 1.442695
        %v897 = vpow.pop %v896
        %v898 = vsel %vm616, %v897, 0.0
        %899 = vadd.xlane.f32.xlu0 %v898
        %v900 = vpop.xlane.xlu0 %899
        %v901 = vrcp.pop %v900
        %v902 = vmul.f32 %v897, %v901
        %903 = vrot.lane.b32.xlu0 %v582, 80
        %v904 = vpop.permute.xlu0 %903
        %v907 = vsel %vm616, %v902, 0
        %909 = vmatpush.msra.mxu0 0.0
        %910 = vmatpush.msra.mxu0 0.0
        %911 = vmatpush.msra.mxu0 0.0
        %912 = vmatpush.msra.mxu0 0.0
        %913 = vmatpush.msra.mxu0 0.0
        %914 = vmatpush.msra.mxu0 0.0
        %915 = vmatpush.msra.mxu0 0.0
        %916 = vmatpush.msra.mxu0 0.0
        %917 = vmatpush.msra.mxu0 0.0
        %918 = vmatpush.msra.mxu0 0.0
        %919 = vmatpush.msra.mxu0 0.0
        %920 = vmatpush.msra.mxu0 0.0
        %921 = vmatpush.msra.mxu0 0.0
        %922 = vmatpush.msra.mxu0 0.0
        %923 = vmatpush.msra.mxu0 0.0
        %924 = vmatpush.msra.mxu0 %v904
        %925 = vmatmul.f32.gmra.mxu0 %v907
        %v926 = vpop.f32.mrf.mxu0
        %v927 = vadd.f32 0.0, %v926
        %928 = vdwg.mxu0
        %v929 = vld [vmem:[#allocation6 + $0x30] sm:$0xff]
        %v930 = vld [vmem:[#allocation6 + $0x38] sm:$0xff]
        %v932 = vsel %vm584, %v927, 0
        %934 = vmatpush.msra.mxu0 0.0
        %935 = vmatpush.msra.mxu0 0.0
        %936 = vmatpush.msra.mxu0 0.0
        %937 = vmatpush.msra.mxu0 0.0
        %938 = vmatpush.msra.mxu0 0.0
        %939 = vmatpush.msra.mxu0 0.0
        %940 = vmatpush.msra.mxu0 0.0
        %941 = vmatpush.msra.mxu0 0.0
        %942 = vmatpush.msra.mxu0 0.0
        %943 = vmatpush.msra.mxu0 0.0
        %944 = vmatpush.msra.mxu0 0.0
        %945 = vmatpush.msra.mxu0 0.0
        %946 = vmatpush.msra.mxu0 0.0
        %947 = vmatpush.msra.mxu0 0.0
        %948 = vmatpush.msra.mxu0 %v930
        %949 = vmatpush.msra.mxu0 %v929
        %950 = vmatmul.f32.gmra.mxu0 %v932
        %v951 = vpop.f32.mrf.mxu0
        %v952 = vadd.f32 0.0, %v951
        %953 = vdwg.mxu0
        %v954 = vadd.f32 %v861, %v952
        %955 = vrot.lane.b32.xlu0 %v504, 64
        %v956 = vpop.permute.xlu0 %955
        %957 = vrot.lane.b32.xlu0 %v562, 64
        %v958 = vpop.permute.xlu0 %957
        %v959 = vsel %vm584, %v956, 0
        %v961 = vsel %vm584, %v958, 0
        %963 = vmatpush.xpose.msra.mxu0 0.0
        %964 = vmatpush.xpose.msra.mxu0 0.0
        %965 = vmatpush.xpose.msra.mxu0 0.0
        %966 = vmatpush.xpose.msra.mxu0 0.0
        %967 = vmatpush.xpose.msra.mxu0 0.0
        %968 = vmatpush.xpose.msra.mxu0 0.0
        %969 = vmatpush.xpose.msra.mxu0 0.0
        %970 = vmatpush.xpose.msra.mxu0 0.0
        %971 = vmatpush.xpose.msra.mxu0 0.0
        %972 = vmatpush.xpose.msra.mxu0 0.0
        %973 = vmatpush.xpose.msra.mxu0 0.0
        %974 = vmatpush.xpose.msra.mxu0 0.0
        %975 = vmatpush.xpose.msra.mxu0 0.0
        %976 = vmatpush.xpose.msra.mxu0 0.0
        %977 = vmatpush.xpose.msra.mxu0 0.0
        %978 = vmatpush.xpose.msra.mxu0 %v961
        %979 = vmatmul.f32.gmra.mxu0 %v959
        %v980 = vpop.f32.mrf.mxu0
        %v981 = vadd.f32 0.0, %v980
        %982 = vdwg.mxu0
        %v983 = vmul.f32 %v981, 0.25
        %v984 = vadd.f32 %v983, %v613
        %v985 = vsel %vm616, %v984, -inf
        %986 = vmax.xlane.f32.xlu0 %v985
        %v987 = vpop.xlane.xlu0 %986
        %v988 = vsub.f32 %v984, %v987
        %v989 = vmul.f32 %v988, 1.442695
        %v990 = vpow.pop %v989
        %v991 = vsel %vm616, %v990, 0.0
        %992 = vadd.xlane.f32.xlu0 %v991
        %v993 = vpop.xlane.xlu0 %992
        %v994 = vrcp.pop %v993
        %v995 = vmul.f32 %v990, %v994
        %996 = vrot.lane.b32.xlu0 %v582, 64
        %v997 = vpop.permute.xlu0 %996
        %v1000 = vsel %vm616, %v995, 0
        %1002 = vmatpush.msra.mxu0 0.0
        %1003 = vmatpush.msra.mxu0 0.0
        %1004 = vmatpush.msra.mxu0 0.0
        %1005 = vmatpush.msra.mxu0 0.0
        %1006 = vmatpush.msra.mxu0 0.0
        %1007 = vmatpush.msra.mxu0 0.0
        %1008 = vmatpush.msra.mxu0 0.0
        %1009 = vmatpush.msra.mxu0 0.0
        %1010 = vmatpush.msra.mxu0 0.0
        %1011 = vmatpush.msra.mxu0 0.0
        %1012 = vmatpush.msra.mxu0 0.0
        %1013 = vmatpush.msra.mxu0 0.0
        %1014 = vmatpush.msra.mxu0 0.0
        %1015 = vmatpush.msra.mxu0 0.0
        %1016 = vmatpush.msra.mxu0 0.0
        %1017 = vmatpush.msra.mxu0 %v997
        %1018 = vmatmul.f32.gmra.mxu0 %v1000
        %v1019 = vpop.f32.mrf.mxu0
        %v1020 = vadd.f32 0.0, %v1019
        %1021 = vdwg.mxu0
        %v1022 = vld [vmem:[#allocation6 + $0x40] sm:$0xff]
        %v1023 = vld [vmem:[#allocation6 + $0x48] sm:$0xff]
        %v1025 = vsel %vm584, %v1020, 0
        %1027 = vmatpush.msra.mxu0 0.0
        %1028 = vmatpush.msra.mxu0 0.0
        %1029 = vmatpush.msra.mxu0 0.0
        %1030 = vmatpush.msra.mxu0 0.0
        %1031 = vmatpush.msra.mxu0 0.0
        %1032 = vmatpush.msra.mxu0 0.0
        %1033 = vmatpush.msra.mxu0 0.0
        %1034 = vmatpush.msra.mxu0 0.0
        %1035 = vmatpush.msra.mxu0 0.0
        %1036 = vmatpush.msra.mxu0 0.0
        %1037 = vmatpush.msra.mxu0 0.0
        %1038 = vmatpush.msra.mxu0 0.0
        %1039 = vmatpush.msra.mxu0 0.0
        %1040 = vmatpush.msra.mxu0 0.0
        %1041 = vmatpush.msra.mxu0 %v1023
        %1042 = vmatpush.msra.mxu0 %v1022
        %1043 = vmatmul.f32.gmra.mxu0 %v1025
        %v1044 = vpop.f32.mrf.mxu0
        %v1045 = vadd.f32 0.0, %v1044
        %1046 = vdwg.mxu0
        %v1047 = vadd.f32 %v954, %v1045
        %1048 = vrot.lane.b32.xlu0 %v504, 48
        %v1049 = vpop.permute.xlu0 %1048
        %1050 = vrot.lane.b32.xlu0 %v562, 48
        %v1051 = vpop.permute.xlu0 %1050
        %v1052 = vsel %vm584, %v1049, 0
        %v1054 = vsel %vm584, %v1051, 0
        %1056 = vmatpush.xpose.msra.mxu0 0.0
        %1057 = vmatpush.xpose.msra.mxu0 0.0
        %1058 = vmatpush.xpose.msra.mxu0 0.0
        %1059 = vmatpush.xpose.msra.mxu0 0.0
        %1060 = vmatpush.xpose.msra.mxu0 0.0
        %1061 = vmatpush.xpose.msra.mxu0 0.0
        %1062 = vmatpush.xpose.msra.mxu0 0.0
        %1063 = vmatpush.xpose.msra.mxu0 0.0
        %1064 = vmatpush.xpose.msra.mxu0 0.0
        %1065 = vmatpush.xpose.msra.mxu0 0.0
        %1066 = vmatpush.xpose.msra.mxu0 0.0
        %1067 = vmatpush.xpose.msra.mxu0 0.0
        %1068 = vmatpush.xpose.msra.mxu0 0.0
        %1069 = vmatpush.xpose.msra.mxu0 0.0
        %1070 = vmatpush.xpose.msra.mxu0 0.0
        %1071 = vmatpush.xpose.msra.mxu0 %v1054
        %1072 = vmatmul.f32.gmra.mxu0 %v1052
        %v1073 = vpop.f32.mrf.mxu0
        %v1074 = vadd.f32 0.0, %v1073
        %1075 = vdwg.mxu0
        %v1076 = vmul.f32 %v1074, 0.25
        %v1077 = vadd.f32 %v1076, %v613
        %v1078 = vsel %vm616, %v1077, -inf
        %1079 = vmax.xlane.f32.xlu0 %v1078
        %v1080 = vpop.xlane.xlu0 %1079
        %v1081 = vsub.f32 %v1077, %v1080
        %v1082 = vmul.f32 %v1081, 1.442695
        %v1083 = vpow.pop %v1082
        %v1084 = vsel %vm616, %v1083, 0.0
        %1085 = vadd.xlane.f32.xlu0 %v1084
        %v1086 = vpop.xlane.xlu0 %1085
        %v1087 = vrcp.pop %v1086
        %v1088 = vmul.f32 %v1083, %v1087
        %1089 = vrot.lane.b32.xlu0 %v582, 48
        %v1090 = vpop.permute.xlu0 %1089
        %v1093 = vsel %vm616, %v1088, 0
        %1095 = vmatpush.msra.mxu0 0.0
        %1096 = vmatpush.msra.mxu0 0.0
        %1097 = vmatpush.msra.mxu0 0.0
        %1098 = vmatpush.msra.mxu0 0.0
        %1099 = vmatpush.msra.mxu0 0.0
        %1100 = vmatpush.msra.mxu0 0.0
        %1101 = vmatpush.msra.mxu0 0.0
        %1102 = vmatpush.msra.mxu0 0.0
        %1103 = vmatpush.msra.mxu0 0.0
        %1104 = vmatpush.msra.mxu0 0.0
        %1105 = vmatpush.msra.mxu0 0.0
        %1106 = vmatpush.msra.mxu0 0.0
        %1107 = vmatpush.msra.mxu0 0.0
        %1108 = vmatpush.msra.mxu0 0.0
        %1109 = vmatpush.msra.mxu0 0.0
        %1110 = vmatpush.msra.mxu0 %v1090
        %1111 = vmatmul.f32.gmra.mxu0 %v1093
        %v1112 = vpop.f32.mrf.mxu0
        %v1113 = vadd.f32 0.0, %v1112
        %1114 = vdwg.mxu0
        %v1115 = vld [vmem:[#allocation6 + $0x50] sm:$0xff]
        %v1116 = vld [vmem:[#allocation6 + $0x58] sm:$0xff]
        %v1118 = vsel %vm584, %v1113, 0
        %1120 = vmatpush.msra.mxu0 0.0
        %1121 = vmatpush.msra.mxu0 0.0
        %1122 = vmatpush.msra.mxu0 0.0
        %1123 = vmatpush.msra.mxu0 0.0
        %1124 = vmatpush.msra.mxu0 0.0
        %1125 = vmatpush.msra.mxu0 0.0
        %1126 = vmatpush.msra.mxu0 0.0
        %1127 = vmatpush.msra.mxu0 0.0
        %1128 = vmatpush.msra.mxu0 0.0
        %1129 = vmatpush.msra.mxu0 0.0
        %1130 = vmatpush.msra.mxu0 0.0
        %1131 = vmatpush.msra.mxu0 0.0
        %1132 = vmatpush.msra.mxu0 0.0
        %1133 = vmatpush.msra.mxu0 0.0
        %1134 = vmatpush.msra.mxu0 %v1116
        %1135 = vmatpush.msra.mxu0 %v1115
        %1136 = vmatmul.f32.gmra.mxu0 %v1118
        %v1137 = vpop.f32.mrf.mxu0
        %v1138 = vadd.f32 0.0, %v1137
        %1139 = vdwg.mxu0
        %v1140 = vadd.f32 %v1047, %v1138
        %1141 = vrot.lane.b32.xlu0 %v504, 32
        %v1142 = vpop.permute.xlu0 %1141
        %1143 = vrot.lane.b32.xlu0 %v562, 32
        %v1144 = vpop.permute.xlu0 %1143
        %v1145 = vsel %vm584, %v1142, 0
        %v1147 = vsel %vm584, %v1144, 0
        %1149 = vmatpush.xpose.msra.mxu0 0.0
        %1150 = vmatpush.xpose.msra.mxu0 0.0
        %1151 = vmatpush.xpose.msra.mxu0 0.0
        %1152 = vmatpush.xpose.msra.mxu0 0.0
        %1153 = vmatpush.xpose.msra.mxu0 0.0
        %1154 = vmatpush.xpose.msra.mxu0 0.0
        %1155 = vmatpush.xpose.msra.mxu0 0.0
        %1156 = vmatpush.xpose.msra.mxu0 0.0
        %1157 = vmatpush.xpose.msra.mxu0 0.0
        %1158 = vmatpush.xpose.msra.mxu0 0.0
        %1159 = vmatpush.xpose.msra.mxu0 0.0
        %1160 = vmatpush.xpose.msra.mxu0 0.0
        %1161 = vmatpush.xpose.msra.mxu0 0.0
        %1162 = vmatpush.xpose.msra.mxu0 0.0
        %1163 = vmatpush.xpose.msra.mxu0 0.0
        %1164 = vmatpush.xpose.msra.mxu0 %v1147
        %1165 = vmatmul.f32.gmra.mxu0 %v1145
        %v1166 = vpop.f32.mrf.mxu0
        %v1167 = vadd.f32 0.0, %v1166
        %1168 = vdwg.mxu0
        %v1169 = vmul.f32 %v1167, 0.25
        %v1170 = vadd.f32 %v1169, %v613
        %v1171 = vsel %vm616, %v1170, -inf
        %1172 = vmax.xlane.f32.xlu0 %v1171
        %v1173 = vpop.xlane.xlu0 %1172
        %v1174 = vsub.f32 %v1170, %v1173
        %v1175 = vmul.f32 %v1174, 1.442695
        %v1176 = vpow.pop %v1175
        %v1177 = vsel %vm616, %v1176, 0.0
        %1178 = vadd.xlane.f32.xlu0 %v1177
        %v1179 = vpop.xlane.xlu0 %1178
        %v1180 = vrcp.pop %v1179
        %v1181 = vmul.f32 %v1176, %v1180
        %1182 = vrot.lane.b32.xlu0 %v582, 32
        %v1183 = vpop.permute.xlu0 %1182
        %v1186 = vsel %vm616, %v1181, 0
        %1188 = vmatpush.msra.mxu0 0.0
        %1189 = vmatpush.msra.mxu0 0.0
        %1190 = vmatpush.msra.mxu0 0.0
        %1191 = vmatpush.msra.mxu0 0.0
        %1192 = vmatpush.msra.mxu0 0.0
        %1193 = vmatpush.msra.mxu0 0.0
        %1194 = vmatpush.msra.mxu0 0.0
        %1195 = vmatpush.msra.mxu0 0.0
        %1196 = vmatpush.msra.mxu0 0.0
        %1197 = vmatpush.msra.mxu0 0.0
        %1198 = vmatpush.msra.mxu0 0.0
        %1199 = vmatpush.msra.mxu0 0.0
        %1200 = vmatpush.msra.mxu0 0.0
        %1201 = vmatpush.msra.mxu0 0.0
        %1202 = vmatpush.msra.mxu0 0.0
        %1203 = vmatpush.msra.mxu0 %v1183
        %1204 = vmatmul.f32.gmra.mxu0 %v1186
        %v1205 = vpop.f32.mrf.mxu0
        %v1206 = vadd.f32 0.0, %v1205
        %1207 = vdwg.mxu0
        %v1208 = vld [vmem:[#allocation6 + $0x60] sm:$0xff]
        %v1209 = vld [vmem:[#allocation6 + $0x68] sm:$0xff]
        %v1211 = vsel %vm584, %v1206, 0
        %1213 = vmatpush.msra.mxu0 0.0
        %1214 = vmatpush.msra.mxu0 0.0
        %1215 = vmatpush.msra.mxu0 0.0
        %1216 = vmatpush.msra.mxu0 0.0
        %1217 = vmatpush.msra.mxu0 0.0
        %1218 = vmatpush.msra.mxu0 0.0
        %1219 = vmatpush.msra.mxu0 0.0
        %1220 = vmatpush.msra.mxu0 0.0
        %1221 = vmatpush.msra.mxu0 0.0
        %1222 = vmatpush.msra.mxu0 0.0
        %1223 = vmatpush.msra.mxu0 0.0
        %1224 = vmatpush.msra.mxu0 0.0
        %1225 = vmatpush.msra.mxu0 0.0
        %1226 = vmatpush.msra.mxu0 0.0
        %1227 = vmatpush.msra.mxu0 %v1209
        %1228 = vmatpush.msra.mxu0 %v1208
        %1229 = vmatmul.f32.gmra.mxu0 %v1211
        %v1230 = vpop.f32.mrf.mxu0
        %v1231 = vadd.f32 0.0, %v1230
        %1232 = vdwg.mxu0
        %v1233 = vadd.f32 %v1140, %v1231
        %1234 = vrot.lane.b32.xlu0 %v504, 16
        %v1235 = vpop.permute.xlu0 %1234
        %1236 = vrot.lane.b32.xlu0 %v562, 16
        %v1237 = vpop.permute.xlu0 %1236
        %v1238 = vsel %vm584, %v1235, 0
        %v1240 = vsel %vm584, %v1237, 0
        %1242 = vmatpush.xpose.msra.mxu0 0.0
        %1243 = vmatpush.xpose.msra.mxu0 0.0
        %1244 = vmatpush.xpose.msra.mxu0 0.0
        %1245 = vmatpush.xpose.msra.mxu0 0.0
        %1246 = vmatpush.xpose.msra.mxu0 0.0
        %1247 = vmatpush.xpose.msra.mxu0 0.0
        %1248 = vmatpush.xpose.msra.mxu0 0.0
        %1249 = vmatpush.xpose.msra.mxu0 0.0
        %1250 = vmatpush.xpose.msra.mxu0 0.0
        %1251 = vmatpush.xpose.msra.mxu0 0.0
        %1252 = vmatpush.xpose.msra.mxu0 0.0
        %1253 = vmatpush.xpose.msra.mxu0 0.0
        %1254 = vmatpush.xpose.msra.mxu0 0.0
        %1255 = vmatpush.xpose.msra.mxu0 0.0
        %1256 = vmatpush.xpose.msra.mxu0 0.0
        %1257 = vmatpush.xpose.msra.mxu0 %v1240
        %1258 = vmatmul.f32.gmra.mxu0 %v1238
        %v1259 = vpop.f32.mrf.mxu0
        %v1260 = vadd.f32 0.0, %v1259
        %1261 = vdwg.mxu0
        %v1262 = vmul.f32 %v1260, 0.25
        %v1263 = vadd.f32 %v1262, %v613
        %v1264 = vsel %vm616, %v1263, -inf
        %1265 = vmax.xlane.f32.xlu0 %v1264
        %v1266 = vpop.xlane.xlu0 %1265
        %v1267 = vsub.f32 %v1263, %v1266
        %v1268 = vmul.f32 %v1267, 1.442695
        %v1269 = vpow.pop %v1268
        %v1270 = vsel %vm616, %v1269, 0.0
        %1271 = vadd.xlane.f32.xlu0 %v1270
        %v1272 = vpop.xlane.xlu0 %1271
        %v1273 = vrcp.pop %v1272
        %v1274 = vmul.f32 %v1269, %v1273
        %1275 = vrot.lane.b32.xlu0 %v582, 16
        %v1276 = vpop.permute.xlu0 %1275
        %v1279 = vsel %vm616, %v1274, 0
        %1281 = vmatpush.msra.mxu0 0.0
        %1282 = vmatpush.msra.mxu0 0.0
        %1283 = vmatpush.msra.mxu0 0.0
        %1284 = vmatpush.msra.mxu0 0.0
        %1285 = vmatpush.msra.mxu0 0.0
        %1286 = vmatpush.msra.mxu0 0.0
        %1287 = vmatpush.msra.mxu0 0.0
        %1288 = vmatpush.msra.mxu0 0.0
        %1289 = vmatpush.msra.mxu0 0.0
        %1290 = vmatpush.msra.mxu0 0.0
        %1291 = vmatpush.msra.mxu0 0.0
        %1292 = vmatpush.msra.mxu0 0.0
        %1293 = vmatpush.msra.mxu0 0.0
        %1294 = vmatpush.msra.mxu0 0.0
        %1295 = vmatpush.msra.mxu0 0.0
        %1296 = vmatpush.msra.mxu0 %v1276
        %1297 = vmatmul.f32.gmra.mxu0 %v1279
        %v1298 = vpop.f32.mrf.mxu0
        %v1299 = vadd.f32 0.0, %v1298
        %1300 = vdwg.mxu0
        %v1301 = vld [vmem:[#allocation6 + $0x70] sm:$0xff]
        %v1302 = vld [vmem:[#allocation6 + $0x78] sm:$0xff]
        %v1304 = vsel %vm584, %v1299, 0
        %1306 = vmatpush.msra.mxu0 0.0
        %1307 = vmatpush.msra.mxu0 0.0
        %1308 = vmatpush.msra.mxu0 0.0
        %1309 = vmatpush.msra.mxu0 0.0
        %1310 = vmatpush.msra.mxu0 0.0
        %1311 = vmatpush.msra.mxu0 0.0
        %1312 = vmatpush.msra.mxu0 0.0
        %1313 = vmatpush.msra.mxu0 0.0
        %1314 = vmatpush.msra.mxu0 0.0
        %1315 = vmatpush.msra.mxu0 0.0
        %1316 = vmatpush.msra.mxu0 0.0
        %1317 = vmatpush.msra.mxu0 0.0
        %1318 = vmatpush.msra.mxu0 0.0
        %1319 = vmatpush.msra.mxu0 0.0
        %1320 = vmatpush.msra.mxu0 %v1302
        %1321 = vmatpush.msra.mxu0 %v1301
        %1322 = vmatmul.f32.gmra.mxu0 %v1304
        %v1323 = vpop.f32.mrf.mxu0
        %v1324 = vadd.f32 0.0, %v1323
        %1325 = vdwg.mxu0
        %v1326 = vadd.f32 %v1233, %v1324
        %v1327 = vld [vmem:[%s8] sm:$0x1]
        %v1329 = vperm.slane %v1327, 0
        %v1331 = vadd.f32 %v1326, %v1329
        %v1332 = vadd.f32 %v1331, %v463
        %1333 = vadd.xlane.f32.xlu0 %v1332
        %v1334 = vpop.xlane.xlu0 %1333
        %v1335 = vrcp.pop 128.0
        %v1336 = vmul.f32 128.0, %v1335
        %v1337 = vsub.f32 1.0, %v1336
        %v1338 = vmul.f32 %v1335, %v1337
        %v1339 = vadd.f32 %v1335, %v1338
        %vm1340 = vweird.f32 %v1335
        %v1341 = vsel %vm1340, %v1335, %v1339
        %v1342 = vmul.f32 %v1334, %v1341
        %v1343 = vsub.f32 %v1332, %v1342
        %v1344 = vmul.f32 %v1343, %v1343
        %1345 = vadd.xlane.f32.xlu0 %v1344
        %v1346 = vpop.xlane.xlu0 %1345
        %v1347 = vmul.f32 %v1346, %v1341
        %v1348 = vadd.f32 %v1347, 1e-05
        %v1349 = vrsqrt.pop %v1348
        %v1350 = vmul.f32 %v1349, %v1348
        %v1351 = vmul.f32 %v1350, %v1349
        %v1352 = vmul.f32 0.5, %v1351
        %v1353 = vsub.f32 1.5, %v1352
        %v1354 = vmul.f32 %v1349, %v1353
        %vm1355 = vweird.f32 %v1348
        %vm1356 = vweird.f32 %v1349
        %vm1357 = vmor %vm1355, %vm1356
        %v1358 = vsel %vm1357, %v1349, %v1354
        %v1359 = vmul.f32 %v1343, %v1358
        %v1360 = vld [vmem:[%s9] sm:$0x1]
        %v1362 = vperm.slane %v1360, 0
        %v1364 = vmul.f32 %v1359, %v1362
        %v1365 = vld [vmem:[%s10] sm:$0x1]
        %v1367 = vperm.slane %v1365, 0
        %v1369 = vadd.f32 %v1364, %v1367
        %1370 = vst [vmem:[%s462] sm:$0xff] %v1369
        %p1371 = scmp.lt.s32.totalorder %s24, 1
        %s1372 = scalar_select %p1371, %s24, 1
        %s1373 = smul.addr %s1372, 8
        %s1374 = scalar_lea.vmem %s11, %s1373
        // Predicated region
        $region77: #{tsp_monty_style_decoder_forward.12} parent=63 // pred_check
          %p1375 = pneg %p288
        $region78: #{tsp_monty_style_decoder_forward.12} parent=63 // pred_check_branch
          %1377 = sbr.rel (%p1375) target = $region80
        $region79: #{tsp_monty_style_decoder_forward.12} parent=63 // pred_region
          _
        $region80: #{tsp_monty_style_decoder_forward.12} parent=63 // pred_fallthru
          _
      $region64: #{tsp_monty_style_decoder_forward.12} parent=5 // pred_fallthru
        _
      %p1378 = scmp.le.s32.totalorder 2, %s19
      // Predicated region
      $region81: #{tsp_monty_style_decoder_forward.12} parent=5 // pred_check
        %p1379 = pneg %p1378
      $region82: #{tsp_monty_style_decoder_forward.12} parent=5 // pred_check_branch
        %1381 = sbr.rel (%p1379) target = $region84
      $region83: #{tsp_monty_style_decoder_forward.12} parent=5 // pred_region
        %s1382 = ssub.s32 %s19, 2
        // Predicated region
        $region85: #{tsp_monty_style_decoder_forward.12} parent=83 // pred_check
          %p1383 = pneg %p294
        $region86: #{tsp_monty_style_decoder_forward.12} parent=83 // pred_check_branch
          %1385 = sbr.rel (%p1383) target = $region88
        $region87: #{tsp_monty_style_decoder_forward.12} parent=83 // pred_region
          %p1386 = scmp.lt.s32.totalorder %s25, 1
          %s1387 = scalar_select %p1386, %s25, 1
          %s1388 = smul.addr %s1387, 8
          %s1389 = scalar_lea.vmem %s11, %s1388
        $region88: #{tsp_monty_style_decoder_forward.12} parent=83 // pred_fallthru
          _
      $region84: #{tsp_monty_style_decoder_forward.12} parent=5 // pred_fallthru
        _
    $region6: #{tsp_monty_style_decoder_forward.12} parent=1 // loop_footer
      %s23 = sadd.s32 1, %s19
    $region7: #{tsp_monty_style_decoder_forward.12} parent=1 // loop_footer_branch
      %18 = sbr.rel target = $region3
    $region8: #{tsp_monty_style_decoder_forward.12} parent=1 // loop_exit
      _
    %1390 = vsyncpa [#allocation3], 1
    %s1391 = scalar_lea.sflag [#allocation3], 1
    %1392 = vsyncpa %s1391, 1
    %1393 = vsyncpa [#allocation5], 1

// kernel: tsp_monty_style_decoder_forward.19
$region0: #{tsp_monty_style_decoder_forward.19}
  #allocation0 [shape = 'u32[]', space=smem, size = 0x4, offset = 0x4, fixed_abs, tag = 'smem constant byte address 0x4 - core index']
  #allocation1 [shape = 'u32[72,128]{1,0:T(1,128)}', space=vmem, size = 0x9000, scoped, tag = 'internal scratch']
  %s0 = inlined_call_operand.vmem [shape: f32[2,8,128], index: 0, kind: input, shape index: {}]
  %s1 = inlined_call_operand.vmem [shape: f32[2,8,128], index: 1, kind: input, shape index: {}]
  %s2 = inlined_call_operand.vmem [shape: f32[2,1,8], index: 2, kind: input, shape index: {}]
  %s3 = inlined_call_operand.hbm [shape: f32[128,128], index: 3, kind: input, shape index: {}]
  %s4 = inlined_call_operand.hbm [shape: f32[1,128], index: 4, kind: input, shape index: {}]
  %s5 = inlined_call_operand.hbm [shape: f32[128,256], index: 5, kind: input, shape index: {}]
  %s6 = inlined_call_operand.vmem [shape: f32[1,256], index: 6, kind: input, shape index: {}]
  %s7 = inlined_call_operand.hbm [shape: f32[128,128], index: 7, kind: input, shape index: {}]
  %s8 = inlined_call_operand.hbm [shape: f32[1,128], index: 8, kind: input, shape index: {}]
  %s9 = inlined_call_operand.hbm [shape: f32[1,128], index: 9, kind: input, shape index: {}]
  %s10 = inlined_call_operand.hbm [shape: f32[1,128], index: 10, kind: input, shape index: {}]
  %s11 = inlined_call_operand.vmem [shape: f32[2,8,128], index: 11, kind: output, shape index: {}]
  %s12 = sld [smem:[#allocation0]]
  $region105: #{tsp_monty_style_decoder_forward.19} parent=0
    _
  %s14 = ssub.s32 1, %s12
  %s15 = scalar_select 0, %s14, %s12
  $region1: #{tsp_monty_style_decoder_forward.19} parent=0
    #allocation2 [shape = 'u8[65536]{0}', space=vmem, size = 0x10000, scoped, tag = 'input window, operand 3, single buffered']
    #allocation3 [shape = 's32[2]{0}', space=sflag, size = 0x8, scoped, tag = 'scoped memory for tsp_monty_style_decoder_forward.19']
    #allocation4 [shape = 'u8[512]{0}', space=vmem, size = 0x400, scoped, tag = 'input window, operand 4, single buffered']
    #allocation5 [shape = 's32[1]{0}', space=sflag, size = 0x4, scoped, tag = 'scoped memory for tsp_monty_style_decoder_forward.19']
    #allocation6 [shape = 'u8[131072]{0}', space=vmem, size = 0x20000, scoped, tag = 'input window, operand 5, single buffered']
    #allocation7 [shape = 'u8[65536]{0}', space=vmem, size = 0x10000, scoped, tag = 'input window, operand 7, single buffered']
    #allocation8 [shape = 's32[1]{0}', space=sflag, size = 0x4, scoped, tag = 'scoped memory for tsp_monty_style_decoder_forward.19']
    #allocation9 [shape = 'u8[512]{0}', space=vmem, size = 0x400, scoped, tag = 'input window, operand 8, single buffered']
    #allocation10 [shape = 'u8[512]{0}', space=vmem, size = 0x400, scoped, tag = 'input window, operand 9, single buffered']
    #allocation11 [shape = 's32[1]{0}', space=sflag, size = 0x4, scoped, tag = 'scoped memory for tsp_monty_style_decoder_forward.19']
    #allocation12 [shape = 'u8[512]{0}', space=vmem, size = 0x400, scoped, tag = 'input window, operand 10, single buffered']
    %16 = vsyncpa [#allocation3], 0
    %17 = vsyncpa [#allocation5], 0
    %18 = vsyncpa [#allocation8], 0
    %19 = vsyncpa [#allocation11], 0
    loop: start=0, step=1, limit=4
    $region2: #{tsp_monty_style_decoder_forward.19} parent=1 // loop_pre_header
      _
    $region3: #{tsp_monty_style_decoder_forward.19} parent=1 // loop_header
      %s21 = sphi 0, %s25
      %p22 = scmp.ge.s32.totalorder %s21, 4
      %s31 = sphi 0, %s33
      %s34 = sphi 0, %s31
      %s35 = sphi 0, %s34
      %s51 = sphi 0, %s35
      %s57 = sphi 0, %s59
      %s60 = sphi 0, %s57
      %s61 = sphi 0, %s60
      %s77 = sphi 0, %s61
      %s83 = sphi 0, %s85
      %s86 = sphi 0, %s83
      %s87 = sphi 0, %s86
      %s103 = sphi 0, %s87
      %s107 = sphi 0, %s107
      %s109 = sphi 0, %s107
      %s110 = sphi 0, %s109
      %s124 = sphi 0, %s110
      %s128 = sphi 0, %s128
      %s130 = sphi 0, %s128
      %s131 = sphi 0, %s130
      %s145 = sphi 0, %s131
      %s149 = sphi 0, %s149
      %s151 = sphi 0, %s149
      %s152 = sphi 0, %s151
      %s166 = sphi 0, %s152
      %s170 = sphi 0, %s170
      %s172 = sphi 0, %s170
      %s173 = sphi 0, %s172
      %s187 = sphi 0, %s173
      %s191 = sphi 0, %s191
      %s193 = sphi 0, %s191
      %s194 = sphi 0, %s193
      %s208 = sphi 0, %s194
      %s212 = sphi 0, %s212
      %s214 = sphi 0, %s212
      %s215 = sphi 0, %s214
      %s229 = sphi 0, %s215
      %s233 = sphi 0, %s233
      %s235 = sphi 0, %s233
      %s236 = sphi 0, %s235
      %s250 = sphi 0, %s236
      %s254 = sphi 0, %s254
      %s256 = sphi 0, %s254
      %s257 = sphi 0, %s256
      %s271 = sphi 0, %s257
      %s277 = sphi 0, %s279
      %s280 = sphi 0, %s277
      %s281 = sphi 0, %s280
      %s297 = sphi 0, %s281
    $region4: #{tsp_monty_style_decoder_forward.19} parent=1 // loop_header_branch
      %24 = sbr.rel (%p22) target = $region8
    $region5: #{tsp_monty_style_decoder_forward.19} parent=1 // loop_body
      %s26 = ssub.s32 %s21, 1
      %s27 = ssub.s32 %s21, 2
      %s28 = sadd.s32 %s21, 1
      %s29 = ssub.s32 %s21, %s28
      %p30 = scmp.eq.s32.totalorder %s29, 0
      %s32 = sadd.s32 %s31, 1
      %s33 = scalar_select %p30, %s31, %s32
      %p36 = pneg %p30
      %p37 = scmp.eq.s32.totalorder %s21, 1
      %p38 = por %p36, %p37
      %p39 = scmp.ne.s32.totalorder %s31, %s34
      %p40 = scmp.eq.s32.totalorder %s21, 0
      %p41 = por %p39, %p40
      %p42 = scmp.ne.s32.totalorder %s31, %s34
      %p43 = scmp.eq.s32.totalorder %s26, 1
      %p44 = por %p42, %p43
      %p45 = scmp.ne.s32.totalorder %s34, %s35
      %p46 = scmp.eq.s32.totalorder %s26, 0
      %p47 = por %p45, %p46
      %p48 = scmp.ne.s32.totalorder %s34, %s35
      %p49 = scmp.eq.s32.totalorder %s27, 1
      %p50 = por %p48, %p49
      %p52 = scmp.ne.s32.totalorder %s35, %s51
      %p53 = scmp.eq.s32.totalorder %s27, 0
      %p54 = por %p52, %p53
      %s55 = ssub.s32 %s21, %s28
      %p56 = scmp.eq.s32.totalorder %s55, 0
      %s58 = sadd.s32 %s57, 1
      %s59 = scalar_select %p56, %s57, %s58
      %p62 = pneg %p56
      %p63 = scmp.eq.s32.totalorder %s21, 1
      %p64 = por %p62, %p63
      %p65 = scmp.ne.s32.totalorder %s57, %s60
      %p66 = scmp.eq.s32.totalorder %s21, 0
      %p67 = por %p65, %p66
      %p68 = scmp.ne.s32.totalorder %s57, %s60
      %p69 = scmp.eq.s32.totalorder %s26, 1
      %p70 = por %p68, %p69
      %p71 = scmp.ne.s32.totalorder %s60, %s61
      %p72 = scmp.eq.s32.totalorder %s26, 0
      %p73 = por %p71, %p72
      %p74 = scmp.ne.s32.totalorder %s60, %s61
      %p75 = scmp.eq.s32.totalorder %s27, 1
      %p76 = por %p74, %p75
      %p78 = scmp.ne.s32.totalorder %s61, %s77
      %p79 = scmp.eq.s32.totalorder %s27, 0
      %p80 = por %p78, %p79
      %s81 = ssub.s32 %s21, %s28
      %p82 = scmp.eq.s32.totalorder %s81, 0
      %s84 = sadd.s32 %s83, 1
      %s85 = scalar_select %p82, %s83, %s84
      %p88 = pneg %p82
      %p89 = scmp.eq.s32.totalorder %s21, 1
      %p90 = por %p88, %p89
      %p91 = scmp.ne.s32.totalorder %s83, %s86
      %p92 = scmp.eq.s32.totalorder %s21, 0
      %p93 = por %p91, %p92
      %p94 = scmp.ne.s32.totalorder %s83, %s86
      %p95 = scmp.eq.s32.totalorder %s26, 1
      %p96 = por %p94, %p95
      %p97 = scmp.ne.s32.totalorder %s86, %s87
      %p98 = scmp.eq.s32.totalorder %s26, 0
      %p99 = por %p97, %p98
      %p100 = scmp.ne.s32.totalorder %s86, %s87
      %p101 = scmp.eq.s32.totalorder %s27, 1
      %p102 = por %p100, %p101
      %p104 = scmp.ne.s32.totalorder %s87, %s103
      %p105 = scmp.eq.s32.totalorder %s27, 0
      %p106 = por %p104, %p105
      %s108 = sadd.s32 %s107, 1
      %p111 = scmp.eq.s32.totalorder %s21, 1
      %p112 = scmp.ne.s32.totalorder %s107, %s109
      %p113 = scmp.eq.s32.totalorder %s21, 0
      %p114 = por %p112, %p113
      %p115 = scmp.ne.s32.totalorder %s107, %s109
      %p116 = scmp.eq.s32.totalorder %s26, 1
      %p117 = por %p115, %p116
      %p118 = scmp.ne.s32.totalorder %s109, %s110
      %p119 = scmp.eq.s32.totalorder %s26, 0
      %p120 = por %p118, %p119
      %p121 = scmp.ne.s32.totalorder %s109, %s110
      %p122 = scmp.eq.s32.totalorder %s27, 1
      %p123 = por %p121, %p122
      %p125 = scmp.ne.s32.totalorder %s110, %s124
      %p126 = scmp.eq.s32.totalorder %s27, 0
      %p127 = por %p125, %p126
      %s129 = sadd.s32 %s128, 1
      %p132 = scmp.eq.s32.totalorder %s21, 1
      %p133 = scmp.ne.s32.totalorder %s128, %s130
      %p134 = scmp.eq.s32.totalorder %s21, 0
      %p135 = por %p133, %p134
      %p136 = scmp.ne.s32.totalorder %s128, %s130
      %p137 = scmp.eq.s32.totalorder %s26, 1
      %p138 = por %p136, %p137
      %p139 = scmp.ne.s32.totalorder %s130, %s131
      %p140 = scmp.eq.s32.totalorder %s26, 0
      %p141 = por %p139, %p140
      %p142 = scmp.ne.s32.totalorder %s130, %s131
      %p143 = scmp.eq.s32.totalorder %s27, 1
      %p144 = por %p142, %p143
      %p146 = scmp.ne.s32.totalorder %s131, %s145
      %p147 = scmp.eq.s32.totalorder %s27, 0
      %p148 = por %p146, %p147
      %s150 = sadd.s32 %s149, 1
      %p153 = scmp.eq.s32.totalorder %s21, 1
      %p154 = scmp.ne.s32.totalorder %s149, %s151
      %p155 = scmp.eq.s32.totalorder %s21, 0
      %p156 = por %p154, %p155
      %p157 = scmp.ne.s32.totalorder %s149, %s151
      %p158 = scmp.eq.s32.totalorder %s26, 1
      %p159 = por %p157, %p158
      %p160 = scmp.ne.s32.totalorder %s151, %s152
      %p161 = scmp.eq.s32.totalorder %s26, 0
      %p162 = por %p160, %p161
      %p163 = scmp.ne.s32.totalorder %s151, %s152
      %p164 = scmp.eq.s32.totalorder %s27, 1
      %p165 = por %p163, %p164
      %p167 = scmp.ne.s32.totalorder %s152, %s166
      %p168 = scmp.eq.s32.totalorder %s27, 0
      %p169 = por %p167, %p168
      %s171 = sadd.s32 %s170, 1
      %p174 = scmp.eq.s32.totalorder %s21, 1
      %p175 = scmp.ne.s32.totalorder %s170, %s172
      %p176 = scmp.eq.s32.totalorder %s21, 0
      %p177 = por %p175, %p176
      %p178 = scmp.ne.s32.totalorder %s170, %s172
      %p179 = scmp.eq.s32.totalorder %s26, 1
      %p180 = por %p178, %p179
      %p181 = scmp.ne.s32.totalorder %s172, %s173
      %p182 = scmp.eq.s32.totalorder %s26, 0
      %p183 = por %p181, %p182
      %p184 = scmp.ne.s32.totalorder %s172, %s173
      %p185 = scmp.eq.s32.totalorder %s27, 1
      %p186 = por %p184, %p185
      %p188 = scmp.ne.s32.totalorder %s173, %s187
      %p189 = scmp.eq.s32.totalorder %s27, 0
      %p190 = por %p188, %p189
      %s192 = sadd.s32 %s191, 1
      %p195 = scmp.eq.s32.totalorder %s21, 1
      %p196 = scmp.ne.s32.totalorder %s191, %s193
      %p197 = scmp.eq.s32.totalorder %s21, 0
      %p198 = por %p196, %p197
      %p199 = scmp.ne.s32.totalorder %s191, %s193
      %p200 = scmp.eq.s32.totalorder %s26, 1
      %p201 = por %p199, %p200
      %p202 = scmp.ne.s32.totalorder %s193, %s194
      %p203 = scmp.eq.s32.totalorder %s26, 0
      %p204 = por %p202, %p203
      %p205 = scmp.ne.s32.totalorder %s193, %s194
      %p206 = scmp.eq.s32.totalorder %s27, 1
      %p207 = por %p205, %p206
      %p209 = scmp.ne.s32.totalorder %s194, %s208
      %p210 = scmp.eq.s32.totalorder %s27, 0
      %p211 = por %p209, %p210
      %s213 = sadd.s32 %s212, 1
      %p216 = scmp.eq.s32.totalorder %s21, 1
      %p217 = scmp.ne.s32.totalorder %s212, %s214
      %p218 = scmp.eq.s32.totalorder %s21, 0
      %p219 = por %p217, %p218
      %p220 = scmp.ne.s32.totalorder %s212, %s214
      %p221 = scmp.eq.s32.totalorder %s26, 1
      %p222 = por %p220, %p221
      %p223 = scmp.ne.s32.totalorder %s214, %s215
      %p224 = scmp.eq.s32.totalorder %s26, 0
      %p225 = por %p223, %p224
      %p226 = scmp.ne.s32.totalorder %s214, %s215
      %p227 = scmp.eq.s32.totalorder %s27, 1
      %p228 = por %p226, %p227
      %p230 = scmp.ne.s32.totalorder %s215, %s229
      %p231 = scmp.eq.s32.totalorder %s27, 0
      %p232 = por %p230, %p231
      %s234 = sadd.s32 %s233, 1
      %p237 = scmp.eq.s32.totalorder %s21, 1
      %p238 = scmp.ne.s32.totalorder %s233, %s235
      %p239 = scmp.eq.s32.totalorder %s21, 0
      %p240 = por %p238, %p239
      %p241 = scmp.ne.s32.totalorder %s233, %s235
      %p242 = scmp.eq.s32.totalorder %s26, 1
      %p243 = por %p241, %p242
      %p244 = scmp.ne.s32.totalorder %s235, %s236
      %p245 = scmp.eq.s32.totalorder %s26, 0
      %p246 = por %p244, %p245
      %p247 = scmp.ne.s32.totalorder %s235, %s236
      %p248 = scmp.eq.s32.totalorder %s27, 1
      %p249 = por %p247, %p248
      %p251 = scmp.ne.s32.totalorder %s236, %s250
      %p252 = scmp.eq.s32.totalorder %s27, 0
      %p253 = por %p251, %p252
      %s255 = sadd.s32 %s254, 1
      %p258 = scmp.eq.s32.totalorder %s21, 1
      %p259 = scmp.ne.s32.totalorder %s254, %s256
      %p260 = scmp.eq.s32.totalorder %s21, 0
      %p261 = por %p259, %p260
      %p262 = scmp.ne.s32.totalorder %s254, %s256
      %p263 = scmp.eq.s32.totalorder %s26, 1
      %p264 = por %p262, %p263
      %p265 = scmp.ne.s32.totalorder %s256, %s257
      %p266 = scmp.eq.s32.totalorder %s26, 0
      %p267 = por %p265, %p266
      %p268 = scmp.ne.s32.totalorder %s256, %s257
      %p269 = scmp.eq.s32.totalorder %s27, 1
      %p270 = por %p268, %p269
      %p272 = scmp.ne.s32.totalorder %s257, %s271
      %p273 = scmp.eq.s32.totalorder %s27, 0
      %p274 = por %p272, %p273
      %s275 = ssub.s32 %s21, %s28
      %p276 = scmp.eq.s32.totalorder %s275, 0
      %s278 = sadd.s32 %s277, 1
      %s279 = scalar_select %p276, %s277, %s278
      %p282 = pneg %p276
      %p283 = scmp.eq.s32.totalorder %s21, 1
      %p284 = por %p282, %p283
      %p285 = scmp.ne.s32.totalorder %s277, %s280
      %p286 = scmp.eq.s32.totalorder %s21, 0
      %p287 = por %p285, %p286
      %p288 = scmp.ne.s32.totalorder %s277, %s280
      %p289 = scmp.eq.s32.totalorder %s26, 1
      %p290 = por %p288, %p289
      %p291 = scmp.ne.s32.totalorder %s280, %s281
      %p292 = scmp.eq.s32.totalorder %s26, 0
      %p293 = por %p291, %p292
      %p294 = scmp.ne.s32.totalorder %s280, %s281
      %p295 = scmp.eq.s32.totalorder %s27, 1
      %p296 = por %p294, %p295
      %p298 = scmp.ne.s32.totalorder %s281, %s297
      %p299 = scmp.eq.s32.totalorder %s27, 0
      %p300 = por %p298, %p299
      %p301 = scmp.le.s32.totalorder 1, %s21
      %p302 = scmp.lt.s32.totalorder %s21, 3
      %p303 = pnand %p301, %p302
      %p304 = pneg %p303
      // Predicated region
      $region9: #{tsp_monty_style_decoder_forward.19} parent=5 // pred_check
        _
      $region10: #{tsp_monty_style_decoder_forward.19} parent=5 // pred_check_branch
        %306 = sbr.rel (%p303) target = $region12
      $region11: #{tsp_monty_style_decoder_forward.19} parent=5 // pred_region
        %s307 = ssub.s32 %s21, 1
        // Predicated region
        $region13: #{tsp_monty_style_decoder_forward.19} parent=11 // pred_check
          %p308 = pneg %p120
        $region14: #{tsp_monty_style_decoder_forward.19} parent=11 // pred_check_branch
          %310 = sbr.rel (%p308) target = $region16
        $region15: #{tsp_monty_style_decoder_forward.19} parent=11 // pred_region
          %312 = vsyncadd [#allocation3], 0
          %s313 = sshll.u32 %s3, 4
          %s314 = int_to_ptr.hbm [resolvable:$true] %s313
          %s315 = sshll.u32 [#allocation2], 4
          %s316 = int_to_ptr.vmem [resolvable:$true] %s315
          %321 = dma.hbm_to_vmem [thread:$0]  %s314, 2048, %s316, [#allocation3], 128, 128, 8
        $region16: #{tsp_monty_style_decoder_forward.19} parent=11 // pred_fallthru
          _
        // Predicated region
        $region17: #{tsp_monty_style_decoder_forward.19} parent=11 // pred_check
          %p322 = pneg %p141
        $region18: #{tsp_monty_style_decoder_forward.19} parent=11 // pred_check_branch
          %324 = sbr.rel (%p322) target = $region20
        $region19: #{tsp_monty_style_decoder_forward.19} parent=11 // pred_region
          %326 = vsyncadd [#allocation5], 0
          %s328 = sshll.u32 %s4, 4
          %s329 = int_to_ptr.hbm [resolvable:$true] %s328
          %s330 = sshll.u32 [#allocation4], 4
          %s331 = int_to_ptr.vmem [resolvable:$true] %s330
          %333 = dma.hbm_to_vmem [thread:$0]  %s329, 16, %s331, [#allocation5]
        $region20: #{tsp_monty_style_decoder_forward.19} parent=11 // pred_fallthru
          _
        // Predicated region
        $region21: #{tsp_monty_style_decoder_forward.19} parent=11 // pred_check
          %p334 = pneg %p162
        $region22: #{tsp_monty_style_decoder_forward.19} parent=11 // pred_check_branch
          %336 = sbr.rel (%p334) target = $region24
        $region23: #{tsp_monty_style_decoder_forward.19} parent=11 // pred_region
          %338 = vsyncadd [#allocation5], 0
          %s339 = sshll.u32 %s5, 4
          %s340 = int_to_ptr.hbm [resolvable:$true] %s339
          %s341 = sshll.u32 [#allocation6], 4
          %s342 = int_to_ptr.vmem [resolvable:$true] %s341
          %347 = dma.hbm_to_vmem [thread:$0]  %s340, 4096, %s342, [#allocation5], 256, 256, 16
        $region24: #{tsp_monty_style_decoder_forward.19} parent=11 // pred_fallthru
          _
        // Predicated region
        $region25: #{tsp_monty_style_decoder_forward.19} parent=11 // pred_check
          %p348 = pneg %p183
        $region26: #{tsp_monty_style_decoder_forward.19} parent=11 // pred_check_branch
          %350 = sbr.rel (%p348) target = $region28
        $region27: #{tsp_monty_style_decoder_forward.19} parent=11 // pred_region
          _
        $region28: #{tsp_monty_style_decoder_forward.19} parent=11 // pred_fallthru
          _
        // Predicated region
        $region29: #{tsp_monty_style_decoder_forward.19} parent=11 // pred_check
          %p351 = pneg %p204
        $region30: #{tsp_monty_style_decoder_forward.19} parent=11 // pred_check_branch
          %353 = sbr.rel (%p351) target = $region32
        $region31: #{tsp_monty_style_decoder_forward.19} parent=11 // pred_region
          %355 = vsyncadd [#allocation8], 0
          %s356 = sshll.u32 %s7, 4
          %s357 = int_to_ptr.hbm [resolvable:$true] %s356
          %s358 = sshll.u32 [#allocation7], 4
          %s359 = int_to_ptr.vmem [resolvable:$true] %s358
          %364 = dma.hbm_to_vmem [thread:$0]  %s357, 2048, %s359, [#allocation8], 128, 128, 8
        $region32: #{tsp_monty_style_decoder_forward.19} parent=11 // pred_fallthru
          _
        // Predicated region
        $region33: #{tsp_monty_style_decoder_forward.19} parent=11 // pred_check
          %p365 = pneg %p225
        $region34: #{tsp_monty_style_decoder_forward.19} parent=11 // pred_check_branch
          %367 = sbr.rel (%p365) target = $region36
        $region35: #{tsp_monty_style_decoder_forward.19} parent=11 // pred_region
          %369 = vsyncadd [#allocation8], 0
          %s371 = sshll.u32 %s8, 4
          %s372 = int_to_ptr.hbm [resolvable:$true] %s371
          %s373 = sshll.u32 [#allocation9], 4
          %s374 = int_to_ptr.vmem [resolvable:$true] %s373
          %376 = dma.hbm_to_vmem [thread:$0]  %s372, 16, %s374, [#allocation8]
        $region36: #{tsp_monty_style_decoder_forward.19} parent=11 // pred_fallthru
          _
        // Predicated region
        $region37: #{tsp_monty_style_decoder_forward.19} parent=11 // pred_check
          %p377 = pneg %p246
        $region38: #{tsp_monty_style_decoder_forward.19} parent=11 // pred_check_branch
          %379 = sbr.rel (%p377) target = $region40
        $region39: #{tsp_monty_style_decoder_forward.19} parent=11 // pred_region
          %381 = vsyncadd [#allocation11], 0
          %s383 = sshll.u32 %s9, 4
          %s384 = int_to_ptr.hbm [resolvable:$true] %s383
          %s385 = sshll.u32 [#allocation10], 4
          %s386 = int_to_ptr.vmem [resolvable:$true] %s385
          %388 = dma.hbm_to_vmem [thread:$0]  %s384, 16, %s386, [#allocation11]
        $region40: #{tsp_monty_style_decoder_forward.19} parent=11 // pred_fallthru
          _
        // Predicated region
        $region41: #{tsp_monty_style_decoder_forward.19} parent=11 // pred_check
          %p389 = pneg %p267
        $region42: #{tsp_monty_style_decoder_forward.19} parent=11 // pred_check_branch
          %391 = sbr.rel (%p389) target = $region44
        $region43: #{tsp_monty_style_decoder_forward.19} parent=11 // pred_region
          %393 = vsyncadd [#allocation11], 0
          %s395 = sshll.u32 %s10, 4
          %s396 = int_to_ptr.hbm [resolvable:$true] %s395
          %s397 = sshll.u32 [#allocation12], 4
          %s398 = int_to_ptr.vmem [resolvable:$true] %s397
          %400 = dma.hbm_to_vmem [thread:$0]  %s396, 16, %s398, [#allocation11]
        $region44: #{tsp_monty_style_decoder_forward.19} parent=11 // pred_fallthru
          _
      $region12: #{tsp_monty_style_decoder_forward.19} parent=5 // pred_fallthru
        _
      %p401 = scmp.lt.s32.totalorder %s21, 2
      // Predicated region
      $region45: #{tsp_monty_style_decoder_forward.19} parent=5 // pred_check
        %p402 = pneg %p401
      $region46: #{tsp_monty_style_decoder_forward.19} parent=5 // pred_check_branch
        %404 = sbr.rel (%p402) target = $region48
      $region47: #{tsp_monty_style_decoder_forward.19} parent=5 // pred_region
        // Predicated region
        $region49: #{tsp_monty_style_decoder_forward.19} parent=47 // pred_check
          %p405 = pneg %p41
        $region50: #{tsp_monty_style_decoder_forward.19} parent=47 // pred_check_branch
          %407 = sbr.rel (%p405) target = $region52
        $region51: #{tsp_monty_style_decoder_forward.19} parent=47 // pred_region
          %p408 = scmp.lt.s32.totalorder %s21, 1
          %s409 = scalar_select %p408, %s21, 1
          %s410 = smul.addr %s409, 8
          %s411 = scalar_lea.vmem %s0, %s410
        $region52: #{tsp_monty_style_decoder_forward.19} parent=47 // pred_fallthru
          _
        // Predicated region
        $region53: #{tsp_monty_style_decoder_forward.19} parent=47 // pred_check
          %p412 = pneg %p67
        $region54: #{tsp_monty_style_decoder_forward.19} parent=47 // pred_check_branch
          %414 = sbr.rel (%p412) target = $region56
        $region55: #{tsp_monty_style_decoder_forward.19} parent=47 // pred_region
          %p415 = scmp.lt.s32.totalorder %s21, 1
          %s416 = scalar_select %p415, %s21, 1
          %s417 = smul.addr %s416, 8
          %s418 = scalar_lea.vmem %s1, %s417
        $region56: #{tsp_monty_style_decoder_forward.19} parent=47 // pred_fallthru
          _
        // Predicated region
        $region57: #{tsp_monty_style_decoder_forward.19} parent=47 // pred_check
          %p419 = pneg %p93
        $region58: #{tsp_monty_style_decoder_forward.19} parent=47 // pred_check_branch
          %421 = sbr.rel (%p419) target = $region60
        $region59: #{tsp_monty_style_decoder_forward.19} parent=47 // pred_region
          %p422 = scmp.lt.s32.totalorder %s21, 1
          %s423 = scalar_select %p422, %s21, 1
          %s424 = scalar_lea.vmem %s2, %s423
        $region60: #{tsp_monty_style_decoder_forward.19} parent=47 // pred_fallthru
          _
      $region48: #{tsp_monty_style_decoder_forward.19} parent=5 // pred_fallthru
        _
      %p425 = scmp.le.s32.totalorder 1, %s21
      %p426 = scmp.lt.s32.totalorder %s21, 3
      %p427 = pnand %p425, %p426
      %p428 = pneg %p427
      // Predicated region
      $region61: #{tsp_monty_style_decoder_forward.19} parent=5 // pred_check
        _
      $region62: #{tsp_monty_style_decoder_forward.19} parent=5 // pred_check_branch
        %430 = sbr.rel (%p427) target = $region64
      $region63: #{tsp_monty_style_decoder_forward.19} parent=5 // pred_region
        %s431 = ssub.s32 %s21, 1
        // Predicated region
        $region65: #{tsp_monty_style_decoder_forward.19} parent=63 // pred_check
          %p432 = pneg %p120
        $region66: #{tsp_monty_style_decoder_forward.19} parent=63 // pred_check_branch
          %434 = sbr.rel (%p432) target = $region68
        $region67: #{tsp_monty_style_decoder_forward.19} parent=63 // pred_region
          %436 = dma.done [#allocation3], 2048
        $region68: #{tsp_monty_style_decoder_forward.19} parent=63 // pred_fallthru
          _
        // Predicated region
        $region69: #{tsp_monty_style_decoder_forward.19} parent=63 // pred_check
          %p437 = pneg %p141
        $region70: #{tsp_monty_style_decoder_forward.19} parent=63 // pred_check_branch
          %439 = sbr.rel (%p437) target = $region72
        $region71: #{tsp_monty_style_decoder_forward.19} parent=63 // pred_region
          %441 = dma.done [#allocation5], 16
        $region72: #{tsp_monty_style_decoder_forward.19} parent=63 // pred_fallthru
          _
        // Predicated region
        $region73: #{tsp_monty_style_decoder_forward.19} parent=63 // pred_check
          %p442 = pneg %p162
        $region74: #{tsp_monty_style_decoder_forward.19} parent=63 // pred_check_branch
          %444 = sbr.rel (%p442) target = $region76
        $region75: #{tsp_monty_style_decoder_forward.19} parent=63 // pred_region
          %446 = dma.done [#allocation5], 4096
        $region76: #{tsp_monty_style_decoder_forward.19} parent=63 // pred_fallthru
          _
        // Predicated region
        $region77: #{tsp_monty_style_decoder_forward.19} parent=63 // pred_check
          %p447 = pneg %p204
        $region78: #{tsp_monty_style_decoder_forward.19} parent=63 // pred_check_branch
          %449 = sbr.rel (%p447) target = $region80
        $region79: #{tsp_monty_style_decoder_forward.19} parent=63 // pred_region
          %451 = dma.done [#allocation8], 2048
        $region80: #{tsp_monty_style_decoder_forward.19} parent=63 // pred_fallthru
          _
        // Predicated region
        $region81: #{tsp_monty_style_decoder_forward.19} parent=63 // pred_check
          %p452 = pneg %p225
        $region82: #{tsp_monty_style_decoder_forward.19} parent=63 // pred_check_branch
          %454 = sbr.rel (%p452) target = $region84
        $region83: #{tsp_monty_style_decoder_forward.19} parent=63 // pred_region
          %456 = dma.done [#allocation8], 16
        $region84: #{tsp_monty_style_decoder_forward.19} parent=63 // pred_fallthru
          _
        // Predicated region
        $region85: #{tsp_monty_style_decoder_forward.19} parent=63 // pred_check
          %p457 = pneg %p246
        $region86: #{tsp_monty_style_decoder_forward.19} parent=63 // pred_check_branch
          %459 = sbr.rel (%p457) target = $region88
        $region87: #{tsp_monty_style_decoder_forward.19} parent=63 // pred_region
          %461 = dma.done [#allocation11], 16
        $region88: #{tsp_monty_style_decoder_forward.19} parent=63 // pred_fallthru
          _
        // Predicated region
        $region89: #{tsp_monty_style_decoder_forward.19} parent=63 // pred_check
          %p462 = pneg %p267
        $region90: #{tsp_monty_style_decoder_forward.19} parent=63 // pred_check_branch
          %464 = sbr.rel (%p462) target = $region92
        $region91: #{tsp_monty_style_decoder_forward.19} parent=63 // pred_region
          %466 = dma.done [#allocation11], 16
        $region92: #{tsp_monty_style_decoder_forward.19} parent=63 // pred_fallthru
          _
        %p467 = scmp.lt.s32.totalorder %s26, 1
        %s468 = scalar_select %p467, %s26, 1
        %s469 = smul.addr %s468, 8
        %s470 = scalar_lea.vmem %s0, %s469
        %p471 = pneg %p47
        %p472 = pneg %p44
        %p473 = scmp.lt.s32.totalorder %s26, 1
        %s474 = scalar_select %p473, %s26, 1
        %s475 = smul.addr %s474, 8
        %s476 = scalar_lea.vmem %s1, %s475
        %p477 = pneg %p73
        %p478 = pneg %p70
        %p479 = scmp.lt.s32.totalorder %s26, 1
        %s480 = scalar_select %p479, %s26, 1
        %s481 = scalar_lea.vmem %s2, %s480
        %p482 = pneg %p99
        %p483 = pneg %p96
        %p484 = pneg %p120
        %p485 = pneg %p117
        %p486 = pneg %p141
        %p487 = pneg %p138
        %p488 = pneg %p162
        %p489 = pneg %p159
        %p490 = pneg %p183
        %p491 = pneg %p180
        %p492 = pneg %p204
        %p493 = pneg %p201
        %p494 = pneg %p225
        %p495 = pneg %p222
        %p496 = pneg %p246
        %p497 = pneg %p243
        %p498 = pneg %p267
        %p499 = pneg %p264
        %p500 = pneg %p293
        %p501 = pneg %p290
        %p502 = scmp.lt.s32.totalorder %s26, 1
        %s503 = scalar_select %p502, %s26, 1
        %s504 = smul.addr %s503, 8
        %s505 = scalar_lea.vmem %s11, %s504
        %p506 = scmp.lt.s32.totalorder %s26, 1
        %s507 = scalar_select %p506, %s26, 1
        %s508 = smul.addr %s507, 8
        %s509 = scalar_lea.vmem %s0, %s508
        %p510 = scmp.lt.s32.totalorder %s26, 1
        %s511 = scalar_select %p510, %s26, 1
        %s512 = smul.addr %s511, 8
        %s513 = scalar_lea.vmem %s1, %s512
        %p514 = scmp.lt.s32.totalorder %s26, 1
        %s515 = scalar_select %p514, %s26, 1
        %s516 = scalar_lea.vmem %s2, %s515
        %p517 = scmp.lt.s32.totalorder %s26, 1
        %s518 = scalar_select %p517, %s26, 1
        %s519 = smul.addr %s518, 8
        %s520 = scalar_lea.vmem %s11, %s519
        %v521 = vld [vmem:[%s509] sm:$0xff]
        %v522 = vld [vmem:[%s513] sm:$0xff]
        %v523 = vld [vmem:[%s516] sm:$0x1]
        %v524 = vld [vmem:[#allocation2] sm:$0xff]
        %v525 = vld [vmem:[#allocation2 + $0x8] sm:$0xff]
        %v526 = vld [vmem:[#allocation2 + $0x10] sm:$0xff]
        %v527 = vld [vmem:[#allocation2 + $0x18] sm:$0xff]
        %v528 = vld [vmem:[#allocation2 + $0x20] sm:$0xff]
        %v529 = vld [vmem:[#allocation2 + $0x28] sm:$0xff]
        %v530 = vld [vmem:[#allocation2 + $0x30] sm:$0xff]
        %v531 = vld [vmem:[#allocation2 + $0x38] sm:$0xff]
        %v532 = vld [vmem:[#allocation2 + $0x40] sm:$0xff]
        %v533 = vld [vmem:[#allocation2 + $0x48] sm:$0xff]
        %v534 = vld [vmem:[#allocation2 + $0x50] sm:$0xff]
        %v535 = vld [vmem:[#allocation2 + $0x58] sm:$0xff]
        %v536 = vld [vmem:[#allocation2 + $0x60] sm:$0xff]
        %v537 = vld [vmem:[#allocation2 + $0x68] sm:$0xff]
        %v538 = vld [vmem:[#allocation2 + $0x70] sm:$0xff]
        %v539 = vld [vmem:[#allocation2 + $0x78] sm:$0xff]
        %v540 = vld [vmem:[#allocation4] sm:$0x1]
        %v542 = vperm.slane %v540, 0
        %544 = vmatpush.msra.mxu0 %v539
        %545 = vmatpush.msra.mxu0 %v538
        %546 = vmatpush.msra.mxu0 %v537
        %547 = vmatpush.msra.mxu0 %v536
        %548 = vmatpush.msra.mxu0 %v535
        %549 = vmatpush.msra.mxu0 %v534
        %550 = vmatpush.msra.mxu0 %v533
        %551 = vmatpush.msra.mxu0 %v532
        %552 = vmatpush.msra.mxu0 %v531
        %553 = vmatpush.msra.mxu0 %v530
        %554 = vmatpush.msra.mxu0 %v529
        %555 = vmatpush.msra.mxu0 %v528
        %556 = vmatpush.msra.mxu0 %v527
        %557 = vmatpush.msra.mxu0 %v526
        %558 = vmatpush.msra.mxu0 %v525
        %559 = vmatpush.msra.mxu0 %v524
        %560 = vmatmul.f32.gmra.mxu0 %v521
        %v561 = vpop.f32.mrf.mxu0
        %v562 = vadd.f32 %v542, %v561
        %563 = vdwg.mxu0
        %v564 = vld [vmem:[#allocation6] sm:$0xff]
        %v565 = vld [vmem:[#allocation6 + $0x8] sm:$0xff]
        %v566 = vld [vmem:[#allocation6 + $0x10] sm:$0xff]
        %v567 = vld [vmem:[#allocation6 + $0x18] sm:$0xff]
        %v568 = vld [vmem:[#allocation6 + $0x20] sm:$0xff]
        %v569 = vld [vmem:[#allocation6 + $0x28] sm:$0xff]
        %v570 = vld [vmem:[#allocation6 + $0x30] sm:$0xff]
        %v571 = vld [vmem:[#allocation6 + $0x38] sm:$0xff]
        %v572 = vld [vmem:[#allocation6 + $0x40] sm:$0xff]
        %v573 = vld [vmem:[#allocation6 + $0x48] sm:$0xff]
        %v574 = vld [vmem:[#allocation6 + $0x50] sm:$0xff]
        %v575 = vld [vmem:[#allocation6 + $0x58] sm:$0xff]
        %v576 = vld [vmem:[#allocation6 + $0x60] sm:$0xff]
        %v577 = vld [vmem:[#allocation6 + $0x68] sm:$0xff]
        %v578 = vld [vmem:[#allocation6 + $0x70] sm:$0xff]
        %v579 = vld [vmem:[#allocation6 + $0x78] sm:$0xff]
        %v580 = vld [vmem:[#allocation6 + $0x80] sm:$0xff]
        %v581 = vld [vmem:[#allocation6 + $0x88] sm:$0xff]
        %v582 = vld [vmem:[#allocation6 + $0x90] sm:$0xff]
        %v583 = vld [vmem:[#allocation6 + $0x98] sm:$0xff]
        %v584 = vld [vmem:[#allocation6 + $0xa0] sm:$0xff]
        %v585 = vld [vmem:[#allocation6 + $0xa8] sm:$0xff]
        %v586 = vld [vmem:[#allocation6 + $0xb0] sm:$0xff]
        %v587 = vld [vmem:[#allocation6 + $0xb8] sm:$0xff]
        %v588 = vld [vmem:[#allocation6 + $0xc0] sm:$0xff]
        %v589 = vld [vmem:[#allocation6 + $0xc8] sm:$0xff]
        %v590 = vld [vmem:[#allocation6 + $0xd0] sm:$0xff]
        %v591 = vld [vmem:[#allocation6 + $0xd8] sm:$0xff]
        %v592 = vld [vmem:[#allocation6 + $0xe0] sm:$0xff]
        %v593 = vld [vmem:[#allocation6 + $0xe8] sm:$0xff]
        %v594 = vld [vmem:[#allocation6 + $0xf0] sm:$0xff]
        %v595 = vld [vmem:[#allocation6 + $0xf8] sm:$0xff]
        %v596 = vld [vmem:[%s6] sm:$0x3]
        %v598 = vperm.slane %v596, 0
        %v599 = vperm.slane %v596, 1
        %602 = vmatpush.msra.mxu0 %v594
        %603 = vmatpush.msra.mxu0 %v592
        %604 = vmatpush.msra.mxu0 %v590
        %605 = vmatpush.msra.mxu0 %v588
        %606 = vmatpush.msra.mxu0 %v586
        %607 = vmatpush.msra.mxu0 %v584
        %608 = vmatpush.msra.mxu0 %v582
        %609 = vmatpush.msra.mxu0 %v580
        %610 = vmatpush.msra.mxu0 %v578
        %611 = vmatpush.msra.mxu0 %v576
        %612 = vmatpush.msra.mxu0 %v574
        %613 = vmatpush.msra.mxu0 %v572
        %614 = vmatpush.msra.mxu0 %v570
        %615 = vmatpush.msra.mxu0 %v568
        %616 = vmatpush.msra.mxu0 %v566
        %617 = vmatpush.msra.mxu0 %v564
        %618 = vmatmul.f32.gmra.mxu0 %v522
        %v619 = vpop.f32.mrf.mxu0
        %v620 = vadd.f32 %v598, %v619
        %621 = vdwg.mxu0
        %622 = vmatpush.msra.mxu0 %v595
        %623 = vmatpush.msra.mxu0 %v593
        %624 = vmatpush.msra.mxu0 %v591
        %625 = vmatpush.msra.mxu0 %v589
        %626 = vmatpush.msra.mxu0 %v587
        %627 = vmatpush.msra.mxu0 %v585
        %628 = vmatpush.msra.mxu0 %v583
        %629 = vmatpush.msra.mxu0 %v581
        %630 = vmatpush.msra.mxu0 %v579
        %631 = vmatpush.msra.mxu0 %v577
        %632 = vmatpush.msra.mxu0 %v575
        %633 = vmatpush.msra.mxu0 %v573
        %634 = vmatpush.msra.mxu0 %v571
        %635 = vmatpush.msra.mxu0 %v569
        %636 = vmatpush.msra.mxu0 %v567
        %637 = vmatpush.msra.mxu0 %v565
        %638 = vmatmul.f32.gmra.mxu0 %v522
        %v639 = vpop.f32.mrf.mxu0
        %v640 = vadd.f32 %v599, %v639
        %641 = vdwg.mxu0
        %vm642 = vcmask 130048
        %v644 = vsel %vm642, %v562, 0
        %v647 = vsel %vm642, %v620, 0
        %649 = vmatpush.xpose.msra.mxu0 0.0
        %650 = vmatpush.xpose.msra.mxu0 0.0
        %651 = vmatpush.xpose.msra.mxu0 0.0
        %652 = vmatpush.xpose.msra.mxu0 0.0
        %653 = vmatpush.xpose.msra.mxu0 0.0
        %654 = vmatpush.xpose.msra.mxu0 0.0
        %655 = vmatpush.xpose.msra.mxu0 0.0
        %656 = vmatpush.xpose.msra.mxu0 0.0
        %657 = vmatpush.xpose.msra.mxu0 0.0
        %658 = vmatpush.xpose.msra.mxu0 0.0
        %659 = vmatpush.xpose.msra.mxu0 0.0
        %660 = vmatpush.xpose.msra.mxu0 0.0
        %661 = vmatpush.xpose.msra.mxu0 0.0
        %662 = vmatpush.xpose.msra.mxu0 0.0
        %663 = vmatpush.xpose.msra.mxu0 0.0
        %664 = vmatpush.xpose.msra.mxu0 %v647
        %665 = vmatmul.f32.gmra.mxu0 %v644
        %v666 = vpop.f32.mrf.mxu0
        %v667 = vadd.f32 0.0, %v666
        %668 = vdwg.mxu0
        %v669 = vmul.f32 %v667, 0.25
        %v671 = vperm.slane %v523, 0
        %v673 = vadd.f32 %v669, %v671
        %vm674 = vcmask 64512
        %v675 = vsel %vm674, %v673, -inf
        %676 = vmax.xlane.f32.xlu0 %v675
        %v677 = vpop.xlane.xlu0 %676
        %v678 = vsub.f32 %v673, %v677
        %v679 = vmul.f32 %v678, 1.442695
        %v680 = vpow.pop %v679
        %v681 = vsel %vm674, %v680, 0.0
        %682 = vadd.xlane.f32.xlu0 %v681
        %v683 = vpop.xlane.xlu0 %682
        %v684 = vrcp.pop %v683
        %v685 = vmul.f32 %v680, %v684
        %v687 = vsel %vm674, %v685, 0
        %689 = vmatpush.msra.mxu0 0.0
        %690 = vmatpush.msra.mxu0 0.0
        %691 = vmatpush.msra.mxu0 0.0
        %692 = vmatpush.msra.mxu0 0.0
        %693 = vmatpush.msra.mxu0 0.0
        %694 = vmatpush.msra.mxu0 0.0
        %695 = vmatpush.msra.mxu0 0.0
        %696 = vmatpush.msra.mxu0 0.0
        %697 = vmatpush.msra.mxu0 0.0
        %698 = vmatpush.msra.mxu0 0.0
        %699 = vmatpush.msra.mxu0 0.0
        %700 = vmatpush.msra.mxu0 0.0
        %701 = vmatpush.msra.mxu0 0.0
        %702 = vmatpush.msra.mxu0 0.0
        %703 = vmatpush.msra.mxu0 0.0
        %704 = vmatpush.msra.mxu0 %v640
        %705 = vmatmul.f32.gmra.mxu0 %v687
        %v706 = vpop.f32.mrf.mxu0
        %v707 = vadd.f32 0.0, %v706
        %708 = vdwg.mxu0
        %v709 = vld [vmem:[#allocation7] sm:$0xff]
        %v710 = vld [vmem:[#allocation7 + $0x8] sm:$0xff]
        %711 = vrot.lane.b32.xlu0 %v562, 112
        %v712 = vpop.permute.xlu0 %711
        %713 = vrot.lane.b32.xlu0 %v620, 112
        %v714 = vpop.permute.xlu0 %713
        %v715 = vsel %vm642, %v712, 0
        %v717 = vsel %vm642, %v714, 0
        %719 = vmatpush.xpose.msra.mxu0 0.0
        %720 = vmatpush.xpose.msra.mxu0 0.0
        %721 = vmatpush.xpose.msra.mxu0 0.0
        %722 = vmatpush.xpose.msra.mxu0 0.0
        %723 = vmatpush.xpose.msra.mxu0 0.0
        %724 = vmatpush.xpose.msra.mxu0 0.0
        %725 = vmatpush.xpose.msra.mxu0 0.0
        %726 = vmatpush.xpose.msra.mxu0 0.0
        %727 = vmatpush.xpose.msra.mxu0 0.0
        %728 = vmatpush.xpose.msra.mxu0 0.0
        %729 = vmatpush.xpose.msra.mxu0 0.0
        %730 = vmatpush.xpose.msra.mxu0 0.0
        %731 = vmatpush.xpose.msra.mxu0 0.0
        %732 = vmatpush.xpose.msra.mxu0 0.0
        %733 = vmatpush.xpose.msra.mxu0 0.0
        %734 = vmatpush.xpose.msra.mxu0 %v717
        %735 = vmatmul.f32.gmra.mxu0 %v715
        %v736 = vpop.f32.mrf.mxu0
        %v737 = vadd.f32 0.0, %v736
        %738 = vdwg.mxu0
        %v739 = vmul.f32 %v737, 0.25
        %v740 = vadd.f32 %v739, %v671
        %v741 = vsel %vm674, %v740, -inf
        %742 = vmax.xlane.f32.xlu0 %v741
        %v743 = vpop.xlane.xlu0 %742
        %v744 = vsub.f32 %v740, %v743
        %v745 = vmul.f32 %v744, 1.442695
        %v746 = vpow.pop %v745
        %v747 = vsel %vm674, %v746, 0.0
        %748 = vadd.xlane.f32.xlu0 %v747
        %v749 = vpop.xlane.xlu0 %748
        %v750 = vrcp.pop %v749
        %v751 = vmul.f32 %v746, %v750
        %753 = vrot.lane.b32.xlu0 %v640, 112
        %v754 = vpop.permute.xlu0 %753
        %v757 = vsel %vm674, %v751, 0
        %759 = vmatpush.msra.mxu0 0.0
        %760 = vmatpush.msra.mxu0 0.0
        %761 = vmatpush.msra.mxu0 0.0
        %762 = vmatpush.msra.mxu0 0.0
        %763 = vmatpush.msra.mxu0 0.0
        %764 = vmatpush.msra.mxu0 0.0
        %765 = vmatpush.msra.mxu0 0.0
        %766 = vmatpush.msra.mxu0 0.0
        %767 = vmatpush.msra.mxu0 0.0
        %768 = vmatpush.msra.mxu0 0.0
        %769 = vmatpush.msra.mxu0 0.0
        %770 = vmatpush.msra.mxu0 0.0
        %771 = vmatpush.msra.mxu0 0.0
        %772 = vmatpush.msra.mxu0 0.0
        %773 = vmatpush.msra.mxu0 0.0
        %774 = vmatpush.msra.mxu0 %v754
        %775 = vmatmul.f32.gmra.mxu0 %v757
        %v776 = vpop.f32.mrf.mxu0
        %v777 = vadd.f32 0.0, %v776
        %778 = vdwg.mxu0
        %v779 = vld [vmem:[#allocation7 + $0x10] sm:$0xff]
        %v780 = vld [vmem:[#allocation7 + $0x18] sm:$0xff]
        %v782 = vsel %vm642, %v777, 0
        %784 = vmatpush.msra.mxu0 0.0
        %785 = vmatpush.msra.mxu0 0.0
        %786 = vmatpush.msra.mxu0 0.0
        %787 = vmatpush.msra.mxu0 0.0
        %788 = vmatpush.msra.mxu0 0.0
        %789 = vmatpush.msra.mxu0 0.0
        %790 = vmatpush.msra.mxu0 0.0
        %791 = vmatpush.msra.mxu0 0.0
        %792 = vmatpush.msra.mxu0 0.0
        %793 = vmatpush.msra.mxu0 0.0
        %794 = vmatpush.msra.mxu0 0.0
        %795 = vmatpush.msra.mxu0 0.0
        %796 = vmatpush.msra.mxu0 0.0
        %797 = vmatpush.msra.mxu0 0.0
        %798 = vmatpush.msra.mxu0 %v780
        %799 = vmatpush.msra.mxu0 %v779
        %800 = vmatmul.f32.gmra.mxu0 %v782
        %v801 = vpop.f32.mrf.mxu0
        %v802 = vadd.f32 0.0, %v801
        %803 = vdwg.mxu0
        %v805 = vsel %vm642, %v707, 0
        %807 = vmatpush.msra.mxu0 0.0
        %808 = vmatpush.msra.mxu0 0.0
        %809 = vmatpush.msra.mxu0 0.0
        %810 = vmatpush.msra.mxu0 0.0
        %811 = vmatpush.msra.mxu0 0.0
        %812 = vmatpush.msra.mxu0 0.0
        %813 = vmatpush.msra.mxu0 0.0
        %814 = vmatpush.msra.mxu0 0.0
        %815 = vmatpush.msra.mxu0 0.0
        %816 = vmatpush.msra.mxu0 0.0
        %817 = vmatpush.msra.mxu0 0.0
        %818 = vmatpush.msra.mxu0 0.0
        %819 = vmatpush.msra.mxu0 0.0
        %820 = vmatpush.msra.mxu0 0.0
        %821 = vmatpush.msra.mxu0 %v710
        %822 = vmatpush.msra.mxu0 %v709
        %823 = vmatmul.f32.gmra.mxu0 %v805
        %v824 = vpop.f32.mrf.mxu0
        %v825 = vadd.f32 %v802, %v824
        %826 = vdwg.mxu0
        %827 = vrot.lane.b32.xlu0 %v562, 96
        %v828 = vpop.permute.xlu0 %827
        %829 = vrot.lane.b32.xlu0 %v620, 96
        %v830 = vpop.permute.xlu0 %829
        %v831 = vsel %vm642, %v828, 0
        %v833 = vsel %vm642, %v830, 0
        %835 = vmatpush.xpose.msra.mxu0 0.0
        %836 = vmatpush.xpose.msra.mxu0 0.0
        %837 = vmatpush.xpose.msra.mxu0 0.0
        %838 = vmatpush.xpose.msra.mxu0 0.0
        %839 = vmatpush.xpose.msra.mxu0 0.0
        %840 = vmatpush.xpose.msra.mxu0 0.0
        %841 = vmatpush.xpose.msra.mxu0 0.0
        %842 = vmatpush.xpose.msra.mxu0 0.0
        %843 = vmatpush.xpose.msra.mxu0 0.0
        %844 = vmatpush.xpose.msra.mxu0 0.0
        %845 = vmatpush.xpose.msra.mxu0 0.0
        %846 = vmatpush.xpose.msra.mxu0 0.0
        %847 = vmatpush.xpose.msra.mxu0 0.0
        %848 = vmatpush.xpose.msra.mxu0 0.0
        %849 = vmatpush.xpose.msra.mxu0 0.0
        %850 = vmatpush.xpose.msra.mxu0 %v833
        %851 = vmatmul.f32.gmra.mxu0 %v831
        %v852 = vpop.f32.mrf.mxu0
        %v853 = vadd.f32 0.0, %v852
        %854 = vdwg.mxu0
        %v855 = vmul.f32 %v853, 0.25
        %v856 = vadd.f32 %v855, %v671
        %v857 = vsel %vm674, %v856, -inf
        %858 = vmax.xlane.f32.xlu0 %v857
        %v859 = vpop.xlane.xlu0 %858
        %v860 = vsub.f32 %v856, %v859
        %v861 = vmul.f32 %v860, 1.442695
        %v862 = vpow.pop %v861
        %v863 = vsel %vm674, %v862, 0.0
        %864 = vadd.xlane.f32.xlu0 %v863
        %v865 = vpop.xlane.xlu0 %864
        %v866 = vrcp.pop %v865
        %v867 = vmul.f32 %v862, %v866
        %868 = vrot.lane.b32.xlu0 %v640, 96
        %v869 = vpop.permute.xlu0 %868
        %v872 = vsel %vm674, %v867, 0
        %874 = vmatpush.msra.mxu0 0.0
        %875 = vmatpush.msra.mxu0 0.0
        %876 = vmatpush.msra.mxu0 0.0
        %877 = vmatpush.msra.mxu0 0.0
        %878 = vmatpush.msra.mxu0 0.0
        %879 = vmatpush.msra.mxu0 0.0
        %880 = vmatpush.msra.mxu0 0.0
        %881 = vmatpush.msra.mxu0 0.0
        %882 = vmatpush.msra.mxu0 0.0
        %883 = vmatpush.msra.mxu0 0.0
        %884 = vmatpush.msra.mxu0 0.0
        %885 = vmatpush.msra.mxu0 0.0
        %886 = vmatpush.msra.mxu0 0.0
        %887 = vmatpush.msra.mxu0 0.0
        %888 = vmatpush.msra.mxu0 0.0
        %889 = vmatpush.msra.mxu0 %v869
        %890 = vmatmul.f32.gmra.mxu0 %v872
        %v891 = vpop.f32.mrf.mxu0
        %v892 = vadd.f32 0.0, %v891
        %893 = vdwg.mxu0
        %v894 = vld [vmem:[#allocation7 + $0x20] sm:$0xff]
        %v895 = vld [vmem:[#allocation7 + $0x28] sm:$0xff]
        %v897 = vsel %vm642, %v892, 0
        %899 = vmatpush.msra.mxu0 0.0
        %900 = vmatpush.msra.mxu0 0.0
        %901 = vmatpush.msra.mxu0 0.0
        %902 = vmatpush.msra.mxu0 0.0
        %903 = vmatpush.msra.mxu0 0.0
        %904 = vmatpush.msra.mxu0 0.0
        %905 = vmatpush.msra.mxu0 0.0
        %906 = vmatpush.msra.mxu0 0.0
        %907 = vmatpush.msra.mxu0 0.0
        %908 = vmatpush.msra.mxu0 0.0
        %909 = vmatpush.msra.mxu0 0.0
        %910 = vmatpush.msra.mxu0 0.0
        %911 = vmatpush.msra.mxu0 0.0
        %912 = vmatpush.msra.mxu0 0.0
        %913 = vmatpush.msra.mxu0 %v895
        %914 = vmatpush.msra.mxu0 %v894
        %915 = vmatmul.f32.gmra.mxu0 %v897
        %v916 = vpop.f32.mrf.mxu0
        %v917 = vadd.f32 0.0, %v916
        %918 = vdwg.mxu0
        %v919 = vadd.f32 %v825, %v917
        %920 = vrot.lane.b32.xlu0 %v562, 80
        %v921 = vpop.permute.xlu0 %920
        %922 = vrot.lane.b32.xlu0 %v620, 80
        %v923 = vpop.permute.xlu0 %922
        %v924 = vsel %vm642, %v921, 0
        %v926 = vsel %vm642, %v923, 0
        %928 = vmatpush.xpose.msra.mxu0 0.0
        %929 = vmatpush.xpose.msra.mxu0 0.0
        %930 = vmatpush.xpose.msra.mxu0 0.0
        %931 = vmatpush.xpose.msra.mxu0 0.0
        %932 = vmatpush.xpose.msra.mxu0 0.0
        %933 = vmatpush.xpose.msra.mxu0 0.0
        %934 = vmatpush.xpose.msra.mxu0 0.0
        %935 = vmatpush.xpose.msra.mxu0 0.0
        %936 = vmatpush.xpose.msra.mxu0 0.0
        %937 = vmatpush.xpose.msra.mxu0 0.0
        %938 = vmatpush.xpose.msra.mxu0 0.0
        %939 = vmatpush.xpose.msra.mxu0 0.0
        %940 = vmatpush.xpose.msra.mxu0 0.0
        %941 = vmatpush.xpose.msra.mxu0 0.0
        %942 = vmatpush.xpose.msra.mxu0 0.0
        %943 = vmatpush.xpose.msra.mxu0 %v926
        %944 = vmatmul.f32.gmra.mxu0 %v924
        %v945 = vpop.f32.mrf.mxu0
        %v946 = vadd.f32 0.0, %v945
        %947 = vdwg.mxu0
        %v948 = vmul.f32 %v946, 0.25
        %v949 = vadd.f32 %v948, %v671
        %v950 = vsel %vm674, %v949, -inf
        %951 = vmax.xlane.f32.xlu0 %v950
        %v952 = vpop.xlane.xlu0 %951
        %v953 = vsub.f32 %v949, %v952
        %v954 = vmul.f32 %v953, 1.442695
        %v955 = vpow.pop %v954
        %v956 = vsel %vm674, %v955, 0.0
        %957 = vadd.xlane.f32.xlu0 %v956
        %v958 = vpop.xlane.xlu0 %957
        %v959 = vrcp.pop %v958
        %v960 = vmul.f32 %v955, %v959
        %961 = vrot.lane.b32.xlu0 %v640, 80
        %v962 = vpop.permute.xlu0 %961
        %v965 = vsel %vm674, %v960, 0
        %967 = vmatpush.msra.mxu0 0.0
        %968 = vmatpush.msra.mxu0 0.0
        %969 = vmatpush.msra.mxu0 0.0
        %970 = vmatpush.msra.mxu0 0.0
        %971 = vmatpush.msra.mxu0 0.0
        %972 = vmatpush.msra.mxu0 0.0
        %973 = vmatpush.msra.mxu0 0.0
        %974 = vmatpush.msra.mxu0 0.0
        %975 = vmatpush.msra.mxu0 0.0
        %976 = vmatpush.msra.mxu0 0.0
        %977 = vmatpush.msra.mxu0 0.0
        %978 = vmatpush.msra.mxu0 0.0
        %979 = vmatpush.msra.mxu0 0.0
        %980 = vmatpush.msra.mxu0 0.0
        %981 = vmatpush.msra.mxu0 0.0
        %982 = vmatpush.msra.mxu0 %v962
        %983 = vmatmul.f32.gmra.mxu0 %v965
        %v984 = vpop.f32.mrf.mxu0
        %v985 = vadd.f32 0.0, %v984
        %986 = vdwg.mxu0
        %v987 = vld [vmem:[#allocation7 + $0x30] sm:$0xff]
        %v988 = vld [vmem:[#allocation7 + $0x38] sm:$0xff]
        %v990 = vsel %vm642, %v985, 0
        %992 = vmatpush.msra.mxu0 0.0
        %993 = vmatpush.msra.mxu0 0.0
        %994 = vmatpush.msra.mxu0 0.0
        %995 = vmatpush.msra.mxu0 0.0
        %996 = vmatpush.msra.mxu0 0.0
        %997 = vmatpush.msra.mxu0 0.0
        %998 = vmatpush.msra.mxu0 0.0
        %999 = vmatpush.msra.mxu0 0.0
        %1000 = vmatpush.msra.mxu0 0.0
        %1001 = vmatpush.msra.mxu0 0.0
        %1002 = vmatpush.msra.mxu0 0.0
        %1003 = vmatpush.msra.mxu0 0.0
        %1004 = vmatpush.msra.mxu0 0.0
        %1005 = vmatpush.msra.mxu0 0.0
        %1006 = vmatpush.msra.mxu0 %v988
        %1007 = vmatpush.msra.mxu0 %v987
        %1008 = vmatmul.f32.gmra.mxu0 %v990
        %v1009 = vpop.f32.mrf.mxu0
        %v1010 = vadd.f32 0.0, %v1009
        %1011 = vdwg.mxu0
        %v1012 = vadd.f32 %v919, %v1010
        %1013 = vrot.lane.b32.xlu0 %v562, 64
        %v1014 = vpop.permute.xlu0 %1013
        %1015 = vrot.lane.b32.xlu0 %v620, 64
        %v1016 = vpop.permute.xlu0 %1015
        %v1017 = vsel %vm642, %v1014, 0
        %v1019 = vsel %vm642, %v1016, 0
        %1021 = vmatpush.xpose.msra.mxu0 0.0
        %1022 = vmatpush.xpose.msra.mxu0 0.0
        %1023 = vmatpush.xpose.msra.mxu0 0.0
        %1024 = vmatpush.xpose.msra.mxu0 0.0
        %1025 = vmatpush.xpose.msra.mxu0 0.0
        %1026 = vmatpush.xpose.msra.mxu0 0.0
        %1027 = vmatpush.xpose.msra.mxu0 0.0
        %1028 = vmatpush.xpose.msra.mxu0 0.0
        %1029 = vmatpush.xpose.msra.mxu0 0.0
        %1030 = vmatpush.xpose.msra.mxu0 0.0
        %1031 = vmatpush.xpose.msra.mxu0 0.0
        %1032 = vmatpush.xpose.msra.mxu0 0.0
        %1033 = vmatpush.xpose.msra.mxu0 0.0
        %1034 = vmatpush.xpose.msra.mxu0 0.0
        %1035 = vmatpush.xpose.msra.mxu0 0.0
        %1036 = vmatpush.xpose.msra.mxu0 %v1019
        %1037 = vmatmul.f32.gmra.mxu0 %v1017
        %v1038 = vpop.f32.mrf.mxu0
        %v1039 = vadd.f32 0.0, %v1038
        %1040 = vdwg.mxu0
        %v1041 = vmul.f32 %v1039, 0.25
        %v1042 = vadd.f32 %v1041, %v671
        %v1043 = vsel %vm674, %v1042, -inf
        %1044 = vmax.xlane.f32.xlu0 %v1043
        %v1045 = vpop.xlane.xlu0 %1044
        %v1046 = vsub.f32 %v1042, %v1045
        %v1047 = vmul.f32 %v1046, 1.442695
        %v1048 = vpow.pop %v1047
        %v1049 = vsel %vm674, %v1048, 0.0
        %1050 = vadd.xlane.f32.xlu0 %v1049
        %v1051 = vpop.xlane.xlu0 %1050
        %v1052 = vrcp.pop %v1051
        %v1053 = vmul.f32 %v1048, %v1052
        %1054 = vrot.lane.b32.xlu0 %v640, 64
        %v1055 = vpop.permute.xlu0 %1054
        %v1058 = vsel %vm674, %v1053, 0
        %1060 = vmatpush.msra.mxu0 0.0
        %1061 = vmatpush.msra.mxu0 0.0
        %1062 = vmatpush.msra.mxu0 0.0
        %1063 = vmatpush.msra.mxu0 0.0
        %1064 = vmatpush.msra.mxu0 0.0
        %1065 = vmatpush.msra.mxu0 0.0
        %1066 = vmatpush.msra.mxu0 0.0
        %1067 = vmatpush.msra.mxu0 0.0
        %1068 = vmatpush.msra.mxu0 0.0
        %1069 = vmatpush.msra.mxu0 0.0
        %1070 = vmatpush.msra.mxu0 0.0
        %1071 = vmatpush.msra.mxu0 0.0
        %1072 = vmatpush.msra.mxu0 0.0
        %1073 = vmatpush.msra.mxu0 0.0
        %1074 = vmatpush.msra.mxu0 0.0
        %1075 = vmatpush.msra.mxu0 %v1055
        %1076 = vmatmul.f32.gmra.mxu0 %v1058
        %v1077 = vpop.f32.mrf.mxu0
        %v1078 = vadd.f32 0.0, %v1077
        %1079 = vdwg.mxu0
        %v1080 = vld [vmem:[#allocation7 + $0x40] sm:$0xff]
        %v1081 = vld [vmem:[#allocation7 + $0x48] sm:$0xff]
        %v1083 = vsel %vm642, %v1078, 0
        %1085 = vmatpush.msra.mxu0 0.0
        %1086 = vmatpush.msra.mxu0 0.0
        %1087 = vmatpush.msra.mxu0 0.0
        %1088 = vmatpush.msra.mxu0 0.0
        %1089 = vmatpush.msra.mxu0 0.0
        %1090 = vmatpush.msra.mxu0 0.0
        %1091 = vmatpush.msra.mxu0 0.0
        %1092 = vmatpush.msra.mxu0 0.0
        %1093 = vmatpush.msra.mxu0 0.0
        %1094 = vmatpush.msra.mxu0 0.0
        %1095 = vmatpush.msra.mxu0 0.0
        %1096 = vmatpush.msra.mxu0 0.0
        %1097 = vmatpush.msra.mxu0 0.0
        %1098 = vmatpush.msra.mxu0 0.0
        %1099 = vmatpush.msra.mxu0 %v1081
        %1100 = vmatpush.msra.mxu0 %v1080
        %1101 = vmatmul.f32.gmra.mxu0 %v1083
        %v1102 = vpop.f32.mrf.mxu0
        %v1103 = vadd.f32 0.0, %v1102
        %1104 = vdwg.mxu0
        %v1105 = vadd.f32 %v1012, %v1103
        %1106 = vrot.lane.b32.xlu0 %v562, 48
        %v1107 = vpop.permute.xlu0 %1106
        %1108 = vrot.lane.b32.xlu0 %v620, 48
        %v1109 = vpop.permute.xlu0 %1108
        %v1110 = vsel %vm642, %v1107, 0
        %v1112 = vsel %vm642, %v1109, 0
        %1114 = vmatpush.xpose.msra.mxu0 0.0
        %1115 = vmatpush.xpose.msra.mxu0 0.0
        %1116 = vmatpush.xpose.msra.mxu0 0.0
        %1117 = vmatpush.xpose.msra.mxu0 0.0
        %1118 = vmatpush.xpose.msra.mxu0 0.0
        %1119 = vmatpush.xpose.msra.mxu0 0.0
        %1120 = vmatpush.xpose.msra.mxu0 0.0
        %1121 = vmatpush.xpose.msra.mxu0 0.0
        %1122 = vmatpush.xpose.msra.mxu0 0.0
        %1123 = vmatpush.xpose.msra.mxu0 0.0
        %1124 = vmatpush.xpose.msra.mxu0 0.0
        %1125 = vmatpush.xpose.msra.mxu0 0.0
        %1126 = vmatpush.xpose.msra.mxu0 0.0
        %1127 = vmatpush.xpose.msra.mxu0 0.0
        %1128 = vmatpush.xpose.msra.mxu0 0.0
        %1129 = vmatpush.xpose.msra.mxu0 %v1112
        %1130 = vmatmul.f32.gmra.mxu0 %v1110
        %v1131 = vpop.f32.mrf.mxu0
        %v1132 = vadd.f32 0.0, %v1131
        %1133 = vdwg.mxu0
        %v1134 = vmul.f32 %v1132, 0.25
        %v1135 = vadd.f32 %v1134, %v671
        %v1136 = vsel %vm674, %v1135, -inf
        %1137 = vmax.xlane.f32.xlu0 %v1136
        %v1138 = vpop.xlane.xlu0 %1137
        %v1139 = vsub.f32 %v1135, %v1138
        %v1140 = vmul.f32 %v1139, 1.442695
        %v1141 = vpow.pop %v1140
        %v1142 = vsel %vm674, %v1141, 0.0
        %1143 = vadd.xlane.f32.xlu0 %v1142
        %v1144 = vpop.xlane.xlu0 %1143
        %v1145 = vrcp.pop %v1144
        %v1146 = vmul.f32 %v1141, %v1145
        %1147 = vrot.lane.b32.xlu0 %v640, 48
        %v1148 = vpop.permute.xlu0 %1147
        %v1151 = vsel %vm674, %v1146, 0
        %1153 = vmatpush.msra.mxu0 0.0
        %1154 = vmatpush.msra.mxu0 0.0
        %1155 = vmatpush.msra.mxu0 0.0
        %1156 = vmatpush.msra.mxu0 0.0
        %1157 = vmatpush.msra.mxu0 0.0
        %1158 = vmatpush.msra.mxu0 0.0
        %1159 = vmatpush.msra.mxu0 0.0
        %1160 = vmatpush.msra.mxu0 0.0
        %1161 = vmatpush.msra.mxu0 0.0
        %1162 = vmatpush.msra.mxu0 0.0
        %1163 = vmatpush.msra.mxu0 0.0
        %1164 = vmatpush.msra.mxu0 0.0
        %1165 = vmatpush.msra.mxu0 0.0
        %1166 = vmatpush.msra.mxu0 0.0
        %1167 = vmatpush.msra.mxu0 0.0
        %1168 = vmatpush.msra.mxu0 %v1148
        %1169 = vmatmul.f32.gmra.mxu0 %v1151
        %v1170 = vpop.f32.mrf.mxu0
        %v1171 = vadd.f32 0.0, %v1170
        %1172 = vdwg.mxu0
        %v1173 = vld [vmem:[#allocation7 + $0x50] sm:$0xff]
        %v1174 = vld [vmem:[#allocation7 + $0x58] sm:$0xff]
        %v1176 = vsel %vm642, %v1171, 0
        %1178 = vmatpush.msra.mxu0 0.0
        %1179 = vmatpush.msra.mxu0 0.0
        %1180 = vmatpush.msra.mxu0 0.0
        %1181 = vmatpush.msra.mxu0 0.0
        %1182 = vmatpush.msra.mxu0 0.0
        %1183 = vmatpush.msra.mxu0 0.0
        %1184 = vmatpush.msra.mxu0 0.0
        %1185 = vmatpush.msra.mxu0 0.0
        %1186 = vmatpush.msra.mxu0 0.0
        %1187 = vmatpush.msra.mxu0 0.0
        %1188 = vmatpush.msra.mxu0 0.0
        %1189 = vmatpush.msra.mxu0 0.0
        %1190 = vmatpush.msra.mxu0 0.0
        %1191 = vmatpush.msra.mxu0 0.0
        %1192 = vmatpush.msra.mxu0 %v1174
        %1193 = vmatpush.msra.mxu0 %v1173
        %1194 = vmatmul.f32.gmra.mxu0 %v1176
        %v1195 = vpop.f32.mrf.mxu0
        %v1196 = vadd.f32 0.0, %v1195
        %1197 = vdwg.mxu0
        %v1198 = vadd.f32 %v1105, %v1196
        %1199 = vrot.lane.b32.xlu0 %v562, 32
        %v1200 = vpop.permute.xlu0 %1199
        %1201 = vrot.lane.b32.xlu0 %v620, 32
        %v1202 = vpop.permute.xlu0 %1201
        %v1203 = vsel %vm642, %v1200, 0
        %v1205 = vsel %vm642, %v1202, 0
        %1207 = vmatpush.xpose.msra.mxu0 0.0
        %1208 = vmatpush.xpose.msra.mxu0 0.0
        %1209 = vmatpush.xpose.msra.mxu0 0.0
        %1210 = vmatpush.xpose.msra.mxu0 0.0
        %1211 = vmatpush.xpose.msra.mxu0 0.0
        %1212 = vmatpush.xpose.msra.mxu0 0.0
        %1213 = vmatpush.xpose.msra.mxu0 0.0
        %1214 = vmatpush.xpose.msra.mxu0 0.0
        %1215 = vmatpush.xpose.msra.mxu0 0.0
        %1216 = vmatpush.xpose.msra.mxu0 0.0
        %1217 = vmatpush.xpose.msra.mxu0 0.0
        %1218 = vmatpush.xpose.msra.mxu0 0.0
        %1219 = vmatpush.xpose.msra.mxu0 0.0
        %1220 = vmatpush.xpose.msra.mxu0 0.0
        %1221 = vmatpush.xpose.msra.mxu0 0.0
        %1222 = vmatpush.xpose.msra.mxu0 %v1205
        %1223 = vmatmul.f32.gmra.mxu0 %v1203
        %v1224 = vpop.f32.mrf.mxu0
        %v1225 = vadd.f32 0.0, %v1224
        %1226 = vdwg.mxu0
        %v1227 = vmul.f32 %v1225, 0.25
        %v1228 = vadd.f32 %v1227, %v671
        %v1229 = vsel %vm674, %v1228, -inf
        %1230 = vmax.xlane.f32.xlu0 %v1229
        %v1231 = vpop.xlane.xlu0 %1230
        %v1232 = vsub.f32 %v1228, %v1231
        %v1233 = vmul.f32 %v1232, 1.442695
        %v1234 = vpow.pop %v1233
        %v1235 = vsel %vm674, %v1234, 0.0
        %1236 = vadd.xlane.f32.xlu0 %v1235
        %v1237 = vpop.xlane.xlu0 %1236
        %v1238 = vrcp.pop %v1237
        %v1239 = vmul.f32 %v1234, %v1238
        %1240 = vrot.lane.b32.xlu0 %v640, 32
        %v1241 = vpop.permute.xlu0 %1240
        %v1244 = vsel %vm674, %v1239, 0
        %1246 = vmatpush.msra.mxu0 0.0
        %1247 = vmatpush.msra.mxu0 0.0
        %1248 = vmatpush.msra.mxu0 0.0
        %1249 = vmatpush.msra.mxu0 0.0
        %1250 = vmatpush.msra.mxu0 0.0
        %1251 = vmatpush.msra.mxu0 0.0
        %1252 = vmatpush.msra.mxu0 0.0
        %1253 = vmatpush.msra.mxu0 0.0
        %1254 = vmatpush.msra.mxu0 0.0
        %1255 = vmatpush.msra.mxu0 0.0
        %1256 = vmatpush.msra.mxu0 0.0
        %1257 = vmatpush.msra.mxu0 0.0
        %1258 = vmatpush.msra.mxu0 0.0
        %1259 = vmatpush.msra.mxu0 0.0
        %1260 = vmatpush.msra.mxu0 0.0
        %1261 = vmatpush.msra.mxu0 %v1241
        %1262 = vmatmul.f32.gmra.mxu0 %v1244
        %v1263 = vpop.f32.mrf.mxu0
        %v1264 = vadd.f32 0.0, %v1263
        %1265 = vdwg.mxu0
        %v1266 = vld [vmem:[#allocation7 + $0x60] sm:$0xff]
        %v1267 = vld [vmem:[#allocation7 + $0x68] sm:$0xff]
        %v1269 = vsel %vm642, %v1264, 0
        %1271 = vmatpush.msra.mxu0 0.0
        %1272 = vmatpush.msra.mxu0 0.0
        %1273 = vmatpush.msra.mxu0 0.0
        %1274 = vmatpush.msra.mxu0 0.0
        %1275 = vmatpush.msra.mxu0 0.0
        %1276 = vmatpush.msra.mxu0 0.0
        %1277 = vmatpush.msra.mxu0 0.0
        %1278 = vmatpush.msra.mxu0 0.0
        %1279 = vmatpush.msra.mxu0 0.0
        %1280 = vmatpush.msra.mxu0 0.0
        %1281 = vmatpush.msra.mxu0 0.0
        %1282 = vmatpush.msra.mxu0 0.0
        %1283 = vmatpush.msra.mxu0 0.0
        %1284 = vmatpush.msra.mxu0 0.0
        %1285 = vmatpush.msra.mxu0 %v1267
        %1286 = vmatpush.msra.mxu0 %v1266
        %1287 = vmatmul.f32.gmra.mxu0 %v1269
        %v1288 = vpop.f32.mrf.mxu0
        %v1289 = vadd.f32 0.0, %v1288
        %1290 = vdwg.mxu0
        %v1291 = vadd.f32 %v1198, %v1289
        %1292 = vrot.lane.b32.xlu0 %v562, 16
        %v1293 = vpop.permute.xlu0 %1292
        %1294 = vrot.lane.b32.xlu0 %v620, 16
        %v1295 = vpop.permute.xlu0 %1294
        %v1296 = vsel %vm642, %v1293, 0
        %v1298 = vsel %vm642, %v1295, 0
        %1300 = vmatpush.xpose.msra.mxu0 0.0
        %1301 = vmatpush.xpose.msra.mxu0 0.0
        %1302 = vmatpush.xpose.msra.mxu0 0.0
        %1303 = vmatpush.xpose.msra.mxu0 0.0
        %1304 = vmatpush.xpose.msra.mxu0 0.0
        %1305 = vmatpush.xpose.msra.mxu0 0.0
        %1306 = vmatpush.xpose.msra.mxu0 0.0
        %1307 = vmatpush.xpose.msra.mxu0 0.0
        %1308 = vmatpush.xpose.msra.mxu0 0.0
        %1309 = vmatpush.xpose.msra.mxu0 0.0
        %1310 = vmatpush.xpose.msra.mxu0 0.0
        %1311 = vmatpush.xpose.msra.mxu0 0.0
        %1312 = vmatpush.xpose.msra.mxu0 0.0
        %1313 = vmatpush.xpose.msra.mxu0 0.0
        %1314 = vmatpush.xpose.msra.mxu0 0.0
        %1315 = vmatpush.xpose.msra.mxu0 %v1298
        %1316 = vmatmul.f32.gmra.mxu0 %v1296
        %v1317 = vpop.f32.mrf.mxu0
        %v1318 = vadd.f32 0.0, %v1317
        %1319 = vdwg.mxu0
        %v1320 = vmul.f32 %v1318, 0.25
        %v1321 = vadd.f32 %v1320, %v671
        %v1322 = vsel %vm674, %v1321, -inf
        %1323 = vmax.xlane.f32.xlu0 %v1322
        %v1324 = vpop.xlane.xlu0 %1323
        %v1325 = vsub.f32 %v1321, %v1324
        %v1326 = vmul.f32 %v1325, 1.442695
        %v1327 = vpow.pop %v1326
        %v1328 = vsel %vm674, %v1327, 0.0
        %1329 = vadd.xlane.f32.xlu0 %v1328
        %v1330 = vpop.xlane.xlu0 %1329
        %v1331 = vrcp.pop %v1330
        %v1332 = vmul.f32 %v1327, %v1331
        %1333 = vrot.lane.b32.xlu0 %v640, 16
        %v1334 = vpop.permute.xlu0 %1333
        %v1337 = vsel %vm674, %v1332, 0
        %1339 = vmatpush.msra.mxu0 0.0
        %1340 = vmatpush.msra.mxu0 0.0
        %1341 = vmatpush.msra.mxu0 0.0
        %1342 = vmatpush.msra.mxu0 0.0
        %1343 = vmatpush.msra.mxu0 0.0
        %1344 = vmatpush.msra.mxu0 0.0
        %1345 = vmatpush.msra.mxu0 0.0
        %1346 = vmatpush.msra.mxu0 0.0
        %1347 = vmatpush.msra.mxu0 0.0
        %1348 = vmatpush.msra.mxu0 0.0
        %1349 = vmatpush.msra.mxu0 0.0
        %1350 = vmatpush.msra.mxu0 0.0
        %1351 = vmatpush.msra.mxu0 0.0
        %1352 = vmatpush.msra.mxu0 0.0
        %1353 = vmatpush.msra.mxu0 0.0
        %1354 = vmatpush.msra.mxu0 %v1334
        %1355 = vmatmul.f32.gmra.mxu0 %v1337
        %v1356 = vpop.f32.mrf.mxu0
        %v1357 = vadd.f32 0.0, %v1356
        %1358 = vdwg.mxu0
        %v1359 = vld [vmem:[#allocation7 + $0x70] sm:$0xff]
        %v1360 = vld [vmem:[#allocation7 + $0x78] sm:$0xff]
        %v1362 = vsel %vm642, %v1357, 0
        %1364 = vmatpush.msra.mxu0 0.0
        %1365 = vmatpush.msra.mxu0 0.0
        %1366 = vmatpush.msra.mxu0 0.0
        %1367 = vmatpush.msra.mxu0 0.0
        %1368 = vmatpush.msra.mxu0 0.0
        %1369 = vmatpush.msra.mxu0 0.0
        %1370 = vmatpush.msra.mxu0 0.0
        %1371 = vmatpush.msra.mxu0 0.0
        %1372 = vmatpush.msra.mxu0 0.0
        %1373 = vmatpush.msra.mxu0 0.0
        %1374 = vmatpush.msra.mxu0 0.0
        %1375 = vmatpush.msra.mxu0 0.0
        %1376 = vmatpush.msra.mxu0 0.0
        %1377 = vmatpush.msra.mxu0 0.0
        %1378 = vmatpush.msra.mxu0 %v1360
        %1379 = vmatpush.msra.mxu0 %v1359
        %1380 = vmatmul.f32.gmra.mxu0 %v1362
        %v1381 = vpop.f32.mrf.mxu0
        %v1382 = vadd.f32 0.0, %v1381
        %1383 = vdwg.mxu0
        %v1384 = vadd.f32 %v1291, %v1382
        %v1385 = vld [vmem:[#allocation9] sm:$0x1]
        %v1387 = vperm.slane %v1385, 0
        %v1389 = vadd.f32 %v1384, %v1387
        %v1390 = vadd.f32 %v1389, %v521
        %1391 = vadd.xlane.f32.xlu0 %v1390
        %v1392 = vpop.xlane.xlu0 %1391
        %v1393 = vrcp.pop 128.0
        %v1394 = vmul.f32 128.0, %v1393
        %v1395 = vsub.f32 1.0, %v1394
        %v1396 = vmul.f32 %v1393, %v1395
        %v1397 = vadd.f32 %v1393, %v1396
        %vm1398 = vweird.f32 %v1393
        %v1399 = vsel %vm1398, %v1393, %v1397
        %v1400 = vmul.f32 %v1392, %v1399
        %v1401 = vsub.f32 %v1390, %v1400
        %v1402 = vmul.f32 %v1401, %v1401
        %1403 = vadd.xlane.f32.xlu0 %v1402
        %v1404 = vpop.xlane.xlu0 %1403
        %v1405 = vmul.f32 %v1404, %v1399
        %v1406 = vadd.f32 %v1405, 1e-05
        %v1407 = vrsqrt.pop %v1406
        %v1408 = vmul.f32 %v1407, %v1406
        %v1409 = vmul.f32 %v1408, %v1407
        %v1410 = vmul.f32 0.5, %v1409
        %v1411 = vsub.f32 1.5, %v1410
        %v1412 = vmul.f32 %v1407, %v1411
        %vm1413 = vweird.f32 %v1406
        %vm1414 = vweird.f32 %v1407
        %vm1415 = vmor %vm1413, %vm1414
        %v1416 = vsel %vm1415, %v1407, %v1412
        %v1417 = vmul.f32 %v1401, %v1416
        %v1418 = vld [vmem:[#allocation10] sm:$0x1]
        %v1420 = vperm.slane %v1418, 0
        %v1422 = vmul.f32 %v1417, %v1420
        %v1423 = vld [vmem:[#allocation12] sm:$0x1]
        %v1425 = vperm.slane %v1423, 0
        %v1427 = vadd.f32 %v1422, %v1425
        %1428 = vst [vmem:[%s520] sm:$0xff] %v1427
        %p1429 = scmp.lt.s32.totalorder %s26, 1
        %s1430 = scalar_select %p1429, %s26, 1
        %s1431 = smul.addr %s1430, 8
        %s1432 = scalar_lea.vmem %s11, %s1431
        // Predicated region
        $region93: #{tsp_monty_style_decoder_forward.19} parent=63 // pred_check
          %p1433 = pneg %p290
        $region94: #{tsp_monty_style_decoder_forward.19} parent=63 // pred_check_branch
          %1435 = sbr.rel (%p1433) target = $region96
        $region95: #{tsp_monty_style_decoder_forward.19} parent=63 // pred_region
          _
        $region96: #{tsp_monty_style_decoder_forward.19} parent=63 // pred_fallthru
          _
      $region64: #{tsp_monty_style_decoder_forward.19} parent=5 // pred_fallthru
        _
      %p1436 = scmp.le.s32.totalorder 2, %s21
      // Predicated region
      $region97: #{tsp_monty_style_decoder_forward.19} parent=5 // pred_check
        %p1437 = pneg %p1436
      $region98: #{tsp_monty_style_decoder_forward.19} parent=5 // pred_check_branch
        %1439 = sbr.rel (%p1437) target = $region100
      $region99: #{tsp_monty_style_decoder_forward.19} parent=5 // pred_region
        %s1440 = ssub.s32 %s21, 2
        // Predicated region
        $region101: #{tsp_monty_style_decoder_forward.19} parent=99 // pred_check
          %p1441 = pneg %p296
        $region102: #{tsp_monty_style_decoder_forward.19} parent=99 // pred_check_branch
          %1443 = sbr.rel (%p1441) target = $region104
        $region103: #{tsp_monty_style_decoder_forward.19} parent=99 // pred_region
          %p1444 = scmp.lt.s32.totalorder %s27, 1
          %s1445 = scalar_select %p1444, %s27, 1
          %s1446 = smul.addr %s1445, 8
          %s1447 = scalar_lea.vmem %s11, %s1446
        $region104: #{tsp_monty_style_decoder_forward.19} parent=99 // pred_fallthru
          _
      $region100: #{tsp_monty_style_decoder_forward.19} parent=5 // pred_fallthru
        _
    $region6: #{tsp_monty_style_decoder_forward.19} parent=1 // loop_footer
      %s25 = sadd.s32 1, %s21
    $region7: #{tsp_monty_style_decoder_forward.19} parent=1 // loop_footer_branch
      %20 = sbr.rel target = $region3
    $region8: #{tsp_monty_style_decoder_forward.19} parent=1 // loop_exit
      _
    %1448 = vsyncpa [#allocation3], 1
    %s1449 = scalar_lea.sflag [#allocation3], 1
    %1450 = vsyncpa %s1449, 1
    %1451 = vsyncpa [#allocation5], 1
    %1452 = vsyncpa [#allocation8], 1
    %1453 = vsyncpa [#allocation11], 1

// kernel: tsp_monty_style_decoder_forward.20
$region0: #{tsp_monty_style_decoder_forward.20}
  #allocation0 [shape = 'u32[]', space=smem, size = 0x4, offset = 0x4, fixed_abs, tag = 'smem constant byte address 0x4 - core index']
  #allocation1 [shape = 'u32[72,128]{1,0:T(1,128)}', space=vmem, size = 0x9000, scoped, tag = 'internal scratch']
  %s0 = inlined_call_operand.vmem [shape: f32[16,128], index: 0, kind: input, shape index: {}]
  %s1 = inlined_call_operand.hbm [shape: f32[128,512], index: 1, kind: input, shape index: {}]
  %s2 = inlined_call_operand.vmem [shape: f32[1,512], index: 2, kind: input, shape index: {}]
  %s3 = inlined_call_operand.hbm [shape: f32[512,128], index: 3, kind: input, shape index: {}]
  %s4 = inlined_call_operand.hbm [shape: f32[1,128], index: 4, kind: input, shape index: {}]
  %s5 = inlined_call_operand.hbm [shape: f32[1,128], index: 5, kind: input, shape index: {}]
  %s6 = inlined_call_operand.hbm [shape: f32[1,128], index: 6, kind: input, shape index: {}]
  %s7 = inlined_call_operand.vmem [shape: f32[16,128], index: 7, kind: output, shape index: {}]
  %s8 = sld [smem:[#allocation0]]
  $region58: #{tsp_monty_style_decoder_forward.20} parent=0
    _
  %s10 = ssub.s32 1, %s8
  %s11 = scalar_select 0, %s10, %s8
  $region1: #{tsp_monty_style_decoder_forward.20} parent=0
    #allocation2 [shape = 'u8[262144]{0}', space=vmem, size = 0x40000, scoped, tag = 'input window, operand 1, single buffered']
    #allocation3 [shape = 's32[1]{0}', space=sflag, size = 0x4, scoped, tag = 'scoped memory for tsp_monty_style_decoder_forward.20']
    #allocation4 [shape = 'u8[262144]{0}', space=vmem, size = 0x40000, scoped, tag = 'input window, operand 3, single buffered']
    #allocation5 [shape = 's32[1]{0}', space=sflag, size = 0x4, scoped, tag = 'scoped memory for tsp_monty_style_decoder_forward.20']
    #allocation6 [shape = 'u8[512]{0}', space=vmem, size = 0x400, scoped, tag = 'input window, operand 4, single buffered']
    #allocation7 [shape = 'u8[512]{0}', space=vmem, size = 0x400, scoped, tag = 'input window, operand 5, single buffered']
    #allocation8 [shape = 's32[1]{0}', space=sflag, size = 0x4, scoped, tag = 'scoped memory for tsp_monty_style_decoder_forward.20']
    #allocation9 [shape = 'u8[512]{0}', space=vmem, size = 0x400, scoped, tag = 'input window, operand 6, single buffered']
    %12 = vsyncpa [#allocation3], 0
    %13 = vsyncpa [#allocation5], 0
    %14 = vsyncpa [#allocation8], 0
    // Predicated region
    $region2: #{tsp_monty_style_decoder_forward.20} parent=1 // pred_check
      _
    $region3: #{tsp_monty_style_decoder_forward.20} parent=1 // pred_check_branch
      %16 = sbr.rel (0) target = $region5
    $region4: #{tsp_monty_style_decoder_forward.20} parent=1 // pred_region
      _
    $region5: #{tsp_monty_style_decoder_forward.20} parent=1 // pred_fallthru
      _
    // Predicated region
    $region6: #{tsp_monty_style_decoder_forward.20} parent=1 // pred_check
      _
    $region7: #{tsp_monty_style_decoder_forward.20} parent=1 // pred_check_branch
      %18 = sbr.rel (0) target = $region9
    $region8: #{tsp_monty_style_decoder_forward.20} parent=1 // pred_region
      %20 = vsyncadd [#allocation3], 0
      %s21 = sshll.u32 %s1, 4
      %s22 = int_to_ptr.hbm [resolvable:$true] %s21
      %s23 = sshll.u32 [#allocation2], 4
      %s24 = int_to_ptr.vmem [resolvable:$true] %s23
      %29 = dma.hbm_to_vmem [thread:$0]  %s22, 8192, %s24, [#allocation3], 512, 512, 32
    $region9: #{tsp_monty_style_decoder_forward.20} parent=1 // pred_fallthru
      _
    // Predicated region
    $region10: #{tsp_monty_style_decoder_forward.20} parent=1 // pred_check
      _
    $region11: #{tsp_monty_style_decoder_forward.20} parent=1 // pred_check_branch
      %31 = sbr.rel (0) target = $region13
    $region12: #{tsp_monty_style_decoder_forward.20} parent=1 // pred_region
      _
    $region13: #{tsp_monty_style_decoder_forward.20} parent=1 // pred_fallthru
      _
    // Predicated region
    $region14: #{tsp_monty_style_decoder_forward.20} parent=1 // pred_check
      _
    $region15: #{tsp_monty_style_decoder_forward.20} parent=1 // pred_check_branch
      %33 = sbr.rel (0) target = $region17
    $region16: #{tsp_monty_style_decoder_forward.20} parent=1 // pred_region
      %35 = vsyncadd [#allocation5], 0
      %s36 = sshll.u32 %s3, 4
      %s37 = int_to_ptr.hbm [resolvable:$true] %s36
      %s38 = sshll.u32 [#allocation4], 4
      %s39 = int_to_ptr.vmem [resolvable:$true] %s38
      %44 = dma.hbm_to_vmem [thread:$0]  %s37, 8192, %s39, [#allocation5], 128, 128, 8
    $region17: #{tsp_monty_style_decoder_forward.20} parent=1 // pred_fallthru
      _
    // Predicated region
    $region18: #{tsp_monty_style_decoder_forward.20} parent=1 // pred_check
      _
    $region19: #{tsp_monty_style_decoder_forward.20} parent=1 // pred_check_branch
      %46 = sbr.rel (0) target = $region21
    $region20: #{tsp_monty_style_decoder_forward.20} parent=1 // pred_region
      %48 = vsyncadd [#allocation5], 0
      %s50 = sshll.u32 %s4, 4
      %s51 = int_to_ptr.hbm [resolvable:$true] %s50
      %s52 = sshll.u32 [#allocation6], 4
      %s53 = int_to_ptr.vmem [resolvable:$true] %s52
      %55 = dma.hbm_to_vmem [thread:$0]  %s51, 16, %s53, [#allocation5]
    $region21: #{tsp_monty_style_decoder_forward.20} parent=1 // pred_fallthru
      _
    // Predicated region
    $region22: #{tsp_monty_style_decoder_forward.20} parent=1 // pred_check
      _
    $region23: #{tsp_monty_style_decoder_forward.20} parent=1 // pred_check_branch
      %57 = sbr.rel (0) target = $region25
    $region24: #{tsp_monty_style_decoder_forward.20} parent=1 // pred_region
      %59 = vsyncadd [#allocation8], 0
      %s61 = sshll.u32 %s5, 4
      %s62 = int_to_ptr.hbm [resolvable:$true] %s61
      %s63 = sshll.u32 [#allocation7], 4
      %s64 = int_to_ptr.vmem [resolvable:$true] %s63
      %66 = dma.hbm_to_vmem [thread:$0]  %s62, 16, %s64, [#allocation8]
    $region25: #{tsp_monty_style_decoder_forward.20} parent=1 // pred_fallthru
      _
    // Predicated region
    $region26: #{tsp_monty_style_decoder_forward.20} parent=1 // pred_check
      _
    $region27: #{tsp_monty_style_decoder_forward.20} parent=1 // pred_check_branch
      %68 = sbr.rel (0) target = $region29
    $region28: #{tsp_monty_style_decoder_forward.20} parent=1 // pred_region
      %70 = vsyncadd [#allocation8], 0
      %s72 = sshll.u32 %s6, 4
      %s73 = int_to_ptr.hbm [resolvable:$true] %s72
      %s74 = sshll.u32 [#allocation9], 4
      %s75 = int_to_ptr.vmem [resolvable:$true] %s74
      %77 = dma.hbm_to_vmem [thread:$0]  %s73, 16, %s75, [#allocation8]
    $region29: #{tsp_monty_style_decoder_forward.20} parent=1 // pred_fallthru
      _
    // Predicated region
    $region30: #{tsp_monty_style_decoder_forward.20} parent=1 // pred_check
      _
    $region31: #{tsp_monty_style_decoder_forward.20} parent=1 // pred_check_branch
      %79 = sbr.rel (0) target = $region33
    $region32: #{tsp_monty_style_decoder_forward.20} parent=1 // pred_region
      %81 = dma.done [#allocation3], 8192
    $region33: #{tsp_monty_style_decoder_forward.20} parent=1 // pred_fallthru
      _
    // Predicated region
    $region34: #{tsp_monty_style_decoder_forward.20} parent=1 // pred_check
      _
    $region35: #{tsp_monty_style_decoder_forward.20} parent=1 // pred_check_branch
      %83 = sbr.rel (0) target = $region37
    $region36: #{tsp_monty_style_decoder_forward.20} parent=1 // pred_region
      %85 = dma.done [#allocation5], 8192
    $region37: #{tsp_monty_style_decoder_forward.20} parent=1 // pred_fallthru
      _
    // Predicated region
    $region38: #{tsp_monty_style_decoder_forward.20} parent=1 // pred_check
      _
    $region39: #{tsp_monty_style_decoder_forward.20} parent=1 // pred_check_branch
      %87 = sbr.rel (0) target = $region41
    $region40: #{tsp_monty_style_decoder_forward.20} parent=1 // pred_region
      %89 = dma.done [#allocation5], 16
    $region41: #{tsp_monty_style_decoder_forward.20} parent=1 // pred_fallthru
      _
    // Predicated region
    $region42: #{tsp_monty_style_decoder_forward.20} parent=1 // pred_check
      _
    $region43: #{tsp_monty_style_decoder_forward.20} parent=1 // pred_check_branch
      %91 = sbr.rel (0) target = $region45
    $region44: #{tsp_monty_style_decoder_forward.20} parent=1 // pred_region
      %93 = dma.done [#allocation8], 16
    $region45: #{tsp_monty_style_decoder_forward.20} parent=1 // pred_fallthru
      _
    // Predicated region
    $region46: #{tsp_monty_style_decoder_forward.20} parent=1 // pred_check
      _
    $region47: #{tsp_monty_style_decoder_forward.20} parent=1 // pred_check_branch
      %95 = sbr.rel (0) target = $region49
    $region48: #{tsp_monty_style_decoder_forward.20} parent=1 // pred_region
      %97 = dma.done [#allocation8], 16
    $region49: #{tsp_monty_style_decoder_forward.20} parent=1 // pred_fallthru
      _
    %v98 = vld [vmem:[%s0] sm:$0xff]
    %v99 = vld [vmem:[%s0 + $0x8] sm:$0xff]
    %v100 = vld [vmem:[#allocation2] sm:$0xff]
    %v101 = vld [vmem:[#allocation2 + $0x8] sm:$0xff]
    %v102 = vld [vmem:[#allocation2 + $0x10] sm:$0xff]
    %v103 = vld [vmem:[#allocation2 + $0x18] sm:$0xff]
    %v104 = vld [vmem:[#allocation2 + $0x20] sm:$0xff]
    %v105 = vld [vmem:[#allocation2 + $0x28] sm:$0xff]
    %v106 = vld [vmem:[#allocation2 + $0x30] sm:$0xff]
    %v107 = vld [vmem:[#allocation2 + $0x38] sm:$0xff]
    %v108 = vld [vmem:[#allocation2 + $0x40] sm:$0xff]
    %v109 = vld [vmem:[#allocation2 + $0x48] sm:$0xff]
    %v110 = vld [vmem:[#allocation2 + $0x50] sm:$0xff]
    %v111 = vld [vmem:[#allocation2 + $0x58] sm:$0xff]
    %v112 = vld [vmem:[#allocation2 + $0x60] sm:$0xff]
    %v113 = vld [vmem:[#allocation2 + $0x68] sm:$0xff]
    %v114 = vld [vmem:[#allocation2 + $0x70] sm:$0xff]
    %v115 = vld [vmem:[#allocation2 + $0x78] sm:$0xff]
    %v116 = vld [vmem:[#allocation2 + $0x80] sm:$0xff]
    %v117 = vld [vmem:[#allocation2 + $0x88] sm:$0xff]
    %v118 = vld [vmem:[#allocation2 + $0x90] sm:$0xff]
    %v119 = vld [vmem:[#allocation2 + $0x98] sm:$0xff]
    %v120 = vld [vmem:[#allocation2 + $0xa0] sm:$0xff]
    %v121 = vld [vmem:[#allocation2 + $0xa8] sm:$0xff]
    %v122 = vld [vmem:[#allocation2 + $0xb0] sm:$0xff]
    %v123 = vld [vmem:[#allocation2 + $0xb8] sm:$0xff]
    %v124 = vld [vmem:[#allocation2 + $0xc0] sm:$0xff]
    %v125 = vld [vmem:[#allocation2 + $0xc8] sm:$0xff]
    %v126 = vld [vmem:[#allocation2 + $0xd0] sm:$0xff]
    %v127 = vld [vmem:[#allocation2 + $0xd8] sm:$0xff]
    %v128 = vld [vmem:[#allocation2 + $0xe0] sm:$0xff]
    %v129 = vld [vmem:[#allocation2 + $0xe8] sm:$0xff]
    %v130 = vld [vmem:[#allocation2 + $0xf0] sm:$0xff]
    %v131 = vld [vmem:[#allocation2 + $0xf8] sm:$0xff]
    %v132 = vld [vmem:[#allocation2 + $0x100] sm:$0xff]
    %v133 = vld [vmem:[#allocation2 + $0x108] sm:$0xff]
    %v134 = vld [vmem:[#allocation2 + $0x110] sm:$0xff]
    %v135 = vld [vmem:[#allocation2 + $0x118] sm:$0xff]
    %v136 = vld [vmem:[#allocation2 + $0x120] sm:$0xff]
    %v137 = vld [vmem:[#allocation2 + $0x128] sm:$0xff]
    %v138 = vld [vmem:[#allocation2 + $0x130] sm:$0xff]
    %v139 = vld [vmem:[#allocation2 + $0x138] sm:$0xff]
    %v140 = vld [vmem:[#allocation2 + $0x140] sm:$0xff]
    %v141 = vld [vmem:[#allocation2 + $0x148] sm:$0xff]
    %v142 = vld [vmem:[#allocation2 + $0x150] sm:$0xff]
    %v143 = vld [vmem:[#allocation2 + $0x158] sm:$0xff]
    %v144 = vld [vmem:[#allocation2 + $0x160] sm:$0xff]
    %v145 = vld [vmem:[#allocation2 + $0x168] sm:$0xff]
    %v146 = vld [vmem:[#allocation2 + $0x170] sm:$0xff]
    %v147 = vld [vmem:[#allocation2 + $0x178] sm:$0xff]
    %v148 = vld [vmem:[#allocation2 + $0x180] sm:$0xff]
    %v149 = vld [vmem:[#allocation2 + $0x188] sm:$0xff]
    %v150 = vld [vmem:[#allocation2 + $0x190] sm:$0xff]
    %v151 = vld [vmem:[#allocation2 + $0x198] sm:$0xff]
    %v152 = vld [vmem:[#allocation2 + $0x1a0] sm:$0xff]
    %v153 = vld [vmem:[#allocation2 + $0x1a8] sm:$0xff]
    %v154 = vld [vmem:[#allocation2 + $0x1b0] sm:$0xff]
    %v155 = vld [vmem:[#allocation2 + $0x1b8] sm:$0xff]
    %v156 = vld [vmem:[#allocation2 + $0x1c0] sm:$0xff]
    %v157 = vld [vmem:[#allocation2 + $0x1c8] sm:$0xff]
    %v158 = vld [vmem:[#allocation2 + $0x1d0] sm:$0xff]
    %v159 = vld [vmem:[#allocation2 + $0x1d8] sm:$0xff]
    %v160 = vld [vmem:[#allocation2 + $0x1e0] sm:$0xff]
    %v161 = vld [vmem:[#allocation2 + $0x1e8] sm:$0xff]
    %v162 = vld [vmem:[#allocation2 + $0x1f0] sm:$0xff]
    %v163 = vld [vmem:[#allocation2 + $0x1f8] sm:$0xff]
    %v164 = vld [vmem:[%s2] sm:$0xf]
    %v166 = vperm.slane %v164, 0
    %v167 = vperm.slane %v164, 1
    %v168 = vperm.slane %v164, 2
    %v169 = vperm.slane %v164, 3
    %174 = vmatpush.msra.mxu0 %v160
    %175 = vmatpush.msra.mxu0 %v156
    %176 = vmatpush.msra.mxu0 %v152
    %177 = vmatpush.msra.mxu0 %v148
    %178 = vmatpush.msra.mxu0 %v144
    %179 = vmatpush.msra.mxu0 %v140
    %180 = vmatpush.msra.mxu0 %v136
    %181 = vmatpush.msra.mxu0 %v132
    %182 = vmatpush.msra.mxu0 %v128
    %183 = vmatpush.msra.mxu0 %v124
    %184 = vmatpush.msra.mxu0 %v120
    %185 = vmatpush.msra.mxu0 %v116
    %186 = vmatpush.msra.mxu0 %v112
    %187 = vmatpush.msra.mxu0 %v108
    %188 = vmatpush.msra.mxu0 %v104
    %189 = vmatpush.msra.mxu0 %v100
    %190 = vmatmul.f32.gmra.mxu0 %v98
    %v191 = vpop.f32.mrf.mxu0
    %v192 = vadd.f32 %v166, %v191
    %193 = vmatmul.f32.gmra.mxu0 %v99
    %v194 = vpop.f32.mrf.mxu0
    %v195 = vadd.f32 %v166, %v194
    %196 = vdwg.mxu0
    %197 = vmatpush.msra.mxu0 %v161
    %198 = vmatpush.msra.mxu0 %v157
    %199 = vmatpush.msra.mxu0 %v153
    %200 = vmatpush.msra.mxu0 %v149
    %201 = vmatpush.msra.mxu0 %v145
    %202 = vmatpush.msra.mxu0 %v141
    %203 = vmatpush.msra.mxu0 %v137
    %204 = vmatpush.msra.mxu0 %v133
    %205 = vmatpush.msra.mxu0 %v129
    %206 = vmatpush.msra.mxu0 %v125
    %207 = vmatpush.msra.mxu0 %v121
    %208 = vmatpush.msra.mxu0 %v117
    %209 = vmatpush.msra.mxu0 %v113
    %210 = vmatpush.msra.mxu0 %v109
    %211 = vmatpush.msra.mxu0 %v105
    %212 = vmatpush.msra.mxu0 %v101
    %213 = vmatmul.f32.gmra.mxu0 %v98
    %v214 = vpop.f32.mrf.mxu0
    %v215 = vadd.f32 %v167, %v214
    %216 = vmatmul.f32.gmra.mxu0 %v99
    %v217 = vpop.f32.mrf.mxu0
    %v218 = vadd.f32 %v167, %v217
    %219 = vdwg.mxu0
    %220 = vmatpush.msra.mxu0 %v162
    %221 = vmatpush.msra.mxu0 %v158
    %222 = vmatpush.msra.mxu0 %v154
    %223 = vmatpush.msra.mxu0 %v150
    %224 = vmatpush.msra.mxu0 %v146
    %225 = vmatpush.msra.mxu0 %v142
    %226 = vmatpush.msra.mxu0 %v138
    %227 = vmatpush.msra.mxu0 %v134
    %228 = vmatpush.msra.mxu0 %v130
    %229 = vmatpush.msra.mxu0 %v126
    %230 = vmatpush.msra.mxu0 %v122
    %231 = vmatpush.msra.mxu0 %v118
    %232 = vmatpush.msra.mxu0 %v114
    %233 = vmatpush.msra.mxu0 %v110
    %234 = vmatpush.msra.mxu0 %v106
    %235 = vmatpush.msra.mxu0 %v102
    %236 = vmatmul.f32.gmra.mxu0 %v98
    %v237 = vpop.f32.mrf.mxu0
    %v238 = vadd.f32 %v168, %v237
    %239 = vmatmul.f32.gmra.mxu0 %v99
    %v240 = vpop.f32.mrf.mxu0
    %v241 = vadd.f32 %v168, %v240
    %242 = vdwg.mxu0
    %243 = vmatpush.msra.mxu0 %v163
    %244 = vmatpush.msra.mxu0 %v159
    %245 = vmatpush.msra.mxu0 %v155
    %246 = vmatpush.msra.mxu0 %v151
    %247 = vmatpush.msra.mxu0 %v147
    %248 = vmatpush.msra.mxu0 %v143
    %249 = vmatpush.msra.mxu0 %v139
    %250 = vmatpush.msra.mxu0 %v135
    %251 = vmatpush.msra.mxu0 %v131
    %252 = vmatpush.msra.mxu0 %v127
    %253 = vmatpush.msra.mxu0 %v123
    %254 = vmatpush.msra.mxu0 %v119
    %255 = vmatpush.msra.mxu0 %v115
    %256 = vmatpush.msra.mxu0 %v111
    %257 = vmatpush.msra.mxu0 %v107
    %258 = vmatpush.msra.mxu0 %v103
    %259 = vmatmul.f32.gmra.mxu0 %v98
    %v260 = vpop.f32.mrf.mxu0
    %v261 = vadd.f32 %v169, %v260
    %262 = vmatmul.f32.gmra.mxu0 %v99
    %v263 = vpop.f32.mrf.mxu0
    %v264 = vadd.f32 %v169, %v263
    %265 = vdwg.mxu0
    %v266 = vmax.f32 %v192, 0.0
    %v267 = vmax.f32 %v215, 0.0
    %v268 = vmax.f32 %v238, 0.0
    %v269 = vmax.f32 %v261, 0.0
    %v270 = vmax.f32 %v195, 0.0
    %v271 = vmax.f32 %v218, 0.0
    %v272 = vmax.f32 %v241, 0.0
    %v273 = vmax.f32 %v264, 0.0
    %v274 = vld [vmem:[#allocation4] sm:$0xff]
    %v275 = vld [vmem:[#allocation4 + $0x8] sm:$0xff]
    %v276 = vld [vmem:[#allocation4 + $0x10] sm:$0xff]
    %v277 = vld [vmem:[#allocation4 + $0x18] sm:$0xff]
    %v278 = vld [vmem:[#allocation4 + $0x20] sm:$0xff]
    %v279 = vld [vmem:[#allocation4 + $0x28] sm:$0xff]
    %v280 = vld [vmem:[#allocation4 + $0x30] sm:$0xff]
    %v281 = vld [vmem:[#allocation4 + $0x38] sm:$0xff]
    %v282 = vld [vmem:[#allocation4 + $0x40] sm:$0xff]
    %v283 = vld [vmem:[#allocation4 + $0x48] sm:$0xff]
    %v284 = vld [vmem:[#allocation4 + $0x50] sm:$0xff]
    %v285 = vld [vmem:[#allocation4 + $0x58] sm:$0xff]
    %v286 = vld [vmem:[#allocation4 + $0x60] sm:$0xff]
    %v287 = vld [vmem:[#allocation4 + $0x68] sm:$0xff]
    %v288 = vld [vmem:[#allocation4 + $0x70] sm:$0xff]
    %v289 = vld [vmem:[#allocation4 + $0x78] sm:$0xff]
    %v290 = vld [vmem:[#allocation4 + $0x80] sm:$0xff]
    %v291 = vld [vmem:[#allocation4 + $0x88] sm:$0xff]
    %v292 = vld [vmem:[#allocation4 + $0x90] sm:$0xff]
    %v293 = vld [vmem:[#allocation4 + $0x98] sm:$0xff]
    %v294 = vld [vmem:[#allocation4 + $0xa0] sm:$0xff]
    %v295 = vld [vmem:[#allocation4 + $0xa8] sm:$0xff]
    %v296 = vld [vmem:[#allocation4 + $0xb0] sm:$0xff]
    %v297 = vld [vmem:[#allocation4 + $0xb8] sm:$0xff]
    %v298 = vld [vmem:[#allocation4 + $0xc0] sm:$0xff]
    %v299 = vld [vmem:[#allocation4 + $0xc8] sm:$0xff]
    %v300 = vld [vmem:[#allocation4 + $0xd0] sm:$0xff]
    %v301 = vld [vmem:[#allocation4 + $0xd8] sm:$0xff]
    %v302 = vld [vmem:[#allocation4 + $0xe0] sm:$0xff]
    %v303 = vld [vmem:[#allocation4 + $0xe8] sm:$0xff]
    %v304 = vld [vmem:[#allocation4 + $0xf0] sm:$0xff]
    %v305 = vld [vmem:[#allocation4 + $0xf8] sm:$0xff]
    %v306 = vld [vmem:[#allocation4 + $0x100] sm:$0xff]
    %v307 = vld [vmem:[#allocation4 + $0x108] sm:$0xff]
    %v308 = vld [vmem:[#allocation4 + $0x110] sm:$0xff]
    %v309 = vld [vmem:[#allocation4 + $0x118] sm:$0xff]
    %v310 = vld [vmem:[#allocation4 + $0x120] sm:$0xff]
    %v311 = vld [vmem:[#allocation4 + $0x128] sm:$0xff]
    %v312 = vld [vmem:[#allocation4 + $0x130] sm:$0xff]
    %v313 = vld [vmem:[#allocation4 + $0x138] sm:$0xff]
    %v314 = vld [vmem:[#allocation4 + $0x140] sm:$0xff]
    %v315 = vld [vmem:[#allocation4 + $0x148] sm:$0xff]
    %v316 = vld [vmem:[#allocation4 + $0x150] sm:$0xff]
    %v317 = vld [vmem:[#allocation4 + $0x158] sm:$0xff]
    %v318 = vld [vmem:[#allocation4 + $0x160] sm:$0xff]
    %v319 = vld [vmem:[#allocation4 + $0x168] sm:$0xff]
    %v320 = vld [vmem:[#allocation4 + $0x170] sm:$0xff]
    %v321 = vld [vmem:[#allocation4 + $0x178] sm:$0xff]
    %v322 = vld [vmem:[#allocation4 + $0x180] sm:$0xff]
    %v323 = vld [vmem:[#allocation4 + $0x188] sm:$0xff]
    %v324 = vld [vmem:[#allocation4 + $0x190] sm:$0xff]
    %v325 = vld [vmem:[#allocation4 + $0x198] sm:$0xff]
    %v326 = vld [vmem:[#allocation4 + $0x1a0] sm:$0xff]
    %v327 = vld [vmem:[#allocation4 + $0x1a8] sm:$0xff]
    %v328 = vld [vmem:[#allocation4 + $0x1b0] sm:$0xff]
    %v329 = vld [vmem:[#allocation4 + $0x1b8] sm:$0xff]
    %v330 = vld [vmem:[#allocation4 + $0x1c0] sm:$0xff]
    %v331 = vld [vmem:[#allocation4 + $0x1c8] sm:$0xff]
    %v332 = vld [vmem:[#allocation4 + $0x1d0] sm:$0xff]
    %v333 = vld [vmem:[#allocation4 + $0x1d8] sm:$0xff]
    %v334 = vld [vmem:[#allocation4 + $0x1e0] sm:$0xff]
    %v335 = vld [vmem:[#allocation4 + $0x1e8] sm:$0xff]
    %v336 = vld [vmem:[#allocation4 + $0x1f0] sm:$0xff]
    %v337 = vld [vmem:[#allocation4 + $0x1f8] sm:$0xff]
    %v338 = vld [vmem:[#allocation6] sm:$0x1]
    %v340 = vperm.slane %v338, 0
    %342 = vmatpush.msra.mxu0 %v289
    %343 = vmatpush.msra.mxu0 %v288
    %344 = vmatpush.msra.mxu0 %v287
    %345 = vmatpush.msra.mxu0 %v286
    %346 = vmatpush.msra.mxu0 %v285
    %347 = vmatpush.msra.mxu0 %v284
    %348 = vmatpush.msra.mxu0 %v283
    %349 = vmatpush.msra.mxu0 %v282
    %350 = vmatpush.msra.mxu0 %v281
    %351 = vmatpush.msra.mxu0 %v280
    %352 = vmatpush.msra.mxu0 %v279
    %353 = vmatpush.msra.mxu0 %v278
    %354 = vmatpush.msra.mxu0 %v277
    %355 = vmatpush.msra.mxu0 %v276
    %356 = vmatpush.msra.mxu0 %v275
    %357 = vmatpush.msra.mxu0 %v274
    %358 = vmatmul.f32.gmra.mxu0 %v266
    %v359 = vpop.f32.mrf.mxu0
    %v360 = vadd.f32 %v340, %v359
    %361 = vmatmul.f32.gmra.mxu0 %v270
    %v362 = vpop.f32.mrf.mxu0
    %v363 = vadd.f32 %v340, %v362
    %364 = vdwg.mxu0
    %365 = vmatpush.msra.mxu0 %v305
    %366 = vmatpush.msra.mxu0 %v304
    %367 = vmatpush.msra.mxu0 %v303
    %368 = vmatpush.msra.mxu0 %v302
    %369 = vmatpush.msra.mxu0 %v301
    %370 = vmatpush.msra.mxu0 %v300
    %371 = vmatpush.msra.mxu0 %v299
    %372 = vmatpush.msra.mxu0 %v298
    %373 = vmatpush.msra.mxu0 %v297
    %374 = vmatpush.msra.mxu0 %v296
    %375 = vmatpush.msra.mxu0 %v295
    %376 = vmatpush.msra.mxu0 %v294
    %377 = vmatpush.msra.mxu0 %v293
    %378 = vmatpush.msra.mxu0 %v292
    %379 = vmatpush.msra.mxu0 %v291
    %380 = vmatpush.msra.mxu0 %v290
    %381 = vmatmul.f32.gmra.mxu0 %v267
    %v382 = vpop.f32.mrf.mxu0
    %v383 = vadd.f32 %v360, %v382
    %384 = vmatmul.f32.gmra.mxu0 %v271
    %v385 = vpop.f32.mrf.mxu0
    %v386 = vadd.f32 %v363, %v385
    %387 = vdwg.mxu0
    %388 = vmatpush.msra.mxu0 %v321
    %389 = vmatpush.msra.mxu0 %v320
    %390 = vmatpush.msra.mxu0 %v319
    %391 = vmatpush.msra.mxu0 %v318
    %392 = vmatpush.msra.mxu0 %v317
    %393 = vmatpush.msra.mxu0 %v316
    %394 = vmatpush.msra.mxu0 %v315
    %395 = vmatpush.msra.mxu0 %v314
    %396 = vmatpush.msra.mxu0 %v313
    %397 = vmatpush.msra.mxu0 %v312
    %398 = vmatpush.msra.mxu0 %v311
    %399 = vmatpush.msra.mxu0 %v310
    %400 = vmatpush.msra.mxu0 %v309
    %401 = vmatpush.msra.mxu0 %v308
    %402 = vmatpush.msra.mxu0 %v307
    %403 = vmatpush.msra.mxu0 %v306
    %404 = vmatmul.f32.gmra.mxu0 %v268
    %v405 = vpop.f32.mrf.mxu0
    %v406 = vadd.f32 %v383, %v405
    %407 = vmatmul.f32.gmra.mxu0 %v272
    %v408 = vpop.f32.mrf.mxu0
    %v409 = vadd.f32 %v386, %v408
    %410 = vdwg.mxu0
    %411 = vmatpush.msra.mxu0 %v337
    %412 = vmatpush.msra.mxu0 %v336
    %413 = vmatpush.msra.mxu0 %v335
    %414 = vmatpush.msra.mxu0 %v334
    %415 = vmatpush.msra.mxu0 %v333
    %416 = vmatpush.msra.mxu0 %v332
    %417 = vmatpush.msra.mxu0 %v331
    %418 = vmatpush.msra.mxu0 %v330
    %419 = vmatpush.msra.mxu0 %v329
    %420 = vmatpush.msra.mxu0 %v328
    %421 = vmatpush.msra.mxu0 %v327
    %422 = vmatpush.msra.mxu0 %v326
    %423 = vmatpush.msra.mxu0 %v325
    %424 = vmatpush.msra.mxu0 %v324
    %425 = vmatpush.msra.mxu0 %v323
    %426 = vmatpush.msra.mxu0 %v322
    %427 = vmatmul.f32.gmra.mxu0 %v269
    %v428 = vpop.f32.mrf.mxu0
    %v429 = vadd.f32 %v406, %v428
    %430 = vmatmul.f32.gmra.mxu0 %v273
    %v431 = vpop.f32.mrf.mxu0
    %v432 = vadd.f32 %v409, %v431
    %433 = vdwg.mxu0
    %v434 = vadd.f32 %v429, %v98
    %v435 = vadd.f32 %v432, %v99
    %436 = vadd.xlane.f32.xlu0 %v434
    %v437 = vpop.xlane.xlu0 %436
    %438 = vadd.xlane.f32.xlu0 %v435
    %v439 = vpop.xlane.xlu0 %438
    %v440 = vrcp.pop 128.0
    %v441 = vmul.f32 128.0, %v440
    %v442 = vsub.f32 1.0, %v441
    %v443 = vmul.f32 %v440, %v442
    %v444 = vadd.f32 %v440, %v443
    %vm445 = vweird.f32 %v440
    %v446 = vsel %vm445, %v440, %v444
    %v447 = vmul.f32 %v437, %v446
    %v448 = vmul.f32 %v439, %v446
    %v449 = vsub.f32 %v434, %v447
    %v450 = vsub.f32 %v435, %v448
    %v451 = vmul.f32 %v449, %v449
    %v452 = vmul.f32 %v450, %v450
    %453 = vadd.xlane.f32.xlu0 %v451
    %v454 = vpop.xlane.xlu0 %453
    %455 = vadd.xlane.f32.xlu0 %v452
    %v456 = vpop.xlane.xlu0 %455
    %v457 = vmul.f32 %v454, %v446
    %v458 = vmul.f32 %v456, %v446
    %v459 = vadd.f32 %v457, 1e-05
    %v460 = vadd.f32 %v458, 1e-05
    %v461 = vrsqrt.pop %v459
    %v462 = vmul.f32 %v461, %v459
    %v463 = vmul.f32 %v462, %v461
    %v464 = vmul.f32 0.5, %v463
    %v465 = vsub.f32 1.5, %v464
    %v466 = vmul.f32 %v461, %v465
    %vm467 = vweird.f32 %v459
    %vm468 = vweird.f32 %v461
    %vm469 = vmor %vm467, %vm468
    %v470 = vsel %vm469, %v461, %v466
    %v471 = vrsqrt.pop %v460
    %v472 = vmul.f32 %v471, %v460
    %v473 = vmul.f32 %v472, %v471
    %v474 = vmul.f32 0.5, %v473
    %v475 = vsub.f32 1.5, %v474
    %v476 = vmul.f32 %v471, %v475
    %vm477 = vweird.f32 %v460
    %vm478 = vweird.f32 %v471
    %vm479 = vmor %vm477, %vm478
    %v480 = vsel %vm479, %v471, %v476
    %v481 = vmul.f32 %v449, %v470
    %v482 = vmul.f32 %v450, %v480
    %v483 = vld [vmem:[#allocation7] sm:$0x1]
    %v485 = vperm.slane %v483, 0
    %v487 = vmul.f32 %v481, %v485
    %v488 = vmul.f32 %v482, %v485
    %v489 = vld [vmem:[#allocation9] sm:$0x1]
    %v491 = vperm.slane %v489, 0
    %v493 = vadd.f32 %v487, %v491
    %v494 = vadd.f32 %v488, %v491
    %495 = vst [vmem:[%s7] sm:$0xff] %v493
    %496 = vst [vmem:[%s7 + $0x8] sm:$0xff] %v494
    // Predicated region
    $region50: #{tsp_monty_style_decoder_forward.20} parent=1 // pred_check
      _
    $region51: #{tsp_monty_style_decoder_forward.20} parent=1 // pred_check_branch
      %498 = sbr.rel (0) target = $region53
    $region52: #{tsp_monty_style_decoder_forward.20} parent=1 // pred_region
      _
    $region53: #{tsp_monty_style_decoder_forward.20} parent=1 // pred_fallthru
      _
    // Predicated region
    $region54: #{tsp_monty_style_decoder_forward.20} parent=1 // pred_check
      _
    $region55: #{tsp_monty_style_decoder_forward.20} parent=1 // pred_check_branch
      %500 = sbr.rel (0) target = $region57
    $region56: #{tsp_monty_style_decoder_forward.20} parent=1 // pred_region
      _
    $region57: #{tsp_monty_style_decoder_forward.20} parent=1 // pred_fallthru
      _
    %501 = vsyncpa [#allocation3], 1
    %502 = vsyncpa [#allocation5], 1
    %503 = vsyncpa [#allocation8], 1

// kernel: tsp_monty_style_decoder_forward.21
$region0: #{tsp_monty_style_decoder_forward.21}
  #allocation0 [shape = 'u32[]', space=smem, size = 0x4, offset = 0x4, fixed_abs, tag = 'smem constant byte address 0x4 - core index']
  #allocation1 [shape = 'u32[72,128]{1,0:T(1,128)}', space=vmem, size = 0x9000, scoped, tag = 'internal scratch']
  #allocation2 [shape = 'f32[1,1]{1,0:T(1,128)S(1)}', space=vmem, size = 0x200, scoped, tag = 'scoped memory for tsp_monty_style_decoder_forward.21']
  %s0 = inlined_call_operand.vmem [shape: f32[2,8,128], index: 0, kind: input, shape index: {}]
  %s1 = inlined_call_operand.hbm [shape: f32[128,128], index: 1, kind: input, shape index: {}]
  %s2 = inlined_call_operand.vmem [shape: f32[1,128], index: 2, kind: input, shape index: {}]
  %s3 = inlined_call_operand.vmem [shape: f32[1,128], index: 3, kind: input, shape index: {}]
  %s4 = inlined_call_operand.<no memory space> [shape: f32[1,1], index: 4, kind: input, shape index: {}]
  %s5 = inlined_call_operand.vmem [shape: f32[2,1,8], index: 5, kind: input, shape index: {}]
  %s6 = inlined_call_operand.vmem [shape: f32[2,1,1], index: 6, kind: input, shape index: {}]
  %s7 = inlined_call_operand.hbm [shape: f32[2,1,8], index: 7, kind: output, shape index: {}]
  %s8 = sld [smem:[#allocation0]]
  $region65: #{tsp_monty_style_decoder_forward.21} parent=0
    _
  %s10 = ssub.s32 1, %s8
  %s11 = scalar_select 0, %s10, %s8
  %v12 = vstv %s4
  %13 = vst [vmem:[#allocation2] sm:$0x1] %v12
  $region1: #{tsp_monty_style_decoder_forward.21} parent=0
    #allocation3 [shape = 'u8[65536]{0}', space=vmem, size = 0x10000, scoped, tag = 'input window, operand 1, single buffered']
    #allocation4 [shape = 's32[2]{0}', space=sflag, size = 0x8, scoped, tag = 'scoped memory for tsp_monty_style_decoder_forward.21']
    #allocation5 [shape = 's32[2]{0}', space=sflag, size = 0x8, scoped, tag = 'scoped memory for tsp_monty_style_decoder_forward.21']
    #allocation6 [shape = 'u8[1024]{0}', space=vmem, size = 0x400, scoped, tag = 'output window, operand 0']
    %14 = vsyncpa [#allocation4], 0
    %15 = vsyncpa [#allocation5], 0
    %s16 = scalar_lea.sflag [#allocation5], 1
    %17 = vsyncpa %s16, 0
    loop: start=0, step=1, limit=4
    $region2: #{tsp_monty_style_decoder_forward.21} parent=1 // loop_pre_header
      _
    $region3: #{tsp_monty_style_decoder_forward.21} parent=1 // loop_header
      %s19 = sphi 0, %s23
      %p20 = scmp.ge.s32.totalorder %s19, 4
      %s29 = sphi 0, %s31
      %s32 = sphi 0, %s29
      %s33 = sphi 0, %s32
      %s49 = sphi 0, %s33
      %s53 = sphi 0, %s53
      %s55 = sphi 0, %s53
      %s56 = sphi 0, %s55
      %s70 = sphi 0, %s56
      %s74 = sphi 0, %s74
      %s76 = sphi 0, %s74
      %s77 = sphi 0, %s76
      %s91 = sphi 0, %s77
      %s95 = sphi 0, %s95
      %s97 = sphi 0, %s95
      %s98 = sphi 0, %s97
      %s112 = sphi 0, %s98
      %s116 = sphi 0, %s116
      %s118 = sphi 0, %s116
      %s119 = sphi 0, %s118
      %s133 = sphi 0, %s119
      %s139 = sphi 0, %s141
      %s142 = sphi 0, %s139
      %s143 = sphi 0, %s142
      %s159 = sphi 0, %s143
      %s165 = sphi 0, %s167
      %s168 = sphi 0, %s165
      %s169 = sphi 0, %s168
      %s185 = sphi 0, %s169
      %s191 = sphi 0, %s193
      %s194 = sphi 0, %s191
      %s195 = sphi 0, %s194
      %s211 = sphi 0, %s195
    $region4: #{tsp_monty_style_decoder_forward.21} parent=1 // loop_header_branch
      %22 = sbr.rel (%p20) target = $region8
    $region5: #{tsp_monty_style_decoder_forward.21} parent=1 // loop_body
      %s24 = ssub.s32 %s19, 1
      %s25 = ssub.s32 %s19, 2
      %s26 = sadd.s32 %s19, 1
      %s27 = ssub.s32 %s19, %s26
      %p28 = scmp.eq.s32.totalorder %s27, 0
      %s30 = sadd.s32 %s29, 1
      %s31 = scalar_select %p28, %s29, %s30
      %p34 = pneg %p28
      %p35 = scmp.eq.s32.totalorder %s19, 1
      %p36 = por %p34, %p35
      %p37 = scmp.ne.s32.totalorder %s29, %s32
      %p38 = scmp.eq.s32.totalorder %s19, 0
      %p39 = por %p37, %p38
      %p40 = scmp.ne.s32.totalorder %s29, %s32
      %p41 = scmp.eq.s32.totalorder %s24, 1
      %p42 = por %p40, %p41
      %p43 = scmp.ne.s32.totalorder %s32, %s33
      %p44 = scmp.eq.s32.totalorder %s24, 0
      %p45 = por %p43, %p44
      %p46 = scmp.ne.s32.totalorder %s32, %s33
      %p47 = scmp.eq.s32.totalorder %s25, 1
      %p48 = por %p46, %p47
      %p50 = scmp.ne.s32.totalorder %s33, %s49
      %p51 = scmp.eq.s32.totalorder %s25, 0
      %p52 = por %p50, %p51
      %s54 = sadd.s32 %s53, 1
      %p57 = scmp.eq.s32.totalorder %s19, 1
      %p58 = scmp.ne.s32.totalorder %s53, %s55
      %p59 = scmp.eq.s32.totalorder %s19, 0
      %p60 = por %p58, %p59
      %p61 = scmp.ne.s32.totalorder %s53, %s55
      %p62 = scmp.eq.s32.totalorder %s24, 1
      %p63 = por %p61, %p62
      %p64 = scmp.ne.s32.totalorder %s55, %s56
      %p65 = scmp.eq.s32.totalorder %s24, 0
      %p66 = por %p64, %p65
      %p67 = scmp.ne.s32.totalorder %s55, %s56
      %p68 = scmp.eq.s32.totalorder %s25, 1
      %p69 = por %p67, %p68
      %p71 = scmp.ne.s32.totalorder %s56, %s70
      %p72 = scmp.eq.s32.totalorder %s25, 0
      %p73 = por %p71, %p72
      %s75 = sadd.s32 %s74, 1
      %p78 = scmp.eq.s32.totalorder %s19, 1
      %p79 = scmp.ne.s32.totalorder %s74, %s76
      %p80 = scmp.eq.s32.totalorder %s19, 0
      %p81 = por %p79, %p80
      %p82 = scmp.ne.s32.totalorder %s74, %s76
      %p83 = scmp.eq.s32.totalorder %s24, 1
      %p84 = por %p82, %p83
      %p85 = scmp.ne.s32.totalorder %s76, %s77
      %p86 = scmp.eq.s32.totalorder %s24, 0
      %p87 = por %p85, %p86
      %p88 = scmp.ne.s32.totalorder %s76, %s77
      %p89 = scmp.eq.s32.totalorder %s25, 1
      %p90 = por %p88, %p89
      %p92 = scmp.ne.s32.totalorder %s77, %s91
      %p93 = scmp.eq.s32.totalorder %s25, 0
      %p94 = por %p92, %p93
      %s96 = sadd.s32 %s95, 1
      %p99 = scmp.eq.s32.totalorder %s19, 1
      %p100 = scmp.ne.s32.totalorder %s95, %s97
      %p101 = scmp.eq.s32.totalorder %s19, 0
      %p102 = por %p100, %p101
      %p103 = scmp.ne.s32.totalorder %s95, %s97
      %p104 = scmp.eq.s32.totalorder %s24, 1
      %p105 = por %p103, %p104
      %p106 = scmp.ne.s32.totalorder %s97, %s98
      %p107 = scmp.eq.s32.totalorder %s24, 0
      %p108 = por %p106, %p107
      %p109 = scmp.ne.s32.totalorder %s97, %s98
      %p110 = scmp.eq.s32.totalorder %s25, 1
      %p111 = por %p109, %p110
      %p113 = scmp.ne.s32.totalorder %s98, %s112
      %p114 = scmp.eq.s32.totalorder %s25, 0
      %p115 = por %p113, %p114
      %s117 = sadd.s32 %s116, 1
      %p120 = scmp.eq.s32.totalorder %s19, 1
      %p121 = scmp.ne.s32.totalorder %s116, %s118
      %p122 = scmp.eq.s32.totalorder %s19, 0
      %p123 = por %p121, %p122
      %p124 = scmp.ne.s32.totalorder %s116, %s118
      %p125 = scmp.eq.s32.totalorder %s24, 1
      %p126 = por %p124, %p125
      %p127 = scmp.ne.s32.totalorder %s118, %s119
      %p128 = scmp.eq.s32.totalorder %s24, 0
      %p129 = por %p127, %p128
      %p130 = scmp.ne.s32.totalorder %s118, %s119
      %p131 = scmp.eq.s32.totalorder %s25, 1
      %p132 = por %p130, %p131
      %p134 = scmp.ne.s32.totalorder %s119, %s133
      %p135 = scmp.eq.s32.totalorder %s25, 0
      %p136 = por %p134, %p135
      %s137 = ssub.s32 %s19, %s26
      %p138 = scmp.eq.s32.totalorder %s137, 0
      %s140 = sadd.s32 %s139, 1
      %s141 = scalar_select %p138, %s139, %s140
      %p144 = pneg %p138
      %p145 = scmp.eq.s32.totalorder %s19, 1
      %p146 = por %p144, %p145
      %p147 = scmp.ne.s32.totalorder %s139, %s142
      %p148 = scmp.eq.s32.totalorder %s19, 0
      %p149 = por %p147, %p148
      %p150 = scmp.ne.s32.totalorder %s139, %s142
      %p151 = scmp.eq.s32.totalorder %s24, 1
      %p152 = por %p150, %p151
      %p153 = scmp.ne.s32.totalorder %s142, %s143
      %p154 = scmp.eq.s32.totalorder %s24, 0
      %p155 = por %p153, %p154
      %p156 = scmp.ne.s32.totalorder %s142, %s143
      %p157 = scmp.eq.s32.totalorder %s25, 1
      %p158 = por %p156, %p157
      %p160 = scmp.ne.s32.totalorder %s143, %s159
      %p161 = scmp.eq.s32.totalorder %s25, 0
      %p162 = por %p160, %p161
      %s163 = ssub.s32 %s19, %s26
      %p164 = scmp.eq.s32.totalorder %s163, 0
      %s166 = sadd.s32 %s165, 1
      %s167 = scalar_select %p164, %s165, %s166
      %p170 = pneg %p164
      %p171 = scmp.eq.s32.totalorder %s19, 1
      %p172 = por %p170, %p171
      %p173 = scmp.ne.s32.totalorder %s165, %s168
      %p174 = scmp.eq.s32.totalorder %s19, 0
      %p175 = por %p173, %p174
      %p176 = scmp.ne.s32.totalorder %s165, %s168
      %p177 = scmp.eq.s32.totalorder %s24, 1
      %p178 = por %p176, %p177
      %p179 = scmp.ne.s32.totalorder %s168, %s169
      %p180 = scmp.eq.s32.totalorder %s24, 0
      %p181 = por %p179, %p180
      %p182 = scmp.ne.s32.totalorder %s168, %s169
      %p183 = scmp.eq.s32.totalorder %s25, 1
      %p184 = por %p182, %p183
      %p186 = scmp.ne.s32.totalorder %s169, %s185
      %p187 = scmp.eq.s32.totalorder %s25, 0
      %p188 = por %p186, %p187
      %s189 = ssub.s32 %s19, %s26
      %p190 = scmp.eq.s32.totalorder %s189, 0
      %s192 = sadd.s32 %s191, 1
      %s193 = scalar_select %p190, %s191, %s192
      %p196 = pneg %p190
      %p197 = scmp.eq.s32.totalorder %s19, 1
      %p198 = por %p196, %p197
      %p199 = scmp.ne.s32.totalorder %s191, %s194
      %p200 = scmp.eq.s32.totalorder %s19, 0
      %p201 = por %p199, %p200
      %p202 = scmp.ne.s32.totalorder %s191, %s194
      %p203 = scmp.eq.s32.totalorder %s24, 1
      %p204 = por %p202, %p203
      %p205 = scmp.ne.s32.totalorder %s194, %s195
      %p206 = scmp.eq.s32.totalorder %s24, 0
      %p207 = por %p205, %p206
      %p208 = scmp.ne.s32.totalorder %s194, %s195
      %p209 = scmp.eq.s32.totalorder %s25, 1
      %p210 = por %p208, %p209
      %p212 = scmp.ne.s32.totalorder %s195, %s211
      %p213 = scmp.eq.s32.totalorder %s25, 0
      %p214 = por %p212, %p213
      %p215 = scmp.le.s32.totalorder 1, %s19
      %p216 = scmp.lt.s32.totalorder %s19, 3
      %p217 = pnand %p215, %p216
      %p218 = pneg %p217
      // Predicated region
      $region9: #{tsp_monty_style_decoder_forward.21} parent=5 // pred_check
        _
      $region10: #{tsp_monty_style_decoder_forward.21} parent=5 // pred_check_branch
        %220 = sbr.rel (%p217) target = $region12
      $region11: #{tsp_monty_style_decoder_forward.21} parent=5 // pred_region
        %s221 = ssub.s32 %s19, 1
        // Predicated region
        $region13: #{tsp_monty_style_decoder_forward.21} parent=11 // pred_check
          %p222 = pneg %p66
        $region14: #{tsp_monty_style_decoder_forward.21} parent=11 // pred_check_branch
          %224 = sbr.rel (%p222) target = $region16
        $region15: #{tsp_monty_style_decoder_forward.21} parent=11 // pred_region
          %226 = vsyncadd [#allocation4], 0
          %s227 = sshll.u32 %s1, 4
          %s228 = int_to_ptr.hbm [resolvable:$true] %s227
          %s229 = sshll.u32 [#allocation3], 4
          %s230 = int_to_ptr.vmem [resolvable:$true] %s229
          %235 = dma.hbm_to_vmem [thread:$0]  %s228, 2048, %s230, [#allocation4], 128, 128, 8
        $region16: #{tsp_monty_style_decoder_forward.21} parent=11 // pred_fallthru
          _
        // Predicated region
        $region17: #{tsp_monty_style_decoder_forward.21} parent=11 // pred_check
          %p236 = pneg %p87
        $region18: #{tsp_monty_style_decoder_forward.21} parent=11 // pred_check_branch
          %238 = sbr.rel (%p236) target = $region20
        $region19: #{tsp_monty_style_decoder_forward.21} parent=11 // pred_region
          _
        $region20: #{tsp_monty_style_decoder_forward.21} parent=11 // pred_fallthru
          _
        // Predicated region
        $region21: #{tsp_monty_style_decoder_forward.21} parent=11 // pred_check
          %p239 = pneg %p108
        $region22: #{tsp_monty_style_decoder_forward.21} parent=11 // pred_check_branch
          %241 = sbr.rel (%p239) target = $region24
        $region23: #{tsp_monty_style_decoder_forward.21} parent=11 // pred_region
          _
        $region24: #{tsp_monty_style_decoder_forward.21} parent=11 // pred_fallthru
          _
        // Predicated region
        $region25: #{tsp_monty_style_decoder_forward.21} parent=11 // pred_check
          %p242 = pneg %p129
        $region26: #{tsp_monty_style_decoder_forward.21} parent=11 // pred_check_branch
          %244 = sbr.rel (%p242) target = $region28
        $region27: #{tsp_monty_style_decoder_forward.21} parent=11 // pred_region
          _
        $region28: #{tsp_monty_style_decoder_forward.21} parent=11 // pred_fallthru
          _
      $region12: #{tsp_monty_style_decoder_forward.21} parent=5 // pred_fallthru
        _
      %p245 = scmp.lt.s32.totalorder %s19, 2
      // Predicated region
      $region29: #{tsp_monty_style_decoder_forward.21} parent=5 // pred_check
        %p246 = pneg %p245
      $region30: #{tsp_monty_style_decoder_forward.21} parent=5 // pred_check_branch
        %248 = sbr.rel (%p246) target = $region32
      $region31: #{tsp_monty_style_decoder_forward.21} parent=5 // pred_region
        // Predicated region
        $region33: #{tsp_monty_style_decoder_forward.21} parent=31 // pred_check
          %p249 = pneg %p39
        $region34: #{tsp_monty_style_decoder_forward.21} parent=31 // pred_check_branch
          %251 = sbr.rel (%p249) target = $region36
        $region35: #{tsp_monty_style_decoder_forward.21} parent=31 // pred_region
          %p252 = scmp.lt.s32.totalorder %s19, 1
          %s253 = scalar_select %p252, %s19, 1
          %s254 = smul.addr %s253, 8
          %s255 = scalar_lea.vmem %s0, %s254
        $region36: #{tsp_monty_style_decoder_forward.21} parent=31 // pred_fallthru
          _
        // Predicated region
        $region37: #{tsp_monty_style_decoder_forward.21} parent=31 // pred_check
          %p256 = pneg %p149
        $region38: #{tsp_monty_style_decoder_forward.21} parent=31 // pred_check_branch
          %258 = sbr.rel (%p256) target = $region40
        $region39: #{tsp_monty_style_decoder_forward.21} parent=31 // pred_region
          %p259 = scmp.lt.s32.totalorder %s19, 1
          %s260 = scalar_select %p259, %s19, 1
          %s261 = scalar_lea.vmem %s5, %s260
        $region40: #{tsp_monty_style_decoder_forward.21} parent=31 // pred_fallthru
          _
        // Predicated region
        $region41: #{tsp_monty_style_decoder_forward.21} parent=31 // pred_check
          %p262 = pneg %p175
        $region42: #{tsp_monty_style_decoder_forward.21} parent=31 // pred_check_branch
          %264 = sbr.rel (%p262) target = $region44
        $region43: #{tsp_monty_style_decoder_forward.21} parent=31 // pred_region
          %p265 = scmp.lt.s32.totalorder %s19, 1
          %s266 = scalar_select %p265, %s19, 1
          %s267 = scalar_lea.vmem %s6, %s266
        $region44: #{tsp_monty_style_decoder_forward.21} parent=31 // pred_fallthru
          _
      $region32: #{tsp_monty_style_decoder_forward.21} parent=5 // pred_fallthru
        _
      %p268 = scmp.le.s32.totalorder 1, %s19
      %p269 = scmp.lt.s32.totalorder %s19, 3
      %p270 = pnand %p268, %p269
      %p271 = pneg %p270
      // Predicated region
      $region45: #{tsp_monty_style_decoder_forward.21} parent=5 // pred_check
        _
      $region46: #{tsp_monty_style_decoder_forward.21} parent=5 // pred_check_branch
        %273 = sbr.rel (%p270) target = $region48
      $region47: #{tsp_monty_style_decoder_forward.21} parent=5 // pred_region
        %s274 = ssub.s32 %s19, 1
        // Predicated region
        $region49: #{tsp_monty_style_decoder_forward.21} parent=47 // pred_check
          %p275 = pneg %p66
        $region50: #{tsp_monty_style_decoder_forward.21} parent=47 // pred_check_branch
          %277 = sbr.rel (%p275) target = $region52
        $region51: #{tsp_monty_style_decoder_forward.21} parent=47 // pred_region
          %279 = dma.done [#allocation4], 2048
        $region52: #{tsp_monty_style_decoder_forward.21} parent=47 // pred_fallthru
          _
        %p280 = scmp.lt.s32.totalorder %s24, 1
        %s281 = scalar_select %p280, %s24, 1
        %s282 = smul.addr %s281, 8
        %s283 = scalar_lea.vmem %s0, %s282
        %p284 = pneg %p45
        %p285 = pneg %p42
        %p286 = pneg %p66
        %p287 = pneg %p63
        %p288 = pneg %p87
        %p289 = pneg %p84
        %p290 = pneg %p108
        %p291 = pneg %p105
        %p292 = pneg %p129
        %p293 = pneg %p126
        %p294 = scmp.lt.s32.totalorder %s24, 1
        %s295 = scalar_select %p294, %s24, 1
        %s296 = scalar_lea.vmem %s5, %s295
        %p297 = pneg %p155
        %p298 = pneg %p152
        %p299 = scmp.lt.s32.totalorder %s24, 1
        %s300 = scalar_select %p299, %s24, 1
        %s301 = scalar_lea.vmem %s6, %s300
        %p302 = pneg %p181
        %p303 = pneg %p178
        %p304 = pneg %p207
        %p305 = pneg %p204
        %s306 = sand.u32 %s194, 1
        %s307 = scalar_lea.sflag [#allocation5], %s306
        %s308 = sand.u32 %s194, 1
        %s309 = scalar_lea.vmem [#allocation6], %s308
        %p310 = scmp.lt.s32.totalorder %s24, 1
        %s311 = scalar_select %p310, %s24, 1
        %s312 = smul.addr %s311, 8
        %s313 = scalar_lea.vmem %s0, %s312
        %p314 = scmp.lt.s32.totalorder %s24, 1
        %s315 = scalar_select %p314, %s24, 1
        %s316 = scalar_lea.vmem %s5, %s315
        %p317 = scmp.lt.s32.totalorder %s24, 1
        %s318 = scalar_select %p317, %s24, 1
        %s319 = scalar_lea.vmem %s6, %s318
        %v320 = vld [vmem:[%s313] sm:$0xff]
        %v321 = vld [vmem:[#allocation3] sm:$0xff]
        %v322 = vld [vmem:[#allocation3 + $0x8] sm:$0xff]
        %v323 = vld [vmem:[#allocation3 + $0x10] sm:$0xff]
        %v324 = vld [vmem:[#allocation3 + $0x18] sm:$0xff]
        %v325 = vld [vmem:[#allocation3 + $0x20] sm:$0xff]
        %v326 = vld [vmem:[#allocation3 + $0x28] sm:$0xff]
        %v327 = vld [vmem:[#allocation3 + $0x30] sm:$0xff]
        %v328 = vld [vmem:[#allocation3 + $0x38] sm:$0xff]
        %v329 = vld [vmem:[#allocation3 + $0x40] sm:$0xff]
        %v330 = vld [vmem:[#allocation3 + $0x48] sm:$0xff]
        %v331 = vld [vmem:[#allocation3 + $0x50] sm:$0xff]
        %v332 = vld [vmem:[#allocation3 + $0x58] sm:$0xff]
        %v333 = vld [vmem:[#allocation3 + $0x60] sm:$0xff]
        %v334 = vld [vmem:[#allocation3 + $0x68] sm:$0xff]
        %v335 = vld [vmem:[#allocation3 + $0x70] sm:$0xff]
        %v336 = vld [vmem:[#allocation3 + $0x78] sm:$0xff]
        %v337 = vld [vmem:[%s2] sm:$0x1]
        %v339 = vperm.slane %v337, 0
        %341 = vmatpush.msra.mxu0 %v336
        %342 = vmatpush.msra.mxu0 %v335
        %343 = vmatpush.msra.mxu0 %v334
        %344 = vmatpush.msra.mxu0 %v333
        %345 = vmatpush.msra.mxu0 %v332
        %346 = vmatpush.msra.mxu0 %v331
        %347 = vmatpush.msra.mxu0 %v330
        %348 = vmatpush.msra.mxu0 %v329
        %349 = vmatpush.msra.mxu0 %v328
        %350 = vmatpush.msra.mxu0 %v327
        %351 = vmatpush.msra.mxu0 %v326
        %352 = vmatpush.msra.mxu0 %v325
        %353 = vmatpush.msra.mxu0 %v324
        %354 = vmatpush.msra.mxu0 %v323
        %355 = vmatpush.msra.mxu0 %v322
        %356 = vmatpush.msra.mxu0 %v321
        %357 = vmatmul.f32.gmra.mxu0 %v320
        %v358 = vpop.f32.mrf.mxu0
        %v359 = vadd.f32 %v339, %v358
        %360 = vdwg.mxu0
        %v361 = vmax.f32 %v359, 0.0
        %v362 = vld [vmem:[%s3] sm:$0x1]
        %v363 = vld [vmem:[#allocation2] sm:$0x1]
        %365 = vset.pattern.permute.xlu0 0
        %366 = vperm.xlu0 %365, %v363
        %v367 = vpop.permute.xlu0 %366
        %v369 = vperm.slane %v367, 0
        %370 = vmatpush.xpose.msra.mxu0 0.0
        %371 = vmatpush.xpose.msra.mxu0 0.0
        %372 = vmatpush.xpose.msra.mxu0 0.0
        %373 = vmatpush.xpose.msra.mxu0 0.0
        %374 = vmatpush.xpose.msra.mxu0 0.0
        %375 = vmatpush.xpose.msra.mxu0 0.0
        %376 = vmatpush.xpose.msra.mxu0 0.0
        %377 = vmatpush.xpose.msra.mxu0 0.0
        %378 = vmatpush.xpose.msra.mxu0 0.0
        %379 = vmatpush.xpose.msra.mxu0 0.0
        %380 = vmatpush.xpose.msra.mxu0 0.0
        %381 = vmatpush.xpose.msra.mxu0 0.0
        %382 = vmatpush.xpose.msra.mxu0 0.0
        %383 = vmatpush.xpose.msra.mxu0 0.0
        %384 = vmatpush.xpose.msra.mxu0 0.0
        %385 = vmatpush.xpose.msra.mxu0 %v361
        %386 = vmatmul.f32.gmra.mxu0 %v362
        %v387 = vpop.f32.mrf.mxu0
        %v388 = vadd.f32 %v369, %v387
        %389 = vdwg.mxu0
        %v390 = vld [vmem:[%s316] sm:$0x1]
        %vm391 = vcmp.gt.f32.partialorder %v390, 0.5
        %v392 = vsel %vm391, -1e+30, %v388
        %v393 = vld [vmem:[%s319] sm:$0x1]
        %vm394 = vcmp.gt.f32.partialorder %v393, 0.5
        %v395 = vsel %vm394, 1, 0
        %396 = vset.pattern.permute.xlu0 0
        %397 = vperm.xlu0 %396, %v395
        %v398 = vpop.permute.xlu0 %397
        %v399 = vperm.slane %v398, 0
        %vm400 = vcmp.eq.s32.totalorder %v399, 1
        %v401 = vsel %vm400, 0.0, %v392
        %vm402 = vcmask 57344
        %v403 = vsel %vm402, %v401, -inf
        %404 = vmax.xlane.f32.xlu0 %v403
        %v405 = vpop.xlane.xlu0 %404
        %v406 = vsub.f32 %v401, %v405
        %v407 = vmul.f32 %v406, 1.442695
        %v408 = vpow.pop %v407
        %v409 = vsel %vm402, %v408, 0.0
        %410 = vadd.xlane.f32.xlu0 %v409
        %v411 = vpop.xlane.xlu0 %410
        %v412 = vlog2.pop %v411
        %v413 = vmul.f32 %v412, 0.6931472
        %v414 = vadd.f32 %v413, %v405
        %v415 = vsub.f32 %v401, %v414
        %416 = vst.msk [vmem:[%s309] sm:$0x1] %vm402, %v415
        %s417 = sand.u32 %s194, 1
        %s418 = scalar_lea.sflag [#allocation5], %s417
        %s419 = sand.u32 %s194, 1
        %s420 = scalar_lea.vmem [#allocation6], %s419
        // Predicated region
        $region53: #{tsp_monty_style_decoder_forward.21} parent=47 // pred_check
          %p421 = pneg %p204
        $region54: #{tsp_monty_style_decoder_forward.21} parent=47 // pred_check_branch
          %423 = sbr.rel (%p421) target = $region56
        $region55: #{tsp_monty_style_decoder_forward.21} parent=47 // pred_region
          %425 = vsyncadd %s418, 0
          %s426 = scalar_lea.hbm %s7, %s24
          %s428 = sshll.u32 %s420, 4
          %s429 = int_to_ptr.vmem [resolvable:$true] %s428
          %s430 = sshll.u32 %s426, 4
          %s431 = int_to_ptr.hbm [resolvable:$true] %s430
          %433 = dma.vmem_to_hbm [thread:$0]  %s429, 16, %s431, %s418
        $region56: #{tsp_monty_style_decoder_forward.21} parent=47 // pred_fallthru
          _
      $region48: #{tsp_monty_style_decoder_forward.21} parent=5 // pred_fallthru
        _
      %p434 = scmp.le.s32.totalorder 2, %s19
      // Predicated region
      $region57: #{tsp_monty_style_decoder_forward.21} parent=5 // pred_check
        %p435 = pneg %p434
      $region58: #{tsp_monty_style_decoder_forward.21} parent=5 // pred_check_branch
        %437 = sbr.rel (%p435) target = $region60
      $region59: #{tsp_monty_style_decoder_forward.21} parent=5 // pred_region
        %s438 = ssub.s32 %s19, 2
        // Predicated region
        $region61: #{tsp_monty_style_decoder_forward.21} parent=59 // pred_check
          %p439 = pneg %p210
        $region62: #{tsp_monty_style_decoder_forward.21} parent=59 // pred_check_branch
          %441 = sbr.rel (%p439) target = $region64
        $region63: #{tsp_monty_style_decoder_forward.21} parent=59 // pred_region
          %s442 = sand.u32 %s195, 1
          %s443 = scalar_lea.sflag [#allocation5], %s442
          %s444 = sand.u32 %s195, 1
          %s445 = scalar_lea.vmem [#allocation6], %s444
          %447 = dma.done %s443, 16
        $region64: #{tsp_monty_style_decoder_forward.21} parent=59 // pred_fallthru
          _
      $region60: #{tsp_monty_style_decoder_forward.21} parent=5 // pred_fallthru
        _
    $region6: #{tsp_monty_style_decoder_forward.21} parent=1 // loop_footer
      %s23 = sadd.s32 1, %s19
    $region7: #{tsp_monty_style_decoder_forward.21} parent=1 // loop_footer_branch
      %18 = sbr.rel target = $region3
    $region8: #{tsp_monty_style_decoder_forward.21} parent=1 // loop_exit
      _
    %448 = vsyncpa [#allocation4], 1
    %s449 = scalar_lea.sflag [#allocation4], 1
    %450 = vsyncpa %s449, 1
    %451 = vsyncpa [#allocation5], 1
    %s452 = scalar_lea.sflag [#allocation5], 1
    %453 = vsyncpa %s452, 1

</llo_original>
